<compile_context>
chip_gen: v5e
topology: v5e:2x2
jax: 0.10.0
libtpu: 0.0.40
codegen_flags: <defaults>
</compile_context>

<pallas_src>
import math
import functools

import jax
import jax.numpy as jnp
from jax import lax
from jax.experimental import pallas as pl
from jax.experimental.pallas import tpu as pltpu  # noqa: F401  (tuning hooks)

# ----------------------------- model config ---------------------------------
D_MODEL = 32
N_HEADS = 4
D_FF = 64
N_LAYERS = 2
VOCAB_SRC = 16
VOCAB_TGT = 16
LN_EPS = 1e-6
MAX_LEN = 64


# ------------------------------ fused kernel --------------------------------
def _encdec_kernel(
    # token ids (pre-flattened to (B*S, 1) int32 by the wrapper), masks
    src_ids_ref, tgt_ids_ref, src_mask_ref, tgt_mask_ref,
    # embedding tables + positional encoding
    src_emb_ref, tgt_emb_ref, pe_ref,
    # encoder stack (packed, stacked over layers)
    enc_attn_w_ref, enc_attn_b_ref, enc_ffn_w1_ref, enc_ffn_w2_ref,
    enc_ffn_b_ref, enc_ln_ref, enc_norm_ref,
    # decoder stack (packed, stacked over layers)
    dec_self_w_ref, dec_self_b_ref, dec_cross_w_ref, dec_cross_b_ref,
    dec_ffn_w1_ref, dec_ffn_w2_ref, dec_ffn_b_ref, dec_ln_ref, dec_norm_ref,
    # output
    out_ref,
    *, n_heads, n_layers, eps, d_model, d_ff, batch, s_src, s_tgt):
    D = d_model
    B = batch
    dk = D // n_heads
    att_scale = 1.0 / math.sqrt(dk)
    emb_scale = math.sqrt(D)

    # -------- helpers on VMEM-resident values --------
    def layernorm(x2, g, beta):
        # torch-style unbiased std (d-1), exact division for tight parity.
        mean = jnp.mean(x2, axis=-1, keepdims=True)
        var = jnp.sum((x2 - mean) ** 2, axis=-1, keepdims=True) * (1.0 / (D - 1))
        return g * (x2 - mean) / (jnp.sqrt(var) + eps) + beta

    def embed(ids_col, table, S):
        # one-hot @ table: exact gather, MXU-friendly, no dynamic indexing.
        vocab = table.shape[0]
        oh = (ids_col == lax.broadcasted_iota(jnp.int32, (B * S, vocab), 1)
              ).astype(jnp.float32)
        x = jnp.dot(oh, table, preferred_element_type=jnp.float32) * emb_scale
        x = x.reshape(B, S, D) + pe_ref[:S, :][None, :, :]
        return x.reshape(B * S, D)

    def attention(q, kv, bias, wo, bo, Sq, Sk):
        # q: (B*Sq, D), kv: (B*Sk, 2D), bias: (B, Sq, Sk) additive mask,
        # wo: (D, D), bo: (1, D).  Per-head contexts are folded straight into a
        # lane-dense (B*Sq, D) accumulator (no lane concat).
        q3 = q.reshape(B, Sq, D)
        k3 = kv[:, :D].reshape(B, Sk, D)
        v3 = kv[:, D:].reshape(B, Sk, D)
        out = jnp.zeros((B * Sq, D), jnp.float32)
        for h in range(n_heads):                       # static unroll over heads
            sl = slice(h * dk, (h + 1) * dk)
            s = jnp.einsum("bqd,bkd->bqk", q3[:, :, sl], k3[:, :, sl],
                           preferred_element_type=jnp.float32) * att_scale + bias
            s = s - jnp.max(s, axis=-1, keepdims=True)
            e = jnp.exp(s)
            p = e * pl.reciprocal(jnp.sum(e, axis=-1, keepdims=True), approx=True)
            ctx = jnp.einsum("bqk,bkd->bqd", p, v3[:, :, sl],
                             preferred_element_type=jnp.float32).reshape(B * Sq, dk)
            out = out + jnp.dot(ctx, wo[sl, :], preferred_element_type=jnp.float32)
        return out + bo

    # -------- additive mask biases, computed exactly once per forward --------
    src_mask = src_mask_ref[...]                       # (B, 1, S_src)
    tgt_mask = tgt_mask_ref[...]                       # (B, S_tgt, S_tgt)
    src_bias = jnp.where(src_mask == 0.0, -1e9, 0.0)
    enc_bias = jnp.broadcast_to(src_bias, (B, s_src, s_src))
    crs_bias = jnp.broadcast_to(src_bias, (B, s_tgt, s_src))
    tgt_bias = jnp.where(tgt_mask == 0.0, -1e9, 0.0)

    # ------------------------------- encoder --------------------------------
    x = embed(src_ids_ref[...], src_emb_ref[...], s_src)          # (B*S_src, D)
    for l in range(n_layers):
        ln = enc_ln_ref[l]                                        # (4, D)
        aw = enc_attn_w_ref[l]                                    # (D, 4D)
        ab = enc_attn_b_ref[l]                                    # (1, 4D)
        # --- self-attention sublayer: x + attn(norm(x)) ---
        y = layernorm(x, ln[0:1, :], ln[1:2, :])
        # one full-width (D,128) matmul: cols [0:3D] = QKV, [3D:4D] unused here
        proj = jnp.dot(y, aw, preferred_element_type=jnp.float32) + ab
        x = x + attention(proj[:, :D], proj[:, D:3 * D], enc_bias,
                          aw[:, 3 * D:], ab[:, 3 * D:], s_src, s_src)
        # --- feed-forward sublayer: x + W2 relu(W1 norm(x) + b1) + b2 ---
        y = layernorm(x, ln[2:3, :], ln[3:4, :])
        fb = enc_ffn_b_ref[l]                                     # (1, FF + D)
        h1 = jnp.maximum(
            jnp.dot(y, enc_ffn_w1_ref[l], preferred_element_type=jnp.float32)
            + fb[:, :d_ff], 0.0)
        x = x + jnp.dot(h1, enc_ffn_w2_ref[l],
                        preferred_element_type=jnp.float32) + fb[:, d_ff:]
    memory = layernorm(x, enc_norm_ref[0:1, :], enc_norm_ref[1:2, :])

    # ------------------------------- decoder --------------------------------
    x = embed(tgt_ids_ref[...], tgt_emb_ref[...], s_tgt)          # (B*S_tgt, D)
    for l in range(n_layers):
        ln = dec_ln_ref[l]                                        # (6, D)
        sw = dec_self_w_ref[l]; sb = dec_self_b_ref[l]            # (D,4D),(1,4D)
        cw = dec_cross_w_ref[l]; cb = dec_cross_b_ref[l]          # (D,4D),(1,4D)
        # --- masked self-attention ---
        y = layernorm(x, ln[0:1, :], ln[1:2, :])
        proj = jnp.dot(y, sw, preferred_element_type=jnp.float32) + sb
        x = x + attention(proj[:, :D], proj[:, D:3 * D], tgt_bias,
                          sw[:, 3 * D:], sb[:, 3 * D:], s_tgt, s_tgt)
        # --- cross-attention over encoder memory ---
        y = layernorm(x, ln[2:3, :], ln[3:4, :])
        q = jnp.dot(y, cw[:, :D], preferred_element_type=jnp.float32) + cb[:, :D]
        kv = (jnp.dot(memory, cw[:, D:3 * D], preferred_element_type=jnp.float32)
              + cb[:, D:3 * D])
        x = x + attention(q, kv, crs_bias,
                          cw[:, 3 * D:], cb[:, 3 * D:], s_tgt, s_src)
        # --- feed-forward ---
        y = layernorm(x, ln[4:5, :], ln[5:6, :])
        fb = dec_ffn_b_ref[l]
        h1 = jnp.maximum(
            jnp.dot(y, dec_ffn_w1_ref[l], preferred_element_type=jnp.float32)
            + fb[:, :d_ff], 0.0)
        x = x + jnp.dot(h1, dec_ffn_w2_ref[l],
                        preferred_element_type=jnp.float32) + fb[:, d_ff:]
    x = layernorm(x, dec_norm_ref[0:1, :], dec_norm_ref[1:2, :])

    out_ref[...] = x.reshape(B, s_tgt, D)


# ------------------------------ kernel wrapper -------------------------------
def encoder_decoder_forward(params, src, tgt, src_mask, tgt_mask):
    # EncoderDecoder.forward: decode(encode(src, src_mask), src_mask, tgt, tgt_mask)
    B, S_src = src.shape
    _, S_tgt = tgt.shape
    kernel = functools.partial(
        _encdec_kernel, n_heads=N_HEADS, n_layers=N_LAYERS, eps=LN_EPS,
        d_model=D_MODEL, d_ff=D_FF, batch=B, s_src=S_src, s_tgt=S_tgt)
    return pl.pallas_call(
        kernel,
        out_shape=jax.ShapeDtypeStruct((B, S_tgt, D_MODEL), jnp.float32),
    )(src.reshape(B * S_src, 1).astype(jnp.int32),
      tgt.reshape(B * S_tgt, 1).astype(jnp.int32),
      src_mask, tgt_mask,
      params["src_emb"], params["tgt_emb"], params["pe"],
      params["enc_attn_w"], params["enc_attn_b"],
      params["enc_ffn_w1"], params["enc_ffn_w2"], params["enc_ffn_b"],
      params["enc_ln"], params["enc_norm"],
      params["dec_self_w"], params["dec_self_b"],
      params["dec_cross_w"], params["dec_cross_b"],
      params["dec_ffn_w1"], params["dec_ffn_w2"], params["dec_ffn_b"],
      params["dec_ln"], params["dec_norm"])


# ------------------------------ parameter init -------------------------------
class KeyGen:
    def __init__(self, seed=0):
        self.key = jax.random.PRNGKey(seed)
        self.i = 0

    def __call__(self):
        self.i += 1
        return jax.random.fold_in(self.key, self.i)


def _init_attn(kg):
    # packed columns [wq | wk | wv | wo] -> (D, 4D); biases (zeros) -> (1, 4D)
    ws = [jax.random.normal(kg(), (D_MODEL, D_MODEL), jnp.float32) * 0.05
          for _ in range(4)]
    return jnp.concatenate(ws, axis=1), jnp.zeros((1, 4 * D_MODEL), jnp.float32)


def _init_ffn(kg):
    w1 = jax.random.normal(kg(), (D_MODEL, D_FF), jnp.float32) * 0.05
    w2 = jax.random.normal(kg(), (D_FF, D_MODEL), jnp.float32) * 0.05
    return w1, w2, jnp.zeros((1, D_FF + D_MODEL), jnp.float32)


def _init_ln_block(n_sub):
    # n_sub LayerNorms, rows [g; b; g; b; ...] -> (2*n_sub, D)
    rows = []
    for _ in range(n_sub):
        rows.append(jnp.ones((1, D_MODEL), jnp.float32))
        rows.append(jnp.zeros((1, D_MODEL), jnp.float32))
    return jnp.concatenate(rows, axis=0)


def sinusoidal_pe(max_len, d_model):
    pos = jnp.arange(max_len, dtype=jnp.float32)[:, None]
    div = jnp.exp(
        jnp.arange(0, d_model, 2, dtype=jnp.float32) * -(math.log(10000.0) / d_model))
    pe = jnp.zeros((max_len, d_model), jnp.float32)
    pe = pe.at[:, 0::2].set(jnp.sin(pos * div))
    pe = pe.at[:, 1::2].set(jnp.cos(pos * div))
    return pe


def init_params(max_len=MAX_LEN):
    kg = KeyGen(0)
    enc_aw, enc_ab, enc_w1, enc_w2, enc_fb, enc_ln = [], [], [], [], [], []
    for _ in range(N_LAYERS):
        w, b = _init_attn(kg); enc_aw.append(w); enc_ab.append(b)
        w1, w2, fb = _init_ffn(kg); enc_w1.append(w1); enc_w2.append(w2); enc_fb.append(fb)
        enc_ln.append(_init_ln_block(2))
    dec_sw, dec_sb, dec_cw, dec_cb = [], [], [], []
    dec_w1, dec_w2, dec_fb, dec_ln = [], [], [], []
    for _ in range(N_LAYERS):
        w, b = _init_attn(kg); dec_sw.append(w); dec_sb.append(b)
        w, b = _init_attn(kg); dec_cw.append(w); dec_cb.append(b)
        w1, w2, fb = _init_ffn(kg); dec_w1.append(w1); dec_w2.append(w2); dec_fb.append(fb)
        dec_ln.append(_init_ln_block(3))
    # TODO(synk): Generator (final Linear + log_softmax) exists in the reference
    # module but is not invoked by EncoderDecoder.forward, so it is omitted.
    return {
        "src_emb": jax.random.normal(kg(), (VOCAB_SRC, D_MODEL), jnp.float32) * 0.1,
        "tgt_emb": jax.random.normal(kg(), (VOCAB_TGT, D_MODEL), jnp.float32) * 0.1,
        "pe": sinusoidal_pe(max_len, D_MODEL),
        "enc_attn_w": jnp.stack(enc_aw), "enc_attn_b": jnp.stack(enc_ab),
        "enc_ffn_w1": jnp.stack(enc_w1), "enc_ffn_w2": jnp.stack(enc_w2),
        "enc_ffn_b": jnp.stack(enc_fb), "enc_ln": jnp.stack(enc_ln),
        "enc_norm": _init_ln_block(1),
        "dec_self_w": jnp.stack(dec_sw), "dec_self_b": jnp.stack(dec_sb),
        "dec_cross_w": jnp.stack(dec_cw), "dec_cross_b": jnp.stack(dec_cb),
        "dec_ffn_w1": jnp.stack(dec_w1), "dec_ffn_w2": jnp.stack(dec_w2),
        "dec_ffn_b": jnp.stack(dec_fb), "dec_ln": jnp.stack(dec_ln),
        "dec_norm": _init_ln_block(1),
    }


# ---------------------------------- main -------------------------------------
if __name__ == "__main__":
    B, S_SRC, S_TGT = 2, 8, 8

    params = init_params(max_len=MAX_LEN)

    key = jax.random.PRNGKey(0)
    k1, k2 = jax.random.split(key)
    src = jax.random.randint(k1, (B, S_SRC), 1, VOCAB_SRC)
    tgt = jax.random.randint(k2, (B, S_TGT), 1, VOCAB_TGT)

    # src_mask: (B, 1, S_src) all-ones (no padding), like Variable(torch.ones(1,1,10))
    src_mask = jnp.ones((B, 1, S_SRC), jnp.float32)
    # tgt_mask: (B, S_tgt, S_tgt) causal (subsequent) mask
    tgt_mask = jnp.broadcast_to(
        jnp.tril(jnp.ones((S_TGT, S_TGT), jnp.float32))[None, :, :], (B, S_TGT, S_TGT))

    out = encoder_decoder_forward(params, src, tgt, src_mask, tgt_mask)
    jax.block_until_ready(out)
    assert out.shape == (B, S_TGT, D_MODEL)
    print("KERNEL_OK")
</pallas_src>

<mosaic_0001>
module attributes {stable_mosaic.version = 11 : i64} {
  func.func @_encdec_kernel(%arg0: memref<16x1xi32, #tpu.memory_space<vmem>>, %arg1: memref<16x1xi32, #tpu.memory_space<vmem>>, %arg2: memref<2x1x8xf32, #tpu.memory_space<vmem>>, %arg3: memref<2x8x8xf32, #tpu.memory_space<vmem>>, %arg4: memref<16x32xf32, #tpu.memory_space<vmem>>, %arg5: memref<16x32xf32, #tpu.memory_space<vmem>>, %arg6: memref<64x32xf32, #tpu.memory_space<vmem>>, %arg7: memref<2x32x128xf32, #tpu.memory_space<vmem>>, %arg8: memref<2x1x128xf32, #tpu.memory_space<vmem>>, %arg9: memref<2x32x64xf32, #tpu.memory_space<vmem>>, %arg10: memref<2x64x32xf32, #tpu.memory_space<vmem>>, %arg11: memref<2x1x96xf32, #tpu.memory_space<vmem>>, %arg12: memref<2x4x32xf32, #tpu.memory_space<vmem>>, %arg13: memref<2x32xf32, #tpu.memory_space<vmem>>, %arg14: memref<2x32x128xf32, #tpu.memory_space<vmem>>, %arg15: memref<2x1x128xf32, #tpu.memory_space<vmem>>, %arg16: memref<2x32x128xf32, #tpu.memory_space<vmem>>, %arg17: memref<2x1x128xf32, #tpu.memory_space<vmem>>, %arg18: memref<2x32x64xf32, #tpu.memory_space<vmem>>, %arg19: memref<2x64x32xf32, #tpu.memory_space<vmem>>, %arg20: memref<2x1x96xf32, #tpu.memory_space<vmem>>, %arg21: memref<2x6x32xf32, #tpu.memory_space<vmem>>, %arg22: memref<2x32xf32, #tpu.memory_space<vmem>>, %arg23: memref<2x8x32xf32, #tpu.memory_space<vmem>>) attributes {dimension_semantics = [], scalar_prefetch = 0 : i64, scratch_operands = 0 : i64, tpu.core_type = #tpu.core_type<tc>} {
    %c0 = arith.constant 0 : index
    %c0_0 = arith.constant 0 : index
    %c0_1 = arith.constant 0 : index
    %0 = vector.load %arg2[%c0, %c0_0, %c0_1] : memref<2x1x8xf32, #tpu.memory_space<vmem>>, vector<2x1x8xf32>
    %c0_2 = arith.constant 0 : index
    %c0_3 = arith.constant 0 : index
    %c0_4 = arith.constant 0 : index
    %1 = vector.load %arg3[%c0_2, %c0_3, %c0_4] : memref<2x8x8xf32, #tpu.memory_space<vmem>>, vector<2x8x8xf32>
    %cst = arith.constant 0.000000e+00 : f32
    %2 = vector.broadcast %cst : f32 to vector<2x1x8xf32>
    %3 = arith.cmpf oeq, %0, %2 : vector<2x1x8xf32>
    %cst_5 = arith.constant -1.000000e+09 : f32
    %cst_6 = arith.constant 0.000000e+00 : f32
    %4 = vector.broadcast %cst_5 : f32 to vector<2x1x8xf32>
    %5 = vector.broadcast %cst_6 : f32 to vector<2x1x8xf32>
    %6 = arith.select %3, %4, %5 : vector<2x1x8xi1>, vector<2x1x8xf32>
    %7 = vector.shape_cast %6 : vector<2x1x8xf32> to vector<2x1x8xf32>
    %8 = vector.broadcast %7 : vector<2x1x8xf32> to vector<2x8x8xf32>
    %9 = vector.shape_cast %6 : vector<2x1x8xf32> to vector<2x1x8xf32>
    %10 = vector.broadcast %9 : vector<2x1x8xf32> to vector<2x8x8xf32>
    %cst_7 = arith.constant 0.000000e+00 : f32
    %11 = vector.broadcast %cst_7 : f32 to vector<2x8x8xf32>
    %12 = arith.cmpf oeq, %1, %11 : vector<2x8x8xf32>
    %cst_8 = arith.constant -1.000000e+09 : f32
    %cst_9 = arith.constant 0.000000e+00 : f32
    %13 = vector.broadcast %cst_8 : f32 to vector<2x8x8xf32>
    %14 = vector.broadcast %cst_9 : f32 to vector<2x8x8xf32>
    %15 = arith.select %12, %13, %14 : vector<2x8x8xi1>, vector<2x8x8xf32>
    %c0_10 = arith.constant 0 : index
    %c0_11 = arith.constant 0 : index
    %16 = vector.load %arg0[%c0_10, %c0_11] : memref<16x1xi32, #tpu.memory_space<vmem>>, vector<16x1xi32>
    %c0_12 = arith.constant 0 : index
    %c0_13 = arith.constant 0 : index
    %17 = vector.load %arg4[%c0_12, %c0_13] : memref<16x32xf32, #tpu.memory_space<vmem>>, vector<16x32xf32>
    %18 = tpu.iota {dimensions = array<i32: 1>} : vector<16x16xi32>
    %19 = vector.broadcast %16 : vector<16x1xi32> to vector<16x16xi32>
    %20 = arith.cmpi eq, %19, %18 : vector<16x16xi32>
    %21 = arith.extui %20 : vector<16x16xi1> to vector<16x16xi32>
    %22 = arith.sitofp %21 : vector<16x16xi32> to vector<16x16xf32>
    %cst_14 = arith.constant dense<0.000000e+00> : vector<16x32xf32>
    %23 = tpu.matmul %22, %17, %cst_14 {dimension_numbers = #tpu.dot_dimension_numbers<[1], [0], [0], [1], [0, 0, 1, 1], [], []>} : vector<16x16xf32>, vector<16x32xf32>, vector<16x32xf32> -> vector<16x32xf32>
    %cst_15 = arith.constant 5.65685415 : f32
    %24 = vector.broadcast %cst_15 : f32 to vector<16x32xf32>
    %25 = arith.mulf %23, %24 : vector<16x32xf32>
    %26 = vector.shape_cast %25 : vector<16x32xf32> to vector<2x8x32xf32>
    %c0_16 = arith.constant 0 : index
    %c0_17 = arith.constant 0 : index
    %27 = vector.load %arg6[%c0_16, %c0_17] : memref<64x32xf32, #tpu.memory_space<vmem>>, vector<8x32xf32>
    %28 = vector.shape_cast %27 : vector<8x32xf32> to vector<1x8x32xf32>
    %29 = vector.broadcast %28 : vector<1x8x32xf32> to vector<2x8x32xf32>
    %30 = arith.addf %26, %29 : vector<2x8x32xf32>
    %31 = vector.shape_cast %30 : vector<2x8x32xf32> to vector<16x32xf32>
    %c0_18 = arith.constant 0 : index
    %c0_19 = arith.constant 0 : index
    %c0_20 = arith.constant 0 : index
    %32 = vector.load %arg12[%c0_18, %c0_19, %c0_20] : memref<2x4x32xf32, #tpu.memory_space<vmem>>, vector<1x4x32xf32>
    %33 = vector.shape_cast %32 : vector<1x4x32xf32> to vector<4x32xf32>
    %c0_21 = arith.constant 0 : index
    %c0_22 = arith.constant 0 : index
    %c0_23 = arith.constant 0 : index
    %34 = vector.load %arg7[%c0_21, %c0_22, %c0_23] : memref<2x32x128xf32, #tpu.memory_space<vmem>>, vector<1x32x128xf32>
    %35 = vector.shape_cast %34 : vector<1x32x128xf32> to vector<32x128xf32>
    %c0_24 = arith.constant 0 : index
    %c0_25 = arith.constant 0 : index
    %c0_26 = arith.constant 0 : index
    %36 = vector.load %arg8[%c0_24, %c0_25, %c0_26] : memref<2x1x128xf32, #tpu.memory_space<vmem>>, vector<1x1x128xf32>
    %37 = vector.shape_cast %36 : vector<1x1x128xf32> to vector<1x128xf32>
    %38 = vector.extract_strided_slice %33 {offsets = [0, 0], sizes = [1, 32], strides = [1, 1]} : vector<4x32xf32> to vector<1x32xf32>
    %39 = vector.extract_strided_slice %33 {offsets = [1, 0], sizes = [1, 32], strides = [1, 1]} : vector<4x32xf32> to vector<1x32xf32>
    %cst_27 = arith.constant dense<0.000000e+00> : vector<16xf32>
    %40 = vector.multi_reduction <add>, %31, %cst_27 [1] : vector<16x32xf32> to vector<16xf32>
    %41 = vector.shape_cast %40 : vector<16xf32> to vector<16x1xf32>
    %cst_28 = arith.constant 3.200000e+01 : f32
    %42 = vector.broadcast %cst_28 : f32 to vector<16x1xf32>
    %43 = arith.divf %41, %42 : vector<16x1xf32>
    %44 = vector.broadcast %43 : vector<16x1xf32> to vector<16x32xf32>
    %45 = arith.subf %31, %44 : vector<16x32xf32>
    %46 = arith.mulf %45, %45 : vector<16x32xf32>
    %cst_29 = arith.constant dense<0.000000e+00> : vector<16xf32>
    %47 = vector.multi_reduction <add>, %46, %cst_29 [1] : vector<16x32xf32> to vector<16xf32>
    %48 = vector.shape_cast %47 : vector<16xf32> to vector<16x1xf32>
    %cst_30 = arith.constant 0.0322580636 : f32
    %49 = vector.broadcast %cst_30 : f32 to vector<16x1xf32>
    %50 = arith.mulf %48, %49 : vector<16x1xf32>
    %51 = vector.broadcast %43 : vector<16x1xf32> to vector<16x32xf32>
    %52 = arith.subf %31, %51 : vector<16x32xf32>
    %53 = vector.broadcast %38 : vector<1x32xf32> to vector<16x32xf32>
    %54 = arith.mulf %53, %52 : vector<16x32xf32>
    %55 = math.sqrt %50 : vector<16x1xf32>
    %cst_31 = arith.constant 9.99999997E-7 : f32
    %56 = vector.broadcast %cst_31 : f32 to vector<16x1xf32>
    %57 = arith.addf %55, %56 : vector<16x1xf32>
    %58 = vector.broadcast %57 : vector<16x1xf32> to vector<16x32xf32>
    %59 = arith.divf %54, %58 : vector<16x32xf32>
    %60 = vector.broadcast %39 : vector<1x32xf32> to vector<16x32xf32>
    %61 = arith.addf %59, %60 : vector<16x32xf32>
    %cst_32 = arith.constant dense<0.000000e+00> : vector<16x128xf32>
    %62 = tpu.matmul %61, %35, %cst_32 {dimension_numbers = #tpu.dot_dimension_numbers<[1], [0], [0], [1], [0, 0, 1, 1], [], []>} : vector<16x32xf32>, vector<32x128xf32>, vector<16x128xf32> -> vector<16x128xf32>
    %63 = vector.broadcast %37 : vector<1x128xf32> to vector<16x128xf32>
    %64 = arith.addf %62, %63 : vector<16x128xf32>
    %65 = vector.extract_strided_slice %64 {offsets = [0, 0], sizes = [16, 32], strides = [1, 1]} : vector<16x128xf32> to vector<16x32xf32>
    %66 = vector.extract_strided_slice %64 {offsets = [0, 32], sizes = [16, 64], strides = [1, 1]} : vector<16x128xf32> to vector<16x64xf32>
    %67 = vector.extract_strided_slice %35 {offsets = [0, 96], sizes = [32, 32], strides = [1, 1]} : vector<32x128xf32> to vector<32x32xf32>
    %68 = vector.extract_strided_slice %37 {offsets = [0, 96], sizes = [1, 32], strides = [1, 1]} : vector<1x128xf32> to vector<1x32xf32>
    %69 = vector.shape_cast %65 : vector<16x32xf32> to vector<2x8x32xf32>
    %70 = vector.extract_strided_slice %66 {offsets = [0, 0], sizes = [16, 32], strides = [1, 1]} : vector<16x64xf32> to vector<16x32xf32>
    %71 = vector.shape_cast %70 : vector<16x32xf32> to vector<2x8x32xf32>
    %72 = vector.extract_strided_slice %66 {offsets = [0, 32], sizes = [16, 32], strides = [1, 1]} : vector<16x64xf32> to vector<16x32xf32>
    %73 = vector.shape_cast %72 : vector<16x32xf32> to vector<2x8x32xf32>
    %cst_33 = arith.constant 0.000000e+00 : f32
    %74 = vector.broadcast %cst_33 : f32 to vector<16x32xf32>
    %75 = vector.extract_strided_slice %69 {offsets = [0, 0, 0], sizes = [2, 8, 8], strides = [1, 1, 1]} : vector<2x8x32xf32> to vector<2x8x8xf32>
    %76 = vector.extract_strided_slice %71 {offsets = [0, 0, 0], sizes = [2, 8, 8], strides = [1, 1, 1]} : vector<2x8x32xf32> to vector<2x8x8xf32>
    "tpu.trace_start"() <{level = 10 : i32, message = "bqd,bkd->bqk"}> : () -> ()
    %cst_34 = arith.constant dense<0.000000e+00> : vector<2x8x8xf32>
    %77 = tpu.matmul %75, %76, %cst_34 {dimension_numbers = #tpu.dot_dimension_numbers<[2], [2], [1], [1], [0, 0, 0, 1, 1, 1], [0], [0]>} : vector<2x8x8xf32>, vector<2x8x8xf32>, vector<2x8x8xf32> -> vector<2x8x8xf32>
    "tpu.trace_stop"() : () -> ()
    %cst_35 = arith.constant 0.353553385 : f32
    %78 = vector.broadcast %cst_35 : f32 to vector<2x8x8xf32>
    %79 = arith.mulf %77, %78 : vector<2x8x8xf32>
    %80 = arith.addf %79, %8 : vector<2x8x8xf32>
    %cst_36 = arith.constant dense<0xFF800000> : vector<2x8xf32>
    %81 = vector.multi_reduction <maximumf>, %80, %cst_36 [2] : vector<2x8x8xf32> to vector<2x8xf32>
    %82 = vector.shape_cast %81 : vector<2x8xf32> to vector<2x8x1xf32>
    %83 = vector.broadcast %82 : vector<2x8x1xf32> to vector<2x8x8xf32>
    %84 = arith.subf %80, %83 : vector<2x8x8xf32>
    %85 = math.exp %84 : vector<2x8x8xf32>
    %cst_37 = arith.constant dense<0.000000e+00> : vector<2x8xf32>
    %86 = vector.multi_reduction <add>, %85, %cst_37 [2] : vector<2x8x8xf32> to vector<2x8xf32>
    %87 = vector.shape_cast %86 : vector<2x8xf32> to vector<2x8x1xf32>
    %88 = tpu.reciprocal %87 {approx = true} : vector<2x8x1xf32> -> vector<2x8x1xf32>
    %89 = vector.broadcast %88 : vector<2x8x1xf32> to vector<2x8x8xf32>
    %90 = arith.mulf %85, %89 : vector<2x8x8xf32>
    %91 = vector.extract_strided_slice %73 {offsets = [0, 0, 0], sizes = [2, 8, 8], strides = [1, 1, 1]} : vector<2x8x32xf32> to vector<2x8x8xf32>
    "tpu.trace_start"() <{level = 10 : i32, message = "bqk,bkd->bqd"}> : () -> ()
    %cst_38 = arith.constant dense<0.000000e+00> : vector<2x8x8xf32>
    %92 = tpu.matmul %90, %91, %cst_38 {dimension_numbers = #tpu.dot_dimension_numbers<[2], [1], [1], [2], [0, 0, 0, 1, 1, 2], [0], [0]>} : vector<2x8x8xf32>, vector<2x8x8xf32>, vector<2x8x8xf32> -> vector<2x8x8xf32>
    "tpu.trace_stop"() : () -> ()
    %93 = vector.shape_cast %92 : vector<2x8x8xf32> to vector<16x8xf32>
    %94 = vector.extract_strided_slice %67 {offsets = [0, 0], sizes = [8, 32], strides = [1, 1]} : vector<32x32xf32> to vector<8x32xf32>
    %cst_39 = arith.constant dense<0.000000e+00> : vector<16x32xf32>
    %95 = tpu.matmul %93, %94, %cst_39 {dimension_numbers = #tpu.dot_dimension_numbers<[1], [0], [0], [1], [0, 0, 1, 1], [], []>} : vector<16x8xf32>, vector<8x32xf32>, vector<16x32xf32> -> vector<16x32xf32>
    %96 = arith.addf %74, %95 : vector<16x32xf32>
    %97 = vector.extract_strided_slice %69 {offsets = [0, 0, 8], sizes = [2, 8, 8], strides = [1, 1, 1]} : vector<2x8x32xf32> to vector<2x8x8xf32>
    %98 = vector.extract_strided_slice %71 {offsets = [0, 0, 8], sizes = [2, 8, 8], strides = [1, 1, 1]} : vector<2x8x32xf32> to vector<2x8x8xf32>
    "tpu.trace_start"() <{level = 10 : i32, message = "bqd,bkd->bqk"}> : () -> ()
    %cst_40 = arith.constant dense<0.000000e+00> : vector<2x8x8xf32>
    %99 = tpu.matmul %97, %98, %cst_40 {dimension_numbers = #tpu.dot_dimension_numbers<[2], [2], [1], [1], [0, 0, 0, 1, 1, 1], [0], [0]>} : vector<2x8x8xf32>, vector<2x8x8xf32>, vector<2x8x8xf32> -> vector<2x8x8xf32>
    "tpu.trace_stop"() : () -> ()
    %cst_41 = arith.constant 0.353553385 : f32
    %100 = vector.broadcast %cst_41 : f32 to vector<2x8x8xf32>
    %101 = arith.mulf %99, %100 : vector<2x8x8xf32>
    %102 = arith.addf %101, %8 : vector<2x8x8xf32>
    %cst_42 = arith.constant dense<0xFF800000> : vector<2x8xf32>
    %103 = vector.multi_reduction <maximumf>, %102, %cst_42 [2] : vector<2x8x8xf32> to vector<2x8xf32>
    %104 = vector.shape_cast %103 : vector<2x8xf32> to vector<2x8x1xf32>
    %105 = vector.broadcast %104 : vector<2x8x1xf32> to vector<2x8x8xf32>
    %106 = arith.subf %102, %105 : vector<2x8x8xf32>
    %107 = math.exp %106 : vector<2x8x8xf32>
    %cst_43 = arith.constant dense<0.000000e+00> : vector<2x8xf32>
    %108 = vector.multi_reduction <add>, %107, %cst_43 [2] : vector<2x8x8xf32> to vector<2x8xf32>
    %109 = vector.shape_cast %108 : vector<2x8xf32> to vector<2x8x1xf32>
    %110 = tpu.reciprocal %109 {approx = true} : vector<2x8x1xf32> -> vector<2x8x1xf32>
    %111 = vector.broadcast %110 : vector<2x8x1xf32> to vector<2x8x8xf32>
    %112 = arith.mulf %107, %111 : vector<2x8x8xf32>
    %113 = vector.extract_strided_slice %73 {offsets = [0, 0, 8], sizes = [2, 8, 8], strides = [1, 1, 1]} : vector<2x8x32xf32> to vector<2x8x8xf32>
    "tpu.trace_start"() <{level = 10 : i32, message = "bqk,bkd->bqd"}> : () -> ()
    %cst_44 = arith.constant dense<0.000000e+00> : vector<2x8x8xf32>
    %114 = tpu.matmul %112, %113, %cst_44 {dimension_numbers = #tpu.dot_dimension_numbers<[2], [1], [1], [2], [0, 0, 0, 1, 1, 2], [0], [0]>} : vector<2x8x8xf32>, vector<2x8x8xf32>, vector<2x8x8xf32> -> vector<2x8x8xf32>
    "tpu.trace_stop"() : () -> ()
    %115 = vector.shape_cast %114 : vector<2x8x8xf32> to vector<16x8xf32>
    %116 = vector.extract_strided_slice %67 {offsets = [8, 0], sizes = [8, 32], strides = [1, 1]} : vector<32x32xf32> to vector<8x32xf32>
    %cst_45 = arith.constant dense<0.000000e+00> : vector<16x32xf32>
    %117 = tpu.matmul %115, %116, %cst_45 {dimension_numbers = #tpu.dot_dimension_numbers<[1], [0], [0], [1], [0, 0, 1, 1], [], []>} : vector<16x8xf32>, vector<8x32xf32>, vector<16x32xf32> -> vector<16x32xf32>
    %118 = arith.addf %96, %117 : vector<16x32xf32>
    %119 = vector.extract_strided_slice %69 {offsets = [0, 0, 16], sizes = [2, 8, 8], strides = [1, 1, 1]} : vector<2x8x32xf32> to vector<2x8x8xf32>
    %120 = vector.extract_strided_slice %71 {offsets = [0, 0, 16], sizes = [2, 8, 8], strides = [1, 1, 1]} : vector<2x8x32xf32> to vector<2x8x8xf32>
    "tpu.trace_start"() <{level = 10 : i32, message = "bqd,bkd->bqk"}> : () -> ()
    %cst_46 = arith.constant dense<0.000000e+00> : vector<2x8x8xf32>
    %121 = tpu.matmul %119, %120, %cst_46 {dimension_numbers = #tpu.dot_dimension_numbers<[2], [2], [1], [1], [0, 0, 0, 1, 1, 1], [0], [0]>} : vector<2x8x8xf32>, vector<2x8x8xf32>, vector<2x8x8xf32> -> vector<2x8x8xf32>
    "tpu.trace_stop"() : () -> ()
    %cst_47 = arith.constant 0.353553385 : f32
    %122 = vector.broadcast %cst_47 : f32 to vector<2x8x8xf32>
    %123 = arith.mulf %121, %122 : vector<2x8x8xf32>
    %124 = arith.addf %123, %8 : vector<2x8x8xf32>
    %cst_48 = arith.constant dense<0xFF800000> : vector<2x8xf32>
    %125 = vector.multi_reduction <maximumf>, %124, %cst_48 [2] : vector<2x8x8xf32> to vector<2x8xf32>
    %126 = vector.shape_cast %125 : vector<2x8xf32> to vector<2x8x1xf32>
    %127 = vector.broadcast %126 : vector<2x8x1xf32> to vector<2x8x8xf32>
    %128 = arith.subf %124, %127 : vector<2x8x8xf32>
    %129 = math.exp %128 : vector<2x8x8xf32>
    %cst_49 = arith.constant dense<0.000000e+00> : vector<2x8xf32>
    %130 = vector.multi_reduction <add>, %129, %cst_49 [2] : vector<2x8x8xf32> to vector<2x8xf32>
    %131 = vector.shape_cast %130 : vector<2x8xf32> to vector<2x8x1xf32>
    %132 = tpu.reciprocal %131 {approx = true} : vector<2x8x1xf32> -> vector<2x8x1xf32>
    %133 = vector.broadcast %132 : vector<2x8x1xf32> to vector<2x8x8xf32>
    %134 = arith.mulf %129, %133 : vector<2x8x8xf32>
    %135 = vector.extract_strided_slice %73 {offsets = [0, 0, 16], sizes = [2, 8, 8], strides = [1, 1, 1]} : vector<2x8x32xf32> to vector<2x8x8xf32>
    "tpu.trace_start"() <{level = 10 : i32, message = "bqk,bkd->bqd"}> : () -> ()
    %cst_50 = arith.constant dense<0.000000e+00> : vector<2x8x8xf32>
    %136 = tpu.matmul %134, %135, %cst_50 {dimension_numbers = #tpu.dot_dimension_numbers<[2], [1], [1], [2], [0, 0, 0, 1, 1, 2], [0], [0]>} : vector<2x8x8xf32>, vector<2x8x8xf32>, vector<2x8x8xf32> -> vector<2x8x8xf32>
    "tpu.trace_stop"() : () -> ()
    %137 = vector.shape_cast %136 : vector<2x8x8xf32> to vector<16x8xf32>
    %138 = vector.extract_strided_slice %67 {offsets = [16, 0], sizes = [8, 32], strides = [1, 1]} : vector<32x32xf32> to vector<8x32xf32>
    %cst_51 = arith.constant dense<0.000000e+00> : vector<16x32xf32>
    %139 = tpu.matmul %137, %138, %cst_51 {dimension_numbers = #tpu.dot_dimension_numbers<[1], [0], [0], [1], [0, 0, 1, 1], [], []>} : vector<16x8xf32>, vector<8x32xf32>, vector<16x32xf32> -> vector<16x32xf32>
    %140 = arith.addf %118, %139 : vector<16x32xf32>
    %141 = vector.extract_strided_slice %69 {offsets = [0, 0, 24], sizes = [2, 8, 8], strides = [1, 1, 1]} : vector<2x8x32xf32> to vector<2x8x8xf32>
    %142 = vector.extract_strided_slice %71 {offsets = [0, 0, 24], sizes = [2, 8, 8], strides = [1, 1, 1]} : vector<2x8x32xf32> to vector<2x8x8xf32>
    "tpu.trace_start"() <{level = 10 : i32, message = "bqd,bkd->bqk"}> : () -> ()
    %cst_52 = arith.constant dense<0.000000e+00> : vector<2x8x8xf32>
    %143 = tpu.matmul %141, %142, %cst_52 {dimension_numbers = #tpu.dot_dimension_numbers<[2], [2], [1], [1], [0, 0, 0, 1, 1, 1], [0], [0]>} : vector<2x8x8xf32>, vector<2x8x8xf32>, vector<2x8x8xf32> -> vector<2x8x8xf32>
    "tpu.trace_stop"() : () -> ()
    %cst_53 = arith.constant 0.353553385 : f32
    %144 = vector.broadcast %cst_53 : f32 to vector<2x8x8xf32>
    %145 = arith.mulf %143, %144 : vector<2x8x8xf32>
    %146 = arith.addf %145, %8 : vector<2x8x8xf32>
    %cst_54 = arith.constant dense<0xFF800000> : vector<2x8xf32>
    %147 = vector.multi_reduction <maximumf>, %146, %cst_54 [2] : vector<2x8x8xf32> to vector<2x8xf32>
    %148 = vector.shape_cast %147 : vector<2x8xf32> to vector<2x8x1xf32>
    %149 = vector.broadcast %148 : vector<2x8x1xf32> to vector<2x8x8xf32>
    %150 = arith.subf %146, %149 : vector<2x8x8xf32>
    %151 = math.exp %150 : vector<2x8x8xf32>
    %cst_55 = arith.constant dense<0.000000e+00> : vector<2x8xf32>
    %152 = vector.multi_reduction <add>, %151, %cst_55 [2] : vector<2x8x8xf32> to vector<2x8xf32>
    %153 = vector.shape_cast %152 : vector<2x8xf32> to vector<2x8x1xf32>
    %154 = tpu.reciprocal %153 {approx = true} : vector<2x8x1xf32> -> vector<2x8x1xf32>
    %155 = vector.broadcast %154 : vector<2x8x1xf32> to vector<2x8x8xf32>
    %156 = arith.mulf %151, %155 : vector<2x8x8xf32>
    %157 = vector.extract_strided_slice %73 {offsets = [0, 0, 24], sizes = [2, 8, 8], strides = [1, 1, 1]} : vector<2x8x32xf32> to vector<2x8x8xf32>
    "tpu.trace_start"() <{level = 10 : i32, message = "bqk,bkd->bqd"}> : () -> ()
    %cst_56 = arith.constant dense<0.000000e+00> : vector<2x8x8xf32>
    %158 = tpu.matmul %156, %157, %cst_56 {dimension_numbers = #tpu.dot_dimension_numbers<[2], [1], [1], [2], [0, 0, 0, 1, 1, 2], [0], [0]>} : vector<2x8x8xf32>, vector<2x8x8xf32>, vector<2x8x8xf32> -> vector<2x8x8xf32>
    "tpu.trace_stop"() : () -> ()
    %159 = vector.shape_cast %158 : vector<2x8x8xf32> to vector<16x8xf32>
    %160 = vector.extract_strided_slice %67 {offsets = [24, 0], sizes = [8, 32], strides = [1, 1]} : vector<32x32xf32> to vector<8x32xf32>
    %cst_57 = arith.constant dense<0.000000e+00> : vector<16x32xf32>
    %161 = tpu.matmul %159, %160, %cst_57 {dimension_numbers = #tpu.dot_dimension_numbers<[1], [0], [0], [1], [0, 0, 1, 1], [], []>} : vector<16x8xf32>, vector<8x32xf32>, vector<16x32xf32> -> vector<16x32xf32>
    %162 = arith.addf %140, %161 : vector<16x32xf32>
    %163 = vector.broadcast %68 : vector<1x32xf32> to vector<16x32xf32>
    %164 = arith.addf %162, %163 : vector<16x32xf32>
    %165 = arith.addf %31, %164 : vector<16x32xf32>
    %166 = vector.extract_strided_slice %33 {offsets = [2, 0], sizes = [1, 32], strides = [1, 1]} : vector<4x32xf32> to vector<1x32xf32>
    %167 = vector.extract_strided_slice %33 {offsets = [3, 0], sizes = [1, 32], strides = [1, 1]} : vector<4x32xf32> to vector<1x32xf32>
    %cst_58 = arith.constant dense<0.000000e+00> : vector<16xf32>
    %168 = vector.multi_reduction <add>, %165, %cst_58 [1] : vector<16x32xf32> to vector<16xf32>
    %169 = vector.shape_cast %168 : vector<16xf32> to vector<16x1xf32>
    %cst_59 = arith.constant 3.200000e+01 : f32
    %170 = vector.broadcast %cst_59 : f32 to vector<16x1xf32>
    %171 = arith.divf %169, %170 : vector<16x1xf32>
    %172 = vector.broadcast %171 : vector<16x1xf32> to vector<16x32xf32>
    %173 = arith.subf %165, %172 : vector<16x32xf32>
    %174 = arith.mulf %173, %173 : vector<16x32xf32>
    %cst_60 = arith.constant dense<0.000000e+00> : vector<16xf32>
    %175 = vector.multi_reduction <add>, %174, %cst_60 [1] : vector<16x32xf32> to vector<16xf32>
    %176 = vector.shape_cast %175 : vector<16xf32> to vector<16x1xf32>
    %cst_61 = arith.constant 0.0322580636 : f32
    %177 = vector.broadcast %cst_61 : f32 to vector<16x1xf32>
    %178 = arith.mulf %176, %177 : vector<16x1xf32>
    %179 = vector.broadcast %171 : vector<16x1xf32> to vector<16x32xf32>
    %180 = arith.subf %165, %179 : vector<16x32xf32>
    %181 = vector.broadcast %166 : vector<1x32xf32> to vector<16x32xf32>
    %182 = arith.mulf %181, %180 : vector<16x32xf32>
    %183 = math.sqrt %178 : vector<16x1xf32>
    %cst_62 = arith.constant 9.99999997E-7 : f32
    %184 = vector.broadcast %cst_62 : f32 to vector<16x1xf32>
    %185 = arith.addf %183, %184 : vector<16x1xf32>
    %186 = vector.broadcast %185 : vector<16x1xf32> to vector<16x32xf32>
    %187 = arith.divf %182, %186 : vector<16x32xf32>
    %188 = vector.broadcast %167 : vector<1x32xf32> to vector<16x32xf32>
    %189 = arith.addf %187, %188 : vector<16x32xf32>
    %c0_63 = arith.constant 0 : index
    %c0_64 = arith.constant 0 : index
    %c0_65 = arith.constant 0 : index
    %190 = vector.load %arg11[%c0_63, %c0_64, %c0_65] : memref<2x1x96xf32, #tpu.memory_space<vmem>>, vector<1x1x96xf32>
    %191 = vector.shape_cast %190 : vector<1x1x96xf32> to vector<1x96xf32>
    %c0_66 = arith.constant 0 : index
    %c0_67 = arith.constant 0 : index
    %c0_68 = arith.constant 0 : index
    %192 = vector.load %arg9[%c0_66, %c0_67, %c0_68] : memref<2x32x64xf32, #tpu.memory_space<vmem>>, vector<1x32x64xf32>
    %193 = vector.shape_cast %192 : vector<1x32x64xf32> to vector<32x64xf32>
    %cst_69 = arith.constant dense<0.000000e+00> : vector<16x64xf32>
    %194 = tpu.matmul %189, %193, %cst_69 {dimension_numbers = #tpu.dot_dimension_numbers<[1], [0], [0], [1], [0, 0, 1, 1], [], []>} : vector<16x32xf32>, vector<32x64xf32>, vector<16x64xf32> -> vector<16x64xf32>
    %195 = vector.extract_strided_slice %191 {offsets = [0, 0], sizes = [1, 64], strides = [1, 1]} : vector<1x96xf32> to vector<1x64xf32>
    %196 = vector.broadcast %195 : vector<1x64xf32> to vector<16x64xf32>
    %197 = arith.addf %194, %196 : vector<16x64xf32>
    %cst_70 = arith.constant 0.000000e+00 : f32
    %198 = vector.broadcast %cst_70 : f32 to vector<16x64xf32>
    %199 = arith.maximumf %197, %198 : vector<16x64xf32>
    %c0_71 = arith.constant 0 : index
    %c0_72 = arith.constant 0 : index
    %c0_73 = arith.constant 0 : index
    %200 = vector.load %arg10[%c0_71, %c0_72, %c0_73] : memref<2x64x32xf32, #tpu.memory_space<vmem>>, vector<1x64x32xf32>
    %201 = vector.shape_cast %200 : vector<1x64x32xf32> to vector<64x32xf32>
    %cst_74 = arith.constant dense<0.000000e+00> : vector<16x32xf32>
    %202 = tpu.matmul %199, %201, %cst_74 {dimension_numbers = #tpu.dot_dimension_numbers<[1], [0], [0], [1], [0, 0, 1, 1], [], []>} : vector<16x64xf32>, vector<64x32xf32>, vector<16x32xf32> -> vector<16x32xf32>
    %203 = arith.addf %165, %202 : vector<16x32xf32>
    %204 = vector.extract_strided_slice %191 {offsets = [0, 64], sizes = [1, 32], strides = [1, 1]} : vector<1x96xf32> to vector<1x32xf32>
    %205 = vector.broadcast %204 : vector<1x32xf32> to vector<16x32xf32>
    %206 = arith.addf %203, %205 : vector<16x32xf32>
    %c1 = arith.constant 1 : index
    %c0_75 = arith.constant 0 : index
    %c0_76 = arith.constant 0 : index
    %207 = vector.load %arg12[%c1, %c0_75, %c0_76] : memref<2x4x32xf32, #tpu.memory_space<vmem>>, vector<1x4x32xf32>
    %208 = vector.shape_cast %207 : vector<1x4x32xf32> to vector<4x32xf32>
    %c1_77 = arith.constant 1 : index
    %c0_78 = arith.constant 0 : index
    %c0_79 = arith.constant 0 : index
    %209 = vector.load %arg7[%c1_77, %c0_78, %c0_79] : memref<2x32x128xf32, #tpu.memory_space<vmem>>, vector<1x32x128xf32>
    %210 = vector.shape_cast %209 : vector<1x32x128xf32> to vector<32x128xf32>
    %c1_80 = arith.constant 1 : index
    %c0_81 = arith.constant 0 : index
    %c0_82 = arith.constant 0 : index
    %211 = vector.load %arg8[%c1_80, %c0_81, %c0_82] : memref<2x1x128xf32, #tpu.memory_space<vmem>>, vector<1x1x128xf32>
    %212 = vector.shape_cast %211 : vector<1x1x128xf32> to vector<1x128xf32>
    %213 = vector.extract_strided_slice %208 {offsets = [0, 0], sizes = [1, 32], strides = [1, 1]} : vector<4x32xf32> to vector<1x32xf32>
    %214 = vector.extract_strided_slice %208 {offsets = [1, 0], sizes = [1, 32], strides = [1, 1]} : vector<4x32xf32> to vector<1x32xf32>
    %cst_83 = arith.constant dense<0.000000e+00> : vector<16xf32>
    %215 = vector.multi_reduction <add>, %206, %cst_83 [1] : vector<16x32xf32> to vector<16xf32>
    %216 = vector.shape_cast %215 : vector<16xf32> to vector<16x1xf32>
    %cst_84 = arith.constant 3.200000e+01 : f32
    %217 = vector.broadcast %cst_84 : f32 to vector<16x1xf32>
    %218 = arith.divf %216, %217 : vector<16x1xf32>
    %219 = vector.broadcast %218 : vector<16x1xf32> to vector<16x32xf32>
    %220 = arith.subf %206, %219 : vector<16x32xf32>
    %221 = arith.mulf %220, %220 : vector<16x32xf32>
    %cst_85 = arith.constant dense<0.000000e+00> : vector<16xf32>
    %222 = vector.multi_reduction <add>, %221, %cst_85 [1] : vector<16x32xf32> to vector<16xf32>
    %223 = vector.shape_cast %222 : vector<16xf32> to vector<16x1xf32>
    %cst_86 = arith.constant 0.0322580636 : f32
    %224 = vector.broadcast %cst_86 : f32 to vector<16x1xf32>
    %225 = arith.mulf %223, %224 : vector<16x1xf32>
    %226 = vector.broadcast %218 : vector<16x1xf32> to vector<16x32xf32>
    %227 = arith.subf %206, %226 : vector<16x32xf32>
    %228 = vector.broadcast %213 : vector<1x32xf32> to vector<16x32xf32>
    %229 = arith.mulf %228, %227 : vector<16x32xf32>
    %230 = math.sqrt %225 : vector<16x1xf32>
    %cst_87 = arith.constant 9.99999997E-7 : f32
    %231 = vector.broadcast %cst_87 : f32 to vector<16x1xf32>
    %232 = arith.addf %230, %231 : vector<16x1xf32>
    %233 = vector.broadcast %232 : vector<16x1xf32> to vector<16x32xf32>
    %234 = arith.divf %229, %233 : vector<16x32xf32>
    %235 = vector.broadcast %214 : vector<1x32xf32> to vector<16x32xf32>
    %236 = arith.addf %234, %235 : vector<16x32xf32>
    %cst_88 = arith.constant dense<0.000000e+00> : vector<16x128xf32>
    %237 = tpu.matmul %236, %210, %cst_88 {dimension_numbers = #tpu.dot_dimension_numbers<[1], [0], [0], [1], [0, 0, 1, 1], [], []>} : vector<16x32xf32>, vector<32x128xf32>, vector<16x128xf32> -> vector<16x128xf32>
    %238 = vector.broadcast %212 : vector<1x128xf32> to vector<16x128xf32>
    %239 = arith.addf %237, %238 : vector<16x128xf32>
    %240 = vector.extract_strided_slice %239 {offsets = [0, 0], sizes = [16, 32], strides = [1, 1]} : vector<16x128xf32> to vector<16x32xf32>
    %241 = vector.extract_strided_slice %239 {offsets = [0, 32], sizes = [16, 64], strides = [1, 1]} : vector<16x128xf32> to vector<16x64xf32>
    %242 = vector.extract_strided_slice %210 {offsets = [0, 96], sizes = [32, 32], strides = [1, 1]} : vector<32x128xf32> to vector<32x32xf32>
    %243 = vector.extract_strided_slice %212 {offsets = [0, 96], sizes = [1, 32], strides = [1, 1]} : vector<1x128xf32> to vector<1x32xf32>
    %244 = vector.shape_cast %240 : vector<16x32xf32> to vector<2x8x32xf32>
    %245 = vector.extract_strided_slice %241 {offsets = [0, 0], sizes = [16, 32], strides = [1, 1]} : vector<16x64xf32> to vector<16x32xf32>
    %246 = vector.shape_cast %245 : vector<16x32xf32> to vector<2x8x32xf32>
    %247 = vector.extract_strided_slice %241 {offsets = [0, 32], sizes = [16, 32], strides = [1, 1]} : vector<16x64xf32> to vector<16x32xf32>
    %248 = vector.shape_cast %247 : vector<16x32xf32> to vector<2x8x32xf32>
    %cst_89 = arith.constant 0.000000e+00 : f32
    %249 = vector.broadcast %cst_89 : f32 to vector<16x32xf32>
    %250 = vector.extract_strided_slice %244 {offsets = [0, 0, 0], sizes = [2, 8, 8], strides = [1, 1, 1]} : vector<2x8x32xf32> to vector<2x8x8xf32>
    %251 = vector.extract_strided_slice %246 {offsets = [0, 0, 0], sizes = [2, 8, 8], strides = [1, 1, 1]} : vector<2x8x32xf32> to vector<2x8x8xf32>
    "tpu.trace_start"() <{level = 10 : i32, message = "bqd,bkd->bqk"}> : () -> ()
    %cst_90 = arith.constant dense<0.000000e+00> : vector<2x8x8xf32>
    %252 = tpu.matmul %250, %251, %cst_90 {dimension_numbers = #tpu.dot_dimension_numbers<[2], [2], [1], [1], [0, 0, 0, 1, 1, 1], [0], [0]>} : vector<2x8x8xf32>, vector<2x8x8xf32>, vector<2x8x8xf32> -> vector<2x8x8xf32>
    "tpu.trace_stop"() : () -> ()
    %cst_91 = arith.constant 0.353553385 : f32
    %253 = vector.broadcast %cst_91 : f32 to vector<2x8x8xf32>
    %254 = arith.mulf %252, %253 : vector<2x8x8xf32>
    %255 = arith.addf %254, %8 : vector<2x8x8xf32>
    %cst_92 = arith.constant dense<0xFF800000> : vector<2x8xf32>
    %256 = vector.multi_reduction <maximumf>, %255, %cst_92 [2] : vector<2x8x8xf32> to vector<2x8xf32>
    %257 = vector.shape_cast %256 : vector<2x8xf32> to vector<2x8x1xf32>
    %258 = vector.broadcast %257 : vector<2x8x1xf32> to vector<2x8x8xf32>
    %259 = arith.subf %255, %258 : vector<2x8x8xf32>
    %260 = math.exp %259 : vector<2x8x8xf32>
    %cst_93 = arith.constant dense<0.000000e+00> : vector<2x8xf32>
    %261 = vector.multi_reduction <add>, %260, %cst_93 [2] : vector<2x8x8xf32> to vector<2x8xf32>
    %262 = vector.shape_cast %261 : vector<2x8xf32> to vector<2x8x1xf32>
    %263 = tpu.reciprocal %262 {approx = true} : vector<2x8x1xf32> -> vector<2x8x1xf32>
    %264 = vector.broadcast %263 : vector<2x8x1xf32> to vector<2x8x8xf32>
    %265 = arith.mulf %260, %264 : vector<2x8x8xf32>
    %266 = vector.extract_strided_slice %248 {offsets = [0, 0, 0], sizes = [2, 8, 8], strides = [1, 1, 1]} : vector<2x8x32xf32> to vector<2x8x8xf32>
    "tpu.trace_start"() <{level = 10 : i32, message = "bqk,bkd->bqd"}> : () -> ()
    %cst_94 = arith.constant dense<0.000000e+00> : vector<2x8x8xf32>
    %267 = tpu.matmul %265, %266, %cst_94 {dimension_numbers = #tpu.dot_dimension_numbers<[2], [1], [1], [2], [0, 0, 0, 1, 1, 2], [0], [0]>} : vector<2x8x8xf32>, vector<2x8x8xf32>, vector<2x8x8xf32> -> vector<2x8x8xf32>
    "tpu.trace_stop"() : () -> ()
    %268 = vector.shape_cast %267 : vector<2x8x8xf32> to vector<16x8xf32>
    %269 = vector.extract_strided_slice %242 {offsets = [0, 0], sizes = [8, 32], strides = [1, 1]} : vector<32x32xf32> to vector<8x32xf32>
    %cst_95 = arith.constant dense<0.000000e+00> : vector<16x32xf32>
    %270 = tpu.matmul %268, %269, %cst_95 {dimension_numbers = #tpu.dot_dimension_numbers<[1], [0], [0], [1], [0, 0, 1, 1], [], []>} : vector<16x8xf32>, vector<8x32xf32>, vector<16x32xf32> -> vector<16x32xf32>
    %271 = arith.addf %249, %270 : vector<16x32xf32>
    %272 = vector.extract_strided_slice %244 {offsets = [0, 0, 8], sizes = [2, 8, 8], strides = [1, 1, 1]} : vector<2x8x32xf32> to vector<2x8x8xf32>
    %273 = vector.extract_strided_slice %246 {offsets = [0, 0, 8], sizes = [2, 8, 8], strides = [1, 1, 1]} : vector<2x8x32xf32> to vector<2x8x8xf32>
    "tpu.trace_start"() <{level = 10 : i32, message = "bqd,bkd->bqk"}> : () -> ()
    %cst_96 = arith.constant dense<0.000000e+00> : vector<2x8x8xf32>
    %274 = tpu.matmul %272, %273, %cst_96 {dimension_numbers = #tpu.dot_dimension_numbers<[2], [2], [1], [1], [0, 0, 0, 1, 1, 1], [0], [0]>} : vector<2x8x8xf32>, vector<2x8x8xf32>, vector<2x8x8xf32> -> vector<2x8x8xf32>
    "tpu.trace_stop"() : () -> ()
    %cst_97 = arith.constant 0.353553385 : f32
    %275 = vector.broadcast %cst_97 : f32 to vector<2x8x8xf32>
    %276 = arith.mulf %274, %275 : vector<2x8x8xf32>
    %277 = arith.addf %276, %8 : vector<2x8x8xf32>
    %cst_98 = arith.constant dense<0xFF800000> : vector<2x8xf32>
    %278 = vector.multi_reduction <maximumf>, %277, %cst_98 [2] : vector<2x8x8xf32> to vector<2x8xf32>
    %279 = vector.shape_cast %278 : vector<2x8xf32> to vector<2x8x1xf32>
    %280 = vector.broadcast %279 : vector<2x8x1xf32> to vector<2x8x8xf32>
    %281 = arith.subf %277, %280 : vector<2x8x8xf32>
    %282 = math.exp %281 : vector<2x8x8xf32>
    %cst_99 = arith.constant dense<0.000000e+00> : vector<2x8xf32>
    %283 = vector.multi_reduction <add>, %282, %cst_99 [2] : vector<2x8x8xf32> to vector<2x8xf32>
    %284 = vector.shape_cast %283 : vector<2x8xf32> to vector<2x8x1xf32>
    %285 = tpu.reciprocal %284 {approx = true} : vector<2x8x1xf32> -> vector<2x8x1xf32>
    %286 = vector.broadcast %285 : vector<2x8x1xf32> to vector<2x8x8xf32>
    %287 = arith.mulf %282, %286 : vector<2x8x8xf32>
    %288 = vector.extract_strided_slice %248 {offsets = [0, 0, 8], sizes = [2, 8, 8], strides = [1, 1, 1]} : vector<2x8x32xf32> to vector<2x8x8xf32>
    "tpu.trace_start"() <{level = 10 : i32, message = "bqk,bkd->bqd"}> : () -> ()
    %cst_100 = arith.constant dense<0.000000e+00> : vector<2x8x8xf32>
    %289 = tpu.matmul %287, %288, %cst_100 {dimension_numbers = #tpu.dot_dimension_numbers<[2], [1], [1], [2], [0, 0, 0, 1, 1, 2], [0], [0]>} : vector<2x8x8xf32>, vector<2x8x8xf32>, vector<2x8x8xf32> -> vector<2x8x8xf32>
    "tpu.trace_stop"() : () -> ()
    %290 = vector.shape_cast %289 : vector<2x8x8xf32> to vector<16x8xf32>
    %291 = vector.extract_strided_slice %242 {offsets = [8, 0], sizes = [8, 32], strides = [1, 1]} : vector<32x32xf32> to vector<8x32xf32>
    %cst_101 = arith.constant dense<0.000000e+00> : vector<16x32xf32>
    %292 = tpu.matmul %290, %291, %cst_101 {dimension_numbers = #tpu.dot_dimension_numbers<[1], [0], [0], [1], [0, 0, 1, 1], [], []>} : vector<16x8xf32>, vector<8x32xf32>, vector<16x32xf32> -> vector<16x32xf32>
    %293 = arith.addf %271, %292 : vector<16x32xf32>
    %294 = vector.extract_strided_slice %244 {offsets = [0, 0, 16], sizes = [2, 8, 8], strides = [1, 1, 1]} : vector<2x8x32xf32> to vector<2x8x8xf32>
    %295 = vector.extract_strided_slice %246 {offsets = [0, 0, 16], sizes = [2, 8, 8], strides = [1, 1, 1]} : vector<2x8x32xf32> to vector<2x8x8xf32>
    "tpu.trace_start"() <{level = 10 : i32, message = "bqd,bkd->bqk"}> : () -> ()
    %cst_102 = arith.constant dense<0.000000e+00> : vector<2x8x8xf32>
    %296 = tpu.matmul %294, %295, %cst_102 {dimension_numbers = #tpu.dot_dimension_numbers<[2], [2], [1], [1], [0, 0, 0, 1, 1, 1], [0], [0]>} : vector<2x8x8xf32>, vector<2x8x8xf32>, vector<2x8x8xf32> -> vector<2x8x8xf32>
    "tpu.trace_stop"() : () -> ()
    %cst_103 = arith.constant 0.353553385 : f32
    %297 = vector.broadcast %cst_103 : f32 to vector<2x8x8xf32>
    %298 = arith.mulf %296, %297 : vector<2x8x8xf32>
    %299 = arith.addf %298, %8 : vector<2x8x8xf32>
    %cst_104 = arith.constant dense<0xFF800000> : vector<2x8xf32>
    %300 = vector.multi_reduction <maximumf>, %299, %cst_104 [2] : vector<2x8x8xf32> to vector<2x8xf32>
    %301 = vector.shape_cast %300 : vector<2x8xf32> to vector<2x8x1xf32>
    %302 = vector.broadcast %301 : vector<2x8x1xf32> to vector<2x8x8xf32>
    %303 = arith.subf %299, %302 : vector<2x8x8xf32>
    %304 = math.exp %303 : vector<2x8x8xf32>
    %cst_105 = arith.constant dense<0.000000e+00> : vector<2x8xf32>
    %305 = vector.multi_reduction <add>, %304, %cst_105 [2] : vector<2x8x8xf32> to vector<2x8xf32>
    %306 = vector.shape_cast %305 : vector<2x8xf32> to vector<2x8x1xf32>
    %307 = tpu.reciprocal %306 {approx = true} : vector<2x8x1xf32> -> vector<2x8x1xf32>
    %308 = vector.broadcast %307 : vector<2x8x1xf32> to vector<2x8x8xf32>
    %309 = arith.mulf %304, %308 : vector<2x8x8xf32>
    %310 = vector.extract_strided_slice %248 {offsets = [0, 0, 16], sizes = [2, 8, 8], strides = [1, 1, 1]} : vector<2x8x32xf32> to vector<2x8x8xf32>
    "tpu.trace_start"() <{level = 10 : i32, message = "bqk,bkd->bqd"}> : () -> ()
    %cst_106 = arith.constant dense<0.000000e+00> : vector<2x8x8xf32>
    %311 = tpu.matmul %309, %310, %cst_106 {dimension_numbers = #tpu.dot_dimension_numbers<[2], [1], [1], [2], [0, 0, 0, 1, 1, 2], [0], [0]>} : vector<2x8x8xf32>, vector<2x8x8xf32>, vector<2x8x8xf32> -> vector<2x8x8xf32>
    "tpu.trace_stop"() : () -> ()
    %312 = vector.shape_cast %311 : vector<2x8x8xf32> to vector<16x8xf32>
    %313 = vector.extract_strided_slice %242 {offsets = [16, 0], sizes = [8, 32], strides = [1, 1]} : vector<32x32xf32> to vector<8x32xf32>
    %cst_107 = arith.constant dense<0.000000e+00> : vector<16x32xf32>
    %314 = tpu.matmul %312, %313, %cst_107 {dimension_numbers = #tpu.dot_dimension_numbers<[1], [0], [0], [1], [0, 0, 1, 1], [], []>} : vector<16x8xf32>, vector<8x32xf32>, vector<16x32xf32> -> vector<16x32xf32>
    %315 = arith.addf %293, %314 : vector<16x32xf32>
    %316 = vector.extract_strided_slice %244 {offsets = [0, 0, 24], sizes = [2, 8, 8], strides = [1, 1, 1]} : vector<2x8x32xf32> to vector<2x8x8xf32>
    %317 = vector.extract_strided_slice %246 {offsets = [0, 0, 24], sizes = [2, 8, 8], strides = [1, 1, 1]} : vector<2x8x32xf32> to vector<2x8x8xf32>
    "tpu.trace_start"() <{level = 10 : i32, message = "bqd,bkd->bqk"}> : () -> ()
    %cst_108 = arith.constant dense<0.000000e+00> : vector<2x8x8xf32>
    %318 = tpu.matmul %316, %317, %cst_108 {dimension_numbers = #tpu.dot_dimension_numbers<[2], [2], [1], [1], [0, 0, 0, 1, 1, 1], [0], [0]>} : vector<2x8x8xf32>, vector<2x8x8xf32>, vector<2x8x8xf32> -> vector<2x8x8xf32>
    "tpu.trace_stop"() : () -> ()
    %cst_109 = arith.constant 0.353553385 : f32
    %319 = vector.broadcast %cst_109 : f32 to vector<2x8x8xf32>
    %320 = arith.mulf %318, %319 : vector<2x8x8xf32>
    %321 = arith.addf %320, %8 : vector<2x8x8xf32>
    %cst_110 = arith.constant dense<0xFF800000> : vector<2x8xf32>
    %322 = vector.multi_reduction <maximumf>, %321, %cst_110 [2] : vector<2x8x8xf32> to vector<2x8xf32>
    %323 = vector.shape_cast %322 : vector<2x8xf32> to vector<2x8x1xf32>
    %324 = vector.broadcast %323 : vector<2x8x1xf32> to vector<2x8x8xf32>
    %325 = arith.subf %321, %324 : vector<2x8x8xf32>
    %326 = math.exp %325 : vector<2x8x8xf32>
    %cst_111 = arith.constant dense<0.000000e+00> : vector<2x8xf32>
    %327 = vector.multi_reduction <add>, %326, %cst_111 [2] : vector<2x8x8xf32> to vector<2x8xf32>
    %328 = vector.shape_cast %327 : vector<2x8xf32> to vector<2x8x1xf32>
    %329 = tpu.reciprocal %328 {approx = true} : vector<2x8x1xf32> -> vector<2x8x1xf32>
    %330 = vector.broadcast %329 : vector<2x8x1xf32> to vector<2x8x8xf32>
    %331 = arith.mulf %326, %330 : vector<2x8x8xf32>
    %332 = vector.extract_strided_slice %248 {offsets = [0, 0, 24], sizes = [2, 8, 8], strides = [1, 1, 1]} : vector<2x8x32xf32> to vector<2x8x8xf32>
    "tpu.trace_start"() <{level = 10 : i32, message = "bqk,bkd->bqd"}> : () -> ()
    %cst_112 = arith.constant dense<0.000000e+00> : vector<2x8x8xf32>
    %333 = tpu.matmul %331, %332, %cst_112 {dimension_numbers = #tpu.dot_dimension_numbers<[2], [1], [1], [2], [0, 0, 0, 1, 1, 2], [0], [0]>} : vector<2x8x8xf32>, vector<2x8x8xf32>, vector<2x8x8xf32> -> vector<2x8x8xf32>
    "tpu.trace_stop"() : () -> ()
    %334 = vector.shape_cast %333 : vector<2x8x8xf32> to vector<16x8xf32>
    %335 = vector.extract_strided_slice %242 {offsets = [24, 0], sizes = [8, 32], strides = [1, 1]} : vector<32x32xf32> to vector<8x32xf32>
    %cst_113 = arith.constant dense<0.000000e+00> : vector<16x32xf32>
    %336 = tpu.matmul %334, %335, %cst_113 {dimension_numbers = #tpu.dot_dimension_numbers<[1], [0], [0], [1], [0, 0, 1, 1], [], []>} : vector<16x8xf32>, vector<8x32xf32>, vector<16x32xf32> -> vector<16x32xf32>
    %337 = arith.addf %315, %336 : vector<16x32xf32>
    %338 = vector.broadcast %243 : vector<1x32xf32> to vector<16x32xf32>
    %339 = arith.addf %337, %338 : vector<16x32xf32>
    %340 = arith.addf %206, %339 : vector<16x32xf32>
    %341 = vector.extract_strided_slice %208 {offsets = [2, 0], sizes = [1, 32], strides = [1, 1]} : vector<4x32xf32> to vector<1x32xf32>
    %342 = vector.extract_strided_slice %208 {offsets = [3, 0], sizes = [1, 32], strides = [1, 1]} : vector<4x32xf32> to vector<1x32xf32>
    %cst_114 = arith.constant dense<0.000000e+00> : vector<16xf32>
    %343 = vector.multi_reduction <add>, %340, %cst_114 [1] : vector<16x32xf32> to vector<16xf32>
    %344 = vector.shape_cast %343 : vector<16xf32> to vector<16x1xf32>
    %cst_115 = arith.constant 3.200000e+01 : f32
    %345 = vector.broadcast %cst_115 : f32 to vector<16x1xf32>
    %346 = arith.divf %344, %345 : vector<16x1xf32>
    %347 = vector.broadcast %346 : vector<16x1xf32> to vector<16x32xf32>
    %348 = arith.subf %340, %347 : vector<16x32xf32>
    %349 = arith.mulf %348, %348 : vector<16x32xf32>
    %cst_116 = arith.constant dense<0.000000e+00> : vector<16xf32>
    %350 = vector.multi_reduction <add>, %349, %cst_116 [1] : vector<16x32xf32> to vector<16xf32>
    %351 = vector.shape_cast %350 : vector<16xf32> to vector<16x1xf32>
    %cst_117 = arith.constant 0.0322580636 : f32
    %352 = vector.broadcast %cst_117 : f32 to vector<16x1xf32>
    %353 = arith.mulf %351, %352 : vector<16x1xf32>
    %354 = vector.broadcast %346 : vector<16x1xf32> to vector<16x32xf32>
    %355 = arith.subf %340, %354 : vector<16x32xf32>
    %356 = vector.broadcast %341 : vector<1x32xf32> to vector<16x32xf32>
    %357 = arith.mulf %356, %355 : vector<16x32xf32>
    %358 = math.sqrt %353 : vector<16x1xf32>
    %cst_118 = arith.constant 9.99999997E-7 : f32
    %359 = vector.broadcast %cst_118 : f32 to vector<16x1xf32>
    %360 = arith.addf %358, %359 : vector<16x1xf32>
    %361 = vector.broadcast %360 : vector<16x1xf32> to vector<16x32xf32>
    %362 = arith.divf %357, %361 : vector<16x32xf32>
    %363 = vector.broadcast %342 : vector<1x32xf32> to vector<16x32xf32>
    %364 = arith.addf %362, %363 : vector<16x32xf32>
    %c1_119 = arith.constant 1 : index
    %c0_120 = arith.constant 0 : index
    %c0_121 = arith.constant 0 : index
    %365 = vector.load %arg11[%c1_119, %c0_120, %c0_121] : memref<2x1x96xf32, #tpu.memory_space<vmem>>, vector<1x1x96xf32>
    %366 = vector.shape_cast %365 : vector<1x1x96xf32> to vector<1x96xf32>
    %c1_122 = arith.constant 1 : index
    %c0_123 = arith.constant 0 : index
    %c0_124 = arith.constant 0 : index
    %367 = vector.load %arg9[%c1_122, %c0_123, %c0_124] : memref<2x32x64xf32, #tpu.memory_space<vmem>>, vector<1x32x64xf32>
    %368 = vector.shape_cast %367 : vector<1x32x64xf32> to vector<32x64xf32>
    %cst_125 = arith.constant dense<0.000000e+00> : vector<16x64xf32>
    %369 = tpu.matmul %364, %368, %cst_125 {dimension_numbers = #tpu.dot_dimension_numbers<[1], [0], [0], [1], [0, 0, 1, 1], [], []>} : vector<16x32xf32>, vector<32x64xf32>, vector<16x64xf32> -> vector<16x64xf32>
    %370 = vector.extract_strided_slice %366 {offsets = [0, 0], sizes = [1, 64], strides = [1, 1]} : vector<1x96xf32> to vector<1x64xf32>
    %371 = vector.broadcast %370 : vector<1x64xf32> to vector<16x64xf32>
    %372 = arith.addf %369, %371 : vector<16x64xf32>
    %cst_126 = arith.constant 0.000000e+00 : f32
    %373 = vector.broadcast %cst_126 : f32 to vector<16x64xf32>
    %374 = arith.maximumf %372, %373 : vector<16x64xf32>
    %c1_127 = arith.constant 1 : index
    %c0_128 = arith.constant 0 : index
    %c0_129 = arith.constant 0 : index
    %375 = vector.load %arg10[%c1_127, %c0_128, %c0_129] : memref<2x64x32xf32, #tpu.memory_space<vmem>>, vector<1x64x32xf32>
    %376 = vector.shape_cast %375 : vector<1x64x32xf32> to vector<64x32xf32>
    %cst_130 = arith.constant dense<0.000000e+00> : vector<16x32xf32>
    %377 = tpu.matmul %374, %376, %cst_130 {dimension_numbers = #tpu.dot_dimension_numbers<[1], [0], [0], [1], [0, 0, 1, 1], [], []>} : vector<16x64xf32>, vector<64x32xf32>, vector<16x32xf32> -> vector<16x32xf32>
    %378 = arith.addf %340, %377 : vector<16x32xf32>
    %379 = vector.extract_strided_slice %366 {offsets = [0, 64], sizes = [1, 32], strides = [1, 1]} : vector<1x96xf32> to vector<1x32xf32>
    %380 = vector.broadcast %379 : vector<1x32xf32> to vector<16x32xf32>
    %381 = arith.addf %378, %380 : vector<16x32xf32>
    %c0_131 = arith.constant 0 : index
    %c0_132 = arith.constant 0 : index
    %382 = vector.load %arg13[%c0_131, %c0_132] : memref<2x32xf32, #tpu.memory_space<vmem>>, vector<1x32xf32>
    %c1_133 = arith.constant 1 : index
    %c0_134 = arith.constant 0 : index
    %383 = vector.load %arg13[%c1_133, %c0_134] : memref<2x32xf32, #tpu.memory_space<vmem>>, vector<1x32xf32>
    %cst_135 = arith.constant dense<0.000000e+00> : vector<16xf32>
    %384 = vector.multi_reduction <add>, %381, %cst_135 [1] : vector<16x32xf32> to vector<16xf32>
    %385 = vector.shape_cast %384 : vector<16xf32> to vector<16x1xf32>
    %cst_136 = arith.constant 3.200000e+01 : f32
    %386 = vector.broadcast %cst_136 : f32 to vector<16x1xf32>
    %387 = arith.divf %385, %386 : vector<16x1xf32>
    %388 = vector.broadcast %387 : vector<16x1xf32> to vector<16x32xf32>
    %389 = arith.subf %381, %388 : vector<16x32xf32>
    %390 = arith.mulf %389, %389 : vector<16x32xf32>
    %cst_137 = arith.constant dense<0.000000e+00> : vector<16xf32>
    %391 = vector.multi_reduction <add>, %390, %cst_137 [1] : vector<16x32xf32> to vector<16xf32>
    %392 = vector.shape_cast %391 : vector<16xf32> to vector<16x1xf32>
    %cst_138 = arith.constant 0.0322580636 : f32
    %393 = vector.broadcast %cst_138 : f32 to vector<16x1xf32>
    %394 = arith.mulf %392, %393 : vector<16x1xf32>
    %395 = vector.broadcast %387 : vector<16x1xf32> to vector<16x32xf32>
    %396 = arith.subf %381, %395 : vector<16x32xf32>
    %397 = vector.broadcast %382 : vector<1x32xf32> to vector<16x32xf32>
    %398 = arith.mulf %397, %396 : vector<16x32xf32>
    %399 = math.sqrt %394 : vector<16x1xf32>
    %cst_139 = arith.constant 9.99999997E-7 : f32
    %400 = vector.broadcast %cst_139 : f32 to vector<16x1xf32>
    %401 = arith.addf %399, %400 : vector<16x1xf32>
    %402 = vector.broadcast %401 : vector<16x1xf32> to vector<16x32xf32>
    %403 = arith.divf %398, %402 : vector<16x32xf32>
    %404 = vector.broadcast %383 : vector<1x32xf32> to vector<16x32xf32>
    %405 = arith.addf %403, %404 : vector<16x32xf32>
    %c0_140 = arith.constant 0 : index
    %c0_141 = arith.constant 0 : index
    %406 = vector.load %arg1[%c0_140, %c0_141] : memref<16x1xi32, #tpu.memory_space<vmem>>, vector<16x1xi32>
    %c0_142 = arith.constant 0 : index
    %c0_143 = arith.constant 0 : index
    %407 = vector.load %arg5[%c0_142, %c0_143] : memref<16x32xf32, #tpu.memory_space<vmem>>, vector<16x32xf32>
    %408 = tpu.iota {dimensions = array<i32: 1>} : vector<16x16xi32>
    %409 = vector.broadcast %406 : vector<16x1xi32> to vector<16x16xi32>
    %410 = arith.cmpi eq, %409, %408 : vector<16x16xi32>
    %411 = arith.extui %410 : vector<16x16xi1> to vector<16x16xi32>
    %412 = arith.sitofp %411 : vector<16x16xi32> to vector<16x16xf32>
    %cst_144 = arith.constant dense<0.000000e+00> : vector<16x32xf32>
    %413 = tpu.matmul %412, %407, %cst_144 {dimension_numbers = #tpu.dot_dimension_numbers<[1], [0], [0], [1], [0, 0, 1, 1], [], []>} : vector<16x16xf32>, vector<16x32xf32>, vector<16x32xf32> -> vector<16x32xf32>
    %cst_145 = arith.constant 5.65685415 : f32
    %414 = vector.broadcast %cst_145 : f32 to vector<16x32xf32>
    %415 = arith.mulf %413, %414 : vector<16x32xf32>
    %416 = vector.shape_cast %415 : vector<16x32xf32> to vector<2x8x32xf32>
    %c0_146 = arith.constant 0 : index
    %c0_147 = arith.constant 0 : index
    %417 = vector.load %arg6[%c0_146, %c0_147] : memref<64x32xf32, #tpu.memory_space<vmem>>, vector<8x32xf32>
    %418 = vector.shape_cast %417 : vector<8x32xf32> to vector<1x8x32xf32>
    %419 = vector.broadcast %418 : vector<1x8x32xf32> to vector<2x8x32xf32>
    %420 = arith.addf %416, %419 : vector<2x8x32xf32>
    %421 = vector.shape_cast %420 : vector<2x8x32xf32> to vector<16x32xf32>
    %c0_148 = arith.constant 0 : index
    %c0_149 = arith.constant 0 : index
    %c0_150 = arith.constant 0 : index
    %422 = vector.load %arg21[%c0_148, %c0_149, %c0_150] : memref<2x6x32xf32, #tpu.memory_space<vmem>>, vector<1x6x32xf32>
    %423 = vector.shape_cast %422 : vector<1x6x32xf32> to vector<6x32xf32>
    %c0_151 = arith.constant 0 : index
    %c0_152 = arith.constant 0 : index
    %c0_153 = arith.constant 0 : index
    %424 = vector.load %arg14[%c0_151, %c0_152, %c0_153] : memref<2x32x128xf32, #tpu.memory_space<vmem>>, vector<1x32x128xf32>
    %425 = vector.shape_cast %424 : vector<1x32x128xf32> to vector<32x128xf32>
    %c0_154 = arith.constant 0 : index
    %c0_155 = arith.constant 0 : index
    %c0_156 = arith.constant 0 : index
    %426 = vector.load %arg15[%c0_154, %c0_155, %c0_156] : memref<2x1x128xf32, #tpu.memory_space<vmem>>, vector<1x1x128xf32>
    %427 = vector.shape_cast %426 : vector<1x1x128xf32> to vector<1x128xf32>
    %c0_157 = arith.constant 0 : index
    %c0_158 = arith.constant 0 : index
    %c0_159 = arith.constant 0 : index
    %428 = vector.load %arg16[%c0_157, %c0_158, %c0_159] : memref<2x32x128xf32, #tpu.memory_space<vmem>>, vector<1x32x128xf32>
    %429 = vector.shape_cast %428 : vector<1x32x128xf32> to vector<32x128xf32>
    %c0_160 = arith.constant 0 : index
    %c0_161 = arith.constant 0 : index
    %c0_162 = arith.constant 0 : index
    %430 = vector.load %arg17[%c0_160, %c0_161, %c0_162] : memref<2x1x128xf32, #tpu.memory_space<vmem>>, vector<1x1x128xf32>
    %431 = vector.shape_cast %430 : vector<1x1x128xf32> to vector<1x128xf32>
    %432 = vector.extract_strided_slice %423 {offsets = [0, 0], sizes = [1, 32], strides = [1, 1]} : vector<6x32xf32> to vector<1x32xf32>
    %433 = vector.extract_strided_slice %423 {offsets = [1, 0], sizes = [1, 32], strides = [1, 1]} : vector<6x32xf32> to vector<1x32xf32>
    %cst_163 = arith.constant dense<0.000000e+00> : vector<16xf32>
    %434 = vector.multi_reduction <add>, %421, %cst_163 [1] : vector<16x32xf32> to vector<16xf32>
    %435 = vector.shape_cast %434 : vector<16xf32> to vector<16x1xf32>
    %cst_164 = arith.constant 3.200000e+01 : f32
    %436 = vector.broadcast %cst_164 : f32 to vector<16x1xf32>
    %437 = arith.divf %435, %436 : vector<16x1xf32>
    %438 = vector.broadcast %437 : vector<16x1xf32> to vector<16x32xf32>
    %439 = arith.subf %421, %438 : vector<16x32xf32>
    %440 = arith.mulf %439, %439 : vector<16x32xf32>
    %cst_165 = arith.constant dense<0.000000e+00> : vector<16xf32>
    %441 = vector.multi_reduction <add>, %440, %cst_165 [1] : vector<16x32xf32> to vector<16xf32>
    %442 = vector.shape_cast %441 : vector<16xf32> to vector<16x1xf32>
    %cst_166 = arith.constant 0.0322580636 : f32
    %443 = vector.broadcast %cst_166 : f32 to vector<16x1xf32>
    %444 = arith.mulf %442, %443 : vector<16x1xf32>
    %445 = vector.broadcast %437 : vector<16x1xf32> to vector<16x32xf32>
    %446 = arith.subf %421, %445 : vector<16x32xf32>
    %447 = vector.broadcast %432 : vector<1x32xf32> to vector<16x32xf32>
    %448 = arith.mulf %447, %446 : vector<16x32xf32>
    %449 = math.sqrt %444 : vector<16x1xf32>
    %cst_167 = arith.constant 9.99999997E-7 : f32
    %450 = vector.broadcast %cst_167 : f32 to vector<16x1xf32>
    %451 = arith.addf %449, %450 : vector<16x1xf32>
    %452 = vector.broadcast %451 : vector<16x1xf32> to vector<16x32xf32>
    %453 = arith.divf %448, %452 : vector<16x32xf32>
    %454 = vector.broadcast %433 : vector<1x32xf32> to vector<16x32xf32>
    %455 = arith.addf %453, %454 : vector<16x32xf32>
    %cst_168 = arith.constant dense<0.000000e+00> : vector<16x128xf32>
    %456 = tpu.matmul %455, %425, %cst_168 {dimension_numbers = #tpu.dot_dimension_numbers<[1], [0], [0], [1], [0, 0, 1, 1], [], []>} : vector<16x32xf32>, vector<32x128xf32>, vector<16x128xf32> -> vector<16x128xf32>
    %457 = vector.broadcast %427 : vector<1x128xf32> to vector<16x128xf32>
    %458 = arith.addf %456, %457 : vector<16x128xf32>
    %459 = vector.extract_strided_slice %458 {offsets = [0, 0], sizes = [16, 32], strides = [1, 1]} : vector<16x128xf32> to vector<16x32xf32>
    %460 = vector.extract_strided_slice %458 {offsets = [0, 32], sizes = [16, 64], strides = [1, 1]} : vector<16x128xf32> to vector<16x64xf32>
    %461 = vector.extract_strided_slice %425 {offsets = [0, 96], sizes = [32, 32], strides = [1, 1]} : vector<32x128xf32> to vector<32x32xf32>
    %462 = vector.extract_strided_slice %427 {offsets = [0, 96], sizes = [1, 32], strides = [1, 1]} : vector<1x128xf32> to vector<1x32xf32>
    %463 = vector.shape_cast %459 : vector<16x32xf32> to vector<2x8x32xf32>
    %464 = vector.extract_strided_slice %460 {offsets = [0, 0], sizes = [16, 32], strides = [1, 1]} : vector<16x64xf32> to vector<16x32xf32>
    %465 = vector.shape_cast %464 : vector<16x32xf32> to vector<2x8x32xf32>
    %466 = vector.extract_strided_slice %460 {offsets = [0, 32], sizes = [16, 32], strides = [1, 1]} : vector<16x64xf32> to vector<16x32xf32>
    %467 = vector.shape_cast %466 : vector<16x32xf32> to vector<2x8x32xf32>
    %cst_169 = arith.constant 0.000000e+00 : f32
    %468 = vector.broadcast %cst_169 : f32 to vector<16x32xf32>
    %469 = vector.extract_strided_slice %463 {offsets = [0, 0, 0], sizes = [2, 8, 8], strides = [1, 1, 1]} : vector<2x8x32xf32> to vector<2x8x8xf32>
    %470 = vector.extract_strided_slice %465 {offsets = [0, 0, 0], sizes = [2, 8, 8], strides = [1, 1, 1]} : vector<2x8x32xf32> to vector<2x8x8xf32>
    "tpu.trace_start"() <{level = 10 : i32, message = "bqd,bkd->bqk"}> : () -> ()
    %cst_170 = arith.constant dense<0.000000e+00> : vector<2x8x8xf32>
    %471 = tpu.matmul %469, %470, %cst_170 {dimension_numbers = #tpu.dot_dimension_numbers<[2], [2], [1], [1], [0, 0, 0, 1, 1, 1], [0], [0]>} : vector<2x8x8xf32>, vector<2x8x8xf32>, vector<2x8x8xf32> -> vector<2x8x8xf32>
    "tpu.trace_stop"() : () -> ()
    %cst_171 = arith.constant 0.353553385 : f32
    %472 = vector.broadcast %cst_171 : f32 to vector<2x8x8xf32>
    %473 = arith.mulf %471, %472 : vector<2x8x8xf32>
    %474 = arith.addf %473, %15 : vector<2x8x8xf32>
    %cst_172 = arith.constant dense<0xFF800000> : vector<2x8xf32>
    %475 = vector.multi_reduction <maximumf>, %474, %cst_172 [2] : vector<2x8x8xf32> to vector<2x8xf32>
    %476 = vector.shape_cast %475 : vector<2x8xf32> to vector<2x8x1xf32>
    %477 = vector.broadcast %476 : vector<2x8x1xf32> to vector<2x8x8xf32>
    %478 = arith.subf %474, %477 : vector<2x8x8xf32>
    %479 = math.exp %478 : vector<2x8x8xf32>
    %cst_173 = arith.constant dense<0.000000e+00> : vector<2x8xf32>
    %480 = vector.multi_reduction <add>, %479, %cst_173 [2] : vector<2x8x8xf32> to vector<2x8xf32>
    %481 = vector.shape_cast %480 : vector<2x8xf32> to vector<2x8x1xf32>
    %482 = tpu.reciprocal %481 {approx = true} : vector<2x8x1xf32> -> vector<2x8x1xf32>
    %483 = vector.broadcast %482 : vector<2x8x1xf32> to vector<2x8x8xf32>
    %484 = arith.mulf %479, %483 : vector<2x8x8xf32>
    %485 = vector.extract_strided_slice %467 {offsets = [0, 0, 0], sizes = [2, 8, 8], strides = [1, 1, 1]} : vector<2x8x32xf32> to vector<2x8x8xf32>
    "tpu.trace_start"() <{level = 10 : i32, message = "bqk,bkd->bqd"}> : () -> ()
    %cst_174 = arith.constant dense<0.000000e+00> : vector<2x8x8xf32>
    %486 = tpu.matmul %484, %485, %cst_174 {dimension_numbers = #tpu.dot_dimension_numbers<[2], [1], [1], [2], [0, 0, 0, 1, 1, 2], [0], [0]>} : vector<2x8x8xf32>, vector<2x8x8xf32>, vector<2x8x8xf32> -> vector<2x8x8xf32>
    "tpu.trace_stop"() : () -> ()
    %487 = vector.shape_cast %486 : vector<2x8x8xf32> to vector<16x8xf32>
    %488 = vector.extract_strided_slice %461 {offsets = [0, 0], sizes = [8, 32], strides = [1, 1]} : vector<32x32xf32> to vector<8x32xf32>
    %cst_175 = arith.constant dense<0.000000e+00> : vector<16x32xf32>
    %489 = tpu.matmul %487, %488, %cst_175 {dimension_numbers = #tpu.dot_dimension_numbers<[1], [0], [0], [1], [0, 0, 1, 1], [], []>} : vector<16x8xf32>, vector<8x32xf32>, vector<16x32xf32> -> vector<16x32xf32>
    %490 = arith.addf %468, %489 : vector<16x32xf32>
    %491 = vector.extract_strided_slice %463 {offsets = [0, 0, 8], sizes = [2, 8, 8], strides = [1, 1, 1]} : vector<2x8x32xf32> to vector<2x8x8xf32>
    %492 = vector.extract_strided_slice %465 {offsets = [0, 0, 8], sizes = [2, 8, 8], strides = [1, 1, 1]} : vector<2x8x32xf32> to vector<2x8x8xf32>
    "tpu.trace_start"() <{level = 10 : i32, message = "bqd,bkd->bqk"}> : () -> ()
    %cst_176 = arith.constant dense<0.000000e+00> : vector<2x8x8xf32>
    %493 = tpu.matmul %491, %492, %cst_176 {dimension_numbers = #tpu.dot_dimension_numbers<[2], [2], [1], [1], [0, 0, 0, 1, 1, 1], [0], [0]>} : vector<2x8x8xf32>, vector<2x8x8xf32>, vector<2x8x8xf32> -> vector<2x8x8xf32>
    "tpu.trace_stop"() : () -> ()
    %cst_177 = arith.constant 0.353553385 : f32
    %494 = vector.broadcast %cst_177 : f32 to vector<2x8x8xf32>
    %495 = arith.mulf %493, %494 : vector<2x8x8xf32>
    %496 = arith.addf %495, %15 : vector<2x8x8xf32>
    %cst_178 = arith.constant dense<0xFF800000> : vector<2x8xf32>
    %497 = vector.multi_reduction <maximumf>, %496, %cst_178 [2] : vector<2x8x8xf32> to vector<2x8xf32>
    %498 = vector.shape_cast %497 : vector<2x8xf32> to vector<2x8x1xf32>
    %499 = vector.broadcast %498 : vector<2x8x1xf32> to vector<2x8x8xf32>
    %500 = arith.subf %496, %499 : vector<2x8x8xf32>
    %501 = math.exp %500 : vector<2x8x8xf32>
    %cst_179 = arith.constant dense<0.000000e+00> : vector<2x8xf32>
    %502 = vector.multi_reduction <add>, %501, %cst_179 [2] : vector<2x8x8xf32> to vector<2x8xf32>
    %503 = vector.shape_cast %502 : vector<2x8xf32> to vector<2x8x1xf32>
    %504 = tpu.reciprocal %503 {approx = true} : vector<2x8x1xf32> -> vector<2x8x1xf32>
    %505 = vector.broadcast %504 : vector<2x8x1xf32> to vector<2x8x8xf32>
    %506 = arith.mulf %501, %505 : vector<2x8x8xf32>
    %507 = vector.extract_strided_slice %467 {offsets = [0, 0, 8], sizes = [2, 8, 8], strides = [1, 1, 1]} : vector<2x8x32xf32> to vector<2x8x8xf32>
    "tpu.trace_start"() <{level = 10 : i32, message = "bqk,bkd->bqd"}> : () -> ()
    %cst_180 = arith.constant dense<0.000000e+00> : vector<2x8x8xf32>
    %508 = tpu.matmul %506, %507, %cst_180 {dimension_numbers = #tpu.dot_dimension_numbers<[2], [1], [1], [2], [0, 0, 0, 1, 1, 2], [0], [0]>} : vector<2x8x8xf32>, vector<2x8x8xf32>, vector<2x8x8xf32> -> vector<2x8x8xf32>
    "tpu.trace_stop"() : () -> ()
    %509 = vector.shape_cast %508 : vector<2x8x8xf32> to vector<16x8xf32>
    %510 = vector.extract_strided_slice %461 {offsets = [8, 0], sizes = [8, 32], strides = [1, 1]} : vector<32x32xf32> to vector<8x32xf32>
    %cst_181 = arith.constant dense<0.000000e+00> : vector<16x32xf32>
    %511 = tpu.matmul %509, %510, %cst_181 {dimension_numbers = #tpu.dot_dimension_numbers<[1], [0], [0], [1], [0, 0, 1, 1], [], []>} : vector<16x8xf32>, vector<8x32xf32>, vector<16x32xf32> -> vector<16x32xf32>
    %512 = arith.addf %490, %511 : vector<16x32xf32>
    %513 = vector.extract_strided_slice %463 {offsets = [0, 0, 16], sizes = [2, 8, 8], strides = [1, 1, 1]} : vector<2x8x32xf32> to vector<2x8x8xf32>
    %514 = vector.extract_strided_slice %465 {offsets = [0, 0, 16], sizes = [2, 8, 8], strides = [1, 1, 1]} : vector<2x8x32xf32> to vector<2x8x8xf32>
    "tpu.trace_start"() <{level = 10 : i32, message = "bqd,bkd->bqk"}> : () -> ()
    %cst_182 = arith.constant dense<0.000000e+00> : vector<2x8x8xf32>
    %515 = tpu.matmul %513, %514, %cst_182 {dimension_numbers = #tpu.dot_dimension_numbers<[2], [2], [1], [1], [0, 0, 0, 1, 1, 1], [0], [0]>} : vector<2x8x8xf32>, vector<2x8x8xf32>, vector<2x8x8xf32> -> vector<2x8x8xf32>
    "tpu.trace_stop"() : () -> ()
    %cst_183 = arith.constant 0.353553385 : f32
    %516 = vector.broadcast %cst_183 : f32 to vector<2x8x8xf32>
    %517 = arith.mulf %515, %516 : vector<2x8x8xf32>
    %518 = arith.addf %517, %15 : vector<2x8x8xf32>
    %cst_184 = arith.constant dense<0xFF800000> : vector<2x8xf32>
    %519 = vector.multi_reduction <maximumf>, %518, %cst_184 [2] : vector<2x8x8xf32> to vector<2x8xf32>
    %520 = vector.shape_cast %519 : vector<2x8xf32> to vector<2x8x1xf32>
    %521 = vector.broadcast %520 : vector<2x8x1xf32> to vector<2x8x8xf32>
    %522 = arith.subf %518, %521 : vector<2x8x8xf32>
    %523 = math.exp %522 : vector<2x8x8xf32>
    %cst_185 = arith.constant dense<0.000000e+00> : vector<2x8xf32>
    %524 = vector.multi_reduction <add>, %523, %cst_185 [2] : vector<2x8x8xf32> to vector<2x8xf32>
    %525 = vector.shape_cast %524 : vector<2x8xf32> to vector<2x8x1xf32>
    %526 = tpu.reciprocal %525 {approx = true} : vector<2x8x1xf32> -> vector<2x8x1xf32>
    %527 = vector.broadcast %526 : vector<2x8x1xf32> to vector<2x8x8xf32>
    %528 = arith.mulf %523, %527 : vector<2x8x8xf32>
    %529 = vector.extract_strided_slice %467 {offsets = [0, 0, 16], sizes = [2, 8, 8], strides = [1, 1, 1]} : vector<2x8x32xf32> to vector<2x8x8xf32>
    "tpu.trace_start"() <{level = 10 : i32, message = "bqk,bkd->bqd"}> : () -> ()
    %cst_186 = arith.constant dense<0.000000e+00> : vector<2x8x8xf32>
    %530 = tpu.matmul %528, %529, %cst_186 {dimension_numbers = #tpu.dot_dimension_numbers<[2], [1], [1], [2], [0, 0, 0, 1, 1, 2], [0], [0]>} : vector<2x8x8xf32>, vector<2x8x8xf32>, vector<2x8x8xf32> -> vector<2x8x8xf32>
    "tpu.trace_stop"() : () -> ()
    %531 = vector.shape_cast %530 : vector<2x8x8xf32> to vector<16x8xf32>
    %532 = vector.extract_strided_slice %461 {offsets = [16, 0], sizes = [8, 32], strides = [1, 1]} : vector<32x32xf32> to vector<8x32xf32>
    %cst_187 = arith.constant dense<0.000000e+00> : vector<16x32xf32>
    %533 = tpu.matmul %531, %532, %cst_187 {dimension_numbers = #tpu.dot_dimension_numbers<[1], [0], [0], [1], [0, 0, 1, 1], [], []>} : vector<16x8xf32>, vector<8x32xf32>, vector<16x32xf32> -> vector<16x32xf32>
    %534 = arith.addf %512, %533 : vector<16x32xf32>
    %535 = vector.extract_strided_slice %463 {offsets = [0, 0, 24], sizes = [2, 8, 8], strides = [1, 1, 1]} : vector<2x8x32xf32> to vector<2x8x8xf32>
    %536 = vector.extract_strided_slice %465 {offsets = [0, 0, 24], sizes = [2, 8, 8], strides = [1, 1, 1]} : vector<2x8x32xf32> to vector<2x8x8xf32>
    "tpu.trace_start"() <{level = 10 : i32, message = "bqd,bkd->bqk"}> : () -> ()
    %cst_188 = arith.constant dense<0.000000e+00> : vector<2x8x8xf32>
    %537 = tpu.matmul %535, %536, %cst_188 {dimension_numbers = #tpu.dot_dimension_numbers<[2], [2], [1], [1], [0, 0, 0, 1, 1, 1], [0], [0]>} : vector<2x8x8xf32>, vector<2x8x8xf32>, vector<2x8x8xf32> -> vector<2x8x8xf32>
    "tpu.trace_stop"() : () -> ()
    %cst_189 = arith.constant 0.353553385 : f32
    %538 = vector.broadcast %cst_189 : f32 to vector<2x8x8xf32>
    %539 = arith.mulf %537, %538 : vector<2x8x8xf32>
    %540 = arith.addf %539, %15 : vector<2x8x8xf32>
    %cst_190 = arith.constant dense<0xFF800000> : vector<2x8xf32>
    %541 = vector.multi_reduction <maximumf>, %540, %cst_190 [2] : vector<2x8x8xf32> to vector<2x8xf32>
    %542 = vector.shape_cast %541 : vector<2x8xf32> to vector<2x8x1xf32>
    %543 = vector.broadcast %542 : vector<2x8x1xf32> to vector<2x8x8xf32>
    %544 = arith.subf %540, %543 : vector<2x8x8xf32>
    %545 = math.exp %544 : vector<2x8x8xf32>
    %cst_191 = arith.constant dense<0.000000e+00> : vector<2x8xf32>
    %546 = vector.multi_reduction <add>, %545, %cst_191 [2] : vector<2x8x8xf32> to vector<2x8xf32>
    %547 = vector.shape_cast %546 : vector<2x8xf32> to vector<2x8x1xf32>
    %548 = tpu.reciprocal %547 {approx = true} : vector<2x8x1xf32> -> vector<2x8x1xf32>
    %549 = vector.broadcast %548 : vector<2x8x1xf32> to vector<2x8x8xf32>
    %550 = arith.mulf %545, %549 : vector<2x8x8xf32>
    %551 = vector.extract_strided_slice %467 {offsets = [0, 0, 24], sizes = [2, 8, 8], strides = [1, 1, 1]} : vector<2x8x32xf32> to vector<2x8x8xf32>
    "tpu.trace_start"() <{level = 10 : i32, message = "bqk,bkd->bqd"}> : () -> ()
    %cst_192 = arith.constant dense<0.000000e+00> : vector<2x8x8xf32>
    %552 = tpu.matmul %550, %551, %cst_192 {dimension_numbers = #tpu.dot_dimension_numbers<[2], [1], [1], [2], [0, 0, 0, 1, 1, 2], [0], [0]>} : vector<2x8x8xf32>, vector<2x8x8xf32>, vector<2x8x8xf32> -> vector<2x8x8xf32>
    "tpu.trace_stop"() : () -> ()
    %553 = vector.shape_cast %552 : vector<2x8x8xf32> to vector<16x8xf32>
    %554 = vector.extract_strided_slice %461 {offsets = [24, 0], sizes = [8, 32], strides = [1, 1]} : vector<32x32xf32> to vector<8x32xf32>
    %cst_193 = arith.constant dense<0.000000e+00> : vector<16x32xf32>
    %555 = tpu.matmul %553, %554, %cst_193 {dimension_numbers = #tpu.dot_dimension_numbers<[1], [0], [0], [1], [0, 0, 1, 1], [], []>} : vector<16x8xf32>, vector<8x32xf32>, vector<16x32xf32> -> vector<16x32xf32>
    %556 = arith.addf %534, %555 : vector<16x32xf32>
    %557 = vector.broadcast %462 : vector<1x32xf32> to vector<16x32xf32>
    %558 = arith.addf %556, %557 : vector<16x32xf32>
    %559 = arith.addf %421, %558 : vector<16x32xf32>
    %560 = vector.extract_strided_slice %423 {offsets = [2, 0], sizes = [1, 32], strides = [1, 1]} : vector<6x32xf32> to vector<1x32xf32>
    %561 = vector.extract_strided_slice %423 {offsets = [3, 0], sizes = [1, 32], strides = [1, 1]} : vector<6x32xf32> to vector<1x32xf32>
    %cst_194 = arith.constant dense<0.000000e+00> : vector<16xf32>
    %562 = vector.multi_reduction <add>, %559, %cst_194 [1] : vector<16x32xf32> to vector<16xf32>
    %563 = vector.shape_cast %562 : vector<16xf32> to vector<16x1xf32>
    %cst_195 = arith.constant 3.200000e+01 : f32
    %564 = vector.broadcast %cst_195 : f32 to vector<16x1xf32>
    %565 = arith.divf %563, %564 : vector<16x1xf32>
    %566 = vector.broadcast %565 : vector<16x1xf32> to vector<16x32xf32>
    %567 = arith.subf %559, %566 : vector<16x32xf32>
    %568 = arith.mulf %567, %567 : vector<16x32xf32>
    %cst_196 = arith.constant dense<0.000000e+00> : vector<16xf32>
    %569 = vector.multi_reduction <add>, %568, %cst_196 [1] : vector<16x32xf32> to vector<16xf32>
    %570 = vector.shape_cast %569 : vector<16xf32> to vector<16x1xf32>
    %cst_197 = arith.constant 0.0322580636 : f32
    %571 = vector.broadcast %cst_197 : f32 to vector<16x1xf32>
    %572 = arith.mulf %570, %571 : vector<16x1xf32>
    %573 = vector.broadcast %565 : vector<16x1xf32> to vector<16x32xf32>
    %574 = arith.subf %559, %573 : vector<16x32xf32>
    %575 = vector.broadcast %560 : vector<1x32xf32> to vector<16x32xf32>
    %576 = arith.mulf %575, %574 : vector<16x32xf32>
    %577 = math.sqrt %572 : vector<16x1xf32>
    %cst_198 = arith.constant 9.99999997E-7 : f32
    %578 = vector.broadcast %cst_198 : f32 to vector<16x1xf32>
    %579 = arith.addf %577, %578 : vector<16x1xf32>
    %580 = vector.broadcast %579 : vector<16x1xf32> to vector<16x32xf32>
    %581 = arith.divf %576, %580 : vector<16x32xf32>
    %582 = vector.broadcast %561 : vector<1x32xf32> to vector<16x32xf32>
    %583 = arith.addf %581, %582 : vector<16x32xf32>
    %584 = vector.extract_strided_slice %429 {offsets = [0, 0], sizes = [32, 32], strides = [1, 1]} : vector<32x128xf32> to vector<32x32xf32>
    %cst_199 = arith.constant dense<0.000000e+00> : vector<16x32xf32>
    %585 = tpu.matmul %583, %584, %cst_199 {dimension_numbers = #tpu.dot_dimension_numbers<[1], [0], [0], [1], [0, 0, 1, 1], [], []>} : vector<16x32xf32>, vector<32x32xf32>, vector<16x32xf32> -> vector<16x32xf32>
    %586 = vector.extract_strided_slice %431 {offsets = [0, 0], sizes = [1, 32], strides = [1, 1]} : vector<1x128xf32> to vector<1x32xf32>
    %587 = vector.broadcast %586 : vector<1x32xf32> to vector<16x32xf32>
    %588 = arith.addf %585, %587 : vector<16x32xf32>
    %589 = vector.extract_strided_slice %429 {offsets = [0, 32], sizes = [32, 64], strides = [1, 1]} : vector<32x128xf32> to vector<32x64xf32>
    %cst_200 = arith.constant dense<0.000000e+00> : vector<16x64xf32>
    %590 = tpu.matmul %405, %589, %cst_200 {dimension_numbers = #tpu.dot_dimension_numbers<[1], [0], [0], [1], [0, 0, 1, 1], [], []>} : vector<16x32xf32>, vector<32x64xf32>, vector<16x64xf32> -> vector<16x64xf32>
    %591 = vector.extract_strided_slice %431 {offsets = [0, 32], sizes = [1, 64], strides = [1, 1]} : vector<1x128xf32> to vector<1x64xf32>
    %592 = vector.broadcast %591 : vector<1x64xf32> to vector<16x64xf32>
    %593 = arith.addf %590, %592 : vector<16x64xf32>
    %594 = vector.extract_strided_slice %429 {offsets = [0, 96], sizes = [32, 32], strides = [1, 1]} : vector<32x128xf32> to vector<32x32xf32>
    %595 = vector.extract_strided_slice %431 {offsets = [0, 96], sizes = [1, 32], strides = [1, 1]} : vector<1x128xf32> to vector<1x32xf32>
    %596 = vector.shape_cast %588 : vector<16x32xf32> to vector<2x8x32xf32>
    %597 = vector.extract_strided_slice %593 {offsets = [0, 0], sizes = [16, 32], strides = [1, 1]} : vector<16x64xf32> to vector<16x32xf32>
    %598 = vector.shape_cast %597 : vector<16x32xf32> to vector<2x8x32xf32>
    %599 = vector.extract_strided_slice %593 {offsets = [0, 32], sizes = [16, 32], strides = [1, 1]} : vector<16x64xf32> to vector<16x32xf32>
    %600 = vector.shape_cast %599 : vector<16x32xf32> to vector<2x8x32xf32>
    %cst_201 = arith.constant 0.000000e+00 : f32
    %601 = vector.broadcast %cst_201 : f32 to vector<16x32xf32>
    %602 = vector.extract_strided_slice %596 {offsets = [0, 0, 0], sizes = [2, 8, 8], strides = [1, 1, 1]} : vector<2x8x32xf32> to vector<2x8x8xf32>
    %603 = vector.extract_strided_slice %598 {offsets = [0, 0, 0], sizes = [2, 8, 8], strides = [1, 1, 1]} : vector<2x8x32xf32> to vector<2x8x8xf32>
    "tpu.trace_start"() <{level = 10 : i32, message = "bqd,bkd->bqk"}> : () -> ()
    %cst_202 = arith.constant dense<0.000000e+00> : vector<2x8x8xf32>
    %604 = tpu.matmul %602, %603, %cst_202 {dimension_numbers = #tpu.dot_dimension_numbers<[2], [2], [1], [1], [0, 0, 0, 1, 1, 1], [0], [0]>} : vector<2x8x8xf32>, vector<2x8x8xf32>, vector<2x8x8xf32> -> vector<2x8x8xf32>
    "tpu.trace_stop"() : () -> ()
    %cst_203 = arith.constant 0.353553385 : f32
    %605 = vector.broadcast %cst_203 : f32 to vector<2x8x8xf32>
    %606 = arith.mulf %604, %605 : vector<2x8x8xf32>
    %607 = arith.addf %606, %10 : vector<2x8x8xf32>
    %cst_204 = arith.constant dense<0xFF800000> : vector<2x8xf32>
    %608 = vector.multi_reduction <maximumf>, %607, %cst_204 [2] : vector<2x8x8xf32> to vector<2x8xf32>
    %609 = vector.shape_cast %608 : vector<2x8xf32> to vector<2x8x1xf32>
    %610 = vector.broadcast %609 : vector<2x8x1xf32> to vector<2x8x8xf32>
    %611 = arith.subf %607, %610 : vector<2x8x8xf32>
    %612 = math.exp %611 : vector<2x8x8xf32>
    %cst_205 = arith.constant dense<0.000000e+00> : vector<2x8xf32>
    %613 = vector.multi_reduction <add>, %612, %cst_205 [2] : vector<2x8x8xf32> to vector<2x8xf32>
    %614 = vector.shape_cast %613 : vector<2x8xf32> to vector<2x8x1xf32>
    %615 = tpu.reciprocal %614 {approx = true} : vector<2x8x1xf32> -> vector<2x8x1xf32>
    %616 = vector.broadcast %615 : vector<2x8x1xf32> to vector<2x8x8xf32>
    %617 = arith.mulf %612, %616 : vector<2x8x8xf32>
    %618 = vector.extract_strided_slice %600 {offsets = [0, 0, 0], sizes = [2, 8, 8], strides = [1, 1, 1]} : vector<2x8x32xf32> to vector<2x8x8xf32>
    "tpu.trace_start"() <{level = 10 : i32, message = "bqk,bkd->bqd"}> : () -> ()
    %cst_206 = arith.constant dense<0.000000e+00> : vector<2x8x8xf32>
    %619 = tpu.matmul %617, %618, %cst_206 {dimension_numbers = #tpu.dot_dimension_numbers<[2], [1], [1], [2], [0, 0, 0, 1, 1, 2], [0], [0]>} : vector<2x8x8xf32>, vector<2x8x8xf32>, vector<2x8x8xf32> -> vector<2x8x8xf32>
    "tpu.trace_stop"() : () -> ()
    %620 = vector.shape_cast %619 : vector<2x8x8xf32> to vector<16x8xf32>
    %621 = vector.extract_strided_slice %594 {offsets = [0, 0], sizes = [8, 32], strides = [1, 1]} : vector<32x32xf32> to vector<8x32xf32>
    %cst_207 = arith.constant dense<0.000000e+00> : vector<16x32xf32>
    %622 = tpu.matmul %620, %621, %cst_207 {dimension_numbers = #tpu.dot_dimension_numbers<[1], [0], [0], [1], [0, 0, 1, 1], [], []>} : vector<16x8xf32>, vector<8x32xf32>, vector<16x32xf32> -> vector<16x32xf32>
    %623 = arith.addf %601, %622 : vector<16x32xf32>
    %624 = vector.extract_strided_slice %596 {offsets = [0, 0, 8], sizes = [2, 8, 8], strides = [1, 1, 1]} : vector<2x8x32xf32> to vector<2x8x8xf32>
    %625 = vector.extract_strided_slice %598 {offsets = [0, 0, 8], sizes = [2, 8, 8], strides = [1, 1, 1]} : vector<2x8x32xf32> to vector<2x8x8xf32>
    "tpu.trace_start"() <{level = 10 : i32, message = "bqd,bkd->bqk"}> : () -> ()
    %cst_208 = arith.constant dense<0.000000e+00> : vector<2x8x8xf32>
    %626 = tpu.matmul %624, %625, %cst_208 {dimension_numbers = #tpu.dot_dimension_numbers<[2], [2], [1], [1], [0, 0, 0, 1, 1, 1], [0], [0]>} : vector<2x8x8xf32>, vector<2x8x8xf32>, vector<2x8x8xf32> -> vector<2x8x8xf32>
    "tpu.trace_stop"() : () -> ()
    %cst_209 = arith.constant 0.353553385 : f32
    %627 = vector.broadcast %cst_209 : f32 to vector<2x8x8xf32>
    %628 = arith.mulf %626, %627 : vector<2x8x8xf32>
    %629 = arith.addf %628, %10 : vector<2x8x8xf32>
    %cst_210 = arith.constant dense<0xFF800000> : vector<2x8xf32>
    %630 = vector.multi_reduction <maximumf>, %629, %cst_210 [2] : vector<2x8x8xf32> to vector<2x8xf32>
    %631 = vector.shape_cast %630 : vector<2x8xf32> to vector<2x8x1xf32>
    %632 = vector.broadcast %631 : vector<2x8x1xf32> to vector<2x8x8xf32>
    %633 = arith.subf %629, %632 : vector<2x8x8xf32>
    %634 = math.exp %633 : vector<2x8x8xf32>
    %cst_211 = arith.constant dense<0.000000e+00> : vector<2x8xf32>
    %635 = vector.multi_reduction <add>, %634, %cst_211 [2] : vector<2x8x8xf32> to vector<2x8xf32>
    %636 = vector.shape_cast %635 : vector<2x8xf32> to vector<2x8x1xf32>
    %637 = tpu.reciprocal %636 {approx = true} : vector<2x8x1xf32> -> vector<2x8x1xf32>
    %638 = vector.broadcast %637 : vector<2x8x1xf32> to vector<2x8x8xf32>
    %639 = arith.mulf %634, %638 : vector<2x8x8xf32>
    %640 = vector.extract_strided_slice %600 {offsets = [0, 0, 8], sizes = [2, 8, 8], strides = [1, 1, 1]} : vector<2x8x32xf32> to vector<2x8x8xf32>
    "tpu.trace_start"() <{level = 10 : i32, message = "bqk,bkd->bqd"}> : () -> ()
    %cst_212 = arith.constant dense<0.000000e+00> : vector<2x8x8xf32>
    %641 = tpu.matmul %639, %640, %cst_212 {dimension_numbers = #tpu.dot_dimension_numbers<[2], [1], [1], [2], [0, 0, 0, 1, 1, 2], [0], [0]>} : vector<2x8x8xf32>, vector<2x8x8xf32>, vector<2x8x8xf32> -> vector<2x8x8xf32>
    "tpu.trace_stop"() : () -> ()
    %642 = vector.shape_cast %641 : vector<2x8x8xf32> to vector<16x8xf32>
    %643 = vector.extract_strided_slice %594 {offsets = [8, 0], sizes = [8, 32], strides = [1, 1]} : vector<32x32xf32> to vector<8x32xf32>
    %cst_213 = arith.constant dense<0.000000e+00> : vector<16x32xf32>
    %644 = tpu.matmul %642, %643, %cst_213 {dimension_numbers = #tpu.dot_dimension_numbers<[1], [0], [0], [1], [0, 0, 1, 1], [], []>} : vector<16x8xf32>, vector<8x32xf32>, vector<16x32xf32> -> vector<16x32xf32>
    %645 = arith.addf %623, %644 : vector<16x32xf32>
    %646 = vector.extract_strided_slice %596 {offsets = [0, 0, 16], sizes = [2, 8, 8], strides = [1, 1, 1]} : vector<2x8x32xf32> to vector<2x8x8xf32>
    %647 = vector.extract_strided_slice %598 {offsets = [0, 0, 16], sizes = [2, 8, 8], strides = [1, 1, 1]} : vector<2x8x32xf32> to vector<2x8x8xf32>
    "tpu.trace_start"() <{level = 10 : i32, message = "bqd,bkd->bqk"}> : () -> ()
    %cst_214 = arith.constant dense<0.000000e+00> : vector<2x8x8xf32>
    %648 = tpu.matmul %646, %647, %cst_214 {dimension_numbers = #tpu.dot_dimension_numbers<[2], [2], [1], [1], [0, 0, 0, 1, 1, 1], [0], [0]>} : vector<2x8x8xf32>, vector<2x8x8xf32>, vector<2x8x8xf32> -> vector<2x8x8xf32>
    "tpu.trace_stop"() : () -> ()
    %cst_215 = arith.constant 0.353553385 : f32
    %649 = vector.broadcast %cst_215 : f32 to vector<2x8x8xf32>
    %650 = arith.mulf %648, %649 : vector<2x8x8xf32>
    %651 = arith.addf %650, %10 : vector<2x8x8xf32>
    %cst_216 = arith.constant dense<0xFF800000> : vector<2x8xf32>
    %652 = vector.multi_reduction <maximumf>, %651, %cst_216 [2] : vector<2x8x8xf32> to vector<2x8xf32>
    %653 = vector.shape_cast %652 : vector<2x8xf32> to vector<2x8x1xf32>
    %654 = vector.broadcast %653 : vector<2x8x1xf32> to vector<2x8x8xf32>
    %655 = arith.subf %651, %654 : vector<2x8x8xf32>
    %656 = math.exp %655 : vector<2x8x8xf32>
    %cst_217 = arith.constant dense<0.000000e+00> : vector<2x8xf32>
    %657 = vector.multi_reduction <add>, %656, %cst_217 [2] : vector<2x8x8xf32> to vector<2x8xf32>
    %658 = vector.shape_cast %657 : vector<2x8xf32> to vector<2x8x1xf32>
    %659 = tpu.reciprocal %658 {approx = true} : vector<2x8x1xf32> -> vector<2x8x1xf32>
    %660 = vector.broadcast %659 : vector<2x8x1xf32> to vector<2x8x8xf32>
    %661 = arith.mulf %656, %660 : vector<2x8x8xf32>
    %662 = vector.extract_strided_slice %600 {offsets = [0, 0, 16], sizes = [2, 8, 8], strides = [1, 1, 1]} : vector<2x8x32xf32> to vector<2x8x8xf32>
    "tpu.trace_start"() <{level = 10 : i32, message = "bqk,bkd->bqd"}> : () -> ()
    %cst_218 = arith.constant dense<0.000000e+00> : vector<2x8x8xf32>
    %663 = tpu.matmul %661, %662, %cst_218 {dimension_numbers = #tpu.dot_dimension_numbers<[2], [1], [1], [2], [0, 0, 0, 1, 1, 2], [0], [0]>} : vector<2x8x8xf32>, vector<2x8x8xf32>, vector<2x8x8xf32> -> vector<2x8x8xf32>
    "tpu.trace_stop"() : () -> ()
    %664 = vector.shape_cast %663 : vector<2x8x8xf32> to vector<16x8xf32>
    %665 = vector.extract_strided_slice %594 {offsets = [16, 0], sizes = [8, 32], strides = [1, 1]} : vector<32x32xf32> to vector<8x32xf32>
    %cst_219 = arith.constant dense<0.000000e+00> : vector<16x32xf32>
    %666 = tpu.matmul %664, %665, %cst_219 {dimension_numbers = #tpu.dot_dimension_numbers<[1], [0], [0], [1], [0, 0, 1, 1], [], []>} : vector<16x8xf32>, vector<8x32xf32>, vector<16x32xf32> -> vector<16x32xf32>
    %667 = arith.addf %645, %666 : vector<16x32xf32>
    %668 = vector.extract_strided_slice %596 {offsets = [0, 0, 24], sizes = [2, 8, 8], strides = [1, 1, 1]} : vector<2x8x32xf32> to vector<2x8x8xf32>
    %669 = vector.extract_strided_slice %598 {offsets = [0, 0, 24], sizes = [2, 8, 8], strides = [1, 1, 1]} : vector<2x8x32xf32> to vector<2x8x8xf32>
    "tpu.trace_start"() <{level = 10 : i32, message = "bqd,bkd->bqk"}> : () -> ()
    %cst_220 = arith.constant dense<0.000000e+00> : vector<2x8x8xf32>
    %670 = tpu.matmul %668, %669, %cst_220 {dimension_numbers = #tpu.dot_dimension_numbers<[2], [2], [1], [1], [0, 0, 0, 1, 1, 1], [0], [0]>} : vector<2x8x8xf32>, vector<2x8x8xf32>, vector<2x8x8xf32> -> vector<2x8x8xf32>
    "tpu.trace_stop"() : () -> ()
    %cst_221 = arith.constant 0.353553385 : f32
    %671 = vector.broadcast %cst_221 : f32 to vector<2x8x8xf32>
    %672 = arith.mulf %670, %671 : vector<2x8x8xf32>
    %673 = arith.addf %672, %10 : vector<2x8x8xf32>
    %cst_222 = arith.constant dense<0xFF800000> : vector<2x8xf32>
    %674 = vector.multi_reduction <maximumf>, %673, %cst_222 [2] : vector<2x8x8xf32> to vector<2x8xf32>
    %675 = vector.shape_cast %674 : vector<2x8xf32> to vector<2x8x1xf32>
    %676 = vector.broadcast %675 : vector<2x8x1xf32> to vector<2x8x8xf32>
    %677 = arith.subf %673, %676 : vector<2x8x8xf32>
    %678 = math.exp %677 : vector<2x8x8xf32>
    %cst_223 = arith.constant dense<0.000000e+00> : vector<2x8xf32>
    %679 = vector.multi_reduction <add>, %678, %cst_223 [2] : vector<2x8x8xf32> to vector<2x8xf32>
    %680 = vector.shape_cast %679 : vector<2x8xf32> to vector<2x8x1xf32>
    %681 = tpu.reciprocal %680 {approx = true} : vector<2x8x1xf32> -> vector<2x8x1xf32>
    %682 = vector.broadcast %681 : vector<2x8x1xf32> to vector<2x8x8xf32>
    %683 = arith.mulf %678, %682 : vector<2x8x8xf32>
    %684 = vector.extract_strided_slice %600 {offsets = [0, 0, 24], sizes = [2, 8, 8], strides = [1, 1, 1]} : vector<2x8x32xf32> to vector<2x8x8xf32>
    "tpu.trace_start"() <{level = 10 : i32, message = "bqk,bkd->bqd"}> : () -> ()
    %cst_224 = arith.constant dense<0.000000e+00> : vector<2x8x8xf32>
    %685 = tpu.matmul %683, %684, %cst_224 {dimension_numbers = #tpu.dot_dimension_numbers<[2], [1], [1], [2], [0, 0, 0, 1, 1, 2], [0], [0]>} : vector<2x8x8xf32>, vector<2x8x8xf32>, vector<2x8x8xf32> -> vector<2x8x8xf32>
    "tpu.trace_stop"() : () -> ()
    %686 = vector.shape_cast %685 : vector<2x8x8xf32> to vector<16x8xf32>
    %687 = vector.extract_strided_slice %594 {offsets = [24, 0], sizes = [8, 32], strides = [1, 1]} : vector<32x32xf32> to vector<8x32xf32>
    %cst_225 = arith.constant dense<0.000000e+00> : vector<16x32xf32>
    %688 = tpu.matmul %686, %687, %cst_225 {dimension_numbers = #tpu.dot_dimension_numbers<[1], [0], [0], [1], [0, 0, 1, 1], [], []>} : vector<16x8xf32>, vector<8x32xf32>, vector<16x32xf32> -> vector<16x32xf32>
    %689 = arith.addf %667, %688 : vector<16x32xf32>
    %690 = vector.broadcast %595 : vector<1x32xf32> to vector<16x32xf32>
    %691 = arith.addf %689, %690 : vector<16x32xf32>
    %692 = arith.addf %559, %691 : vector<16x32xf32>
    %693 = vector.extract_strided_slice %423 {offsets = [4, 0], sizes = [1, 32], strides = [1, 1]} : vector<6x32xf32> to vector<1x32xf32>
    %694 = vector.extract_strided_slice %423 {offsets = [5, 0], sizes = [1, 32], strides = [1, 1]} : vector<6x32xf32> to vector<1x32xf32>
    %cst_226 = arith.constant dense<0.000000e+00> : vector<16xf32>
    %695 = vector.multi_reduction <add>, %692, %cst_226 [1] : vector<16x32xf32> to vector<16xf32>
    %696 = vector.shape_cast %695 : vector<16xf32> to vector<16x1xf32>
    %cst_227 = arith.constant 3.200000e+01 : f32
    %697 = vector.broadcast %cst_227 : f32 to vector<16x1xf32>
    %698 = arith.divf %696, %697 : vector<16x1xf32>
    %699 = vector.broadcast %698 : vector<16x1xf32> to vector<16x32xf32>
    %700 = arith.subf %692, %699 : vector<16x32xf32>
    %701 = arith.mulf %700, %700 : vector<16x32xf32>
    %cst_228 = arith.constant dense<0.000000e+00> : vector<16xf32>
    %702 = vector.multi_reduction <add>, %701, %cst_228 [1] : vector<16x32xf32> to vector<16xf32>
    %703 = vector.shape_cast %702 : vector<16xf32> to vector<16x1xf32>
    %cst_229 = arith.constant 0.0322580636 : f32
    %704 = vector.broadcast %cst_229 : f32 to vector<16x1xf32>
    %705 = arith.mulf %703, %704 : vector<16x1xf32>
    %706 = vector.broadcast %698 : vector<16x1xf32> to vector<16x32xf32>
    %707 = arith.subf %692, %706 : vector<16x32xf32>
    %708 = vector.broadcast %693 : vector<1x32xf32> to vector<16x32xf32>
    %709 = arith.mulf %708, %707 : vector<16x32xf32>
    %710 = math.sqrt %705 : vector<16x1xf32>
    %cst_230 = arith.constant 9.99999997E-7 : f32
    %711 = vector.broadcast %cst_230 : f32 to vector<16x1xf32>
    %712 = arith.addf %710, %711 : vector<16x1xf32>
    %713 = vector.broadcast %712 : vector<16x1xf32> to vector<16x32xf32>
    %714 = arith.divf %709, %713 : vector<16x32xf32>
    %715 = vector.broadcast %694 : vector<1x32xf32> to vector<16x32xf32>
    %716 = arith.addf %714, %715 : vector<16x32xf32>
    %c0_231 = arith.constant 0 : index
    %c0_232 = arith.constant 0 : index
    %c0_233 = arith.constant 0 : index
    %717 = vector.load %arg20[%c0_231, %c0_232, %c0_233] : memref<2x1x96xf32, #tpu.memory_space<vmem>>, vector<1x1x96xf32>
    %718 = vector.shape_cast %717 : vector<1x1x96xf32> to vector<1x96xf32>
    %c0_234 = arith.constant 0 : index
    %c0_235 = arith.constant 0 : index
    %c0_236 = arith.constant 0 : index
    %719 = vector.load %arg18[%c0_234, %c0_235, %c0_236] : memref<2x32x64xf32, #tpu.memory_space<vmem>>, vector<1x32x64xf32>
    %720 = vector.shape_cast %719 : vector<1x32x64xf32> to vector<32x64xf32>
    %cst_237 = arith.constant dense<0.000000e+00> : vector<16x64xf32>
    %721 = tpu.matmul %716, %720, %cst_237 {dimension_numbers = #tpu.dot_dimension_numbers<[1], [0], [0], [1], [0, 0, 1, 1], [], []>} : vector<16x32xf32>, vector<32x64xf32>, vector<16x64xf32> -> vector<16x64xf32>
    %722 = vector.extract_strided_slice %718 {offsets = [0, 0], sizes = [1, 64], strides = [1, 1]} : vector<1x96xf32> to vector<1x64xf32>
    %723 = vector.broadcast %722 : vector<1x64xf32> to vector<16x64xf32>
    %724 = arith.addf %721, %723 : vector<16x64xf32>
    %cst_238 = arith.constant 0.000000e+00 : f32
    %725 = vector.broadcast %cst_238 : f32 to vector<16x64xf32>
    %726 = arith.maximumf %724, %725 : vector<16x64xf32>
    %c0_239 = arith.constant 0 : index
    %c0_240 = arith.constant 0 : index
    %c0_241 = arith.constant 0 : index
    %727 = vector.load %arg19[%c0_239, %c0_240, %c0_241] : memref<2x64x32xf32, #tpu.memory_space<vmem>>, vector<1x64x32xf32>
    %728 = vector.shape_cast %727 : vector<1x64x32xf32> to vector<64x32xf32>
    %cst_242 = arith.constant dense<0.000000e+00> : vector<16x32xf32>
    %729 = tpu.matmul %726, %728, %cst_242 {dimension_numbers = #tpu.dot_dimension_numbers<[1], [0], [0], [1], [0, 0, 1, 1], [], []>} : vector<16x64xf32>, vector<64x32xf32>, vector<16x32xf32> -> vector<16x32xf32>
    %730 = arith.addf %692, %729 : vector<16x32xf32>
    %731 = vector.extract_strided_slice %718 {offsets = [0, 64], sizes = [1, 32], strides = [1, 1]} : vector<1x96xf32> to vector<1x32xf32>
    %732 = vector.broadcast %731 : vector<1x32xf32> to vector<16x32xf32>
    %733 = arith.addf %730, %732 : vector<16x32xf32>
    %c1_243 = arith.constant 1 : index
    %c0_244 = arith.constant 0 : index
    %c0_245 = arith.constant 0 : index
    %734 = vector.load %arg21[%c1_243, %c0_244, %c0_245] : memref<2x6x32xf32, #tpu.memory_space<vmem>>, vector<1x6x32xf32>
    %735 = vector.shape_cast %734 : vector<1x6x32xf32> to vector<6x32xf32>
    %c1_246 = arith.constant 1 : index
    %c0_247 = arith.constant 0 : index
    %c0_248 = arith.constant 0 : index
    %736 = vector.load %arg14[%c1_246, %c0_247, %c0_248] : memref<2x32x128xf32, #tpu.memory_space<vmem>>, vector<1x32x128xf32>
    %737 = vector.shape_cast %736 : vector<1x32x128xf32> to vector<32x128xf32>
    %c1_249 = arith.constant 1 : index
    %c0_250 = arith.constant 0 : index
    %c0_251 = arith.constant 0 : index
    %738 = vector.load %arg15[%c1_249, %c0_250, %c0_251] : memref<2x1x128xf32, #tpu.memory_space<vmem>>, vector<1x1x128xf32>
    %739 = vector.shape_cast %738 : vector<1x1x128xf32> to vector<1x128xf32>
    %c1_252 = arith.constant 1 : index
    %c0_253 = arith.constant 0 : index
    %c0_254 = arith.constant 0 : index
    %740 = vector.load %arg16[%c1_252, %c0_253, %c0_254] : memref<2x32x128xf32, #tpu.memory_space<vmem>>, vector<1x32x128xf32>
    %741 = vector.shape_cast %740 : vector<1x32x128xf32> to vector<32x128xf32>
    %c1_255 = arith.constant 1 : index
    %c0_256 = arith.constant 0 : index
    %c0_257 = arith.constant 0 : index
    %742 = vector.load %arg17[%c1_255, %c0_256, %c0_257] : memref<2x1x128xf32, #tpu.memory_space<vmem>>, vector<1x1x128xf32>
    %743 = vector.shape_cast %742 : vector<1x1x128xf32> to vector<1x128xf32>
    %744 = vector.extract_strided_slice %735 {offsets = [0, 0], sizes = [1, 32], strides = [1, 1]} : vector<6x32xf32> to vector<1x32xf32>
    %745 = vector.extract_strided_slice %735 {offsets = [1, 0], sizes = [1, 32], strides = [1, 1]} : vector<6x32xf32> to vector<1x32xf32>
    %cst_258 = arith.constant dense<0.000000e+00> : vector<16xf32>
    %746 = vector.multi_reduction <add>, %733, %cst_258 [1] : vector<16x32xf32> to vector<16xf32>
    %747 = vector.shape_cast %746 : vector<16xf32> to vector<16x1xf32>
    %cst_259 = arith.constant 3.200000e+01 : f32
    %748 = vector.broadcast %cst_259 : f32 to vector<16x1xf32>
    %749 = arith.divf %747, %748 : vector<16x1xf32>
    %750 = vector.broadcast %749 : vector<16x1xf32> to vector<16x32xf32>
    %751 = arith.subf %733, %750 : vector<16x32xf32>
    %752 = arith.mulf %751, %751 : vector<16x32xf32>
    %cst_260 = arith.constant dense<0.000000e+00> : vector<16xf32>
    %753 = vector.multi_reduction <add>, %752, %cst_260 [1] : vector<16x32xf32> to vector<16xf32>
    %754 = vector.shape_cast %753 : vector<16xf32> to vector<16x1xf32>
    %cst_261 = arith.constant 0.0322580636 : f32
    %755 = vector.broadcast %cst_261 : f32 to vector<16x1xf32>
    %756 = arith.mulf %754, %755 : vector<16x1xf32>
    %757 = vector.broadcast %749 : vector<16x1xf32> to vector<16x32xf32>
    %758 = arith.subf %733, %757 : vector<16x32xf32>
    %759 = vector.broadcast %744 : vector<1x32xf32> to vector<16x32xf32>
    %760 = arith.mulf %759, %758 : vector<16x32xf32>
    %761 = math.sqrt %756 : vector<16x1xf32>
    %cst_262 = arith.constant 9.99999997E-7 : f32
    %762 = vector.broadcast %cst_262 : f32 to vector<16x1xf32>
    %763 = arith.addf %761, %762 : vector<16x1xf32>
    %764 = vector.broadcast %763 : vector<16x1xf32> to vector<16x32xf32>
    %765 = arith.divf %760, %764 : vector<16x32xf32>
    %766 = vector.broadcast %745 : vector<1x32xf32> to vector<16x32xf32>
    %767 = arith.addf %765, %766 : vector<16x32xf32>
    %cst_263 = arith.constant dense<0.000000e+00> : vector<16x128xf32>
    %768 = tpu.matmul %767, %737, %cst_263 {dimension_numbers = #tpu.dot_dimension_numbers<[1], [0], [0], [1], [0, 0, 1, 1], [], []>} : vector<16x32xf32>, vector<32x128xf32>, vector<16x128xf32> -> vector<16x128xf32>
    %769 = vector.broadcast %739 : vector<1x128xf32> to vector<16x128xf32>
    %770 = arith.addf %768, %769 : vector<16x128xf32>
    %771 = vector.extract_strided_slice %770 {offsets = [0, 0], sizes = [16, 32], strides = [1, 1]} : vector<16x128xf32> to vector<16x32xf32>
    %772 = vector.extract_strided_slice %770 {offsets = [0, 32], sizes = [16, 64], strides = [1, 1]} : vector<16x128xf32> to vector<16x64xf32>
    %773 = vector.extract_strided_slice %737 {offsets = [0, 96], sizes = [32, 32], strides = [1, 1]} : vector<32x128xf32> to vector<32x32xf32>
    %774 = vector.extract_strided_slice %739 {offsets = [0, 96], sizes = [1, 32], strides = [1, 1]} : vector<1x128xf32> to vector<1x32xf32>
    %775 = vector.shape_cast %771 : vector<16x32xf32> to vector<2x8x32xf32>
    %776 = vector.extract_strided_slice %772 {offsets = [0, 0], sizes = [16, 32], strides = [1, 1]} : vector<16x64xf32> to vector<16x32xf32>
    %777 = vector.shape_cast %776 : vector<16x32xf32> to vector<2x8x32xf32>
    %778 = vector.extract_strided_slice %772 {offsets = [0, 32], sizes = [16, 32], strides = [1, 1]} : vector<16x64xf32> to vector<16x32xf32>
    %779 = vector.shape_cast %778 : vector<16x32xf32> to vector<2x8x32xf32>
    %cst_264 = arith.constant 0.000000e+00 : f32
    %780 = vector.broadcast %cst_264 : f32 to vector<16x32xf32>
    %781 = vector.extract_strided_slice %775 {offsets = [0, 0, 0], sizes = [2, 8, 8], strides = [1, 1, 1]} : vector<2x8x32xf32> to vector<2x8x8xf32>
    %782 = vector.extract_strided_slice %777 {offsets = [0, 0, 0], sizes = [2, 8, 8], strides = [1, 1, 1]} : vector<2x8x32xf32> to vector<2x8x8xf32>
    "tpu.trace_start"() <{level = 10 : i32, message = "bqd,bkd->bqk"}> : () -> ()
    %cst_265 = arith.constant dense<0.000000e+00> : vector<2x8x8xf32>
    %783 = tpu.matmul %781, %782, %cst_265 {dimension_numbers = #tpu.dot_dimension_numbers<[2], [2], [1], [1], [0, 0, 0, 1, 1, 1], [0], [0]>} : vector<2x8x8xf32>, vector<2x8x8xf32>, vector<2x8x8xf32> -> vector<2x8x8xf32>
    "tpu.trace_stop"() : () -> ()
    %cst_266 = arith.constant 0.353553385 : f32
    %784 = vector.broadcast %cst_266 : f32 to vector<2x8x8xf32>
    %785 = arith.mulf %783, %784 : vector<2x8x8xf32>
    %786 = arith.addf %785, %15 : vector<2x8x8xf32>
    %cst_267 = arith.constant dense<0xFF800000> : vector<2x8xf32>
    %787 = vector.multi_reduction <maximumf>, %786, %cst_267 [2] : vector<2x8x8xf32> to vector<2x8xf32>
    %788 = vector.shape_cast %787 : vector<2x8xf32> to vector<2x8x1xf32>
    %789 = vector.broadcast %788 : vector<2x8x1xf32> to vector<2x8x8xf32>
    %790 = arith.subf %786, %789 : vector<2x8x8xf32>
    %791 = math.exp %790 : vector<2x8x8xf32>
    %cst_268 = arith.constant dense<0.000000e+00> : vector<2x8xf32>
    %792 = vector.multi_reduction <add>, %791, %cst_268 [2] : vector<2x8x8xf32> to vector<2x8xf32>
    %793 = vector.shape_cast %792 : vector<2x8xf32> to vector<2x8x1xf32>
    %794 = tpu.reciprocal %793 {approx = true} : vector<2x8x1xf32> -> vector<2x8x1xf32>
    %795 = vector.broadcast %794 : vector<2x8x1xf32> to vector<2x8x8xf32>
    %796 = arith.mulf %791, %795 : vector<2x8x8xf32>
    %797 = vector.extract_strided_slice %779 {offsets = [0, 0, 0], sizes = [2, 8, 8], strides = [1, 1, 1]} : vector<2x8x32xf32> to vector<2x8x8xf32>
    "tpu.trace_start"() <{level = 10 : i32, message = "bqk,bkd->bqd"}> : () -> ()
    %cst_269 = arith.constant dense<0.000000e+00> : vector<2x8x8xf32>
    %798 = tpu.matmul %796, %797, %cst_269 {dimension_numbers = #tpu.dot_dimension_numbers<[2], [1], [1], [2], [0, 0, 0, 1, 1, 2], [0], [0]>} : vector<2x8x8xf32>, vector<2x8x8xf32>, vector<2x8x8xf32> -> vector<2x8x8xf32>
    "tpu.trace_stop"() : () -> ()
    %799 = vector.shape_cast %798 : vector<2x8x8xf32> to vector<16x8xf32>
    %800 = vector.extract_strided_slice %773 {offsets = [0, 0], sizes = [8, 32], strides = [1, 1]} : vector<32x32xf32> to vector<8x32xf32>
    %cst_270 = arith.constant dense<0.000000e+00> : vector<16x32xf32>
    %801 = tpu.matmul %799, %800, %cst_270 {dimension_numbers = #tpu.dot_dimension_numbers<[1], [0], [0], [1], [0, 0, 1, 1], [], []>} : vector<16x8xf32>, vector<8x32xf32>, vector<16x32xf32> -> vector<16x32xf32>
    %802 = arith.addf %780, %801 : vector<16x32xf32>
    %803 = vector.extract_strided_slice %775 {offsets = [0, 0, 8], sizes = [2, 8, 8], strides = [1, 1, 1]} : vector<2x8x32xf32> to vector<2x8x8xf32>
    %804 = vector.extract_strided_slice %777 {offsets = [0, 0, 8], sizes = [2, 8, 8], strides = [1, 1, 1]} : vector<2x8x32xf32> to vector<2x8x8xf32>
    "tpu.trace_start"() <{level = 10 : i32, message = "bqd,bkd->bqk"}> : () -> ()
    %cst_271 = arith.constant dense<0.000000e+00> : vector<2x8x8xf32>
    %805 = tpu.matmul %803, %804, %cst_271 {dimension_numbers = #tpu.dot_dimension_numbers<[2], [2], [1], [1], [0, 0, 0, 1, 1, 1], [0], [0]>} : vector<2x8x8xf32>, vector<2x8x8xf32>, vector<2x8x8xf32> -> vector<2x8x8xf32>
    "tpu.trace_stop"() : () -> ()
    %cst_272 = arith.constant 0.353553385 : f32
    %806 = vector.broadcast %cst_272 : f32 to vector<2x8x8xf32>
    %807 = arith.mulf %805, %806 : vector<2x8x8xf32>
    %808 = arith.addf %807, %15 : vector<2x8x8xf32>
    %cst_273 = arith.constant dense<0xFF800000> : vector<2x8xf32>
    %809 = vector.multi_reduction <maximumf>, %808, %cst_273 [2] : vector<2x8x8xf32> to vector<2x8xf32>
    %810 = vector.shape_cast %809 : vector<2x8xf32> to vector<2x8x1xf32>
    %811 = vector.broadcast %810 : vector<2x8x1xf32> to vector<2x8x8xf32>
    %812 = arith.subf %808, %811 : vector<2x8x8xf32>
    %813 = math.exp %812 : vector<2x8x8xf32>
    %cst_274 = arith.constant dense<0.000000e+00> : vector<2x8xf32>
    %814 = vector.multi_reduction <add>, %813, %cst_274 [2] : vector<2x8x8xf32> to vector<2x8xf32>
    %815 = vector.shape_cast %814 : vector<2x8xf32> to vector<2x8x1xf32>
    %816 = tpu.reciprocal %815 {approx = true} : vector<2x8x1xf32> -> vector<2x8x1xf32>
    %817 = vector.broadcast %816 : vector<2x8x1xf32> to vector<2x8x8xf32>
    %818 = arith.mulf %813, %817 : vector<2x8x8xf32>
    %819 = vector.extract_strided_slice %779 {offsets = [0, 0, 8], sizes = [2, 8, 8], strides = [1, 1, 1]} : vector<2x8x32xf32> to vector<2x8x8xf32>
    "tpu.trace_start"() <{level = 10 : i32, message = "bqk,bkd->bqd"}> : () -> ()
    %cst_275 = arith.constant dense<0.000000e+00> : vector<2x8x8xf32>
    %820 = tpu.matmul %818, %819, %cst_275 {dimension_numbers = #tpu.dot_dimension_numbers<[2], [1], [1], [2], [0, 0, 0, 1, 1, 2], [0], [0]>} : vector<2x8x8xf32>, vector<2x8x8xf32>, vector<2x8x8xf32> -> vector<2x8x8xf32>
    "tpu.trace_stop"() : () -> ()
    %821 = vector.shape_cast %820 : vector<2x8x8xf32> to vector<16x8xf32>
    %822 = vector.extract_strided_slice %773 {offsets = [8, 0], sizes = [8, 32], strides = [1, 1]} : vector<32x32xf32> to vector<8x32xf32>
    %cst_276 = arith.constant dense<0.000000e+00> : vector<16x32xf32>
    %823 = tpu.matmul %821, %822, %cst_276 {dimension_numbers = #tpu.dot_dimension_numbers<[1], [0], [0], [1], [0, 0, 1, 1], [], []>} : vector<16x8xf32>, vector<8x32xf32>, vector<16x32xf32> -> vector<16x32xf32>
    %824 = arith.addf %802, %823 : vector<16x32xf32>
    %825 = vector.extract_strided_slice %775 {offsets = [0, 0, 16], sizes = [2, 8, 8], strides = [1, 1, 1]} : vector<2x8x32xf32> to vector<2x8x8xf32>
    %826 = vector.extract_strided_slice %777 {offsets = [0, 0, 16], sizes = [2, 8, 8], strides = [1, 1, 1]} : vector<2x8x32xf32> to vector<2x8x8xf32>
    "tpu.trace_start"() <{level = 10 : i32, message = "bqd,bkd->bqk"}> : () -> ()
    %cst_277 = arith.constant dense<0.000000e+00> : vector<2x8x8xf32>
    %827 = tpu.matmul %825, %826, %cst_277 {dimension_numbers = #tpu.dot_dimension_numbers<[2], [2], [1], [1], [0, 0, 0, 1, 1, 1], [0], [0]>} : vector<2x8x8xf32>, vector<2x8x8xf32>, vector<2x8x8xf32> -> vector<2x8x8xf32>
    "tpu.trace_stop"() : () -> ()
    %cst_278 = arith.constant 0.353553385 : f32
    %828 = vector.broadcast %cst_278 : f32 to vector<2x8x8xf32>
    %829 = arith.mulf %827, %828 : vector<2x8x8xf32>
    %830 = arith.addf %829, %15 : vector<2x8x8xf32>
    %cst_279 = arith.constant dense<0xFF800000> : vector<2x8xf32>
    %831 = vector.multi_reduction <maximumf>, %830, %cst_279 [2] : vector<2x8x8xf32> to vector<2x8xf32>
    %832 = vector.shape_cast %831 : vector<2x8xf32> to vector<2x8x1xf32>
    %833 = vector.broadcast %832 : vector<2x8x1xf32> to vector<2x8x8xf32>
    %834 = arith.subf %830, %833 : vector<2x8x8xf32>
    %835 = math.exp %834 : vector<2x8x8xf32>
    %cst_280 = arith.constant dense<0.000000e+00> : vector<2x8xf32>
    %836 = vector.multi_reduction <add>, %835, %cst_280 [2] : vector<2x8x8xf32> to vector<2x8xf32>
    %837 = vector.shape_cast %836 : vector<2x8xf32> to vector<2x8x1xf32>
    %838 = tpu.reciprocal %837 {approx = true} : vector<2x8x1xf32> -> vector<2x8x1xf32>
    %839 = vector.broadcast %838 : vector<2x8x1xf32> to vector<2x8x8xf32>
    %840 = arith.mulf %835, %839 : vector<2x8x8xf32>
    %841 = vector.extract_strided_slice %779 {offsets = [0, 0, 16], sizes = [2, 8, 8], strides = [1, 1, 1]} : vector<2x8x32xf32> to vector<2x8x8xf32>
    "tpu.trace_start"() <{level = 10 : i32, message = "bqk,bkd->bqd"}> : () -> ()
    %cst_281 = arith.constant dense<0.000000e+00> : vector<2x8x8xf32>
    %842 = tpu.matmul %840, %841, %cst_281 {dimension_numbers = #tpu.dot_dimension_numbers<[2], [1], [1], [2], [0, 0, 0, 1, 1, 2], [0], [0]>} : vector<2x8x8xf32>, vector<2x8x8xf32>, vector<2x8x8xf32> -> vector<2x8x8xf32>
    "tpu.trace_stop"() : () -> ()
    %843 = vector.shape_cast %842 : vector<2x8x8xf32> to vector<16x8xf32>
    %844 = vector.extract_strided_slice %773 {offsets = [16, 0], sizes = [8, 32], strides = [1, 1]} : vector<32x32xf32> to vector<8x32xf32>
    %cst_282 = arith.constant dense<0.000000e+00> : vector<16x32xf32>
    %845 = tpu.matmul %843, %844, %cst_282 {dimension_numbers = #tpu.dot_dimension_numbers<[1], [0], [0], [1], [0, 0, 1, 1], [], []>} : vector<16x8xf32>, vector<8x32xf32>, vector<16x32xf32> -> vector<16x32xf32>
    %846 = arith.addf %824, %845 : vector<16x32xf32>
    %847 = vector.extract_strided_slice %775 {offsets = [0, 0, 24], sizes = [2, 8, 8], strides = [1, 1, 1]} : vector<2x8x32xf32> to vector<2x8x8xf32>
    %848 = vector.extract_strided_slice %777 {offsets = [0, 0, 24], sizes = [2, 8, 8], strides = [1, 1, 1]} : vector<2x8x32xf32> to vector<2x8x8xf32>
    "tpu.trace_start"() <{level = 10 : i32, message = "bqd,bkd->bqk"}> : () -> ()
    %cst_283 = arith.constant dense<0.000000e+00> : vector<2x8x8xf32>
    %849 = tpu.matmul %847, %848, %cst_283 {dimension_numbers = #tpu.dot_dimension_numbers<[2], [2], [1], [1], [0, 0, 0, 1, 1, 1], [0], [0]>} : vector<2x8x8xf32>, vector<2x8x8xf32>, vector<2x8x8xf32> -> vector<2x8x8xf32>
    "tpu.trace_stop"() : () -> ()
    %cst_284 = arith.constant 0.353553385 : f32
    %850 = vector.broadcast %cst_284 : f32 to vector<2x8x8xf32>
    %851 = arith.mulf %849, %850 : vector<2x8x8xf32>
    %852 = arith.addf %851, %15 : vector<2x8x8xf32>
    %cst_285 = arith.constant dense<0xFF800000> : vector<2x8xf32>
    %853 = vector.multi_reduction <maximumf>, %852, %cst_285 [2] : vector<2x8x8xf32> to vector<2x8xf32>
    %854 = vector.shape_cast %853 : vector<2x8xf32> to vector<2x8x1xf32>
    %855 = vector.broadcast %854 : vector<2x8x1xf32> to vector<2x8x8xf32>
    %856 = arith.subf %852, %855 : vector<2x8x8xf32>
    %857 = math.exp %856 : vector<2x8x8xf32>
    %cst_286 = arith.constant dense<0.000000e+00> : vector<2x8xf32>
    %858 = vector.multi_reduction <add>, %857, %cst_286 [2] : vector<2x8x8xf32> to vector<2x8xf32>
    %859 = vector.shape_cast %858 : vector<2x8xf32> to vector<2x8x1xf32>
    %860 = tpu.reciprocal %859 {approx = true} : vector<2x8x1xf32> -> vector<2x8x1xf32>
    %861 = vector.broadcast %860 : vector<2x8x1xf32> to vector<2x8x8xf32>
    %862 = arith.mulf %857, %861 : vector<2x8x8xf32>
    %863 = vector.extract_strided_slice %779 {offsets = [0, 0, 24], sizes = [2, 8, 8], strides = [1, 1, 1]} : vector<2x8x32xf32> to vector<2x8x8xf32>
    "tpu.trace_start"() <{level = 10 : i32, message = "bqk,bkd->bqd"}> : () -> ()
    %cst_287 = arith.constant dense<0.000000e+00> : vector<2x8x8xf32>
    %864 = tpu.matmul %862, %863, %cst_287 {dimension_numbers = #tpu.dot_dimension_numbers<[2], [1], [1], [2], [0, 0, 0, 1, 1, 2], [0], [0]>} : vector<2x8x8xf32>, vector<2x8x8xf32>, vector<2x8x8xf32> -> vector<2x8x8xf32>
    "tpu.trace_stop"() : () -> ()
    %865 = vector.shape_cast %864 : vector<2x8x8xf32> to vector<16x8xf32>
    %866 = vector.extract_strided_slice %773 {offsets = [24, 0], sizes = [8, 32], strides = [1, 1]} : vector<32x32xf32> to vector<8x32xf32>
    %cst_288 = arith.constant dense<0.000000e+00> : vector<16x32xf32>
    %867 = tpu.matmul %865, %866, %cst_288 {dimension_numbers = #tpu.dot_dimension_numbers<[1], [0], [0], [1], [0, 0, 1, 1], [], []>} : vector<16x8xf32>, vector<8x32xf32>, vector<16x32xf32> -> vector<16x32xf32>
    %868 = arith.addf %846, %867 : vector<16x32xf32>
    %869 = vector.broadcast %774 : vector<1x32xf32> to vector<16x32xf32>
    %870 = arith.addf %868, %869 : vector<16x32xf32>
    %871 = arith.addf %733, %870 : vector<16x32xf32>
    %872 = vector.extract_strided_slice %735 {offsets = [2, 0], sizes = [1, 32], strides = [1, 1]} : vector<6x32xf32> to vector<1x32xf32>
    %873 = vector.extract_strided_slice %735 {offsets = [3, 0], sizes = [1, 32], strides = [1, 1]} : vector<6x32xf32> to vector<1x32xf32>
    %cst_289 = arith.constant dense<0.000000e+00> : vector<16xf32>
    %874 = vector.multi_reduction <add>, %871, %cst_289 [1] : vector<16x32xf32> to vector<16xf32>
    %875 = vector.shape_cast %874 : vector<16xf32> to vector<16x1xf32>
    %cst_290 = arith.constant 3.200000e+01 : f32
    %876 = vector.broadcast %cst_290 : f32 to vector<16x1xf32>
    %877 = arith.divf %875, %876 : vector<16x1xf32>
    %878 = vector.broadcast %877 : vector<16x1xf32> to vector<16x32xf32>
    %879 = arith.subf %871, %878 : vector<16x32xf32>
    %880 = arith.mulf %879, %879 : vector<16x32xf32>
    %cst_291 = arith.constant dense<0.000000e+00> : vector<16xf32>
    %881 = vector.multi_reduction <add>, %880, %cst_291 [1] : vector<16x32xf32> to vector<16xf32>
    %882 = vector.shape_cast %881 : vector<16xf32> to vector<16x1xf32>
    %cst_292 = arith.constant 0.0322580636 : f32
    %883 = vector.broadcast %cst_292 : f32 to vector<16x1xf32>
    %884 = arith.mulf %882, %883 : vector<16x1xf32>
    %885 = vector.broadcast %877 : vector<16x1xf32> to vector<16x32xf32>
    %886 = arith.subf %871, %885 : vector<16x32xf32>
    %887 = vector.broadcast %872 : vector<1x32xf32> to vector<16x32xf32>
    %888 = arith.mulf %887, %886 : vector<16x32xf32>
    %889 = math.sqrt %884 : vector<16x1xf32>
    %cst_293 = arith.constant 9.99999997E-7 : f32
    %890 = vector.broadcast %cst_293 : f32 to vector<16x1xf32>
    %891 = arith.addf %889, %890 : vector<16x1xf32>
    %892 = vector.broadcast %891 : vector<16x1xf32> to vector<16x32xf32>
    %893 = arith.divf %888, %892 : vector<16x32xf32>
    %894 = vector.broadcast %873 : vector<1x32xf32> to vector<16x32xf32>
    %895 = arith.addf %893, %894 : vector<16x32xf32>
    %896 = vector.extract_strided_slice %741 {offsets = [0, 0], sizes = [32, 32], strides = [1, 1]} : vector<32x128xf32> to vector<32x32xf32>
    %cst_294 = arith.constant dense<0.000000e+00> : vector<16x32xf32>
    %897 = tpu.matmul %895, %896, %cst_294 {dimension_numbers = #tpu.dot_dimension_numbers<[1], [0], [0], [1], [0, 0, 1, 1], [], []>} : vector<16x32xf32>, vector<32x32xf32>, vector<16x32xf32> -> vector<16x32xf32>
    %898 = vector.extract_strided_slice %743 {offsets = [0, 0], sizes = [1, 32], strides = [1, 1]} : vector<1x128xf32> to vector<1x32xf32>
    %899 = vector.broadcast %898 : vector<1x32xf32> to vector<16x32xf32>
    %900 = arith.addf %897, %899 : vector<16x32xf32>
    %901 = vector.extract_strided_slice %741 {offsets = [0, 32], sizes = [32, 64], strides = [1, 1]} : vector<32x128xf32> to vector<32x64xf32>
    %cst_295 = arith.constant dense<0.000000e+00> : vector<16x64xf32>
    %902 = tpu.matmul %405, %901, %cst_295 {dimension_numbers = #tpu.dot_dimension_numbers<[1], [0], [0], [1], [0, 0, 1, 1], [], []>} : vector<16x32xf32>, vector<32x64xf32>, vector<16x64xf32> -> vector<16x64xf32>
    %903 = vector.extract_strided_slice %743 {offsets = [0, 32], sizes = [1, 64], strides = [1, 1]} : vector<1x128xf32> to vector<1x64xf32>
    %904 = vector.broadcast %903 : vector<1x64xf32> to vector<16x64xf32>
    %905 = arith.addf %902, %904 : vector<16x64xf32>
    %906 = vector.extract_strided_slice %741 {offsets = [0, 96], sizes = [32, 32], strides = [1, 1]} : vector<32x128xf32> to vector<32x32xf32>
    %907 = vector.extract_strided_slice %743 {offsets = [0, 96], sizes = [1, 32], strides = [1, 1]} : vector<1x128xf32> to vector<1x32xf32>
    %908 = vector.shape_cast %900 : vector<16x32xf32> to vector<2x8x32xf32>
    %909 = vector.extract_strided_slice %905 {offsets = [0, 0], sizes = [16, 32], strides = [1, 1]} : vector<16x64xf32> to vector<16x32xf32>
    %910 = vector.shape_cast %909 : vector<16x32xf32> to vector<2x8x32xf32>
    %911 = vector.extract_strided_slice %905 {offsets = [0, 32], sizes = [16, 32], strides = [1, 1]} : vector<16x64xf32> to vector<16x32xf32>
    %912 = vector.shape_cast %911 : vector<16x32xf32> to vector<2x8x32xf32>
    %cst_296 = arith.constant 0.000000e+00 : f32
    %913 = vector.broadcast %cst_296 : f32 to vector<16x32xf32>
    %914 = vector.extract_strided_slice %908 {offsets = [0, 0, 0], sizes = [2, 8, 8], strides = [1, 1, 1]} : vector<2x8x32xf32> to vector<2x8x8xf32>
    %915 = vector.extract_strided_slice %910 {offsets = [0, 0, 0], sizes = [2, 8, 8], strides = [1, 1, 1]} : vector<2x8x32xf32> to vector<2x8x8xf32>
    "tpu.trace_start"() <{level = 10 : i32, message = "bqd,bkd->bqk"}> : () -> ()
    %cst_297 = arith.constant dense<0.000000e+00> : vector<2x8x8xf32>
    %916 = tpu.matmul %914, %915, %cst_297 {dimension_numbers = #tpu.dot_dimension_numbers<[2], [2], [1], [1], [0, 0, 0, 1, 1, 1], [0], [0]>} : vector<2x8x8xf32>, vector<2x8x8xf32>, vector<2x8x8xf32> -> vector<2x8x8xf32>
    "tpu.trace_stop"() : () -> ()
    %cst_298 = arith.constant 0.353553385 : f32
    %917 = vector.broadcast %cst_298 : f32 to vector<2x8x8xf32>
    %918 = arith.mulf %916, %917 : vector<2x8x8xf32>
    %919 = arith.addf %918, %10 : vector<2x8x8xf32>
    %cst_299 = arith.constant dense<0xFF800000> : vector<2x8xf32>
    %920 = vector.multi_reduction <maximumf>, %919, %cst_299 [2] : vector<2x8x8xf32> to vector<2x8xf32>
    %921 = vector.shape_cast %920 : vector<2x8xf32> to vector<2x8x1xf32>
    %922 = vector.broadcast %921 : vector<2x8x1xf32> to vector<2x8x8xf32>
    %923 = arith.subf %919, %922 : vector<2x8x8xf32>
    %924 = math.exp %923 : vector<2x8x8xf32>
    %cst_300 = arith.constant dense<0.000000e+00> : vector<2x8xf32>
    %925 = vector.multi_reduction <add>, %924, %cst_300 [2] : vector<2x8x8xf32> to vector<2x8xf32>
    %926 = vector.shape_cast %925 : vector<2x8xf32> to vector<2x8x1xf32>
    %927 = tpu.reciprocal %926 {approx = true} : vector<2x8x1xf32> -> vector<2x8x1xf32>
    %928 = vector.broadcast %927 : vector<2x8x1xf32> to vector<2x8x8xf32>
    %929 = arith.mulf %924, %928 : vector<2x8x8xf32>
    %930 = vector.extract_strided_slice %912 {offsets = [0, 0, 0], sizes = [2, 8, 8], strides = [1, 1, 1]} : vector<2x8x32xf32> to vector<2x8x8xf32>
    "tpu.trace_start"() <{level = 10 : i32, message = "bqk,bkd->bqd"}> : () -> ()
    %cst_301 = arith.constant dense<0.000000e+00> : vector<2x8x8xf32>
    %931 = tpu.matmul %929, %930, %cst_301 {dimension_numbers = #tpu.dot_dimension_numbers<[2], [1], [1], [2], [0, 0, 0, 1, 1, 2], [0], [0]>} : vector<2x8x8xf32>, vector<2x8x8xf32>, vector<2x8x8xf32> -> vector<2x8x8xf32>
    "tpu.trace_stop"() : () -> ()
    %932 = vector.shape_cast %931 : vector<2x8x8xf32> to vector<16x8xf32>
    %933 = vector.extract_strided_slice %906 {offsets = [0, 0], sizes = [8, 32], strides = [1, 1]} : vector<32x32xf32> to vector<8x32xf32>
    %cst_302 = arith.constant dense<0.000000e+00> : vector<16x32xf32>
    %934 = tpu.matmul %932, %933, %cst_302 {dimension_numbers = #tpu.dot_dimension_numbers<[1], [0], [0], [1], [0, 0, 1, 1], [], []>} : vector<16x8xf32>, vector<8x32xf32>, vector<16x32xf32> -> vector<16x32xf32>
    %935 = arith.addf %913, %934 : vector<16x32xf32>
    %936 = vector.extract_strided_slice %908 {offsets = [0, 0, 8], sizes = [2, 8, 8], strides = [1, 1, 1]} : vector<2x8x32xf32> to vector<2x8x8xf32>
    %937 = vector.extract_strided_slice %910 {offsets = [0, 0, 8], sizes = [2, 8, 8], strides = [1, 1, 1]} : vector<2x8x32xf32> to vector<2x8x8xf32>
    "tpu.trace_start"() <{level = 10 : i32, message = "bqd,bkd->bqk"}> : () -> ()
    %cst_303 = arith.constant dense<0.000000e+00> : vector<2x8x8xf32>
    %938 = tpu.matmul %936, %937, %cst_303 {dimension_numbers = #tpu.dot_dimension_numbers<[2], [2], [1], [1], [0, 0, 0, 1, 1, 1], [0], [0]>} : vector<2x8x8xf32>, vector<2x8x8xf32>, vector<2x8x8xf32> -> vector<2x8x8xf32>
    "tpu.trace_stop"() : () -> ()
    %cst_304 = arith.constant 0.353553385 : f32
    %939 = vector.broadcast %cst_304 : f32 to vector<2x8x8xf32>
    %940 = arith.mulf %938, %939 : vector<2x8x8xf32>
    %941 = arith.addf %940, %10 : vector<2x8x8xf32>
    %cst_305 = arith.constant dense<0xFF800000> : vector<2x8xf32>
    %942 = vector.multi_reduction <maximumf>, %941, %cst_305 [2] : vector<2x8x8xf32> to vector<2x8xf32>
    %943 = vector.shape_cast %942 : vector<2x8xf32> to vector<2x8x1xf32>
    %944 = vector.broadcast %943 : vector<2x8x1xf32> to vector<2x8x8xf32>
    %945 = arith.subf %941, %944 : vector<2x8x8xf32>
    %946 = math.exp %945 : vector<2x8x8xf32>
    %cst_306 = arith.constant dense<0.000000e+00> : vector<2x8xf32>
    %947 = vector.multi_reduction <add>, %946, %cst_306 [2] : vector<2x8x8xf32> to vector<2x8xf32>
    %948 = vector.shape_cast %947 : vector<2x8xf32> to vector<2x8x1xf32>
    %949 = tpu.reciprocal %948 {approx = true} : vector<2x8x1xf32> -> vector<2x8x1xf32>
    %950 = vector.broadcast %949 : vector<2x8x1xf32> to vector<2x8x8xf32>
    %951 = arith.mulf %946, %950 : vector<2x8x8xf32>
    %952 = vector.extract_strided_slice %912 {offsets = [0, 0, 8], sizes = [2, 8, 8], strides = [1, 1, 1]} : vector<2x8x32xf32> to vector<2x8x8xf32>
    "tpu.trace_start"() <{level = 10 : i32, message = "bqk,bkd->bqd"}> : () -> ()
    %cst_307 = arith.constant dense<0.000000e+00> : vector<2x8x8xf32>
    %953 = tpu.matmul %951, %952, %cst_307 {dimension_numbers = #tpu.dot_dimension_numbers<[2], [1], [1], [2], [0, 0, 0, 1, 1, 2], [0], [0]>} : vector<2x8x8xf32>, vector<2x8x8xf32>, vector<2x8x8xf32> -> vector<2x8x8xf32>
    "tpu.trace_stop"() : () -> ()
    %954 = vector.shape_cast %953 : vector<2x8x8xf32> to vector<16x8xf32>
    %955 = vector.extract_strided_slice %906 {offsets = [8, 0], sizes = [8, 32], strides = [1, 1]} : vector<32x32xf32> to vector<8x32xf32>
    %cst_308 = arith.constant dense<0.000000e+00> : vector<16x32xf32>
    %956 = tpu.matmul %954, %955, %cst_308 {dimension_numbers = #tpu.dot_dimension_numbers<[1], [0], [0], [1], [0, 0, 1, 1], [], []>} : vector<16x8xf32>, vector<8x32xf32>, vector<16x32xf32> -> vector<16x32xf32>
    %957 = arith.addf %935, %956 : vector<16x32xf32>
    %958 = vector.extract_strided_slice %908 {offsets = [0, 0, 16], sizes = [2, 8, 8], strides = [1, 1, 1]} : vector<2x8x32xf32> to vector<2x8x8xf32>
    %959 = vector.extract_strided_slice %910 {offsets = [0, 0, 16], sizes = [2, 8, 8], strides = [1, 1, 1]} : vector<2x8x32xf32> to vector<2x8x8xf32>
    "tpu.trace_start"() <{level = 10 : i32, message = "bqd,bkd->bqk"}> : () -> ()
    %cst_309 = arith.constant dense<0.000000e+00> : vector<2x8x8xf32>
    %960 = tpu.matmul %958, %959, %cst_309 {dimension_numbers = #tpu.dot_dimension_numbers<[2], [2], [1], [1], [0, 0, 0, 1, 1, 1], [0], [0]>} : vector<2x8x8xf32>, vector<2x8x8xf32>, vector<2x8x8xf32> -> vector<2x8x8xf32>
    "tpu.trace_stop"() : () -> ()
    %cst_310 = arith.constant 0.353553385 : f32
    %961 = vector.broadcast %cst_310 : f32 to vector<2x8x8xf32>
    %962 = arith.mulf %960, %961 : vector<2x8x8xf32>
    %963 = arith.addf %962, %10 : vector<2x8x8xf32>
    %cst_311 = arith.constant dense<0xFF800000> : vector<2x8xf32>
    %964 = vector.multi_reduction <maximumf>, %963, %cst_311 [2] : vector<2x8x8xf32> to vector<2x8xf32>
    %965 = vector.shape_cast %964 : vector<2x8xf32> to vector<2x8x1xf32>
    %966 = vector.broadcast %965 : vector<2x8x1xf32> to vector<2x8x8xf32>
    %967 = arith.subf %963, %966 : vector<2x8x8xf32>
    %968 = math.exp %967 : vector<2x8x8xf32>
    %cst_312 = arith.constant dense<0.000000e+00> : vector<2x8xf32>
    %969 = vector.multi_reduction <add>, %968, %cst_312 [2] : vector<2x8x8xf32> to vector<2x8xf32>
    %970 = vector.shape_cast %969 : vector<2x8xf32> to vector<2x8x1xf32>
    %971 = tpu.reciprocal %970 {approx = true} : vector<2x8x1xf32> -> vector<2x8x1xf32>
    %972 = vector.broadcast %971 : vector<2x8x1xf32> to vector<2x8x8xf32>
    %973 = arith.mulf %968, %972 : vector<2x8x8xf32>
    %974 = vector.extract_strided_slice %912 {offsets = [0, 0, 16], sizes = [2, 8, 8], strides = [1, 1, 1]} : vector<2x8x32xf32> to vector<2x8x8xf32>
    "tpu.trace_start"() <{level = 10 : i32, message = "bqk,bkd->bqd"}> : () -> ()
    %cst_313 = arith.constant dense<0.000000e+00> : vector<2x8x8xf32>
    %975 = tpu.matmul %973, %974, %cst_313 {dimension_numbers = #tpu.dot_dimension_numbers<[2], [1], [1], [2], [0, 0, 0, 1, 1, 2], [0], [0]>} : vector<2x8x8xf32>, vector<2x8x8xf32>, vector<2x8x8xf32> -> vector<2x8x8xf32>
    "tpu.trace_stop"() : () -> ()
    %976 = vector.shape_cast %975 : vector<2x8x8xf32> to vector<16x8xf32>
    %977 = vector.extract_strided_slice %906 {offsets = [16, 0], sizes = [8, 32], strides = [1, 1]} : vector<32x32xf32> to vector<8x32xf32>
    %cst_314 = arith.constant dense<0.000000e+00> : vector<16x32xf32>
    %978 = tpu.matmul %976, %977, %cst_314 {dimension_numbers = #tpu.dot_dimension_numbers<[1], [0], [0], [1], [0, 0, 1, 1], [], []>} : vector<16x8xf32>, vector<8x32xf32>, vector<16x32xf32> -> vector<16x32xf32>
    %979 = arith.addf %957, %978 : vector<16x32xf32>
    %980 = vector.extract_strided_slice %908 {offsets = [0, 0, 24], sizes = [2, 8, 8], strides = [1, 1, 1]} : vector<2x8x32xf32> to vector<2x8x8xf32>
    %981 = vector.extract_strided_slice %910 {offsets = [0, 0, 24], sizes = [2, 8, 8], strides = [1, 1, 1]} : vector<2x8x32xf32> to vector<2x8x8xf32>
    "tpu.trace_start"() <{level = 10 : i32, message = "bqd,bkd->bqk"}> : () -> ()
    %cst_315 = arith.constant dense<0.000000e+00> : vector<2x8x8xf32>
    %982 = tpu.matmul %980, %981, %cst_315 {dimension_numbers = #tpu.dot_dimension_numbers<[2], [2], [1], [1], [0, 0, 0, 1, 1, 1], [0], [0]>} : vector<2x8x8xf32>, vector<2x8x8xf32>, vector<2x8x8xf32> -> vector<2x8x8xf32>
    "tpu.trace_stop"() : () -> ()
    %cst_316 = arith.constant 0.353553385 : f32
    %983 = vector.broadcast %cst_316 : f32 to vector<2x8x8xf32>
    %984 = arith.mulf %982, %983 : vector<2x8x8xf32>
    %985 = arith.addf %984, %10 : vector<2x8x8xf32>
    %cst_317 = arith.constant dense<0xFF800000> : vector<2x8xf32>
    %986 = vector.multi_reduction <maximumf>, %985, %cst_317 [2] : vector<2x8x8xf32> to vector<2x8xf32>
    %987 = vector.shape_cast %986 : vector<2x8xf32> to vector<2x8x1xf32>
    %988 = vector.broadcast %987 : vector<2x8x1xf32> to vector<2x8x8xf32>
    %989 = arith.subf %985, %988 : vector<2x8x8xf32>
    %990 = math.exp %989 : vector<2x8x8xf32>
    %cst_318 = arith.constant dense<0.000000e+00> : vector<2x8xf32>
    %991 = vector.multi_reduction <add>, %990, %cst_318 [2] : vector<2x8x8xf32> to vector<2x8xf32>
    %992 = vector.shape_cast %991 : vector<2x8xf32> to vector<2x8x1xf32>
    %993 = tpu.reciprocal %992 {approx = true} : vector<2x8x1xf32> -> vector<2x8x1xf32>
    %994 = vector.broadcast %993 : vector<2x8x1xf32> to vector<2x8x8xf32>
    %995 = arith.mulf %990, %994 : vector<2x8x8xf32>
    %996 = vector.extract_strided_slice %912 {offsets = [0, 0, 24], sizes = [2, 8, 8], strides = [1, 1, 1]} : vector<2x8x32xf32> to vector<2x8x8xf32>
    "tpu.trace_start"() <{level = 10 : i32, message = "bqk,bkd->bqd"}> : () -> ()
    %cst_319 = arith.constant dense<0.000000e+00> : vector<2x8x8xf32>
    %997 = tpu.matmul %995, %996, %cst_319 {dimension_numbers = #tpu.dot_dimension_numbers<[2], [1], [1], [2], [0, 0, 0, 1, 1, 2], [0], [0]>} : vector<2x8x8xf32>, vector<2x8x8xf32>, vector<2x8x8xf32> -> vector<2x8x8xf32>
    "tpu.trace_stop"() : () -> ()
    %998 = vector.shape_cast %997 : vector<2x8x8xf32> to vector<16x8xf32>
    %999 = vector.extract_strided_slice %906 {offsets = [24, 0], sizes = [8, 32], strides = [1, 1]} : vector<32x32xf32> to vector<8x32xf32>
    %cst_320 = arith.constant dense<0.000000e+00> : vector<16x32xf32>
    %1000 = tpu.matmul %998, %999, %cst_320 {dimension_numbers = #tpu.dot_dimension_numbers<[1], [0], [0], [1], [0, 0, 1, 1], [], []>} : vector<16x8xf32>, vector<8x32xf32>, vector<16x32xf32> -> vector<16x32xf32>
    %1001 = arith.addf %979, %1000 : vector<16x32xf32>
    %1002 = vector.broadcast %907 : vector<1x32xf32> to vector<16x32xf32>
    %1003 = arith.addf %1001, %1002 : vector<16x32xf32>
    %1004 = arith.addf %871, %1003 : vector<16x32xf32>
    %1005 = vector.extract_strided_slice %735 {offsets = [4, 0], sizes = [1, 32], strides = [1, 1]} : vector<6x32xf32> to vector<1x32xf32>
    %1006 = vector.extract_strided_slice %735 {offsets = [5, 0], sizes = [1, 32], strides = [1, 1]} : vector<6x32xf32> to vector<1x32xf32>
    %cst_321 = arith.constant dense<0.000000e+00> : vector<16xf32>
    %1007 = vector.multi_reduction <add>, %1004, %cst_321 [1] : vector<16x32xf32> to vector<16xf32>
    %1008 = vector.shape_cast %1007 : vector<16xf32> to vector<16x1xf32>
    %cst_322 = arith.constant 3.200000e+01 : f32
    %1009 = vector.broadcast %cst_322 : f32 to vector<16x1xf32>
    %1010 = arith.divf %1008, %1009 : vector<16x1xf32>
    %1011 = vector.broadcast %1010 : vector<16x1xf32> to vector<16x32xf32>
    %1012 = arith.subf %1004, %1011 : vector<16x32xf32>
    %1013 = arith.mulf %1012, %1012 : vector<16x32xf32>
    %cst_323 = arith.constant dense<0.000000e+00> : vector<16xf32>
    %1014 = vector.multi_reduction <add>, %1013, %cst_323 [1] : vector<16x32xf32> to vector<16xf32>
    %1015 = vector.shape_cast %1014 : vector<16xf32> to vector<16x1xf32>
    %cst_324 = arith.constant 0.0322580636 : f32
    %1016 = vector.broadcast %cst_324 : f32 to vector<16x1xf32>
    %1017 = arith.mulf %1015, %1016 : vector<16x1xf32>
    %1018 = vector.broadcast %1010 : vector<16x1xf32> to vector<16x32xf32>
    %1019 = arith.subf %1004, %1018 : vector<16x32xf32>
    %1020 = vector.broadcast %1005 : vector<1x32xf32> to vector<16x32xf32>
    %1021 = arith.mulf %1020, %1019 : vector<16x32xf32>
    %1022 = math.sqrt %1017 : vector<16x1xf32>
    %cst_325 = arith.constant 9.99999997E-7 : f32
    %1023 = vector.broadcast %cst_325 : f32 to vector<16x1xf32>
    %1024 = arith.addf %1022, %1023 : vector<16x1xf32>
    %1025 = vector.broadcast %1024 : vector<16x1xf32> to vector<16x32xf32>
    %1026 = arith.divf %1021, %1025 : vector<16x32xf32>
    %1027 = vector.broadcast %1006 : vector<1x32xf32> to vector<16x32xf32>
    %1028 = arith.addf %1026, %1027 : vector<16x32xf32>
    %c1_326 = arith.constant 1 : index
    %c0_327 = arith.constant 0 : index
    %c0_328 = arith.constant 0 : index
    %1029 = vector.load %arg20[%c1_326, %c0_327, %c0_328] : memref<2x1x96xf32, #tpu.memory_space<vmem>>, vector<1x1x96xf32>
    %1030 = vector.shape_cast %1029 : vector<1x1x96xf32> to vector<1x96xf32>
    %c1_329 = arith.constant 1 : index
    %c0_330 = arith.constant 0 : index
    %c0_331 = arith.constant 0 : index
    %1031 = vector.load %arg18[%c1_329, %c0_330, %c0_331] : memref<2x32x64xf32, #tpu.memory_space<vmem>>, vector<1x32x64xf32>
    %1032 = vector.shape_cast %1031 : vector<1x32x64xf32> to vector<32x64xf32>
    %cst_332 = arith.constant dense<0.000000e+00> : vector<16x64xf32>
    %1033 = tpu.matmul %1028, %1032, %cst_332 {dimension_numbers = #tpu.dot_dimension_numbers<[1], [0], [0], [1], [0, 0, 1, 1], [], []>} : vector<16x32xf32>, vector<32x64xf32>, vector<16x64xf32> -> vector<16x64xf32>
    %1034 = vector.extract_strided_slice %1030 {offsets = [0, 0], sizes = [1, 64], strides = [1, 1]} : vector<1x96xf32> to vector<1x64xf32>
    %1035 = vector.broadcast %1034 : vector<1x64xf32> to vector<16x64xf32>
    %1036 = arith.addf %1033, %1035 : vector<16x64xf32>
    %cst_333 = arith.constant 0.000000e+00 : f32
    %1037 = vector.broadcast %cst_333 : f32 to vector<16x64xf32>
    %1038 = arith.maximumf %1036, %1037 : vector<16x64xf32>
    %c1_334 = arith.constant 1 : index
    %c0_335 = arith.constant 0 : index
    %c0_336 = arith.constant 0 : index
    %1039 = vector.load %arg19[%c1_334, %c0_335, %c0_336] : memref<2x64x32xf32, #tpu.memory_space<vmem>>, vector<1x64x32xf32>
    %1040 = vector.shape_cast %1039 : vector<1x64x32xf32> to vector<64x32xf32>
    %cst_337 = arith.constant dense<0.000000e+00> : vector<16x32xf32>
    %1041 = tpu.matmul %1038, %1040, %cst_337 {dimension_numbers = #tpu.dot_dimension_numbers<[1], [0], [0], [1], [0, 0, 1, 1], [], []>} : vector<16x64xf32>, vector<64x32xf32>, vector<16x32xf32> -> vector<16x32xf32>
    %1042 = arith.addf %1004, %1041 : vector<16x32xf32>
    %1043 = vector.extract_strided_slice %1030 {offsets = [0, 64], sizes = [1, 32], strides = [1, 1]} : vector<1x96xf32> to vector<1x32xf32>
    %1044 = vector.broadcast %1043 : vector<1x32xf32> to vector<16x32xf32>
    %1045 = arith.addf %1042, %1044 : vector<16x32xf32>
    %c0_338 = arith.constant 0 : index
    %c0_339 = arith.constant 0 : index
    %1046 = vector.load %arg22[%c0_338, %c0_339] : memref<2x32xf32, #tpu.memory_space<vmem>>, vector<1x32xf32>
    %c1_340 = arith.constant 1 : index
    %c0_341 = arith.constant 0 : index
    %1047 = vector.load %arg22[%c1_340, %c0_341] : memref<2x32xf32, #tpu.memory_space<vmem>>, vector<1x32xf32>
    %cst_342 = arith.constant dense<0.000000e+00> : vector<16xf32>
    %1048 = vector.multi_reduction <add>, %1045, %cst_342 [1] : vector<16x32xf32> to vector<16xf32>
    %1049 = vector.shape_cast %1048 : vector<16xf32> to vector<16x1xf32>
    %cst_343 = arith.constant 3.200000e+01 : f32
    %1050 = vector.broadcast %cst_343 : f32 to vector<16x1xf32>
    %1051 = arith.divf %1049, %1050 : vector<16x1xf32>
    %1052 = vector.broadcast %1051 : vector<16x1xf32> to vector<16x32xf32>
    %1053 = arith.subf %1045, %1052 : vector<16x32xf32>
    %1054 = arith.mulf %1053, %1053 : vector<16x32xf32>
    %cst_344 = arith.constant dense<0.000000e+00> : vector<16xf32>
    %1055 = vector.multi_reduction <add>, %1054, %cst_344 [1] : vector<16x32xf32> to vector<16xf32>
    %1056 = vector.shape_cast %1055 : vector<16xf32> to vector<16x1xf32>
    %cst_345 = arith.constant 0.0322580636 : f32
    %1057 = vector.broadcast %cst_345 : f32 to vector<16x1xf32>
    %1058 = arith.mulf %1056, %1057 : vector<16x1xf32>
    %1059 = vector.broadcast %1051 : vector<16x1xf32> to vector<16x32xf32>
    %1060 = arith.subf %1045, %1059 : vector<16x32xf32>
    %1061 = vector.broadcast %1046 : vector<1x32xf32> to vector<16x32xf32>
    %1062 = arith.mulf %1061, %1060 : vector<16x32xf32>
    %1063 = math.sqrt %1058 : vector<16x1xf32>
    %cst_346 = arith.constant 9.99999997E-7 : f32
    %1064 = vector.broadcast %cst_346 : f32 to vector<16x1xf32>
    %1065 = arith.addf %1063, %1064 : vector<16x1xf32>
    %1066 = vector.broadcast %1065 : vector<16x1xf32> to vector<16x32xf32>
    %1067 = arith.divf %1062, %1066 : vector<16x32xf32>
    %1068 = vector.broadcast %1047 : vector<1x32xf32> to vector<16x32xf32>
    %1069 = arith.addf %1067, %1068 : vector<16x32xf32>
    %1070 = vector.shape_cast %1069 : vector<16x32xf32> to vector<2x8x32xf32>
    %c0_347 = arith.constant 0 : index
    %c0_348 = arith.constant 0 : index
    %c0_349 = arith.constant 0 : index
    %1071 = vector.load %arg23[%c0_347, %c0_348, %c0_349] : memref<2x8x32xf32, #tpu.memory_space<vmem>>, vector<2x8x32xf32>
    tpu.vector_store %arg23[%c0_347, %c0_348, %c0_349], %1070 {strides = array<i32>} : memref<2x8x32xf32, #tpu.memory_space<vmem>>, vector<2x8x32xf32>,
    return
  }
}

</mosaic_0001>

<llo_original>
// kernel: tpu_custom_call.1
$region0: #{tpu_custom_call.1}
  #allocation0 [shape = 'u32[]', space=smem, size = 0x4, offset = 0x4, fixed_abs, tag = 'smem constant byte address 0x4 - core index']
  #allocation1 [shape = 'u32[72,128]{1,0:T(1,128)}', space=vmem, size = 0x9000, scoped, tag = 'internal scratch']
  %s0 = inlined_call_operand.vmem [shape: s32[16,1], index: 0, kind: input, shape index: {}]
  %s1 = inlined_call_operand.vmem [shape: s32[16,1], index: 1, kind: input, shape index: {}]
  %s2 = inlined_call_operand.vmem [shape: f32[2,1,8], index: 2, kind: input, shape index: {}]
  %s3 = inlined_call_operand.vmem [shape: f32[2,8,8], index: 3, kind: input, shape index: {}]
  %s4 = inlined_call_operand.vmem [shape: f32[16,32], index: 4, kind: input, shape index: {}]
  %s5 = inlined_call_operand.vmem [shape: f32[16,32], index: 5, kind: input, shape index: {}]
  %s6 = inlined_call_operand.vmem [shape: f32[64,32], index: 6, kind: input, shape index: {}]
  %s7 = inlined_call_operand.vmem [shape: f32[2,32,128], index: 7, kind: input, shape index: {}]
  %s8 = inlined_call_operand.vmem [shape: f32[2,1,128], index: 8, kind: input, shape index: {}]
  %s9 = inlined_call_operand.vmem [shape: f32[2,32,64], index: 9, kind: input, shape index: {}]
  %s10 = inlined_call_operand.vmem [shape: f32[2,64,32], index: 10, kind: input, shape index: {}]
  %s11 = inlined_call_operand.hbm [shape: f32[2,1,96], index: 11, kind: input, shape index: {}]
  %s12 = inlined_call_operand.vmem [shape: f32[2,4,32], index: 12, kind: input, shape index: {}]
  %s13 = inlined_call_operand.hbm [shape: f32[2,32], index: 13, kind: input, shape index: {}]
  %s14 = inlined_call_operand.vmem [shape: f32[2,32,128], index: 14, kind: input, shape index: {}]
  %s15 = inlined_call_operand.hbm [shape: f32[2,1,128], index: 15, kind: input, shape index: {}]
  %s16 = inlined_call_operand.vmem [shape: f32[2,32,128], index: 16, kind: input, shape index: {}]
  %s17 = inlined_call_operand.hbm [shape: f32[2,1,128], index: 17, kind: input, shape index: {}]
  %s18 = inlined_call_operand.vmem [shape: f32[2,32,64], index: 18, kind: input, shape index: {}]
  %s19 = inlined_call_operand.vmem [shape: f32[2,64,32], index: 19, kind: input, shape index: {}]
  %s20 = inlined_call_operand.vmem [shape: f32[2,1,96], index: 20, kind: input, shape index: {}]
  %s21 = inlined_call_operand.vmem [shape: f32[2,6,32], index: 21, kind: input, shape index: {}]
  %s22 = inlined_call_operand.vmem [shape: f32[2,32], index: 22, kind: input, shape index: {}]
  %s23 = inlined_call_operand.hbm [shape: f32[2,8,32], index: 23, kind: output, shape index: {}]
  %s24 = sld [smem:[#allocation0]]
  $region118: #{tpu_custom_call.1} parent=0
    _
  %s26 = ssub.s32 1, %s24
  %s27 = scalar_select 0, %s26, %s24
  $region1: #{tpu_custom_call.1} parent=0
    #allocation2 [shape = 'u8[1024]{0}', space=vmem, size = 0x400, scoped, tag = 'input window, operand 11, single buffered']
    #allocation3 [shape = 's32[1]{0}', space=sflag, size = 0x4, scoped, tag = 'scoped memory for tpu_custom_call.1']
    #allocation4 [shape = 's32[1]{0}', space=sflag, size = 0x4, scoped, tag = 'scoped memory for tpu_custom_call.1']
    #allocation5 [shape = 'u8[1024]{0}', space=vmem, size = 0x400, scoped, tag = 'input window, operand 13, single buffered']
    #allocation6 [shape = 's32[1]{0}', space=sflag, size = 0x4, scoped, tag = 'scoped memory for tpu_custom_call.1']
    #allocation7 [shape = 'u8[1024]{0}', space=vmem, size = 0x400, scoped, tag = 'input window, operand 15, single buffered']
    #allocation8 [shape = 'u8[1024]{0}', space=vmem, size = 0x400, scoped, tag = 'input window, operand 17, single buffered']
    #allocation9 [shape = 's32[1]{0}', space=sflag, size = 0x4, scoped, tag = 'scoped memory for tpu_custom_call.1']
    #allocation10 [shape = 'u8[8192]{0}', space=vmem, size = 0x2000, scoped, tag = 'output window, operand 0, single buffered']
    %28 = vsyncpa [#allocation3], 0
    %29 = vsyncpa [#allocation6], 0
    %30 = vsyncpa [#allocation9], 0
    %31 = vsyncpa [#allocation4], 0
    // Predicated region
    $region2: #{tpu_custom_call.1} parent=1 // pred_check
      _
    $region3: #{tpu_custom_call.1} parent=1 // pred_check_branch
      %33 = sbr.rel (0) target = $region5
    $region4: #{tpu_custom_call.1} parent=1 // pred_region
      _
    $region5: #{tpu_custom_call.1} parent=1 // pred_fallthru
      _
    // Predicated region
    $region6: #{tpu_custom_call.1} parent=1 // pred_check
      _
    $region7: #{tpu_custom_call.1} parent=1 // pred_check_branch
      %35 = sbr.rel (0) target = $region9
    $region8: #{tpu_custom_call.1} parent=1 // pred_region
      _
    $region9: #{tpu_custom_call.1} parent=1 // pred_fallthru
      _
    // Predicated region
    $region10: #{tpu_custom_call.1} parent=1 // pred_check
      _
    $region11: #{tpu_custom_call.1} parent=1 // pred_check_branch
      %37 = sbr.rel (0) target = $region13
    $region12: #{tpu_custom_call.1} parent=1 // pred_region
      _
    $region13: #{tpu_custom_call.1} parent=1 // pred_fallthru
      _
    // Predicated region
    $region14: #{tpu_custom_call.1} parent=1 // pred_check
      _
    $region15: #{tpu_custom_call.1} parent=1 // pred_check_branch
      %39 = sbr.rel (0) target = $region17
    $region16: #{tpu_custom_call.1} parent=1 // pred_region
      _
    $region17: #{tpu_custom_call.1} parent=1 // pred_fallthru
      _
    // Predicated region
    $region18: #{tpu_custom_call.1} parent=1 // pred_check
      _
    $region19: #{tpu_custom_call.1} parent=1 // pred_check_branch
      %41 = sbr.rel (0) target = $region21
    $region20: #{tpu_custom_call.1} parent=1 // pred_region
      _
    $region21: #{tpu_custom_call.1} parent=1 // pred_fallthru
      _
    // Predicated region
    $region22: #{tpu_custom_call.1} parent=1 // pred_check
      _
    $region23: #{tpu_custom_call.1} parent=1 // pred_check_branch
      %43 = sbr.rel (0) target = $region25
    $region24: #{tpu_custom_call.1} parent=1 // pred_region
      _
    $region25: #{tpu_custom_call.1} parent=1 // pred_fallthru
      _
    // Predicated region
    $region26: #{tpu_custom_call.1} parent=1 // pred_check
      _
    $region27: #{tpu_custom_call.1} parent=1 // pred_check_branch
      %45 = sbr.rel (0) target = $region29
    $region28: #{tpu_custom_call.1} parent=1 // pred_region
      _
    $region29: #{tpu_custom_call.1} parent=1 // pred_fallthru
      _
    // Predicated region
    $region30: #{tpu_custom_call.1} parent=1 // pred_check
      _
    $region31: #{tpu_custom_call.1} parent=1 // pred_check_branch
      %47 = sbr.rel (0) target = $region33
    $region32: #{tpu_custom_call.1} parent=1 // pred_region
      _
    $region33: #{tpu_custom_call.1} parent=1 // pred_fallthru
      _
    // Predicated region
    $region34: #{tpu_custom_call.1} parent=1 // pred_check
      _
    $region35: #{tpu_custom_call.1} parent=1 // pred_check_branch
      %49 = sbr.rel (0) target = $region37
    $region36: #{tpu_custom_call.1} parent=1 // pred_region
      _
    $region37: #{tpu_custom_call.1} parent=1 // pred_fallthru
      _
    // Predicated region
    $region38: #{tpu_custom_call.1} parent=1 // pred_check
      _
    $region39: #{tpu_custom_call.1} parent=1 // pred_check_branch
      %51 = sbr.rel (0) target = $region41
    $region40: #{tpu_custom_call.1} parent=1 // pred_region
      _
    $region41: #{tpu_custom_call.1} parent=1 // pred_fallthru
      _
    // Predicated region
    $region42: #{tpu_custom_call.1} parent=1 // pred_check
      _
    $region43: #{tpu_custom_call.1} parent=1 // pred_check_branch
      %53 = sbr.rel (0) target = $region45
    $region44: #{tpu_custom_call.1} parent=1 // pred_region
      _
    $region45: #{tpu_custom_call.1} parent=1 // pred_fallthru
      _
    // Predicated region
    $region46: #{tpu_custom_call.1} parent=1 // pred_check
      _
    $region47: #{tpu_custom_call.1} parent=1 // pred_check_branch
      %55 = sbr.rel (0) target = $region49
    $region48: #{tpu_custom_call.1} parent=1 // pred_region
      %57 = vsyncadd [#allocation3], 0
      %s58 = sshll.u32 %s11, 4
      %s59 = int_to_ptr.hbm [resolvable:$true] %s58
      %s60 = sshll.u32 [#allocation2], 4
      %s61 = int_to_ptr.vmem [resolvable:$true] %s60
      %66 = dma.hbm_to_vmem [thread:$0]  %s59, 32, %s61, [#allocation3], 16, 16, 1
    $region49: #{tpu_custom_call.1} parent=1 // pred_fallthru
      _
    // Predicated region
    $region50: #{tpu_custom_call.1} parent=1 // pred_check
      _
    $region51: #{tpu_custom_call.1} parent=1 // pred_check_branch
      %68 = sbr.rel (0) target = $region53
    $region52: #{tpu_custom_call.1} parent=1 // pred_region
      _
    $region53: #{tpu_custom_call.1} parent=1 // pred_fallthru
      _
    // Predicated region
    $region54: #{tpu_custom_call.1} parent=1 // pred_check
      _
    $region55: #{tpu_custom_call.1} parent=1 // pred_check_branch
      %70 = sbr.rel (0) target = $region57
    $region56: #{tpu_custom_call.1} parent=1 // pred_region
      %72 = vsyncadd [#allocation6], 0
      %s74 = sshll.u32 %s13, 4
      %s75 = int_to_ptr.hbm [resolvable:$true] %s74
      %s76 = sshll.u32 [#allocation5], 4
      %s77 = int_to_ptr.vmem [resolvable:$true] %s76
      %79 = dma.hbm_to_vmem [thread:$0]  %s75, 32, %s77, [#allocation6]
    $region57: #{tpu_custom_call.1} parent=1 // pred_fallthru
      _
    // Predicated region
    $region58: #{tpu_custom_call.1} parent=1 // pred_check
      _
    $region59: #{tpu_custom_call.1} parent=1 // pred_check_branch
      %81 = sbr.rel (0) target = $region61
    $region60: #{tpu_custom_call.1} parent=1 // pred_region
      _
    $region61: #{tpu_custom_call.1} parent=1 // pred_fallthru
      _
    // Predicated region
    $region62: #{tpu_custom_call.1} parent=1 // pred_check
      _
    $region63: #{tpu_custom_call.1} parent=1 // pred_check_branch
      %83 = sbr.rel (0) target = $region65
    $region64: #{tpu_custom_call.1} parent=1 // pred_region
      %85 = vsyncadd [#allocation6], 0
      %s86 = sshll.u32 %s15, 4
      %s87 = int_to_ptr.hbm [resolvable:$true] %s86
      %s88 = sshll.u32 [#allocation7], 4
      %s89 = int_to_ptr.vmem [resolvable:$true] %s88
      %94 = dma.hbm_to_vmem [thread:$0]  %s87, 32, %s89, [#allocation6], 16, 16, 1
    $region65: #{tpu_custom_call.1} parent=1 // pred_fallthru
      _
    // Predicated region
    $region66: #{tpu_custom_call.1} parent=1 // pred_check
      _
    $region67: #{tpu_custom_call.1} parent=1 // pred_check_branch
      %96 = sbr.rel (0) target = $region69
    $region68: #{tpu_custom_call.1} parent=1 // pred_region
      _
    $region69: #{tpu_custom_call.1} parent=1 // pred_fallthru
      _
    // Predicated region
    $region70: #{tpu_custom_call.1} parent=1 // pred_check
      _
    $region71: #{tpu_custom_call.1} parent=1 // pred_check_branch
      %98 = sbr.rel (0) target = $region73
    $region72: #{tpu_custom_call.1} parent=1 // pred_region
      %100 = vsyncadd [#allocation9], 0
      %s101 = sshll.u32 %s17, 4
      %s102 = int_to_ptr.hbm [resolvable:$true] %s101
      %s103 = sshll.u32 [#allocation8], 4
      %s104 = int_to_ptr.vmem [resolvable:$true] %s103
      %109 = dma.hbm_to_vmem [thread:$0]  %s102, 32, %s104, [#allocation9], 16, 16, 1
    $region73: #{tpu_custom_call.1} parent=1 // pred_fallthru
      _
    // Predicated region
    $region74: #{tpu_custom_call.1} parent=1 // pred_check
      _
    $region75: #{tpu_custom_call.1} parent=1 // pred_check_branch
      %111 = sbr.rel (0) target = $region77
    $region76: #{tpu_custom_call.1} parent=1 // pred_region
      _
    $region77: #{tpu_custom_call.1} parent=1 // pred_fallthru
      _
    // Predicated region
    $region78: #{tpu_custom_call.1} parent=1 // pred_check
      _
    $region79: #{tpu_custom_call.1} parent=1 // pred_check_branch
      %113 = sbr.rel (0) target = $region81
    $region80: #{tpu_custom_call.1} parent=1 // pred_region
      _
    $region81: #{tpu_custom_call.1} parent=1 // pred_fallthru
      _
    // Predicated region
    $region82: #{tpu_custom_call.1} parent=1 // pred_check
      _
    $region83: #{tpu_custom_call.1} parent=1 // pred_check_branch
      %115 = sbr.rel (0) target = $region85
    $region84: #{tpu_custom_call.1} parent=1 // pred_region
      _
    $region85: #{tpu_custom_call.1} parent=1 // pred_fallthru
      _
    // Predicated region
    $region86: #{tpu_custom_call.1} parent=1 // pred_check
      _
    $region87: #{tpu_custom_call.1} parent=1 // pred_check_branch
      %117 = sbr.rel (0) target = $region89
    $region88: #{tpu_custom_call.1} parent=1 // pred_region
      _
    $region89: #{tpu_custom_call.1} parent=1 // pred_fallthru
      _
    // Predicated region
    $region90: #{tpu_custom_call.1} parent=1 // pred_check
      _
    $region91: #{tpu_custom_call.1} parent=1 // pred_check_branch
      %119 = sbr.rel (0) target = $region93
    $region92: #{tpu_custom_call.1} parent=1 // pred_region
      _
    $region93: #{tpu_custom_call.1} parent=1 // pred_fallthru
      _
    // Predicated region
    $region94: #{tpu_custom_call.1} parent=1 // pred_check
      _
    $region95: #{tpu_custom_call.1} parent=1 // pred_check_branch
      %121 = sbr.rel (0) target = $region97
    $region96: #{tpu_custom_call.1} parent=1 // pred_region
      %123 = dma.done [#allocation3], 32
    $region97: #{tpu_custom_call.1} parent=1 // pred_fallthru
      _
    // Predicated region
    $region98: #{tpu_custom_call.1} parent=1 // pred_check
      _
    $region99: #{tpu_custom_call.1} parent=1 // pred_check_branch
      %125 = sbr.rel (0) target = $region101
    $region100: #{tpu_custom_call.1} parent=1 // pred_region
      %127 = dma.done [#allocation6], 32
    $region101: #{tpu_custom_call.1} parent=1 // pred_fallthru
      _
    // Predicated region
    $region102: #{tpu_custom_call.1} parent=1 // pred_check
      _
    $region103: #{tpu_custom_call.1} parent=1 // pred_check_branch
      %129 = sbr.rel (0) target = $region105
    $region104: #{tpu_custom_call.1} parent=1 // pred_region
      %131 = dma.done [#allocation6], 32
    $region105: #{tpu_custom_call.1} parent=1 // pred_fallthru
      _
    // Predicated region
    $region106: #{tpu_custom_call.1} parent=1 // pred_check
      _
    $region107: #{tpu_custom_call.1} parent=1 // pred_check_branch
      %133 = sbr.rel (0) target = $region109
    $region108: #{tpu_custom_call.1} parent=1 // pred_region
      %135 = dma.done [#allocation9], 32
    $region109: #{tpu_custom_call.1} parent=1 // pred_fallthru
      _
    %v136 = vld [vmem:[%s2] sm:$0x1]
    %v137 = vld [vmem:[%s2 + $0x1] sm:$0x1]
    %v138 = vld [vmem:[%s3] sm:$0xff]
    %v139 = vld [vmem:[%s3 + $0x8] sm:$0xff]
    %vm140 = vcmp.eq.f32.partialorder %v136, 0.0
    %vm141 = vcmp.eq.f32.partialorder %v137, 0.0
    %v142 = vsel %vm140, -1e+09, 0.0
    %v143 = vsel %vm141, -1e+09, 0.0
    %v146 = vperm.slane %v142, 0
    %v147 = vperm.slane %v143, 0
    %vm150 = vcmp.eq.f32.partialorder %v138, 0.0
    %vm151 = vcmp.eq.f32.partialorder %v139, 0.0
    %v152 = vsel %vm150, -1e+09, 0.0
    %v153 = vsel %vm151, -1e+09, 0.0
    %v154 = vld [vmem:[%s0] sm:$0xff]
    %v155 = vld [vmem:[%s0 + $0x8] sm:$0xff]
    %v156 = vld [vmem:[%s4] sm:$0xff]
    %v157 = vld [vmem:[%s4 + $0x8] sm:$0xff]
    %v158 = vlaneseq
    %v159 = vand.u32 %v158, 127
    %160 = vset.pattern.permute.xlu0 0
    %161 = vperm.xlu0 %160, %v154
    %v162 = vpop.permute.xlu0 %161
    %163 = vset.pattern.permute.xlu0 0
    %164 = vperm.xlu0 %163, %v155
    %v165 = vpop.permute.xlu0 %164
    %vm166 = vcmp.eq.s32.totalorder %v162, %v159
    %vm167 = vcmp.eq.s32.totalorder %v165, %v159
    %v168 = vsel %vm166, 1, 0
    %v169 = vsel %vm167, 1, 0
    %v170 = vcvt.s32.f32 %v168
    %v171 = vcvt.s32.f32 %v169
    %vm172 = vcmask 130048
    %v174 = vsel %vm172, %v170, 0
    %v177 = vsel %vm172, %v171, 0
    %179 = vmatpush.msra.mxu0 0.0
    %180 = vmatpush.msra.mxu0 0.0
    %181 = vmatpush.msra.mxu0 0.0
    %182 = vmatpush.msra.mxu0 0.0
    %183 = vmatpush.msra.mxu0 0.0
    %184 = vmatpush.msra.mxu0 0.0
    %185 = vmatpush.msra.mxu0 0.0
    %186 = vmatpush.msra.mxu0 0.0
    %187 = vmatpush.msra.mxu0 0.0
    %188 = vmatpush.msra.mxu0 0.0
    %189 = vmatpush.msra.mxu0 0.0
    %190 = vmatpush.msra.mxu0 0.0
    %191 = vmatpush.msra.mxu0 0.0
    %192 = vmatpush.msra.mxu0 0.0
    %193 = vmatpush.msra.mxu0 %v157
    %194 = vmatpush.msra.mxu0 %v156
    %195 = vmatmul.f32.gmra.mxu0 %v174
    %v196 = vpop.f32.mrf.mxu0
    %v197 = vadd.f32 0.0, %v196
    %198 = vmatmul.f32.gmra.mxu0 %v177
    %v199 = vpop.f32.mrf.mxu0
    %v200 = vadd.f32 0.0, %v199
    %201 = vdwg.mxu0
    %v202 = vmul.f32 %v197, 5.656854
    %v203 = vmul.f32 %v200, 5.656854
    %v204 = vld [vmem:[%s6] sm:$0xff]
    %v205 = vadd.f32 %v202, %v204
    %v206 = vadd.f32 %v203, %v204
    %v207 = vld [vmem:[%s12] sm:$0xf]
    %v208 = vld [vmem:[%s7] sm:$0xff]
    %v209 = vld [vmem:[%s7 + $0x8] sm:$0xff]
    %v210 = vld [vmem:[%s7 + $0x10] sm:$0xff]
    %v211 = vld [vmem:[%s7 + $0x18] sm:$0xff]
    %v212 = vld [vmem:[%s8] sm:$0x1]
    %vm213 = vcmask 261120
    %v214 = vsel %vm213, %v205, 0.0
    %215 = vadd.xlane.f32.xlu0 %v214
    %v216 = vpop.xlane.xlu0 %215
    %v217 = vsel %vm213, %v206, 0.0
    %218 = vadd.xlane.f32.xlu0 %v217
    %v219 = vpop.xlane.xlu0 %218
    %v220 = vrcp.pop 32.0
    %v221 = vmul.f32 32.0, %v220
    %v222 = vsub.f32 1.0, %v221
    %v223 = vmul.f32 %v220, %v222
    %v224 = vadd.f32 %v220, %v223
    %vm225 = vweird.f32 %v220
    %v226 = vsel %vm225, %v220, %v224
    %v227 = vmul.f32 %v216, %v226
    %v228 = vmul.f32 %v219, %v226
    %v229 = vsub.f32 %v205, %v227
    %v230 = vsub.f32 %v206, %v228
    %v231 = vmul.f32 %v229, %v229
    %v232 = vmul.f32 %v230, %v230
    %v233 = vsel %vm213, %v231, 0.0
    %234 = vadd.xlane.f32.xlu0 %v233
    %v235 = vpop.xlane.xlu0 %234
    %v236 = vsel %vm213, %v232, 0.0
    %237 = vadd.xlane.f32.xlu0 %v236
    %v238 = vpop.xlane.xlu0 %237
    %v239 = vmul.f32 %v235, 0.032258064
    %v240 = vmul.f32 %v238, 0.032258064
    %v241 = vperm.slane %v207, 0
    %v242 = vmul.f32 %v241, %v229
    %v243 = vmul.f32 %v241, %v230
    %v244 = vrsqrt.pop %v239
    %v245 = vmul.f32 %v244, %v239
    %v246 = vmul.f32 %v245, %v244
    %v247 = vmul.f32 0.5, %v246
    %v248 = vsub.f32 1.5, %v247
    %v249 = vmul.f32 %v244, %v248
    %v250 = vmul.f32 %v239, %v249
    %vm251 = vcmp.eq.f32.partialorder %v239, inf
    %v252 = vsel %vm251, %v239, %v250
    %vm253 = vcmp.eq.f32.partialorder %v239, 0.0
    %v254 = vand.u32 %v239, 2147483648
    %v255 = vsel %vm253, %v254, %v252
    %v256 = vrsqrt.pop %v240
    %v257 = vmul.f32 %v256, %v240
    %v258 = vmul.f32 %v257, %v256
    %v259 = vmul.f32 0.5, %v258
    %v260 = vsub.f32 1.5, %v259
    %v261 = vmul.f32 %v256, %v260
    %v262 = vmul.f32 %v240, %v261
    %vm263 = vcmp.eq.f32.partialorder %v240, inf
    %v264 = vsel %vm263, %v240, %v262
    %vm265 = vcmp.eq.f32.partialorder %v240, 0.0
    %v266 = vand.u32 %v240, 2147483648
    %v267 = vsel %vm265, %v266, %v264
    %v268 = vadd.f32 %v255, 1e-06
    %v269 = vadd.f32 %v267, 1e-06
    %v270 = vrcp.pop %v268
    %v271 = vmul.f32 %v268, %v270
    %v272 = vsub.f32 1.0, %v271
    %v273 = vmul.f32 %v270, %v272
    %v274 = vadd.f32 %v270, %v273
    %vm275 = vweird.f32 %v268
    %vm276 = vweird.f32 %v270
    %vm277 = vmor %vm275, %vm276
    %v278 = vsel %vm277, %v270, %v274
    %v279 = vand.u32 2147483647, %v268
    %vm280 = vcmp.eq.f32.partialorder %v279, 8.507059e+37
    %v281 = vand.u32 %v268, 2147483648
    %v282 = vor.u32 1.1754944e-38, %v281
    %v283 = vsel %vm280, %v282, %v278
    %v284 = vmul.f32 %v242, %v283
    %v285 = vrcp.pop %v269
    %v286 = vmul.f32 %v269, %v285
    %v287 = vsub.f32 1.0, %v286
    %v288 = vmul.f32 %v285, %v287
    %v289 = vadd.f32 %v285, %v288
    %vm290 = vweird.f32 %v269
    %vm291 = vweird.f32 %v285
    %vm292 = vmor %vm290, %vm291
    %v293 = vsel %vm292, %v285, %v289
    %v294 = vand.u32 2147483647, %v269
    %vm295 = vcmp.eq.f32.partialorder %v294, 8.507059e+37
    %v296 = vand.u32 %v269, 2147483648
    %v297 = vor.u32 1.1754944e-38, %v296
    %v298 = vsel %vm295, %v297, %v293
    %v299 = vmul.f32 %v243, %v298
    %v300 = vperm.slane %v207, 1
    %v301 = vadd.f32 %v284, %v300
    %v302 = vadd.f32 %v299, %v300
    %v304 = vperm.slane %v212, 0
    %v307 = vsel %vm213, %v301, 0
    %v310 = vsel %vm213, %v302, 0
    %312 = vmatpush.msra.mxu0 0.0
    %313 = vmatpush.msra.mxu0 0.0
    %314 = vmatpush.msra.mxu0 0.0
    %315 = vmatpush.msra.mxu0 0.0
    %316 = vmatpush.msra.mxu0 0.0
    %317 = vmatpush.msra.mxu0 0.0
    %318 = vmatpush.msra.mxu0 0.0
    %319 = vmatpush.msra.mxu0 0.0
    %320 = vmatpush.msra.mxu0 0.0
    %321 = vmatpush.msra.mxu0 0.0
    %322 = vmatpush.msra.mxu0 0.0
    %323 = vmatpush.msra.mxu0 0.0
    %324 = vmatpush.msra.mxu0 %v211
    %325 = vmatpush.msra.mxu0 %v210
    %326 = vmatpush.msra.mxu0 %v209
    %327 = vmatpush.msra.mxu0 %v208
    %328 = vmatmul.f32.gmra.mxu0 %v307
    %v329 = vpop.f32.mrf.mxu0
    %v330 = vadd.f32 %v304, %v329
    %331 = vmatmul.f32.gmra.mxu0 %v310
    %v332 = vpop.f32.mrf.mxu0
    %v333 = vadd.f32 %v304, %v332
    %334 = vdwg.mxu0
    %336 = vrot.lane.b32.xlu0 %v330, 96
    %v337 = vpop.permute.xlu0 %336
    %vm338 = vcmask 64512
    %v339 = vsel %vm338, %v330, 0
    %v341 = vsel %vm338, %v337, 0
    %343 = vmatpush.xpose.msra.mxu0 0.0
    %344 = vmatpush.xpose.msra.mxu0 0.0
    %345 = vmatpush.xpose.msra.mxu0 0.0
    %346 = vmatpush.xpose.msra.mxu0 0.0
    %347 = vmatpush.xpose.msra.mxu0 0.0
    %348 = vmatpush.xpose.msra.mxu0 0.0
    %349 = vmatpush.xpose.msra.mxu0 0.0
    %350 = vmatpush.xpose.msra.mxu0 0.0
    %351 = vmatpush.xpose.msra.mxu0 0.0
    %352 = vmatpush.xpose.msra.mxu0 0.0
    %353 = vmatpush.xpose.msra.mxu0 0.0
    %354 = vmatpush.xpose.msra.mxu0 0.0
    %355 = vmatpush.xpose.msra.mxu0 0.0
    %356 = vmatpush.xpose.msra.mxu0 0.0
    %357 = vmatpush.xpose.msra.mxu0 0.0
    %358 = vmatpush.xpose.msra.mxu0 %v341
    %359 = vmatmul.f32.gmra.mxu0 %v339
    %v360 = vpop.f32.mrf.mxu0
    %v361 = vadd.f32 0.0, %v360
    %362 = vdwg.mxu0
    %364 = vrot.lane.b32.xlu0 %v333, 96
    %v365 = vpop.permute.xlu0 %364
    %v366 = vsel %vm338, %v333, 0
    %v368 = vsel %vm338, %v365, 0
    %370 = vmatpush.xpose.msra.mxu0 0.0
    %371 = vmatpush.xpose.msra.mxu0 0.0
    %372 = vmatpush.xpose.msra.mxu0 0.0
    %373 = vmatpush.xpose.msra.mxu0 0.0
    %374 = vmatpush.xpose.msra.mxu0 0.0
    %375 = vmatpush.xpose.msra.mxu0 0.0
    %376 = vmatpush.xpose.msra.mxu0 0.0
    %377 = vmatpush.xpose.msra.mxu0 0.0
    %378 = vmatpush.xpose.msra.mxu0 0.0
    %379 = vmatpush.xpose.msra.mxu0 0.0
    %380 = vmatpush.xpose.msra.mxu0 0.0
    %381 = vmatpush.xpose.msra.mxu0 0.0
    %382 = vmatpush.xpose.msra.mxu0 0.0
    %383 = vmatpush.xpose.msra.mxu0 0.0
    %384 = vmatpush.xpose.msra.mxu0 0.0
    %385 = vmatpush.xpose.msra.mxu0 %v368
    %386 = vmatmul.f32.gmra.mxu0 %v366
    %v387 = vpop.f32.mrf.mxu0
    %v388 = vadd.f32 0.0, %v387
    %389 = vdwg.mxu0
    %v390 = vmul.f32 %v361, 0.35355338
    %v391 = vmul.f32 %v388, 0.35355338
    %v392 = vadd.f32 %v390, %v146
    %v393 = vadd.f32 %v391, %v147
    %v394 = vsel %vm338, %v392, -inf
    %395 = vmax.xlane.f32.xlu0 %v394
    %v396 = vpop.xlane.xlu0 %395
    %v397 = vsel %vm338, %v393, -inf
    %398 = vmax.xlane.f32.xlu0 %v397
    %v399 = vpop.xlane.xlu0 %398
    %v400 = vsub.f32 %v392, %v396
    %v401 = vsub.f32 %v393, %v399
    %v402 = vmul.f32 %v400, 1.442695
    %v403 = vpow.pop %v402
    %v404 = vmul.f32 %v401, 1.442695
    %v405 = vpow.pop %v404
    %v406 = vsel %vm338, %v403, 0.0
    %407 = vadd.xlane.f32.xlu0 %v406
    %v408 = vpop.xlane.xlu0 %407
    %v409 = vsel %vm338, %v405, 0.0
    %410 = vadd.xlane.f32.xlu0 %v409
    %v411 = vpop.xlane.xlu0 %410
    %v412 = vrcp.pop %v408
    %v413 = vrcp.pop %v411
    %v414 = vmul.f32 %v403, %v412
    %v415 = vmul.f32 %v405, %v413
    %416 = vrot.lane.b32.xlu0 %v330, 64
    %v417 = vpop.permute.xlu0 %416
    %v420 = vsel %vm338, %v414, 0
    %422 = vmatpush.msra.mxu0 0.0
    %423 = vmatpush.msra.mxu0 0.0
    %424 = vmatpush.msra.mxu0 0.0
    %425 = vmatpush.msra.mxu0 0.0
    %426 = vmatpush.msra.mxu0 0.0
    %427 = vmatpush.msra.mxu0 0.0
    %428 = vmatpush.msra.mxu0 0.0
    %429 = vmatpush.msra.mxu0 0.0
    %430 = vmatpush.msra.mxu0 0.0
    %431 = vmatpush.msra.mxu0 0.0
    %432 = vmatpush.msra.mxu0 0.0
    %433 = vmatpush.msra.mxu0 0.0
    %434 = vmatpush.msra.mxu0 0.0
    %435 = vmatpush.msra.mxu0 0.0
    %436 = vmatpush.msra.mxu0 0.0
    %437 = vmatpush.msra.mxu0 %v417
    %438 = vmatmul.f32.gmra.mxu0 %v420
    %v439 = vpop.f32.mrf.mxu0
    %v440 = vadd.f32 0.0, %v439
    %441 = vdwg.mxu0
    %442 = vrot.lane.b32.xlu0 %v333, 64
    %v443 = vpop.permute.xlu0 %442
    %v446 = vsel %vm338, %v415, 0
    %448 = vmatpush.msra.mxu0 0.0
    %449 = vmatpush.msra.mxu0 0.0
    %450 = vmatpush.msra.mxu0 0.0
    %451 = vmatpush.msra.mxu0 0.0
    %452 = vmatpush.msra.mxu0 0.0
    %453 = vmatpush.msra.mxu0 0.0
    %454 = vmatpush.msra.mxu0 0.0
    %455 = vmatpush.msra.mxu0 0.0
    %456 = vmatpush.msra.mxu0 0.0
    %457 = vmatpush.msra.mxu0 0.0
    %458 = vmatpush.msra.mxu0 0.0
    %459 = vmatpush.msra.mxu0 0.0
    %460 = vmatpush.msra.mxu0 0.0
    %461 = vmatpush.msra.mxu0 0.0
    %462 = vmatpush.msra.mxu0 0.0
    %463 = vmatpush.msra.mxu0 %v443
    %464 = vmatmul.f32.gmra.mxu0 %v446
    %v465 = vpop.f32.mrf.mxu0
    %v466 = vadd.f32 0.0, %v465
    %467 = vdwg.mxu0
    %468 = vrot.lane.b32.xlu0 %v330, 120
    %v469 = vpop.permute.xlu0 %468
    %470 = vrot.lane.b32.xlu0 %v330, 88
    %v471 = vpop.permute.xlu0 %470
    %v472 = vsel %vm338, %v469, 0
    %v474 = vsel %vm338, %v471, 0
    %476 = vmatpush.xpose.msra.mxu0 0.0
    %477 = vmatpush.xpose.msra.mxu0 0.0
    %478 = vmatpush.xpose.msra.mxu0 0.0
    %479 = vmatpush.xpose.msra.mxu0 0.0
    %480 = vmatpush.xpose.msra.mxu0 0.0
    %481 = vmatpush.xpose.msra.mxu0 0.0
    %482 = vmatpush.xpose.msra.mxu0 0.0
    %483 = vmatpush.xpose.msra.mxu0 0.0
    %484 = vmatpush.xpose.msra.mxu0 0.0
    %485 = vmatpush.xpose.msra.mxu0 0.0
    %486 = vmatpush.xpose.msra.mxu0 0.0
    %487 = vmatpush.xpose.msra.mxu0 0.0
    %488 = vmatpush.xpose.msra.mxu0 0.0
    %489 = vmatpush.xpose.msra.mxu0 0.0
    %490 = vmatpush.xpose.msra.mxu0 0.0
    %491 = vmatpush.xpose.msra.mxu0 %v474
    %492 = vmatmul.f32.gmra.mxu0 %v472
    %v493 = vpop.f32.mrf.mxu0
    %v494 = vadd.f32 0.0, %v493
    %495 = vdwg.mxu0
    %496 = vrot.lane.b32.xlu0 %v333, 120
    %v497 = vpop.permute.xlu0 %496
    %498 = vrot.lane.b32.xlu0 %v333, 88
    %v499 = vpop.permute.xlu0 %498
    %v500 = vsel %vm338, %v497, 0
    %v502 = vsel %vm338, %v499, 0
    %504 = vmatpush.xpose.msra.mxu0 0.0
    %505 = vmatpush.xpose.msra.mxu0 0.0
    %506 = vmatpush.xpose.msra.mxu0 0.0
    %507 = vmatpush.xpose.msra.mxu0 0.0
    %508 = vmatpush.xpose.msra.mxu0 0.0
    %509 = vmatpush.xpose.msra.mxu0 0.0
    %510 = vmatpush.xpose.msra.mxu0 0.0
    %511 = vmatpush.xpose.msra.mxu0 0.0
    %512 = vmatpush.xpose.msra.mxu0 0.0
    %513 = vmatpush.xpose.msra.mxu0 0.0
    %514 = vmatpush.xpose.msra.mxu0 0.0
    %515 = vmatpush.xpose.msra.mxu0 0.0
    %516 = vmatpush.xpose.msra.mxu0 0.0
    %517 = vmatpush.xpose.msra.mxu0 0.0
    %518 = vmatpush.xpose.msra.mxu0 0.0
    %519 = vmatpush.xpose.msra.mxu0 %v502
    %520 = vmatmul.f32.gmra.mxu0 %v500
    %v521 = vpop.f32.mrf.mxu0
    %v522 = vadd.f32 0.0, %v521
    %523 = vdwg.mxu0
    %v524 = vmul.f32 %v494, 0.35355338
    %v525 = vmul.f32 %v522, 0.35355338
    %v526 = vadd.f32 %v524, %v146
    %v527 = vadd.f32 %v525, %v147
    %v528 = vsel %vm338, %v526, -inf
    %529 = vmax.xlane.f32.xlu0 %v528
    %v530 = vpop.xlane.xlu0 %529
    %v531 = vsel %vm338, %v527, -inf
    %532 = vmax.xlane.f32.xlu0 %v531
    %v533 = vpop.xlane.xlu0 %532
    %v534 = vsub.f32 %v526, %v530
    %v535 = vsub.f32 %v527, %v533
    %v536 = vmul.f32 %v534, 1.442695
    %v537 = vpow.pop %v536
    %v538 = vmul.f32 %v535, 1.442695
    %v539 = vpow.pop %v538
    %v540 = vsel %vm338, %v537, 0.0
    %541 = vadd.xlane.f32.xlu0 %v540
    %v542 = vpop.xlane.xlu0 %541
    %v543 = vsel %vm338, %v539, 0.0
    %544 = vadd.xlane.f32.xlu0 %v543
    %v545 = vpop.xlane.xlu0 %544
    %v546 = vrcp.pop %v542
    %v547 = vrcp.pop %v545
    %v548 = vmul.f32 %v537, %v546
    %v549 = vmul.f32 %v539, %v547
    %550 = vrot.lane.b32.xlu0 %v330, 56
    %v551 = vpop.permute.xlu0 %550
    %v554 = vsel %vm338, %v548, 0
    %556 = vmatpush.msra.mxu0 0.0
    %557 = vmatpush.msra.mxu0 0.0
    %558 = vmatpush.msra.mxu0 0.0
    %559 = vmatpush.msra.mxu0 0.0
    %560 = vmatpush.msra.mxu0 0.0
    %561 = vmatpush.msra.mxu0 0.0
    %562 = vmatpush.msra.mxu0 0.0
    %563 = vmatpush.msra.mxu0 0.0
    %564 = vmatpush.msra.mxu0 0.0
    %565 = vmatpush.msra.mxu0 0.0
    %566 = vmatpush.msra.mxu0 0.0
    %567 = vmatpush.msra.mxu0 0.0
    %568 = vmatpush.msra.mxu0 0.0
    %569 = vmatpush.msra.mxu0 0.0
    %570 = vmatpush.msra.mxu0 0.0
    %571 = vmatpush.msra.mxu0 %v551
    %572 = vmatmul.f32.gmra.mxu0 %v554
    %v573 = vpop.f32.mrf.mxu0
    %v574 = vadd.f32 0.0, %v573
    %575 = vdwg.mxu0
    %576 = vrot.lane.b32.xlu0 %v333, 56
    %v577 = vpop.permute.xlu0 %576
    %v580 = vsel %vm338, %v549, 0
    %582 = vmatpush.msra.mxu0 0.0
    %583 = vmatpush.msra.mxu0 0.0
    %584 = vmatpush.msra.mxu0 0.0
    %585 = vmatpush.msra.mxu0 0.0
    %586 = vmatpush.msra.mxu0 0.0
    %587 = vmatpush.msra.mxu0 0.0
    %588 = vmatpush.msra.mxu0 0.0
    %589 = vmatpush.msra.mxu0 0.0
    %590 = vmatpush.msra.mxu0 0.0
    %591 = vmatpush.msra.mxu0 0.0
    %592 = vmatpush.msra.mxu0 0.0
    %593 = vmatpush.msra.mxu0 0.0
    %594 = vmatpush.msra.mxu0 0.0
    %595 = vmatpush.msra.mxu0 0.0
    %596 = vmatpush.msra.mxu0 0.0
    %597 = vmatpush.msra.mxu0 %v577
    %598 = vmatmul.f32.gmra.mxu0 %v580
    %v599 = vpop.f32.mrf.mxu0
    %v600 = vadd.f32 0.0, %v599
    %601 = vdwg.mxu0
    %603 = vrot.lane.b32.xlu0 %v209, 32
    %v604 = vpop.permute.xlu0 %603
    %v607 = vsel %vm338, %v574, 0
    %v610 = vsel %vm338, %v600, 0
    %612 = vmatpush.msra.mxu0 0.0
    %613 = vmatpush.msra.mxu0 0.0
    %614 = vmatpush.msra.mxu0 0.0
    %615 = vmatpush.msra.mxu0 0.0
    %616 = vmatpush.msra.mxu0 0.0
    %617 = vmatpush.msra.mxu0 0.0
    %618 = vmatpush.msra.mxu0 0.0
    %619 = vmatpush.msra.mxu0 0.0
    %620 = vmatpush.msra.mxu0 0.0
    %621 = vmatpush.msra.mxu0 0.0
    %622 = vmatpush.msra.mxu0 0.0
    %623 = vmatpush.msra.mxu0 0.0
    %624 = vmatpush.msra.mxu0 0.0
    %625 = vmatpush.msra.mxu0 0.0
    %626 = vmatpush.msra.mxu0 0.0
    %627 = vmatpush.msra.mxu0 %v604
    %628 = vmatmul.f32.gmra.mxu0 %v607
    %v629 = vpop.f32.mrf.mxu0
    %v630 = vadd.f32 0.0, %v629
    %631 = vmatmul.f32.gmra.mxu0 %v610
    %v632 = vpop.f32.mrf.mxu0
    %v633 = vadd.f32 0.0, %v632
    %634 = vdwg.mxu0
    %636 = vrot.lane.b32.xlu0 %v208, 32
    %v637 = vpop.permute.xlu0 %636
    %v640 = vsel %vm338, %v440, 0
    %v643 = vsel %vm338, %v466, 0
    %645 = vmatpush.msra.mxu0 0.0
    %646 = vmatpush.msra.mxu0 0.0
    %647 = vmatpush.msra.mxu0 0.0
    %648 = vmatpush.msra.mxu0 0.0
    %649 = vmatpush.msra.mxu0 0.0
    %650 = vmatpush.msra.mxu0 0.0
    %651 = vmatpush.msra.mxu0 0.0
    %652 = vmatpush.msra.mxu0 0.0
    %653 = vmatpush.msra.mxu0 0.0
    %654 = vmatpush.msra.mxu0 0.0
    %655 = vmatpush.msra.mxu0 0.0
    %656 = vmatpush.msra.mxu0 0.0
    %657 = vmatpush.msra.mxu0 0.0
    %658 = vmatpush.msra.mxu0 0.0
    %659 = vmatpush.msra.mxu0 0.0
    %660 = vmatpush.msra.mxu0 %v637
    %661 = vmatmul.f32.gmra.mxu0 %v640
    %v662 = vpop.f32.mrf.mxu0
    %v663 = vadd.f32 %v630, %v662
    %664 = vmatmul.f32.gmra.mxu0 %v643
    %v665 = vpop.f32.mrf.mxu0
    %v666 = vadd.f32 %v633, %v665
    %667 = vdwg.mxu0
    %668 = vrot.lane.b32.xlu0 %v330, 112
    %v669 = vpop.permute.xlu0 %668
    %670 = vrot.lane.b32.xlu0 %v330, 80
    %v671 = vpop.permute.xlu0 %670
    %v672 = vsel %vm338, %v669, 0
    %v674 = vsel %vm338, %v671, 0
    %676 = vmatpush.xpose.msra.mxu0 0.0
    %677 = vmatpush.xpose.msra.mxu0 0.0
    %678 = vmatpush.xpose.msra.mxu0 0.0
    %679 = vmatpush.xpose.msra.mxu0 0.0
    %680 = vmatpush.xpose.msra.mxu0 0.0
    %681 = vmatpush.xpose.msra.mxu0 0.0
    %682 = vmatpush.xpose.msra.mxu0 0.0
    %683 = vmatpush.xpose.msra.mxu0 0.0
    %684 = vmatpush.xpose.msra.mxu0 0.0
    %685 = vmatpush.xpose.msra.mxu0 0.0
    %686 = vmatpush.xpose.msra.mxu0 0.0
    %687 = vmatpush.xpose.msra.mxu0 0.0
    %688 = vmatpush.xpose.msra.mxu0 0.0
    %689 = vmatpush.xpose.msra.mxu0 0.0
    %690 = vmatpush.xpose.msra.mxu0 0.0
    %691 = vmatpush.xpose.msra.mxu0 %v674
    %692 = vmatmul.f32.gmra.mxu0 %v672
    %v693 = vpop.f32.mrf.mxu0
    %v694 = vadd.f32 0.0, %v693
    %695 = vdwg.mxu0
    %696 = vrot.lane.b32.xlu0 %v333, 112
    %v697 = vpop.permute.xlu0 %696
    %698 = vrot.lane.b32.xlu0 %v333, 80
    %v699 = vpop.permute.xlu0 %698
    %v700 = vsel %vm338, %v697, 0
    %v702 = vsel %vm338, %v699, 0
    %704 = vmatpush.xpose.msra.mxu0 0.0
    %705 = vmatpush.xpose.msra.mxu0 0.0
    %706 = vmatpush.xpose.msra.mxu0 0.0
    %707 = vmatpush.xpose.msra.mxu0 0.0
    %708 = vmatpush.xpose.msra.mxu0 0.0
    %709 = vmatpush.xpose.msra.mxu0 0.0
    %710 = vmatpush.xpose.msra.mxu0 0.0
    %711 = vmatpush.xpose.msra.mxu0 0.0
    %712 = vmatpush.xpose.msra.mxu0 0.0
    %713 = vmatpush.xpose.msra.mxu0 0.0
    %714 = vmatpush.xpose.msra.mxu0 0.0
    %715 = vmatpush.xpose.msra.mxu0 0.0
    %716 = vmatpush.xpose.msra.mxu0 0.0
    %717 = vmatpush.xpose.msra.mxu0 0.0
    %718 = vmatpush.xpose.msra.mxu0 0.0
    %719 = vmatpush.xpose.msra.mxu0 %v702
    %720 = vmatmul.f32.gmra.mxu0 %v700
    %v721 = vpop.f32.mrf.mxu0
    %v722 = vadd.f32 0.0, %v721
    %723 = vdwg.mxu0
    %v724 = vmul.f32 %v694, 0.35355338
    %v725 = vmul.f32 %v722, 0.35355338
    %v726 = vadd.f32 %v724, %v146
    %v727 = vadd.f32 %v725, %v147
    %v728 = vsel %vm338, %v726, -inf
    %729 = vmax.xlane.f32.xlu0 %v728
    %v730 = vpop.xlane.xlu0 %729
    %v731 = vsel %vm338, %v727, -inf
    %732 = vmax.xlane.f32.xlu0 %v731
    %v733 = vpop.xlane.xlu0 %732
    %v734 = vsub.f32 %v726, %v730
    %v735 = vsub.f32 %v727, %v733
    %v736 = vmul.f32 %v734, 1.442695
    %v737 = vpow.pop %v736
    %v738 = vmul.f32 %v735, 1.442695
    %v739 = vpow.pop %v738
    %v740 = vsel %vm338, %v737, 0.0
    %741 = vadd.xlane.f32.xlu0 %v740
    %v742 = vpop.xlane.xlu0 %741
    %v743 = vsel %vm338, %v739, 0.0
    %744 = vadd.xlane.f32.xlu0 %v743
    %v745 = vpop.xlane.xlu0 %744
    %v746 = vrcp.pop %v742
    %v747 = vrcp.pop %v745
    %v748 = vmul.f32 %v737, %v746
    %v749 = vmul.f32 %v739, %v747
    %750 = vrot.lane.b32.xlu0 %v330, 48
    %v751 = vpop.permute.xlu0 %750
    %v754 = vsel %vm338, %v748, 0
    %756 = vmatpush.msra.mxu0 0.0
    %757 = vmatpush.msra.mxu0 0.0
    %758 = vmatpush.msra.mxu0 0.0
    %759 = vmatpush.msra.mxu0 0.0
    %760 = vmatpush.msra.mxu0 0.0
    %761 = vmatpush.msra.mxu0 0.0
    %762 = vmatpush.msra.mxu0 0.0
    %763 = vmatpush.msra.mxu0 0.0
    %764 = vmatpush.msra.mxu0 0.0
    %765 = vmatpush.msra.mxu0 0.0
    %766 = vmatpush.msra.mxu0 0.0
    %767 = vmatpush.msra.mxu0 0.0
    %768 = vmatpush.msra.mxu0 0.0
    %769 = vmatpush.msra.mxu0 0.0
    %770 = vmatpush.msra.mxu0 0.0
    %771 = vmatpush.msra.mxu0 %v751
    %772 = vmatmul.f32.gmra.mxu0 %v754
    %v773 = vpop.f32.mrf.mxu0
    %v774 = vadd.f32 0.0, %v773
    %775 = vdwg.mxu0
    %776 = vrot.lane.b32.xlu0 %v333, 48
    %v777 = vpop.permute.xlu0 %776
    %v780 = vsel %vm338, %v749, 0
    %782 = vmatpush.msra.mxu0 0.0
    %783 = vmatpush.msra.mxu0 0.0
    %784 = vmatpush.msra.mxu0 0.0
    %785 = vmatpush.msra.mxu0 0.0
    %786 = vmatpush.msra.mxu0 0.0
    %787 = vmatpush.msra.mxu0 0.0
    %788 = vmatpush.msra.mxu0 0.0
    %789 = vmatpush.msra.mxu0 0.0
    %790 = vmatpush.msra.mxu0 0.0
    %791 = vmatpush.msra.mxu0 0.0
    %792 = vmatpush.msra.mxu0 0.0
    %793 = vmatpush.msra.mxu0 0.0
    %794 = vmatpush.msra.mxu0 0.0
    %795 = vmatpush.msra.mxu0 0.0
    %796 = vmatpush.msra.mxu0 0.0
    %797 = vmatpush.msra.mxu0 %v777
    %798 = vmatmul.f32.gmra.mxu0 %v780
    %v799 = vpop.f32.mrf.mxu0
    %v800 = vadd.f32 0.0, %v799
    %801 = vdwg.mxu0
    %803 = vrot.lane.b32.xlu0 %v210, 32
    %v804 = vpop.permute.xlu0 %803
    %v807 = vsel %vm338, %v774, 0
    %v810 = vsel %vm338, %v800, 0
    %812 = vmatpush.msra.mxu0 0.0
    %813 = vmatpush.msra.mxu0 0.0
    %814 = vmatpush.msra.mxu0 0.0
    %815 = vmatpush.msra.mxu0 0.0
    %816 = vmatpush.msra.mxu0 0.0
    %817 = vmatpush.msra.mxu0 0.0
    %818 = vmatpush.msra.mxu0 0.0
    %819 = vmatpush.msra.mxu0 0.0
    %820 = vmatpush.msra.mxu0 0.0
    %821 = vmatpush.msra.mxu0 0.0
    %822 = vmatpush.msra.mxu0 0.0
    %823 = vmatpush.msra.mxu0 0.0
    %824 = vmatpush.msra.mxu0 0.0
    %825 = vmatpush.msra.mxu0 0.0
    %826 = vmatpush.msra.mxu0 0.0
    %827 = vmatpush.msra.mxu0 %v804
    %828 = vmatmul.f32.gmra.mxu0 %v807
    %v829 = vpop.f32.mrf.mxu0
    %v830 = vadd.f32 0.0, %v829
    %831 = vmatmul.f32.gmra.mxu0 %v810
    %v832 = vpop.f32.mrf.mxu0
    %v833 = vadd.f32 0.0, %v832
    %834 = vdwg.mxu0
    %v835 = vadd.f32 %v663, %v830
    %v836 = vadd.f32 %v666, %v833
    %837 = vrot.lane.b32.xlu0 %v330, 104
    %v838 = vpop.permute.xlu0 %837
    %839 = vrot.lane.b32.xlu0 %v330, 72
    %v840 = vpop.permute.xlu0 %839
    %v841 = vsel %vm338, %v838, 0
    %v843 = vsel %vm338, %v840, 0
    %845 = vmatpush.xpose.msra.mxu0 0.0
    %846 = vmatpush.xpose.msra.mxu0 0.0
    %847 = vmatpush.xpose.msra.mxu0 0.0
    %848 = vmatpush.xpose.msra.mxu0 0.0
    %849 = vmatpush.xpose.msra.mxu0 0.0
    %850 = vmatpush.xpose.msra.mxu0 0.0
    %851 = vmatpush.xpose.msra.mxu0 0.0
    %852 = vmatpush.xpose.msra.mxu0 0.0
    %853 = vmatpush.xpose.msra.mxu0 0.0
    %854 = vmatpush.xpose.msra.mxu0 0.0
    %855 = vmatpush.xpose.msra.mxu0 0.0
    %856 = vmatpush.xpose.msra.mxu0 0.0
    %857 = vmatpush.xpose.msra.mxu0 0.0
    %858 = vmatpush.xpose.msra.mxu0 0.0
    %859 = vmatpush.xpose.msra.mxu0 0.0
    %860 = vmatpush.xpose.msra.mxu0 %v843
    %861 = vmatmul.f32.gmra.mxu0 %v841
    %v862 = vpop.f32.mrf.mxu0
    %v863 = vadd.f32 0.0, %v862
    %864 = vdwg.mxu0
    %865 = vrot.lane.b32.xlu0 %v333, 104
    %v866 = vpop.permute.xlu0 %865
    %867 = vrot.lane.b32.xlu0 %v333, 72
    %v868 = vpop.permute.xlu0 %867
    %v869 = vsel %vm338, %v866, 0
    %v871 = vsel %vm338, %v868, 0
    %873 = vmatpush.xpose.msra.mxu0 0.0
    %874 = vmatpush.xpose.msra.mxu0 0.0
    %875 = vmatpush.xpose.msra.mxu0 0.0
    %876 = vmatpush.xpose.msra.mxu0 0.0
    %877 = vmatpush.xpose.msra.mxu0 0.0
    %878 = vmatpush.xpose.msra.mxu0 0.0
    %879 = vmatpush.xpose.msra.mxu0 0.0
    %880 = vmatpush.xpose.msra.mxu0 0.0
    %881 = vmatpush.xpose.msra.mxu0 0.0
    %882 = vmatpush.xpose.msra.mxu0 0.0
    %883 = vmatpush.xpose.msra.mxu0 0.0
    %884 = vmatpush.xpose.msra.mxu0 0.0
    %885 = vmatpush.xpose.msra.mxu0 0.0
    %886 = vmatpush.xpose.msra.mxu0 0.0
    %887 = vmatpush.xpose.msra.mxu0 0.0
    %888 = vmatpush.xpose.msra.mxu0 %v871
    %889 = vmatmul.f32.gmra.mxu0 %v869
    %v890 = vpop.f32.mrf.mxu0
    %v891 = vadd.f32 0.0, %v890
    %892 = vdwg.mxu0
    %v893 = vmul.f32 %v863, 0.35355338
    %v894 = vmul.f32 %v891, 0.35355338
    %v895 = vadd.f32 %v893, %v146
    %v896 = vadd.f32 %v894, %v147
    %v897 = vsel %vm338, %v895, -inf
    %898 = vmax.xlane.f32.xlu0 %v897
    %v899 = vpop.xlane.xlu0 %898
    %v900 = vsel %vm338, %v896, -inf
    %901 = vmax.xlane.f32.xlu0 %v900
    %v902 = vpop.xlane.xlu0 %901
    %v903 = vsub.f32 %v895, %v899
    %v904 = vsub.f32 %v896, %v902
    %v905 = vmul.f32 %v903, 1.442695
    %v906 = vpow.pop %v905
    %v907 = vmul.f32 %v904, 1.442695
    %v908 = vpow.pop %v907
    %v909 = vsel %vm338, %v906, 0.0
    %910 = vadd.xlane.f32.xlu0 %v909
    %v911 = vpop.xlane.xlu0 %910
    %v912 = vsel %vm338, %v908, 0.0
    %913 = vadd.xlane.f32.xlu0 %v912
    %v914 = vpop.xlane.xlu0 %913
    %v915 = vrcp.pop %v911
    %v916 = vrcp.pop %v914
    %v917 = vmul.f32 %v906, %v915
    %v918 = vmul.f32 %v908, %v916
    %919 = vrot.lane.b32.xlu0 %v330, 40
    %v920 = vpop.permute.xlu0 %919
    %v923 = vsel %vm338, %v917, 0
    %925 = vmatpush.msra.mxu0 0.0
    %926 = vmatpush.msra.mxu0 0.0
    %927 = vmatpush.msra.mxu0 0.0
    %928 = vmatpush.msra.mxu0 0.0
    %929 = vmatpush.msra.mxu0 0.0
    %930 = vmatpush.msra.mxu0 0.0
    %931 = vmatpush.msra.mxu0 0.0
    %932 = vmatpush.msra.mxu0 0.0
    %933 = vmatpush.msra.mxu0 0.0
    %934 = vmatpush.msra.mxu0 0.0
    %935 = vmatpush.msra.mxu0 0.0
    %936 = vmatpush.msra.mxu0 0.0
    %937 = vmatpush.msra.mxu0 0.0
    %938 = vmatpush.msra.mxu0 0.0
    %939 = vmatpush.msra.mxu0 0.0
    %940 = vmatpush.msra.mxu0 %v920
    %941 = vmatmul.f32.gmra.mxu0 %v923
    %v942 = vpop.f32.mrf.mxu0
    %v943 = vadd.f32 0.0, %v942
    %944 = vdwg.mxu0
    %945 = vrot.lane.b32.xlu0 %v333, 40
    %v946 = vpop.permute.xlu0 %945
    %v949 = vsel %vm338, %v918, 0
    %951 = vmatpush.msra.mxu0 0.0
    %952 = vmatpush.msra.mxu0 0.0
    %953 = vmatpush.msra.mxu0 0.0
    %954 = vmatpush.msra.mxu0 0.0
    %955 = vmatpush.msra.mxu0 0.0
    %956 = vmatpush.msra.mxu0 0.0
    %957 = vmatpush.msra.mxu0 0.0
    %958 = vmatpush.msra.mxu0 0.0
    %959 = vmatpush.msra.mxu0 0.0
    %960 = vmatpush.msra.mxu0 0.0
    %961 = vmatpush.msra.mxu0 0.0
    %962 = vmatpush.msra.mxu0 0.0
    %963 = vmatpush.msra.mxu0 0.0
    %964 = vmatpush.msra.mxu0 0.0
    %965 = vmatpush.msra.mxu0 0.0
    %966 = vmatpush.msra.mxu0 %v946
    %967 = vmatmul.f32.gmra.mxu0 %v949
    %v968 = vpop.f32.mrf.mxu0
    %v969 = vadd.f32 0.0, %v968
    %970 = vdwg.mxu0
    %972 = vrot.lane.b32.xlu0 %v211, 32
    %v973 = vpop.permute.xlu0 %972
    %v976 = vsel %vm338, %v943, 0
    %v979 = vsel %vm338, %v969, 0
    %981 = vmatpush.msra.mxu0 0.0
    %982 = vmatpush.msra.mxu0 0.0
    %983 = vmatpush.msra.mxu0 0.0
    %984 = vmatpush.msra.mxu0 0.0
    %985 = vmatpush.msra.mxu0 0.0
    %986 = vmatpush.msra.mxu0 0.0
    %987 = vmatpush.msra.mxu0 0.0
    %988 = vmatpush.msra.mxu0 0.0
    %989 = vmatpush.msra.mxu0 0.0
    %990 = vmatpush.msra.mxu0 0.0
    %991 = vmatpush.msra.mxu0 0.0
    %992 = vmatpush.msra.mxu0 0.0
    %993 = vmatpush.msra.mxu0 0.0
    %994 = vmatpush.msra.mxu0 0.0
    %995 = vmatpush.msra.mxu0 0.0
    %996 = vmatpush.msra.mxu0 %v973
    %997 = vmatmul.f32.gmra.mxu0 %v976
    %v998 = vpop.f32.mrf.mxu0
    %v999 = vadd.f32 0.0, %v998
    %1000 = vmatmul.f32.gmra.mxu0 %v979
    %v1001 = vpop.f32.mrf.mxu0
    %v1002 = vadd.f32 0.0, %v1001
    %1003 = vdwg.mxu0
    %v1004 = vadd.f32 %v835, %v999
    %v1005 = vadd.f32 %v836, %v1002
    %1006 = vrot.lane.b32.xlu0 %v304, 32
    %v1007 = vpop.permute.xlu0 %1006
    %v1009 = vadd.f32 %v1004, %v1007
    %v1010 = vadd.f32 %v1005, %v1007
    %v1011 = vadd.f32 %v205, %v1009
    %v1012 = vadd.f32 %v206, %v1010
    %v1013 = vsel %vm213, %v1011, 0.0
    %1014 = vadd.xlane.f32.xlu0 %v1013
    %v1015 = vpop.xlane.xlu0 %1014
    %v1016 = vsel %vm213, %v1012, 0.0
    %1017 = vadd.xlane.f32.xlu0 %v1016
    %v1018 = vpop.xlane.xlu0 %1017
    %v1019 = vmul.f32 %v1015, %v226
    %v1020 = vmul.f32 %v1018, %v226
    %v1021 = vsub.f32 %v1011, %v1019
    %v1022 = vsub.f32 %v1012, %v1020
    %v1023 = vmul.f32 %v1021, %v1021
    %v1024 = vmul.f32 %v1022, %v1022
    %v1025 = vsel %vm213, %v1023, 0.0
    %1026 = vadd.xlane.f32.xlu0 %v1025
    %v1027 = vpop.xlane.xlu0 %1026
    %v1028 = vsel %vm213, %v1024, 0.0
    %1029 = vadd.xlane.f32.xlu0 %v1028
    %v1030 = vpop.xlane.xlu0 %1029
    %v1031 = vmul.f32 %v1027, 0.032258064
    %v1032 = vmul.f32 %v1030, 0.032258064
    %v1033 = vperm.slane %v207, 2
    %v1034 = vmul.f32 %v1033, %v1021
    %v1035 = vmul.f32 %v1033, %v1022
    %v1036 = vrsqrt.pop %v1031
    %v1037 = vmul.f32 %v1036, %v1031
    %v1038 = vmul.f32 %v1037, %v1036
    %v1039 = vmul.f32 0.5, %v1038
    %v1040 = vsub.f32 1.5, %v1039
    %v1041 = vmul.f32 %v1036, %v1040
    %v1042 = vmul.f32 %v1031, %v1041
    %vm1043 = vcmp.eq.f32.partialorder %v1031, inf
    %v1044 = vsel %vm1043, %v1031, %v1042
    %vm1045 = vcmp.eq.f32.partialorder %v1031, 0.0
    %v1046 = vand.u32 %v1031, 2147483648
    %v1047 = vsel %vm1045, %v1046, %v1044
    %v1048 = vrsqrt.pop %v1032
    %v1049 = vmul.f32 %v1048, %v1032
    %v1050 = vmul.f32 %v1049, %v1048
    %v1051 = vmul.f32 0.5, %v1050
    %v1052 = vsub.f32 1.5, %v1051
    %v1053 = vmul.f32 %v1048, %v1052
    %v1054 = vmul.f32 %v1032, %v1053
    %vm1055 = vcmp.eq.f32.partialorder %v1032, inf
    %v1056 = vsel %vm1055, %v1032, %v1054
    %vm1057 = vcmp.eq.f32.partialorder %v1032, 0.0
    %v1058 = vand.u32 %v1032, 2147483648
    %v1059 = vsel %vm1057, %v1058, %v1056
    %v1060 = vadd.f32 %v1047, 1e-06
    %v1061 = vadd.f32 %v1059, 1e-06
    %v1062 = vrcp.pop %v1060
    %v1063 = vmul.f32 %v1060, %v1062
    %v1064 = vsub.f32 1.0, %v1063
    %v1065 = vmul.f32 %v1062, %v1064
    %v1066 = vadd.f32 %v1062, %v1065
    %vm1067 = vweird.f32 %v1060
    %vm1068 = vweird.f32 %v1062
    %vm1069 = vmor %vm1067, %vm1068
    %v1070 = vsel %vm1069, %v1062, %v1066
    %v1071 = vand.u32 2147483647, %v1060
    %vm1072 = vcmp.eq.f32.partialorder %v1071, 8.507059e+37
    %v1073 = vand.u32 %v1060, 2147483648
    %v1074 = vor.u32 1.1754944e-38, %v1073
    %v1075 = vsel %vm1072, %v1074, %v1070
    %v1076 = vmul.f32 %v1034, %v1075
    %v1077 = vrcp.pop %v1061
    %v1078 = vmul.f32 %v1061, %v1077
    %v1079 = vsub.f32 1.0, %v1078
    %v1080 = vmul.f32 %v1077, %v1079
    %v1081 = vadd.f32 %v1077, %v1080
    %vm1082 = vweird.f32 %v1061
    %vm1083 = vweird.f32 %v1077
    %vm1084 = vmor %vm1082, %vm1083
    %v1085 = vsel %vm1084, %v1077, %v1081
    %v1086 = vand.u32 2147483647, %v1061
    %vm1087 = vcmp.eq.f32.partialorder %v1086, 8.507059e+37
    %v1088 = vand.u32 %v1061, 2147483648
    %v1089 = vor.u32 1.1754944e-38, %v1088
    %v1090 = vsel %vm1087, %v1089, %v1085
    %v1091 = vmul.f32 %v1035, %v1090
    %v1092 = vperm.slane %v207, 3
    %v1093 = vadd.f32 %v1076, %v1092
    %v1094 = vadd.f32 %v1091, %v1092
    %v1095 = vld [vmem:[#allocation2] sm:$0x1]
    %v1096 = vld [vmem:[%s9] sm:$0xff]
    %v1097 = vld [vmem:[%s9 + $0x8] sm:$0xff]
    %v1098 = vld [vmem:[%s9 + $0x10] sm:$0xff]
    %v1099 = vld [vmem:[%s9 + $0x18] sm:$0xff]
    %v1101 = vperm.slane %v1095, 0
    %v1104 = vsel %vm213, %v1093, 0
    %v1107 = vsel %vm213, %v1094, 0
    %1109 = vmatpush.msra.mxu0 0.0
    %1110 = vmatpush.msra.mxu0 0.0
    %1111 = vmatpush.msra.mxu0 0.0
    %1112 = vmatpush.msra.mxu0 0.0
    %1113 = vmatpush.msra.mxu0 0.0
    %1114 = vmatpush.msra.mxu0 0.0
    %1115 = vmatpush.msra.mxu0 0.0
    %1116 = vmatpush.msra.mxu0 0.0
    %1117 = vmatpush.msra.mxu0 0.0
    %1118 = vmatpush.msra.mxu0 0.0
    %1119 = vmatpush.msra.mxu0 0.0
    %1120 = vmatpush.msra.mxu0 0.0
    %1121 = vmatpush.msra.mxu0 %v1099
    %1122 = vmatpush.msra.mxu0 %v1098
    %1123 = vmatpush.msra.mxu0 %v1097
    %1124 = vmatpush.msra.mxu0 %v1096
    %1125 = vmatmul.f32.gmra.mxu0 %v1104
    %v1126 = vpop.f32.mrf.mxu0
    %v1127 = vadd.f32 %v1101, %v1126
    %1128 = vmatmul.f32.gmra.mxu0 %v1107
    %v1129 = vpop.f32.mrf.mxu0
    %v1130 = vadd.f32 %v1101, %v1129
    %1131 = vdwg.mxu0
    %v1132 = vmax.f32 %v1127, 0.0
    %v1133 = vmax.f32 %v1130, 0.0
    %v1134 = vld [vmem:[%s10] sm:$0xff]
    %v1135 = vld [vmem:[%s10 + $0x8] sm:$0xff]
    %v1136 = vld [vmem:[%s10 + $0x10] sm:$0xff]
    %v1137 = vld [vmem:[%s10 + $0x18] sm:$0xff]
    %v1138 = vld [vmem:[%s10 + $0x20] sm:$0xff]
    %v1139 = vld [vmem:[%s10 + $0x28] sm:$0xff]
    %v1140 = vld [vmem:[%s10 + $0x30] sm:$0xff]
    %v1141 = vld [vmem:[%s10 + $0x38] sm:$0xff]
    %vm1142 = vcmask 523264
    %v1144 = vsel %vm1142, %v1132, 0
    %v1147 = vsel %vm1142, %v1133, 0
    %1149 = vmatpush.msra.mxu0 0.0
    %1150 = vmatpush.msra.mxu0 0.0
    %1151 = vmatpush.msra.mxu0 0.0
    %1152 = vmatpush.msra.mxu0 0.0
    %1153 = vmatpush.msra.mxu0 0.0
    %1154 = vmatpush.msra.mxu0 0.0
    %1155 = vmatpush.msra.mxu0 0.0
    %1156 = vmatpush.msra.mxu0 0.0
    %1157 = vmatpush.msra.mxu0 %v1141
    %1158 = vmatpush.msra.mxu0 %v1140
    %1159 = vmatpush.msra.mxu0 %v1139
    %1160 = vmatpush.msra.mxu0 %v1138
    %1161 = vmatpush.msra.mxu0 %v1137
    %1162 = vmatpush.msra.mxu0 %v1136
    %1163 = vmatpush.msra.mxu0 %v1135
    %1164 = vmatpush.msra.mxu0 %v1134
    %1165 = vmatmul.f32.gmra.mxu0 %v1144
    %v1166 = vpop.f32.mrf.mxu0
    %v1167 = vadd.f32 0.0, %v1166
    %1168 = vmatmul.f32.gmra.mxu0 %v1147
    %v1169 = vpop.f32.mrf.mxu0
    %v1170 = vadd.f32 0.0, %v1169
    %1171 = vdwg.mxu0
    %v1172 = vadd.f32 %v1011, %v1167
    %v1173 = vadd.f32 %v1012, %v1170
    %1174 = vrot.lane.b32.xlu0 %v1101, 64
    %v1175 = vpop.permute.xlu0 %1174
    %v1177 = vadd.f32 %v1172, %v1175
    %v1178 = vadd.f32 %v1173, %v1175
    %s1179 = scalar_lea.vmem %s12, 4
    %v1180 = vld [vmem:[%s1179] sm:$0xf]
    %s1181 = scalar_lea.vmem %s7, 32
    %v1182 = vld [vmem:[%s1181] sm:$0xff]
    %v1183 = vld [vmem:[%s1181 + $0x8] sm:$0xff]
    %v1184 = vld [vmem:[%s1181 + $0x10] sm:$0xff]
    %v1185 = vld [vmem:[%s1181 + $0x18] sm:$0xff]
    %s1186 = scalar_lea.vmem %s8, 1
    %v1187 = vld [vmem:[%s1186] sm:$0x1]
    %v1188 = vsel %vm213, %v1177, 0.0
    %1189 = vadd.xlane.f32.xlu0 %v1188
    %v1190 = vpop.xlane.xlu0 %1189
    %v1191 = vsel %vm213, %v1178, 0.0
    %1192 = vadd.xlane.f32.xlu0 %v1191
    %v1193 = vpop.xlane.xlu0 %1192
    %v1194 = vmul.f32 %v1190, %v226
    %v1195 = vmul.f32 %v1193, %v226
    %v1196 = vsub.f32 %v1177, %v1194
    %v1197 = vsub.f32 %v1178, %v1195
    %v1198 = vmul.f32 %v1196, %v1196
    %v1199 = vmul.f32 %v1197, %v1197
    %v1200 = vsel %vm213, %v1198, 0.0
    %1201 = vadd.xlane.f32.xlu0 %v1200
    %v1202 = vpop.xlane.xlu0 %1201
    %v1203 = vsel %vm213, %v1199, 0.0
    %1204 = vadd.xlane.f32.xlu0 %v1203
    %v1205 = vpop.xlane.xlu0 %1204
    %v1206 = vmul.f32 %v1202, 0.032258064
    %v1207 = vmul.f32 %v1205, 0.032258064
    %v1208 = vperm.slane %v1180, 0
    %v1209 = vmul.f32 %v1208, %v1196
    %v1210 = vmul.f32 %v1208, %v1197
    %v1211 = vrsqrt.pop %v1206
    %v1212 = vmul.f32 %v1211, %v1206
    %v1213 = vmul.f32 %v1212, %v1211
    %v1214 = vmul.f32 0.5, %v1213
    %v1215 = vsub.f32 1.5, %v1214
    %v1216 = vmul.f32 %v1211, %v1215
    %v1217 = vmul.f32 %v1206, %v1216
    %vm1218 = vcmp.eq.f32.partialorder %v1206, inf
    %v1219 = vsel %vm1218, %v1206, %v1217
    %vm1220 = vcmp.eq.f32.partialorder %v1206, 0.0
    %v1221 = vand.u32 %v1206, 2147483648
    %v1222 = vsel %vm1220, %v1221, %v1219
    %v1223 = vrsqrt.pop %v1207
    %v1224 = vmul.f32 %v1223, %v1207
    %v1225 = vmul.f32 %v1224, %v1223
    %v1226 = vmul.f32 0.5, %v1225
    %v1227 = vsub.f32 1.5, %v1226
    %v1228 = vmul.f32 %v1223, %v1227
    %v1229 = vmul.f32 %v1207, %v1228
    %vm1230 = vcmp.eq.f32.partialorder %v1207, inf
    %v1231 = vsel %vm1230, %v1207, %v1229
    %vm1232 = vcmp.eq.f32.partialorder %v1207, 0.0
    %v1233 = vand.u32 %v1207, 2147483648
    %v1234 = vsel %vm1232, %v1233, %v1231
    %v1235 = vadd.f32 %v1222, 1e-06
    %v1236 = vadd.f32 %v1234, 1e-06
    %v1237 = vrcp.pop %v1235
    %v1238 = vmul.f32 %v1235, %v1237
    %v1239 = vsub.f32 1.0, %v1238
    %v1240 = vmul.f32 %v1237, %v1239
    %v1241 = vadd.f32 %v1237, %v1240
    %vm1242 = vweird.f32 %v1235
    %vm1243 = vweird.f32 %v1237
    %vm1244 = vmor %vm1242, %vm1243
    %v1245 = vsel %vm1244, %v1237, %v1241
    %v1246 = vand.u32 2147483647, %v1235
    %vm1247 = vcmp.eq.f32.partialorder %v1246, 8.507059e+37
    %v1248 = vand.u32 %v1235, 2147483648
    %v1249 = vor.u32 1.1754944e-38, %v1248
    %v1250 = vsel %vm1247, %v1249, %v1245
    %v1251 = vmul.f32 %v1209, %v1250
    %v1252 = vrcp.pop %v1236
    %v1253 = vmul.f32 %v1236, %v1252
    %v1254 = vsub.f32 1.0, %v1253
    %v1255 = vmul.f32 %v1252, %v1254
    %v1256 = vadd.f32 %v1252, %v1255
    %vm1257 = vweird.f32 %v1236
    %vm1258 = vweird.f32 %v1252
    %vm1259 = vmor %vm1257, %vm1258
    %v1260 = vsel %vm1259, %v1252, %v1256
    %v1261 = vand.u32 2147483647, %v1236
    %vm1262 = vcmp.eq.f32.partialorder %v1261, 8.507059e+37
    %v1263 = vand.u32 %v1236, 2147483648
    %v1264 = vor.u32 1.1754944e-38, %v1263
    %v1265 = vsel %vm1262, %v1264, %v1260
    %v1266 = vmul.f32 %v1210, %v1265
    %v1267 = vperm.slane %v1180, 1
    %v1268 = vadd.f32 %v1251, %v1267
    %v1269 = vadd.f32 %v1266, %v1267
    %v1271 = vperm.slane %v1187, 0
    %v1274 = vsel %vm213, %v1268, 0
    %v1277 = vsel %vm213, %v1269, 0
    %1279 = vmatpush.msra.mxu0 0.0
    %1280 = vmatpush.msra.mxu0 0.0
    %1281 = vmatpush.msra.mxu0 0.0
    %1282 = vmatpush.msra.mxu0 0.0
    %1283 = vmatpush.msra.mxu0 0.0
    %1284 = vmatpush.msra.mxu0 0.0
    %1285 = vmatpush.msra.mxu0 0.0
    %1286 = vmatpush.msra.mxu0 0.0
    %1287 = vmatpush.msra.mxu0 0.0
    %1288 = vmatpush.msra.mxu0 0.0
    %1289 = vmatpush.msra.mxu0 0.0
    %1290 = vmatpush.msra.mxu0 0.0
    %1291 = vmatpush.msra.mxu0 %v1185
    %1292 = vmatpush.msra.mxu0 %v1184
    %1293 = vmatpush.msra.mxu0 %v1183
    %1294 = vmatpush.msra.mxu0 %v1182
    %1295 = vmatmul.f32.gmra.mxu0 %v1274
    %v1296 = vpop.f32.mrf.mxu0
    %v1297 = vadd.f32 %v1271, %v1296
    %1298 = vmatmul.f32.gmra.mxu0 %v1277
    %v1299 = vpop.f32.mrf.mxu0
    %v1300 = vadd.f32 %v1271, %v1299
    %1301 = vdwg.mxu0
    %1303 = vrot.lane.b32.xlu0 %v1297, 96
    %v1304 = vpop.permute.xlu0 %1303
    %v1305 = vsel %vm338, %v1297, 0
    %v1307 = vsel %vm338, %v1304, 0
    %1309 = vmatpush.xpose.msra.mxu0 0.0
    %1310 = vmatpush.xpose.msra.mxu0 0.0
    %1311 = vmatpush.xpose.msra.mxu0 0.0
    %1312 = vmatpush.xpose.msra.mxu0 0.0
    %1313 = vmatpush.xpose.msra.mxu0 0.0
    %1314 = vmatpush.xpose.msra.mxu0 0.0
    %1315 = vmatpush.xpose.msra.mxu0 0.0
    %1316 = vmatpush.xpose.msra.mxu0 0.0
    %1317 = vmatpush.xpose.msra.mxu0 0.0
    %1318 = vmatpush.xpose.msra.mxu0 0.0
    %1319 = vmatpush.xpose.msra.mxu0 0.0
    %1320 = vmatpush.xpose.msra.mxu0 0.0
    %1321 = vmatpush.xpose.msra.mxu0 0.0
    %1322 = vmatpush.xpose.msra.mxu0 0.0
    %1323 = vmatpush.xpose.msra.mxu0 0.0
    %1324 = vmatpush.xpose.msra.mxu0 %v1307
    %1325 = vmatmul.f32.gmra.mxu0 %v1305
    %v1326 = vpop.f32.mrf.mxu0
    %v1327 = vadd.f32 0.0, %v1326
    %1328 = vdwg.mxu0
    %1330 = vrot.lane.b32.xlu0 %v1300, 96
    %v1331 = vpop.permute.xlu0 %1330
    %v1332 = vsel %vm338, %v1300, 0
    %v1334 = vsel %vm338, %v1331, 0
    %1336 = vmatpush.xpose.msra.mxu0 0.0
    %1337 = vmatpush.xpose.msra.mxu0 0.0
    %1338 = vmatpush.xpose.msra.mxu0 0.0
    %1339 = vmatpush.xpose.msra.mxu0 0.0
    %1340 = vmatpush.xpose.msra.mxu0 0.0
    %1341 = vmatpush.xpose.msra.mxu0 0.0
    %1342 = vmatpush.xpose.msra.mxu0 0.0
    %1343 = vmatpush.xpose.msra.mxu0 0.0
    %1344 = vmatpush.xpose.msra.mxu0 0.0
    %1345 = vmatpush.xpose.msra.mxu0 0.0
    %1346 = vmatpush.xpose.msra.mxu0 0.0
    %1347 = vmatpush.xpose.msra.mxu0 0.0
    %1348 = vmatpush.xpose.msra.mxu0 0.0
    %1349 = vmatpush.xpose.msra.mxu0 0.0
    %1350 = vmatpush.xpose.msra.mxu0 0.0
    %1351 = vmatpush.xpose.msra.mxu0 %v1334
    %1352 = vmatmul.f32.gmra.mxu0 %v1332
    %v1353 = vpop.f32.mrf.mxu0
    %v1354 = vadd.f32 0.0, %v1353
    %1355 = vdwg.mxu0
    %v1356 = vmul.f32 %v1327, 0.35355338
    %v1357 = vmul.f32 %v1354, 0.35355338
    %v1358 = vadd.f32 %v1356, %v146
    %v1359 = vadd.f32 %v1357, %v147
    %v1360 = vsel %vm338, %v1358, -inf
    %1361 = vmax.xlane.f32.xlu0 %v1360
    %v1362 = vpop.xlane.xlu0 %1361
    %v1363 = vsel %vm338, %v1359, -inf
    %1364 = vmax.xlane.f32.xlu0 %v1363
    %v1365 = vpop.xlane.xlu0 %1364
    %v1366 = vsub.f32 %v1358, %v1362
    %v1367 = vsub.f32 %v1359, %v1365
    %v1368 = vmul.f32 %v1366, 1.442695
    %v1369 = vpow.pop %v1368
    %v1370 = vmul.f32 %v1367, 1.442695
    %v1371 = vpow.pop %v1370
    %v1372 = vsel %vm338, %v1369, 0.0
    %1373 = vadd.xlane.f32.xlu0 %v1372
    %v1374 = vpop.xlane.xlu0 %1373
    %v1375 = vsel %vm338, %v1371, 0.0
    %1376 = vadd.xlane.f32.xlu0 %v1375
    %v1377 = vpop.xlane.xlu0 %1376
    %v1378 = vrcp.pop %v1374
    %v1379 = vrcp.pop %v1377
    %v1380 = vmul.f32 %v1369, %v1378
    %v1381 = vmul.f32 %v1371, %v1379
    %1382 = vrot.lane.b32.xlu0 %v1297, 64
    %v1383 = vpop.permute.xlu0 %1382
    %v1386 = vsel %vm338, %v1380, 0
    %1388 = vmatpush.msra.mxu0 0.0
    %1389 = vmatpush.msra.mxu0 0.0
    %1390 = vmatpush.msra.mxu0 0.0
    %1391 = vmatpush.msra.mxu0 0.0
    %1392 = vmatpush.msra.mxu0 0.0
    %1393 = vmatpush.msra.mxu0 0.0
    %1394 = vmatpush.msra.mxu0 0.0
    %1395 = vmatpush.msra.mxu0 0.0
    %1396 = vmatpush.msra.mxu0 0.0
    %1397 = vmatpush.msra.mxu0 0.0
    %1398 = vmatpush.msra.mxu0 0.0
    %1399 = vmatpush.msra.mxu0 0.0
    %1400 = vmatpush.msra.mxu0 0.0
    %1401 = vmatpush.msra.mxu0 0.0
    %1402 = vmatpush.msra.mxu0 0.0
    %1403 = vmatpush.msra.mxu0 %v1383
    %1404 = vmatmul.f32.gmra.mxu0 %v1386
    %v1405 = vpop.f32.mrf.mxu0
    %v1406 = vadd.f32 0.0, %v1405
    %1407 = vdwg.mxu0
    %1408 = vrot.lane.b32.xlu0 %v1300, 64
    %v1409 = vpop.permute.xlu0 %1408
    %v1412 = vsel %vm338, %v1381, 0
    %1414 = vmatpush.msra.mxu0 0.0
    %1415 = vmatpush.msra.mxu0 0.0
    %1416 = vmatpush.msra.mxu0 0.0
    %1417 = vmatpush.msra.mxu0 0.0
    %1418 = vmatpush.msra.mxu0 0.0
    %1419 = vmatpush.msra.mxu0 0.0
    %1420 = vmatpush.msra.mxu0 0.0
    %1421 = vmatpush.msra.mxu0 0.0
    %1422 = vmatpush.msra.mxu0 0.0
    %1423 = vmatpush.msra.mxu0 0.0
    %1424 = vmatpush.msra.mxu0 0.0
    %1425 = vmatpush.msra.mxu0 0.0
    %1426 = vmatpush.msra.mxu0 0.0
    %1427 = vmatpush.msra.mxu0 0.0
    %1428 = vmatpush.msra.mxu0 0.0
    %1429 = vmatpush.msra.mxu0 %v1409
    %1430 = vmatmul.f32.gmra.mxu0 %v1412
    %v1431 = vpop.f32.mrf.mxu0
    %v1432 = vadd.f32 0.0, %v1431
    %1433 = vdwg.mxu0
    %1434 = vrot.lane.b32.xlu0 %v1297, 120
    %v1435 = vpop.permute.xlu0 %1434
    %1436 = vrot.lane.b32.xlu0 %v1297, 88
    %v1437 = vpop.permute.xlu0 %1436
    %v1438 = vsel %vm338, %v1435, 0
    %v1440 = vsel %vm338, %v1437, 0
    %1442 = vmatpush.xpose.msra.mxu0 0.0
    %1443 = vmatpush.xpose.msra.mxu0 0.0
    %1444 = vmatpush.xpose.msra.mxu0 0.0
    %1445 = vmatpush.xpose.msra.mxu0 0.0
    %1446 = vmatpush.xpose.msra.mxu0 0.0
    %1447 = vmatpush.xpose.msra.mxu0 0.0
    %1448 = vmatpush.xpose.msra.mxu0 0.0
    %1449 = vmatpush.xpose.msra.mxu0 0.0
    %1450 = vmatpush.xpose.msra.mxu0 0.0
    %1451 = vmatpush.xpose.msra.mxu0 0.0
    %1452 = vmatpush.xpose.msra.mxu0 0.0
    %1453 = vmatpush.xpose.msra.mxu0 0.0
    %1454 = vmatpush.xpose.msra.mxu0 0.0
    %1455 = vmatpush.xpose.msra.mxu0 0.0
    %1456 = vmatpush.xpose.msra.mxu0 0.0
    %1457 = vmatpush.xpose.msra.mxu0 %v1440
    %1458 = vmatmul.f32.gmra.mxu0 %v1438
    %v1459 = vpop.f32.mrf.mxu0
    %v1460 = vadd.f32 0.0, %v1459
    %1461 = vdwg.mxu0
    %1462 = vrot.lane.b32.xlu0 %v1300, 120
    %v1463 = vpop.permute.xlu0 %1462
    %1464 = vrot.lane.b32.xlu0 %v1300, 88
    %v1465 = vpop.permute.xlu0 %1464
    %v1466 = vsel %vm338, %v1463, 0
    %v1468 = vsel %vm338, %v1465, 0
    %1470 = vmatpush.xpose.msra.mxu0 0.0
    %1471 = vmatpush.xpose.msra.mxu0 0.0
    %1472 = vmatpush.xpose.msra.mxu0 0.0
    %1473 = vmatpush.xpose.msra.mxu0 0.0
    %1474 = vmatpush.xpose.msra.mxu0 0.0
    %1475 = vmatpush.xpose.msra.mxu0 0.0
    %1476 = vmatpush.xpose.msra.mxu0 0.0
    %1477 = vmatpush.xpose.msra.mxu0 0.0
    %1478 = vmatpush.xpose.msra.mxu0 0.0
    %1479 = vmatpush.xpose.msra.mxu0 0.0
    %1480 = vmatpush.xpose.msra.mxu0 0.0
    %1481 = vmatpush.xpose.msra.mxu0 0.0
    %1482 = vmatpush.xpose.msra.mxu0 0.0
    %1483 = vmatpush.xpose.msra.mxu0 0.0
    %1484 = vmatpush.xpose.msra.mxu0 0.0
    %1485 = vmatpush.xpose.msra.mxu0 %v1468
    %1486 = vmatmul.f32.gmra.mxu0 %v1466
    %v1487 = vpop.f32.mrf.mxu0
    %v1488 = vadd.f32 0.0, %v1487
    %1489 = vdwg.mxu0
    %v1490 = vmul.f32 %v1460, 0.35355338
    %v1491 = vmul.f32 %v1488, 0.35355338
    %v1492 = vadd.f32 %v1490, %v146
    %v1493 = vadd.f32 %v1491, %v147
    %v1494 = vsel %vm338, %v1492, -inf
    %1495 = vmax.xlane.f32.xlu0 %v1494
    %v1496 = vpop.xlane.xlu0 %1495
    %v1497 = vsel %vm338, %v1493, -inf
    %1498 = vmax.xlane.f32.xlu0 %v1497
    %v1499 = vpop.xlane.xlu0 %1498
    %v1500 = vsub.f32 %v1492, %v1496
    %v1501 = vsub.f32 %v1493, %v1499
    %v1502 = vmul.f32 %v1500, 1.442695
    %v1503 = vpow.pop %v1502
    %v1504 = vmul.f32 %v1501, 1.442695
    %v1505 = vpow.pop %v1504
    %v1506 = vsel %vm338, %v1503, 0.0
    %1507 = vadd.xlane.f32.xlu0 %v1506
    %v1508 = vpop.xlane.xlu0 %1507
    %v1509 = vsel %vm338, %v1505, 0.0
    %1510 = vadd.xlane.f32.xlu0 %v1509
    %v1511 = vpop.xlane.xlu0 %1510
    %v1512 = vrcp.pop %v1508
    %v1513 = vrcp.pop %v1511
    %v1514 = vmul.f32 %v1503, %v1512
    %v1515 = vmul.f32 %v1505, %v1513
    %1516 = vrot.lane.b32.xlu0 %v1297, 56
    %v1517 = vpop.permute.xlu0 %1516
    %v1520 = vsel %vm338, %v1514, 0
    %1522 = vmatpush.msra.mxu0 0.0
    %1523 = vmatpush.msra.mxu0 0.0
    %1524 = vmatpush.msra.mxu0 0.0
    %1525 = vmatpush.msra.mxu0 0.0
    %1526 = vmatpush.msra.mxu0 0.0
    %1527 = vmatpush.msra.mxu0 0.0
    %1528 = vmatpush.msra.mxu0 0.0
    %1529 = vmatpush.msra.mxu0 0.0
    %1530 = vmatpush.msra.mxu0 0.0
    %1531 = vmatpush.msra.mxu0 0.0
    %1532 = vmatpush.msra.mxu0 0.0
    %1533 = vmatpush.msra.mxu0 0.0
    %1534 = vmatpush.msra.mxu0 0.0
    %1535 = vmatpush.msra.mxu0 0.0
    %1536 = vmatpush.msra.mxu0 0.0
    %1537 = vmatpush.msra.mxu0 %v1517
    %1538 = vmatmul.f32.gmra.mxu0 %v1520
    %v1539 = vpop.f32.mrf.mxu0
    %v1540 = vadd.f32 0.0, %v1539
    %1541 = vdwg.mxu0
    %1542 = vrot.lane.b32.xlu0 %v1300, 56
    %v1543 = vpop.permute.xlu0 %1542
    %v1546 = vsel %vm338, %v1515, 0
    %1548 = vmatpush.msra.mxu0 0.0
    %1549 = vmatpush.msra.mxu0 0.0
    %1550 = vmatpush.msra.mxu0 0.0
    %1551 = vmatpush.msra.mxu0 0.0
    %1552 = vmatpush.msra.mxu0 0.0
    %1553 = vmatpush.msra.mxu0 0.0
    %1554 = vmatpush.msra.mxu0 0.0
    %1555 = vmatpush.msra.mxu0 0.0
    %1556 = vmatpush.msra.mxu0 0.0
    %1557 = vmatpush.msra.mxu0 0.0
    %1558 = vmatpush.msra.mxu0 0.0
    %1559 = vmatpush.msra.mxu0 0.0
    %1560 = vmatpush.msra.mxu0 0.0
    %1561 = vmatpush.msra.mxu0 0.0
    %1562 = vmatpush.msra.mxu0 0.0
    %1563 = vmatpush.msra.mxu0 %v1543
    %1564 = vmatmul.f32.gmra.mxu0 %v1546
    %v1565 = vpop.f32.mrf.mxu0
    %v1566 = vadd.f32 0.0, %v1565
    %1567 = vdwg.mxu0
    %1569 = vrot.lane.b32.xlu0 %v1183, 32
    %v1570 = vpop.permute.xlu0 %1569
    %v1573 = vsel %vm338, %v1540, 0
    %v1576 = vsel %vm338, %v1566, 0
    %1578 = vmatpush.msra.mxu0 0.0
    %1579 = vmatpush.msra.mxu0 0.0
    %1580 = vmatpush.msra.mxu0 0.0
    %1581 = vmatpush.msra.mxu0 0.0
    %1582 = vmatpush.msra.mxu0 0.0
    %1583 = vmatpush.msra.mxu0 0.0
    %1584 = vmatpush.msra.mxu0 0.0
    %1585 = vmatpush.msra.mxu0 0.0
    %1586 = vmatpush.msra.mxu0 0.0
    %1587 = vmatpush.msra.mxu0 0.0
    %1588 = vmatpush.msra.mxu0 0.0
    %1589 = vmatpush.msra.mxu0 0.0
    %1590 = vmatpush.msra.mxu0 0.0
    %1591 = vmatpush.msra.mxu0 0.0
    %1592 = vmatpush.msra.mxu0 0.0
    %1593 = vmatpush.msra.mxu0 %v1570
    %1594 = vmatmul.f32.gmra.mxu0 %v1573
    %v1595 = vpop.f32.mrf.mxu0
    %v1596 = vadd.f32 0.0, %v1595
    %1597 = vmatmul.f32.gmra.mxu0 %v1576
    %v1598 = vpop.f32.mrf.mxu0
    %v1599 = vadd.f32 0.0, %v1598
    %1600 = vdwg.mxu0
    %1602 = vrot.lane.b32.xlu0 %v1182, 32
    %v1603 = vpop.permute.xlu0 %1602
    %v1606 = vsel %vm338, %v1406, 0
    %v1609 = vsel %vm338, %v1432, 0
    %1611 = vmatpush.msra.mxu0 0.0
    %1612 = vmatpush.msra.mxu0 0.0
    %1613 = vmatpush.msra.mxu0 0.0
    %1614 = vmatpush.msra.mxu0 0.0
    %1615 = vmatpush.msra.mxu0 0.0
    %1616 = vmatpush.msra.mxu0 0.0
    %1617 = vmatpush.msra.mxu0 0.0
    %1618 = vmatpush.msra.mxu0 0.0
    %1619 = vmatpush.msra.mxu0 0.0
    %1620 = vmatpush.msra.mxu0 0.0
    %1621 = vmatpush.msra.mxu0 0.0
    %1622 = vmatpush.msra.mxu0 0.0
    %1623 = vmatpush.msra.mxu0 0.0
    %1624 = vmatpush.msra.mxu0 0.0
    %1625 = vmatpush.msra.mxu0 0.0
    %1626 = vmatpush.msra.mxu0 %v1603
    %1627 = vmatmul.f32.gmra.mxu0 %v1606
    %v1628 = vpop.f32.mrf.mxu0
    %v1629 = vadd.f32 %v1596, %v1628
    %1630 = vmatmul.f32.gmra.mxu0 %v1609
    %v1631 = vpop.f32.mrf.mxu0
    %v1632 = vadd.f32 %v1599, %v1631
    %1633 = vdwg.mxu0
    %1634 = vrot.lane.b32.xlu0 %v1297, 112
    %v1635 = vpop.permute.xlu0 %1634
    %1636 = vrot.lane.b32.xlu0 %v1297, 80
    %v1637 = vpop.permute.xlu0 %1636
    %v1638 = vsel %vm338, %v1635, 0
    %v1640 = vsel %vm338, %v1637, 0
    %1642 = vmatpush.xpose.msra.mxu0 0.0
    %1643 = vmatpush.xpose.msra.mxu0 0.0
    %1644 = vmatpush.xpose.msra.mxu0 0.0
    %1645 = vmatpush.xpose.msra.mxu0 0.0
    %1646 = vmatpush.xpose.msra.mxu0 0.0
    %1647 = vmatpush.xpose.msra.mxu0 0.0
    %1648 = vmatpush.xpose.msra.mxu0 0.0
    %1649 = vmatpush.xpose.msra.mxu0 0.0
    %1650 = vmatpush.xpose.msra.mxu0 0.0
    %1651 = vmatpush.xpose.msra.mxu0 0.0
    %1652 = vmatpush.xpose.msra.mxu0 0.0
    %1653 = vmatpush.xpose.msra.mxu0 0.0
    %1654 = vmatpush.xpose.msra.mxu0 0.0
    %1655 = vmatpush.xpose.msra.mxu0 0.0
    %1656 = vmatpush.xpose.msra.mxu0 0.0
    %1657 = vmatpush.xpose.msra.mxu0 %v1640
    %1658 = vmatmul.f32.gmra.mxu0 %v1638
    %v1659 = vpop.f32.mrf.mxu0
    %v1660 = vadd.f32 0.0, %v1659
    %1661 = vdwg.mxu0
    %1662 = vrot.lane.b32.xlu0 %v1300, 112
    %v1663 = vpop.permute.xlu0 %1662
    %1664 = vrot.lane.b32.xlu0 %v1300, 80
    %v1665 = vpop.permute.xlu0 %1664
    %v1666 = vsel %vm338, %v1663, 0
    %v1668 = vsel %vm338, %v1665, 0
    %1670 = vmatpush.xpose.msra.mxu0 0.0
    %1671 = vmatpush.xpose.msra.mxu0 0.0
    %1672 = vmatpush.xpose.msra.mxu0 0.0
    %1673 = vmatpush.xpose.msra.mxu0 0.0
    %1674 = vmatpush.xpose.msra.mxu0 0.0
    %1675 = vmatpush.xpose.msra.mxu0 0.0
    %1676 = vmatpush.xpose.msra.mxu0 0.0
    %1677 = vmatpush.xpose.msra.mxu0 0.0
    %1678 = vmatpush.xpose.msra.mxu0 0.0
    %1679 = vmatpush.xpose.msra.mxu0 0.0
    %1680 = vmatpush.xpose.msra.mxu0 0.0
    %1681 = vmatpush.xpose.msra.mxu0 0.0
    %1682 = vmatpush.xpose.msra.mxu0 0.0
    %1683 = vmatpush.xpose.msra.mxu0 0.0
    %1684 = vmatpush.xpose.msra.mxu0 0.0
    %1685 = vmatpush.xpose.msra.mxu0 %v1668
    %1686 = vmatmul.f32.gmra.mxu0 %v1666
    %v1687 = vpop.f32.mrf.mxu0
    %v1688 = vadd.f32 0.0, %v1687
    %1689 = vdwg.mxu0
    %v1690 = vmul.f32 %v1660, 0.35355338
    %v1691 = vmul.f32 %v1688, 0.35355338
    %v1692 = vadd.f32 %v1690, %v146
    %v1693 = vadd.f32 %v1691, %v147
    %v1694 = vsel %vm338, %v1692, -inf
    %1695 = vmax.xlane.f32.xlu0 %v1694
    %v1696 = vpop.xlane.xlu0 %1695
    %v1697 = vsel %vm338, %v1693, -inf
    %1698 = vmax.xlane.f32.xlu0 %v1697
    %v1699 = vpop.xlane.xlu0 %1698
    %v1700 = vsub.f32 %v1692, %v1696
    %v1701 = vsub.f32 %v1693, %v1699
    %v1702 = vmul.f32 %v1700, 1.442695
    %v1703 = vpow.pop %v1702
    %v1704 = vmul.f32 %v1701, 1.442695
    %v1705 = vpow.pop %v1704
    %v1706 = vsel %vm338, %v1703, 0.0
    %1707 = vadd.xlane.f32.xlu0 %v1706
    %v1708 = vpop.xlane.xlu0 %1707
    %v1709 = vsel %vm338, %v1705, 0.0
    %1710 = vadd.xlane.f32.xlu0 %v1709
    %v1711 = vpop.xlane.xlu0 %1710
    %v1712 = vrcp.pop %v1708
    %v1713 = vrcp.pop %v1711
    %v1714 = vmul.f32 %v1703, %v1712
    %v1715 = vmul.f32 %v1705, %v1713
    %1716 = vrot.lane.b32.xlu0 %v1297, 48
    %v1717 = vpop.permute.xlu0 %1716
    %v1720 = vsel %vm338, %v1714, 0
    %1722 = vmatpush.msra.mxu0 0.0
    %1723 = vmatpush.msra.mxu0 0.0
    %1724 = vmatpush.msra.mxu0 0.0
    %1725 = vmatpush.msra.mxu0 0.0
    %1726 = vmatpush.msra.mxu0 0.0
    %1727 = vmatpush.msra.mxu0 0.0
    %1728 = vmatpush.msra.mxu0 0.0
    %1729 = vmatpush.msra.mxu0 0.0
    %1730 = vmatpush.msra.mxu0 0.0
    %1731 = vmatpush.msra.mxu0 0.0
    %1732 = vmatpush.msra.mxu0 0.0
    %1733 = vmatpush.msra.mxu0 0.0
    %1734 = vmatpush.msra.mxu0 0.0
    %1735 = vmatpush.msra.mxu0 0.0
    %1736 = vmatpush.msra.mxu0 0.0
    %1737 = vmatpush.msra.mxu0 %v1717
    %1738 = vmatmul.f32.gmra.mxu0 %v1720
    %v1739 = vpop.f32.mrf.mxu0
    %v1740 = vadd.f32 0.0, %v1739
    %1741 = vdwg.mxu0
    %1742 = vrot.lane.b32.xlu0 %v1300, 48
    %v1743 = vpop.permute.xlu0 %1742
    %v1746 = vsel %vm338, %v1715, 0
    %1748 = vmatpush.msra.mxu0 0.0
    %1749 = vmatpush.msra.mxu0 0.0
    %1750 = vmatpush.msra.mxu0 0.0
    %1751 = vmatpush.msra.mxu0 0.0
    %1752 = vmatpush.msra.mxu0 0.0
    %1753 = vmatpush.msra.mxu0 0.0
    %1754 = vmatpush.msra.mxu0 0.0
    %1755 = vmatpush.msra.mxu0 0.0
    %1756 = vmatpush.msra.mxu0 0.0
    %1757 = vmatpush.msra.mxu0 0.0
    %1758 = vmatpush.msra.mxu0 0.0
    %1759 = vmatpush.msra.mxu0 0.0
    %1760 = vmatpush.msra.mxu0 0.0
    %1761 = vmatpush.msra.mxu0 0.0
    %1762 = vmatpush.msra.mxu0 0.0
    %1763 = vmatpush.msra.mxu0 %v1743
    %1764 = vmatmul.f32.gmra.mxu0 %v1746
    %v1765 = vpop.f32.mrf.mxu0
    %v1766 = vadd.f32 0.0, %v1765
    %1767 = vdwg.mxu0
    %1769 = vrot.lane.b32.xlu0 %v1184, 32
    %v1770 = vpop.permute.xlu0 %1769
    %v1773 = vsel %vm338, %v1740, 0
    %v1776 = vsel %vm338, %v1766, 0
    %1778 = vmatpush.msra.mxu0 0.0
    %1779 = vmatpush.msra.mxu0 0.0
    %1780 = vmatpush.msra.mxu0 0.0
    %1781 = vmatpush.msra.mxu0 0.0
    %1782 = vmatpush.msra.mxu0 0.0
    %1783 = vmatpush.msra.mxu0 0.0
    %1784 = vmatpush.msra.mxu0 0.0
    %1785 = vmatpush.msra.mxu0 0.0
    %1786 = vmatpush.msra.mxu0 0.0
    %1787 = vmatpush.msra.mxu0 0.0
    %1788 = vmatpush.msra.mxu0 0.0
    %1789 = vmatpush.msra.mxu0 0.0
    %1790 = vmatpush.msra.mxu0 0.0
    %1791 = vmatpush.msra.mxu0 0.0
    %1792 = vmatpush.msra.mxu0 0.0
    %1793 = vmatpush.msra.mxu0 %v1770
    %1794 = vmatmul.f32.gmra.mxu0 %v1773
    %v1795 = vpop.f32.mrf.mxu0
    %v1796 = vadd.f32 0.0, %v1795
    %1797 = vmatmul.f32.gmra.mxu0 %v1776
    %v1798 = vpop.f32.mrf.mxu0
    %v1799 = vadd.f32 0.0, %v1798
    %1800 = vdwg.mxu0
    %v1801 = vadd.f32 %v1629, %v1796
    %v1802 = vadd.f32 %v1632, %v1799
    %1803 = vrot.lane.b32.xlu0 %v1297, 104
    %v1804 = vpop.permute.xlu0 %1803
    %1805 = vrot.lane.b32.xlu0 %v1297, 72
    %v1806 = vpop.permute.xlu0 %1805
    %v1807 = vsel %vm338, %v1804, 0
    %v1809 = vsel %vm338, %v1806, 0
    %1811 = vmatpush.xpose.msra.mxu0 0.0
    %1812 = vmatpush.xpose.msra.mxu0 0.0
    %1813 = vmatpush.xpose.msra.mxu0 0.0
    %1814 = vmatpush.xpose.msra.mxu0 0.0
    %1815 = vmatpush.xpose.msra.mxu0 0.0
    %1816 = vmatpush.xpose.msra.mxu0 0.0
    %1817 = vmatpush.xpose.msra.mxu0 0.0
    %1818 = vmatpush.xpose.msra.mxu0 0.0
    %1819 = vmatpush.xpose.msra.mxu0 0.0
    %1820 = vmatpush.xpose.msra.mxu0 0.0
    %1821 = vmatpush.xpose.msra.mxu0 0.0
    %1822 = vmatpush.xpose.msra.mxu0 0.0
    %1823 = vmatpush.xpose.msra.mxu0 0.0
    %1824 = vmatpush.xpose.msra.mxu0 0.0
    %1825 = vmatpush.xpose.msra.mxu0 0.0
    %1826 = vmatpush.xpose.msra.mxu0 %v1809
    %1827 = vmatmul.f32.gmra.mxu0 %v1807
    %v1828 = vpop.f32.mrf.mxu0
    %v1829 = vadd.f32 0.0, %v1828
    %1830 = vdwg.mxu0
    %1831 = vrot.lane.b32.xlu0 %v1300, 104
    %v1832 = vpop.permute.xlu0 %1831
    %1833 = vrot.lane.b32.xlu0 %v1300, 72
    %v1834 = vpop.permute.xlu0 %1833
    %v1835 = vsel %vm338, %v1832, 0
    %v1837 = vsel %vm338, %v1834, 0
    %1839 = vmatpush.xpose.msra.mxu0 0.0
    %1840 = vmatpush.xpose.msra.mxu0 0.0
    %1841 = vmatpush.xpose.msra.mxu0 0.0
    %1842 = vmatpush.xpose.msra.mxu0 0.0
    %1843 = vmatpush.xpose.msra.mxu0 0.0
    %1844 = vmatpush.xpose.msra.mxu0 0.0
    %1845 = vmatpush.xpose.msra.mxu0 0.0
    %1846 = vmatpush.xpose.msra.mxu0 0.0
    %1847 = vmatpush.xpose.msra.mxu0 0.0
    %1848 = vmatpush.xpose.msra.mxu0 0.0
    %1849 = vmatpush.xpose.msra.mxu0 0.0
    %1850 = vmatpush.xpose.msra.mxu0 0.0
    %1851 = vmatpush.xpose.msra.mxu0 0.0
    %1852 = vmatpush.xpose.msra.mxu0 0.0
    %1853 = vmatpush.xpose.msra.mxu0 0.0
    %1854 = vmatpush.xpose.msra.mxu0 %v1837
    %1855 = vmatmul.f32.gmra.mxu0 %v1835
    %v1856 = vpop.f32.mrf.mxu0
    %v1857 = vadd.f32 0.0, %v1856
    %1858 = vdwg.mxu0
    %v1859 = vmul.f32 %v1829, 0.35355338
    %v1860 = vmul.f32 %v1857, 0.35355338
    %v1861 = vadd.f32 %v1859, %v146
    %v1862 = vadd.f32 %v1860, %v147
    %v1863 = vsel %vm338, %v1861, -inf
    %1864 = vmax.xlane.f32.xlu0 %v1863
    %v1865 = vpop.xlane.xlu0 %1864
    %v1866 = vsel %vm338, %v1862, -inf
    %1867 = vmax.xlane.f32.xlu0 %v1866
    %v1868 = vpop.xlane.xlu0 %1867
    %v1869 = vsub.f32 %v1861, %v1865
    %v1870 = vsub.f32 %v1862, %v1868
    %v1871 = vmul.f32 %v1869, 1.442695
    %v1872 = vpow.pop %v1871
    %v1873 = vmul.f32 %v1870, 1.442695
    %v1874 = vpow.pop %v1873
    %v1875 = vsel %vm338, %v1872, 0.0
    %1876 = vadd.xlane.f32.xlu0 %v1875
    %v1877 = vpop.xlane.xlu0 %1876
    %v1878 = vsel %vm338, %v1874, 0.0
    %1879 = vadd.xlane.f32.xlu0 %v1878
    %v1880 = vpop.xlane.xlu0 %1879
    %v1881 = vrcp.pop %v1877
    %v1882 = vrcp.pop %v1880
    %v1883 = vmul.f32 %v1872, %v1881
    %v1884 = vmul.f32 %v1874, %v1882
    %1885 = vrot.lane.b32.xlu0 %v1297, 40
    %v1886 = vpop.permute.xlu0 %1885
    %v1889 = vsel %vm338, %v1883, 0
    %1891 = vmatpush.msra.mxu0 0.0
    %1892 = vmatpush.msra.mxu0 0.0
    %1893 = vmatpush.msra.mxu0 0.0
    %1894 = vmatpush.msra.mxu0 0.0
    %1895 = vmatpush.msra.mxu0 0.0
    %1896 = vmatpush.msra.mxu0 0.0
    %1897 = vmatpush.msra.mxu0 0.0
    %1898 = vmatpush.msra.mxu0 0.0
    %1899 = vmatpush.msra.mxu0 0.0
    %1900 = vmatpush.msra.mxu0 0.0
    %1901 = vmatpush.msra.mxu0 0.0
    %1902 = vmatpush.msra.mxu0 0.0
    %1903 = vmatpush.msra.mxu0 0.0
    %1904 = vmatpush.msra.mxu0 0.0
    %1905 = vmatpush.msra.mxu0 0.0
    %1906 = vmatpush.msra.mxu0 %v1886
    %1907 = vmatmul.f32.gmra.mxu0 %v1889
    %v1908 = vpop.f32.mrf.mxu0
    %v1909 = vadd.f32 0.0, %v1908
    %1910 = vdwg.mxu0
    %1911 = vrot.lane.b32.xlu0 %v1300, 40
    %v1912 = vpop.permute.xlu0 %1911
    %v1915 = vsel %vm338, %v1884, 0
    %1917 = vmatpush.msra.mxu0 0.0
    %1918 = vmatpush.msra.mxu0 0.0
    %1919 = vmatpush.msra.mxu0 0.0
    %1920 = vmatpush.msra.mxu0 0.0
    %1921 = vmatpush.msra.mxu0 0.0
    %1922 = vmatpush.msra.mxu0 0.0
    %1923 = vmatpush.msra.mxu0 0.0
    %1924 = vmatpush.msra.mxu0 0.0
    %1925 = vmatpush.msra.mxu0 0.0
    %1926 = vmatpush.msra.mxu0 0.0
    %1927 = vmatpush.msra.mxu0 0.0
    %1928 = vmatpush.msra.mxu0 0.0
    %1929 = vmatpush.msra.mxu0 0.0
    %1930 = vmatpush.msra.mxu0 0.0
    %1931 = vmatpush.msra.mxu0 0.0
    %1932 = vmatpush.msra.mxu0 %v1912
    %1933 = vmatmul.f32.gmra.mxu0 %v1915
    %v1934 = vpop.f32.mrf.mxu0
    %v1935 = vadd.f32 0.0, %v1934
    %1936 = vdwg.mxu0
    %1938 = vrot.lane.b32.xlu0 %v1185, 32
    %v1939 = vpop.permute.xlu0 %1938
    %v1942 = vsel %vm338, %v1909, 0
    %v1945 = vsel %vm338, %v1935, 0
    %1947 = vmatpush.msra.mxu0 0.0
    %1948 = vmatpush.msra.mxu0 0.0
    %1949 = vmatpush.msra.mxu0 0.0
    %1950 = vmatpush.msra.mxu0 0.0
    %1951 = vmatpush.msra.mxu0 0.0
    %1952 = vmatpush.msra.mxu0 0.0
    %1953 = vmatpush.msra.mxu0 0.0
    %1954 = vmatpush.msra.mxu0 0.0
    %1955 = vmatpush.msra.mxu0 0.0
    %1956 = vmatpush.msra.mxu0 0.0
    %1957 = vmatpush.msra.mxu0 0.0
    %1958 = vmatpush.msra.mxu0 0.0
    %1959 = vmatpush.msra.mxu0 0.0
    %1960 = vmatpush.msra.mxu0 0.0
    %1961 = vmatpush.msra.mxu0 0.0
    %1962 = vmatpush.msra.mxu0 %v1939
    %1963 = vmatmul.f32.gmra.mxu0 %v1942
    %v1964 = vpop.f32.mrf.mxu0
    %v1965 = vadd.f32 0.0, %v1964
    %1966 = vmatmul.f32.gmra.mxu0 %v1945
    %v1967 = vpop.f32.mrf.mxu0
    %v1968 = vadd.f32 0.0, %v1967
    %1969 = vdwg.mxu0
    %v1970 = vadd.f32 %v1801, %v1965
    %v1971 = vadd.f32 %v1802, %v1968
    %1972 = vrot.lane.b32.xlu0 %v1271, 32
    %v1973 = vpop.permute.xlu0 %1972
    %v1975 = vadd.f32 %v1970, %v1973
    %v1976 = vadd.f32 %v1971, %v1973
    %v1977 = vadd.f32 %v1177, %v1975
    %v1978 = vadd.f32 %v1178, %v1976
    %v1979 = vsel %vm213, %v1977, 0.0
    %1980 = vadd.xlane.f32.xlu0 %v1979
    %v1981 = vpop.xlane.xlu0 %1980
    %v1982 = vsel %vm213, %v1978, 0.0
    %1983 = vadd.xlane.f32.xlu0 %v1982
    %v1984 = vpop.xlane.xlu0 %1983
    %v1985 = vmul.f32 %v1981, %v226
    %v1986 = vmul.f32 %v1984, %v226
    %v1987 = vsub.f32 %v1977, %v1985
    %v1988 = vsub.f32 %v1978, %v1986
    %v1989 = vmul.f32 %v1987, %v1987
    %v1990 = vmul.f32 %v1988, %v1988
    %v1991 = vsel %vm213, %v1989, 0.0
    %1992 = vadd.xlane.f32.xlu0 %v1991
    %v1993 = vpop.xlane.xlu0 %1992
    %v1994 = vsel %vm213, %v1990, 0.0
    %1995 = vadd.xlane.f32.xlu0 %v1994
    %v1996 = vpop.xlane.xlu0 %1995
    %v1997 = vmul.f32 %v1993, 0.032258064
    %v1998 = vmul.f32 %v1996, 0.032258064
    %v1999 = vperm.slane %v1180, 2
    %v2000 = vmul.f32 %v1999, %v1987
    %v2001 = vmul.f32 %v1999, %v1988
    %v2002 = vrsqrt.pop %v1997
    %v2003 = vmul.f32 %v2002, %v1997
    %v2004 = vmul.f32 %v2003, %v2002
    %v2005 = vmul.f32 0.5, %v2004
    %v2006 = vsub.f32 1.5, %v2005
    %v2007 = vmul.f32 %v2002, %v2006
    %v2008 = vmul.f32 %v1997, %v2007
    %vm2009 = vcmp.eq.f32.partialorder %v1997, inf
    %v2010 = vsel %vm2009, %v1997, %v2008
    %vm2011 = vcmp.eq.f32.partialorder %v1997, 0.0
    %v2012 = vand.u32 %v1997, 2147483648
    %v2013 = vsel %vm2011, %v2012, %v2010
    %v2014 = vrsqrt.pop %v1998
    %v2015 = vmul.f32 %v2014, %v1998
    %v2016 = vmul.f32 %v2015, %v2014
    %v2017 = vmul.f32 0.5, %v2016
    %v2018 = vsub.f32 1.5, %v2017
    %v2019 = vmul.f32 %v2014, %v2018
    %v2020 = vmul.f32 %v1998, %v2019
    %vm2021 = vcmp.eq.f32.partialorder %v1998, inf
    %v2022 = vsel %vm2021, %v1998, %v2020
    %vm2023 = vcmp.eq.f32.partialorder %v1998, 0.0
    %v2024 = vand.u32 %v1998, 2147483648
    %v2025 = vsel %vm2023, %v2024, %v2022
    %v2026 = vadd.f32 %v2013, 1e-06
    %v2027 = vadd.f32 %v2025, 1e-06
    %v2028 = vrcp.pop %v2026
    %v2029 = vmul.f32 %v2026, %v2028
    %v2030 = vsub.f32 1.0, %v2029
    %v2031 = vmul.f32 %v2028, %v2030
    %v2032 = vadd.f32 %v2028, %v2031
    %vm2033 = vweird.f32 %v2026
    %vm2034 = vweird.f32 %v2028
    %vm2035 = vmor %vm2033, %vm2034
    %v2036 = vsel %vm2035, %v2028, %v2032
    %v2037 = vand.u32 2147483647, %v2026
    %vm2038 = vcmp.eq.f32.partialorder %v2037, 8.507059e+37
    %v2039 = vand.u32 %v2026, 2147483648
    %v2040 = vor.u32 1.1754944e-38, %v2039
    %v2041 = vsel %vm2038, %v2040, %v2036
    %v2042 = vmul.f32 %v2000, %v2041
    %v2043 = vrcp.pop %v2027
    %v2044 = vmul.f32 %v2027, %v2043
    %v2045 = vsub.f32 1.0, %v2044
    %v2046 = vmul.f32 %v2043, %v2045
    %v2047 = vadd.f32 %v2043, %v2046
    %vm2048 = vweird.f32 %v2027
    %vm2049 = vweird.f32 %v2043
    %vm2050 = vmor %vm2048, %vm2049
    %v2051 = vsel %vm2050, %v2043, %v2047
    %v2052 = vand.u32 2147483647, %v2027
    %vm2053 = vcmp.eq.f32.partialorder %v2052, 8.507059e+37
    %v2054 = vand.u32 %v2027, 2147483648
    %v2055 = vor.u32 1.1754944e-38, %v2054
    %v2056 = vsel %vm2053, %v2055, %v2051
    %v2057 = vmul.f32 %v2001, %v2056
    %v2058 = vperm.slane %v1180, 3
    %v2059 = vadd.f32 %v2042, %v2058
    %v2060 = vadd.f32 %v2057, %v2058
    %s2061 = scalar_lea.vmem [#allocation2], 1
    %v2062 = vld [vmem:[%s2061] sm:$0x1]
    %s2063 = scalar_lea.vmem %s9, 32
    %v2064 = vld [vmem:[%s2063] sm:$0xff]
    %v2065 = vld [vmem:[%s2063 + $0x8] sm:$0xff]
    %v2066 = vld [vmem:[%s2063 + $0x10] sm:$0xff]
    %v2067 = vld [vmem:[%s2063 + $0x18] sm:$0xff]
    %v2069 = vperm.slane %v2062, 0
    %v2072 = vsel %vm213, %v2059, 0
    %v2075 = vsel %vm213, %v2060, 0
    %2077 = vmatpush.msra.mxu0 0.0
    %2078 = vmatpush.msra.mxu0 0.0
    %2079 = vmatpush.msra.mxu0 0.0
    %2080 = vmatpush.msra.mxu0 0.0
    %2081 = vmatpush.msra.mxu0 0.0
    %2082 = vmatpush.msra.mxu0 0.0
    %2083 = vmatpush.msra.mxu0 0.0
    %2084 = vmatpush.msra.mxu0 0.0
    %2085 = vmatpush.msra.mxu0 0.0
    %2086 = vmatpush.msra.mxu0 0.0
    %2087 = vmatpush.msra.mxu0 0.0
    %2088 = vmatpush.msra.mxu0 0.0
    %2089 = vmatpush.msra.mxu0 %v2067
    %2090 = vmatpush.msra.mxu0 %v2066
    %2091 = vmatpush.msra.mxu0 %v2065
    %2092 = vmatpush.msra.mxu0 %v2064
    %2093 = vmatmul.f32.gmra.mxu0 %v2072
    %v2094 = vpop.f32.mrf.mxu0
    %v2095 = vadd.f32 %v2069, %v2094
    %2096 = vmatmul.f32.gmra.mxu0 %v2075
    %v2097 = vpop.f32.mrf.mxu0
    %v2098 = vadd.f32 %v2069, %v2097
    %2099 = vdwg.mxu0
    %v2100 = vmax.f32 %v2095, 0.0
    %v2101 = vmax.f32 %v2098, 0.0
    %s2102 = scalar_lea.vmem %s10, 64
    %v2103 = vld [vmem:[%s2102] sm:$0xff]
    %v2104 = vld [vmem:[%s2102 + $0x8] sm:$0xff]
    %v2105 = vld [vmem:[%s2102 + $0x10] sm:$0xff]
    %v2106 = vld [vmem:[%s2102 + $0x18] sm:$0xff]
    %v2107 = vld [vmem:[%s2102 + $0x20] sm:$0xff]
    %v2108 = vld [vmem:[%s2102 + $0x28] sm:$0xff]
    %v2109 = vld [vmem:[%s2102 + $0x30] sm:$0xff]
    %v2110 = vld [vmem:[%s2102 + $0x38] sm:$0xff]
    %v2112 = vsel %vm1142, %v2100, 0
    %v2115 = vsel %vm1142, %v2101, 0
    %2117 = vmatpush.msra.mxu0 0.0
    %2118 = vmatpush.msra.mxu0 0.0
    %2119 = vmatpush.msra.mxu0 0.0
    %2120 = vmatpush.msra.mxu0 0.0
    %2121 = vmatpush.msra.mxu0 0.0
    %2122 = vmatpush.msra.mxu0 0.0
    %2123 = vmatpush.msra.mxu0 0.0
    %2124 = vmatpush.msra.mxu0 0.0
    %2125 = vmatpush.msra.mxu0 %v2110
    %2126 = vmatpush.msra.mxu0 %v2109
    %2127 = vmatpush.msra.mxu0 %v2108
    %2128 = vmatpush.msra.mxu0 %v2107
    %2129 = vmatpush.msra.mxu0 %v2106
    %2130 = vmatpush.msra.mxu0 %v2105
    %2131 = vmatpush.msra.mxu0 %v2104
    %2132 = vmatpush.msra.mxu0 %v2103
    %2133 = vmatmul.f32.gmra.mxu0 %v2112
    %v2134 = vpop.f32.mrf.mxu0
    %v2135 = vadd.f32 0.0, %v2134
    %2136 = vmatmul.f32.gmra.mxu0 %v2115
    %v2137 = vpop.f32.mrf.mxu0
    %v2138 = vadd.f32 0.0, %v2137
    %2139 = vdwg.mxu0
    %v2140 = vadd.f32 %v1977, %v2135
    %v2141 = vadd.f32 %v1978, %v2138
    %2142 = vrot.lane.b32.xlu0 %v2069, 64
    %v2143 = vpop.permute.xlu0 %2142
    %v2145 = vadd.f32 %v2140, %v2143
    %v2146 = vadd.f32 %v2141, %v2143
    %v2147 = vld [vmem:[#allocation5] sm:$0x1]
    %v2148 = vld [vmem:[#allocation5 + $0x1] sm:$0x1]
    %v2149 = vsel %vm213, %v2145, 0.0
    %2150 = vadd.xlane.f32.xlu0 %v2149
    %v2151 = vpop.xlane.xlu0 %2150
    %v2152 = vsel %vm213, %v2146, 0.0
    %2153 = vadd.xlane.f32.xlu0 %v2152
    %v2154 = vpop.xlane.xlu0 %2153
    %v2155 = vmul.f32 %v2151, %v226
    %v2156 = vmul.f32 %v2154, %v226
    %v2157 = vsub.f32 %v2145, %v2155
    %v2158 = vsub.f32 %v2146, %v2156
    %v2159 = vmul.f32 %v2157, %v2157
    %v2160 = vmul.f32 %v2158, %v2158
    %v2161 = vsel %vm213, %v2159, 0.0
    %2162 = vadd.xlane.f32.xlu0 %v2161
    %v2163 = vpop.xlane.xlu0 %2162
    %v2164 = vsel %vm213, %v2160, 0.0
    %2165 = vadd.xlane.f32.xlu0 %v2164
    %v2166 = vpop.xlane.xlu0 %2165
    %v2167 = vmul.f32 %v2163, 0.032258064
    %v2168 = vmul.f32 %v2166, 0.032258064
    %v2169 = vperm.slane %v2147, 0
    %v2170 = vmul.f32 %v2169, %v2157
    %v2171 = vmul.f32 %v2169, %v2158
    %v2172 = vrsqrt.pop %v2167
    %v2173 = vmul.f32 %v2172, %v2167
    %v2174 = vmul.f32 %v2173, %v2172
    %v2175 = vmul.f32 0.5, %v2174
    %v2176 = vsub.f32 1.5, %v2175
    %v2177 = vmul.f32 %v2172, %v2176
    %v2178 = vmul.f32 %v2167, %v2177
    %vm2179 = vcmp.eq.f32.partialorder %v2167, inf
    %v2180 = vsel %vm2179, %v2167, %v2178
    %vm2181 = vcmp.eq.f32.partialorder %v2167, 0.0
    %v2182 = vand.u32 %v2167, 2147483648
    %v2183 = vsel %vm2181, %v2182, %v2180
    %v2184 = vrsqrt.pop %v2168
    %v2185 = vmul.f32 %v2184, %v2168
    %v2186 = vmul.f32 %v2185, %v2184
    %v2187 = vmul.f32 0.5, %v2186
    %v2188 = vsub.f32 1.5, %v2187
    %v2189 = vmul.f32 %v2184, %v2188
    %v2190 = vmul.f32 %v2168, %v2189
    %vm2191 = vcmp.eq.f32.partialorder %v2168, inf
    %v2192 = vsel %vm2191, %v2168, %v2190
    %vm2193 = vcmp.eq.f32.partialorder %v2168, 0.0
    %v2194 = vand.u32 %v2168, 2147483648
    %v2195 = vsel %vm2193, %v2194, %v2192
    %v2196 = vadd.f32 %v2183, 1e-06
    %v2197 = vadd.f32 %v2195, 1e-06
    %v2198 = vrcp.pop %v2196
    %v2199 = vmul.f32 %v2196, %v2198
    %v2200 = vsub.f32 1.0, %v2199
    %v2201 = vmul.f32 %v2198, %v2200
    %v2202 = vadd.f32 %v2198, %v2201
    %vm2203 = vweird.f32 %v2196
    %vm2204 = vweird.f32 %v2198
    %vm2205 = vmor %vm2203, %vm2204
    %v2206 = vsel %vm2205, %v2198, %v2202
    %v2207 = vand.u32 2147483647, %v2196
    %vm2208 = vcmp.eq.f32.partialorder %v2207, 8.507059e+37
    %v2209 = vand.u32 %v2196, 2147483648
    %v2210 = vor.u32 1.1754944e-38, %v2209
    %v2211 = vsel %vm2208, %v2210, %v2206
    %v2212 = vmul.f32 %v2170, %v2211
    %v2213 = vrcp.pop %v2197
    %v2214 = vmul.f32 %v2197, %v2213
    %v2215 = vsub.f32 1.0, %v2214
    %v2216 = vmul.f32 %v2213, %v2215
    %v2217 = vadd.f32 %v2213, %v2216
    %vm2218 = vweird.f32 %v2197
    %vm2219 = vweird.f32 %v2213
    %vm2220 = vmor %vm2218, %vm2219
    %v2221 = vsel %vm2220, %v2213, %v2217
    %v2222 = vand.u32 2147483647, %v2197
    %vm2223 = vcmp.eq.f32.partialorder %v2222, 8.507059e+37
    %v2224 = vand.u32 %v2197, 2147483648
    %v2225 = vor.u32 1.1754944e-38, %v2224
    %v2226 = vsel %vm2223, %v2225, %v2221
    %v2227 = vmul.f32 %v2171, %v2226
    %v2228 = vperm.slane %v2148, 0
    %v2229 = vadd.f32 %v2212, %v2228
    %v2230 = vadd.f32 %v2227, %v2228
    %v2231 = vld [vmem:[%s1] sm:$0xff]
    %v2232 = vld [vmem:[%s1 + $0x8] sm:$0xff]
    %v2233 = vld [vmem:[%s5] sm:$0xff]
    %v2234 = vld [vmem:[%s5 + $0x8] sm:$0xff]
    %2235 = vset.pattern.permute.xlu0 0
    %2236 = vperm.xlu0 %2235, %v2231
    %v2237 = vpop.permute.xlu0 %2236
    %2238 = vset.pattern.permute.xlu0 0
    %2239 = vperm.xlu0 %2238, %v2232
    %v2240 = vpop.permute.xlu0 %2239
    %vm2241 = vcmp.eq.s32.totalorder %v2237, %v159
    %vm2242 = vcmp.eq.s32.totalorder %v2240, %v159
    %v2243 = vsel %vm2241, 1, 0
    %v2244 = vsel %vm2242, 1, 0
    %v2245 = vcvt.s32.f32 %v2243
    %v2246 = vcvt.s32.f32 %v2244
    %v2248 = vsel %vm172, %v2245, 0
    %v2251 = vsel %vm172, %v2246, 0
    %2253 = vmatpush.msra.mxu0 0.0
    %2254 = vmatpush.msra.mxu0 0.0
    %2255 = vmatpush.msra.mxu0 0.0
    %2256 = vmatpush.msra.mxu0 0.0
    %2257 = vmatpush.msra.mxu0 0.0
    %2258 = vmatpush.msra.mxu0 0.0
    %2259 = vmatpush.msra.mxu0 0.0
    %2260 = vmatpush.msra.mxu0 0.0
    %2261 = vmatpush.msra.mxu0 0.0
    %2262 = vmatpush.msra.mxu0 0.0
    %2263 = vmatpush.msra.mxu0 0.0
    %2264 = vmatpush.msra.mxu0 0.0
    %2265 = vmatpush.msra.mxu0 0.0
    %2266 = vmatpush.msra.mxu0 0.0
    %2267 = vmatpush.msra.mxu0 %v2234
    %2268 = vmatpush.msra.mxu0 %v2233
    %2269 = vmatmul.f32.gmra.mxu0 %v2248
    %v2270 = vpop.f32.mrf.mxu0
    %v2271 = vadd.f32 0.0, %v2270
    %2272 = vmatmul.f32.gmra.mxu0 %v2251
    %v2273 = vpop.f32.mrf.mxu0
    %v2274 = vadd.f32 0.0, %v2273
    %2275 = vdwg.mxu0
    %v2276 = vmul.f32 %v2271, 5.656854
    %v2277 = vmul.f32 %v2274, 5.656854
    %v2278 = vld [vmem:[%s6] sm:$0xff]
    %v2279 = vadd.f32 %v2276, %v2278
    %v2280 = vadd.f32 %v2277, %v2278
    %v2281 = vld [vmem:[%s21] sm:$0x3f]
    %v2282 = vld [vmem:[%s14] sm:$0xff]
    %v2283 = vld [vmem:[%s14 + $0x8] sm:$0xff]
    %v2284 = vld [vmem:[%s14 + $0x10] sm:$0xff]
    %v2285 = vld [vmem:[%s14 + $0x18] sm:$0xff]
    %v2286 = vld [vmem:[#allocation7] sm:$0x1]
    %v2287 = vld [vmem:[%s16] sm:$0xff]
    %v2288 = vld [vmem:[%s16 + $0x8] sm:$0xff]
    %v2289 = vld [vmem:[%s16 + $0x10] sm:$0xff]
    %v2290 = vld [vmem:[%s16 + $0x18] sm:$0xff]
    %v2291 = vld [vmem:[#allocation8] sm:$0x1]
    %v2292 = vsel %vm213, %v2279, 0.0
    %2293 = vadd.xlane.f32.xlu0 %v2292
    %v2294 = vpop.xlane.xlu0 %2293
    %v2295 = vsel %vm213, %v2280, 0.0
    %2296 = vadd.xlane.f32.xlu0 %v2295
    %v2297 = vpop.xlane.xlu0 %2296
    %v2298 = vmul.f32 %v2294, %v226
    %v2299 = vmul.f32 %v2297, %v226
    %v2300 = vsub.f32 %v2279, %v2298
    %v2301 = vsub.f32 %v2280, %v2299
    %v2302 = vmul.f32 %v2300, %v2300
    %v2303 = vmul.f32 %v2301, %v2301
    %v2304 = vsel %vm213, %v2302, 0.0
    %2305 = vadd.xlane.f32.xlu0 %v2304
    %v2306 = vpop.xlane.xlu0 %2305
    %v2307 = vsel %vm213, %v2303, 0.0
    %2308 = vadd.xlane.f32.xlu0 %v2307
    %v2309 = vpop.xlane.xlu0 %2308
    %v2310 = vmul.f32 %v2306, 0.032258064
    %v2311 = vmul.f32 %v2309, 0.032258064
    %v2312 = vperm.slane %v2281, 0
    %v2313 = vmul.f32 %v2312, %v2300
    %v2314 = vmul.f32 %v2312, %v2301
    %v2315 = vrsqrt.pop %v2310
    %v2316 = vmul.f32 %v2315, %v2310
    %v2317 = vmul.f32 %v2316, %v2315
    %v2318 = vmul.f32 0.5, %v2317
    %v2319 = vsub.f32 1.5, %v2318
    %v2320 = vmul.f32 %v2315, %v2319
    %v2321 = vmul.f32 %v2310, %v2320
    %vm2322 = vcmp.eq.f32.partialorder %v2310, inf
    %v2323 = vsel %vm2322, %v2310, %v2321
    %vm2324 = vcmp.eq.f32.partialorder %v2310, 0.0
    %v2325 = vand.u32 %v2310, 2147483648
    %v2326 = vsel %vm2324, %v2325, %v2323
    %v2327 = vrsqrt.pop %v2311
    %v2328 = vmul.f32 %v2327, %v2311
    %v2329 = vmul.f32 %v2328, %v2327
    %v2330 = vmul.f32 0.5, %v2329
    %v2331 = vsub.f32 1.5, %v2330
    %v2332 = vmul.f32 %v2327, %v2331
    %v2333 = vmul.f32 %v2311, %v2332
    %vm2334 = vcmp.eq.f32.partialorder %v2311, inf
    %v2335 = vsel %vm2334, %v2311, %v2333
    %vm2336 = vcmp.eq.f32.partialorder %v2311, 0.0
    %v2337 = vand.u32 %v2311, 2147483648
    %v2338 = vsel %vm2336, %v2337, %v2335
    %v2339 = vadd.f32 %v2326, 1e-06
    %v2340 = vadd.f32 %v2338, 1e-06
    %v2341 = vrcp.pop %v2339
    %v2342 = vmul.f32 %v2339, %v2341
    %v2343 = vsub.f32 1.0, %v2342
    %v2344 = vmul.f32 %v2341, %v2343
    %v2345 = vadd.f32 %v2341, %v2344
    %vm2346 = vweird.f32 %v2339
    %vm2347 = vweird.f32 %v2341
    %vm2348 = vmor %vm2346, %vm2347
    %v2349 = vsel %vm2348, %v2341, %v2345
    %v2350 = vand.u32 2147483647, %v2339
    %vm2351 = vcmp.eq.f32.partialorder %v2350, 8.507059e+37
    %v2352 = vand.u32 %v2339, 2147483648
    %v2353 = vor.u32 1.1754944e-38, %v2352
    %v2354 = vsel %vm2351, %v2353, %v2349
    %v2355 = vmul.f32 %v2313, %v2354
    %v2356 = vrcp.pop %v2340
    %v2357 = vmul.f32 %v2340, %v2356
    %v2358 = vsub.f32 1.0, %v2357
    %v2359 = vmul.f32 %v2356, %v2358
    %v2360 = vadd.f32 %v2356, %v2359
    %vm2361 = vweird.f32 %v2340
    %vm2362 = vweird.f32 %v2356
    %vm2363 = vmor %vm2361, %vm2362
    %v2364 = vsel %vm2363, %v2356, %v2360
    %v2365 = vand.u32 2147483647, %v2340
    %vm2366 = vcmp.eq.f32.partialorder %v2365, 8.507059e+37
    %v2367 = vand.u32 %v2340, 2147483648
    %v2368 = vor.u32 1.1754944e-38, %v2367
    %v2369 = vsel %vm2366, %v2368, %v2364
    %v2370 = vmul.f32 %v2314, %v2369
    %v2371 = vperm.slane %v2281, 1
    %v2372 = vadd.f32 %v2355, %v2371
    %v2373 = vadd.f32 %v2370, %v2371
    %v2375 = vperm.slane %v2286, 0
    %v2378 = vsel %vm213, %v2372, 0
    %v2381 = vsel %vm213, %v2373, 0
    %2383 = vmatpush.msra.mxu0 0.0
    %2384 = vmatpush.msra.mxu0 0.0
    %2385 = vmatpush.msra.mxu0 0.0
    %2386 = vmatpush.msra.mxu0 0.0
    %2387 = vmatpush.msra.mxu0 0.0
    %2388 = vmatpush.msra.mxu0 0.0
    %2389 = vmatpush.msra.mxu0 0.0
    %2390 = vmatpush.msra.mxu0 0.0
    %2391 = vmatpush.msra.mxu0 0.0
    %2392 = vmatpush.msra.mxu0 0.0
    %2393 = vmatpush.msra.mxu0 0.0
    %2394 = vmatpush.msra.mxu0 0.0
    %2395 = vmatpush.msra.mxu0 %v2285
    %2396 = vmatpush.msra.mxu0 %v2284
    %2397 = vmatpush.msra.mxu0 %v2283
    %2398 = vmatpush.msra.mxu0 %v2282
    %2399 = vmatmul.f32.gmra.mxu0 %v2378
    %v2400 = vpop.f32.mrf.mxu0
    %v2401 = vadd.f32 %v2375, %v2400
    %2402 = vmatmul.f32.gmra.mxu0 %v2381
    %v2403 = vpop.f32.mrf.mxu0
    %v2404 = vadd.f32 %v2375, %v2403
    %2405 = vdwg.mxu0
    %2407 = vrot.lane.b32.xlu0 %v2401, 96
    %v2408 = vpop.permute.xlu0 %2407
    %v2409 = vsel %vm338, %v2401, 0
    %v2411 = vsel %vm338, %v2408, 0
    %2413 = vmatpush.xpose.msra.mxu0 0.0
    %2414 = vmatpush.xpose.msra.mxu0 0.0
    %2415 = vmatpush.xpose.msra.mxu0 0.0
    %2416 = vmatpush.xpose.msra.mxu0 0.0
    %2417 = vmatpush.xpose.msra.mxu0 0.0
    %2418 = vmatpush.xpose.msra.mxu0 0.0
    %2419 = vmatpush.xpose.msra.mxu0 0.0
    %2420 = vmatpush.xpose.msra.mxu0 0.0
    %2421 = vmatpush.xpose.msra.mxu0 0.0
    %2422 = vmatpush.xpose.msra.mxu0 0.0
    %2423 = vmatpush.xpose.msra.mxu0 0.0
    %2424 = vmatpush.xpose.msra.mxu0 0.0
    %2425 = vmatpush.xpose.msra.mxu0 0.0
    %2426 = vmatpush.xpose.msra.mxu0 0.0
    %2427 = vmatpush.xpose.msra.mxu0 0.0
    %2428 = vmatpush.xpose.msra.mxu0 %v2411
    %2429 = vmatmul.f32.gmra.mxu0 %v2409
    %v2430 = vpop.f32.mrf.mxu0
    %v2431 = vadd.f32 0.0, %v2430
    %2432 = vdwg.mxu0
    %2434 = vrot.lane.b32.xlu0 %v2404, 96
    %v2435 = vpop.permute.xlu0 %2434
    %v2436 = vsel %vm338, %v2404, 0
    %v2438 = vsel %vm338, %v2435, 0
    %2440 = vmatpush.xpose.msra.mxu0 0.0
    %2441 = vmatpush.xpose.msra.mxu0 0.0
    %2442 = vmatpush.xpose.msra.mxu0 0.0
    %2443 = vmatpush.xpose.msra.mxu0 0.0
    %2444 = vmatpush.xpose.msra.mxu0 0.0
    %2445 = vmatpush.xpose.msra.mxu0 0.0
    %2446 = vmatpush.xpose.msra.mxu0 0.0
    %2447 = vmatpush.xpose.msra.mxu0 0.0
    %2448 = vmatpush.xpose.msra.mxu0 0.0
    %2449 = vmatpush.xpose.msra.mxu0 0.0
    %2450 = vmatpush.xpose.msra.mxu0 0.0
    %2451 = vmatpush.xpose.msra.mxu0 0.0
    %2452 = vmatpush.xpose.msra.mxu0 0.0
    %2453 = vmatpush.xpose.msra.mxu0 0.0
    %2454 = vmatpush.xpose.msra.mxu0 0.0
    %2455 = vmatpush.xpose.msra.mxu0 %v2438
    %2456 = vmatmul.f32.gmra.mxu0 %v2436
    %v2457 = vpop.f32.mrf.mxu0
    %v2458 = vadd.f32 0.0, %v2457
    %2459 = vdwg.mxu0
    %v2460 = vmul.f32 %v2431, 0.35355338
    %v2461 = vmul.f32 %v2458, 0.35355338
    %v2462 = vadd.f32 %v2460, %v152
    %v2463 = vadd.f32 %v2461, %v153
    %v2464 = vsel %vm338, %v2462, -inf
    %2465 = vmax.xlane.f32.xlu0 %v2464
    %v2466 = vpop.xlane.xlu0 %2465
    %v2467 = vsel %vm338, %v2463, -inf
    %2468 = vmax.xlane.f32.xlu0 %v2467
    %v2469 = vpop.xlane.xlu0 %2468
    %v2470 = vsub.f32 %v2462, %v2466
    %v2471 = vsub.f32 %v2463, %v2469
    %v2472 = vmul.f32 %v2470, 1.442695
    %v2473 = vpow.pop %v2472
    %v2474 = vmul.f32 %v2471, 1.442695
    %v2475 = vpow.pop %v2474
    %v2476 = vsel %vm338, %v2473, 0.0
    %2477 = vadd.xlane.f32.xlu0 %v2476
    %v2478 = vpop.xlane.xlu0 %2477
    %v2479 = vsel %vm338, %v2475, 0.0
    %2480 = vadd.xlane.f32.xlu0 %v2479
    %v2481 = vpop.xlane.xlu0 %2480
    %v2482 = vrcp.pop %v2478
    %v2483 = vrcp.pop %v2481
    %v2484 = vmul.f32 %v2473, %v2482
    %v2485 = vmul.f32 %v2475, %v2483
    %2486 = vrot.lane.b32.xlu0 %v2401, 64
    %v2487 = vpop.permute.xlu0 %2486
    %v2490 = vsel %vm338, %v2484, 0
    %2492 = vmatpush.msra.mxu0 0.0
    %2493 = vmatpush.msra.mxu0 0.0
    %2494 = vmatpush.msra.mxu0 0.0
    %2495 = vmatpush.msra.mxu0 0.0
    %2496 = vmatpush.msra.mxu0 0.0
    %2497 = vmatpush.msra.mxu0 0.0
    %2498 = vmatpush.msra.mxu0 0.0
    %2499 = vmatpush.msra.mxu0 0.0
    %2500 = vmatpush.msra.mxu0 0.0
    %2501 = vmatpush.msra.mxu0 0.0
    %2502 = vmatpush.msra.mxu0 0.0
    %2503 = vmatpush.msra.mxu0 0.0
    %2504 = vmatpush.msra.mxu0 0.0
    %2505 = vmatpush.msra.mxu0 0.0
    %2506 = vmatpush.msra.mxu0 0.0
    %2507 = vmatpush.msra.mxu0 %v2487
    %2508 = vmatmul.f32.gmra.mxu0 %v2490
    %v2509 = vpop.f32.mrf.mxu0
    %v2510 = vadd.f32 0.0, %v2509
    %2511 = vdwg.mxu0
    %2512 = vrot.lane.b32.xlu0 %v2404, 64
    %v2513 = vpop.permute.xlu0 %2512
    %v2516 = vsel %vm338, %v2485, 0
    %2518 = vmatpush.msra.mxu0 0.0
    %2519 = vmatpush.msra.mxu0 0.0
    %2520 = vmatpush.msra.mxu0 0.0
    %2521 = vmatpush.msra.mxu0 0.0
    %2522 = vmatpush.msra.mxu0 0.0
    %2523 = vmatpush.msra.mxu0 0.0
    %2524 = vmatpush.msra.mxu0 0.0
    %2525 = vmatpush.msra.mxu0 0.0
    %2526 = vmatpush.msra.mxu0 0.0
    %2527 = vmatpush.msra.mxu0 0.0
    %2528 = vmatpush.msra.mxu0 0.0
    %2529 = vmatpush.msra.mxu0 0.0
    %2530 = vmatpush.msra.mxu0 0.0
    %2531 = vmatpush.msra.mxu0 0.0
    %2532 = vmatpush.msra.mxu0 0.0
    %2533 = vmatpush.msra.mxu0 %v2513
    %2534 = vmatmul.f32.gmra.mxu0 %v2516
    %v2535 = vpop.f32.mrf.mxu0
    %v2536 = vadd.f32 0.0, %v2535
    %2537 = vdwg.mxu0
    %2538 = vrot.lane.b32.xlu0 %v2401, 120
    %v2539 = vpop.permute.xlu0 %2538
    %2540 = vrot.lane.b32.xlu0 %v2401, 88
    %v2541 = vpop.permute.xlu0 %2540
    %v2542 = vsel %vm338, %v2539, 0
    %v2544 = vsel %vm338, %v2541, 0
    %2546 = vmatpush.xpose.msra.mxu0 0.0
    %2547 = vmatpush.xpose.msra.mxu0 0.0
    %2548 = vmatpush.xpose.msra.mxu0 0.0
    %2549 = vmatpush.xpose.msra.mxu0 0.0
    %2550 = vmatpush.xpose.msra.mxu0 0.0
    %2551 = vmatpush.xpose.msra.mxu0 0.0
    %2552 = vmatpush.xpose.msra.mxu0 0.0
    %2553 = vmatpush.xpose.msra.mxu0 0.0
    %2554 = vmatpush.xpose.msra.mxu0 0.0
    %2555 = vmatpush.xpose.msra.mxu0 0.0
    %2556 = vmatpush.xpose.msra.mxu0 0.0
    %2557 = vmatpush.xpose.msra.mxu0 0.0
    %2558 = vmatpush.xpose.msra.mxu0 0.0
    %2559 = vmatpush.xpose.msra.mxu0 0.0
    %2560 = vmatpush.xpose.msra.mxu0 0.0
    %2561 = vmatpush.xpose.msra.mxu0 %v2544
    %2562 = vmatmul.f32.gmra.mxu0 %v2542
    %v2563 = vpop.f32.mrf.mxu0
    %v2564 = vadd.f32 0.0, %v2563
    %2565 = vdwg.mxu0
    %2566 = vrot.lane.b32.xlu0 %v2404, 120
    %v2567 = vpop.permute.xlu0 %2566
    %2568 = vrot.lane.b32.xlu0 %v2404, 88
    %v2569 = vpop.permute.xlu0 %2568
    %v2570 = vsel %vm338, %v2567, 0
    %v2572 = vsel %vm338, %v2569, 0
    %2574 = vmatpush.xpose.msra.mxu0 0.0
    %2575 = vmatpush.xpose.msra.mxu0 0.0
    %2576 = vmatpush.xpose.msra.mxu0 0.0
    %2577 = vmatpush.xpose.msra.mxu0 0.0
    %2578 = vmatpush.xpose.msra.mxu0 0.0
    %2579 = vmatpush.xpose.msra.mxu0 0.0
    %2580 = vmatpush.xpose.msra.mxu0 0.0
    %2581 = vmatpush.xpose.msra.mxu0 0.0
    %2582 = vmatpush.xpose.msra.mxu0 0.0
    %2583 = vmatpush.xpose.msra.mxu0 0.0
    %2584 = vmatpush.xpose.msra.mxu0 0.0
    %2585 = vmatpush.xpose.msra.mxu0 0.0
    %2586 = vmatpush.xpose.msra.mxu0 0.0
    %2587 = vmatpush.xpose.msra.mxu0 0.0
    %2588 = vmatpush.xpose.msra.mxu0 0.0
    %2589 = vmatpush.xpose.msra.mxu0 %v2572
    %2590 = vmatmul.f32.gmra.mxu0 %v2570
    %v2591 = vpop.f32.mrf.mxu0
    %v2592 = vadd.f32 0.0, %v2591
    %2593 = vdwg.mxu0
    %v2594 = vmul.f32 %v2564, 0.35355338
    %v2595 = vmul.f32 %v2592, 0.35355338
    %v2596 = vadd.f32 %v2594, %v152
    %v2597 = vadd.f32 %v2595, %v153
    %v2598 = vsel %vm338, %v2596, -inf
    %2599 = vmax.xlane.f32.xlu0 %v2598
    %v2600 = vpop.xlane.xlu0 %2599
    %v2601 = vsel %vm338, %v2597, -inf
    %2602 = vmax.xlane.f32.xlu0 %v2601
    %v2603 = vpop.xlane.xlu0 %2602
    %v2604 = vsub.f32 %v2596, %v2600
    %v2605 = vsub.f32 %v2597, %v2603
    %v2606 = vmul.f32 %v2604, 1.442695
    %v2607 = vpow.pop %v2606
    %v2608 = vmul.f32 %v2605, 1.442695
    %v2609 = vpow.pop %v2608
    %v2610 = vsel %vm338, %v2607, 0.0
    %2611 = vadd.xlane.f32.xlu0 %v2610
    %v2612 = vpop.xlane.xlu0 %2611
    %v2613 = vsel %vm338, %v2609, 0.0
    %2614 = vadd.xlane.f32.xlu0 %v2613
    %v2615 = vpop.xlane.xlu0 %2614
    %v2616 = vrcp.pop %v2612
    %v2617 = vrcp.pop %v2615
    %v2618 = vmul.f32 %v2607, %v2616
    %v2619 = vmul.f32 %v2609, %v2617
    %2620 = vrot.lane.b32.xlu0 %v2401, 56
    %v2621 = vpop.permute.xlu0 %2620
    %v2624 = vsel %vm338, %v2618, 0
    %2626 = vmatpush.msra.mxu0 0.0
    %2627 = vmatpush.msra.mxu0 0.0
    %2628 = vmatpush.msra.mxu0 0.0
    %2629 = vmatpush.msra.mxu0 0.0
    %2630 = vmatpush.msra.mxu0 0.0
    %2631 = vmatpush.msra.mxu0 0.0
    %2632 = vmatpush.msra.mxu0 0.0
    %2633 = vmatpush.msra.mxu0 0.0
    %2634 = vmatpush.msra.mxu0 0.0
    %2635 = vmatpush.msra.mxu0 0.0
    %2636 = vmatpush.msra.mxu0 0.0
    %2637 = vmatpush.msra.mxu0 0.0
    %2638 = vmatpush.msra.mxu0 0.0
    %2639 = vmatpush.msra.mxu0 0.0
    %2640 = vmatpush.msra.mxu0 0.0
    %2641 = vmatpush.msra.mxu0 %v2621
    %2642 = vmatmul.f32.gmra.mxu0 %v2624
    %v2643 = vpop.f32.mrf.mxu0
    %v2644 = vadd.f32 0.0, %v2643
    %2645 = vdwg.mxu0
    %2646 = vrot.lane.b32.xlu0 %v2404, 56
    %v2647 = vpop.permute.xlu0 %2646
    %v2650 = vsel %vm338, %v2619, 0
    %2652 = vmatpush.msra.mxu0 0.0
    %2653 = vmatpush.msra.mxu0 0.0
    %2654 = vmatpush.msra.mxu0 0.0
    %2655 = vmatpush.msra.mxu0 0.0
    %2656 = vmatpush.msra.mxu0 0.0
    %2657 = vmatpush.msra.mxu0 0.0
    %2658 = vmatpush.msra.mxu0 0.0
    %2659 = vmatpush.msra.mxu0 0.0
    %2660 = vmatpush.msra.mxu0 0.0
    %2661 = vmatpush.msra.mxu0 0.0
    %2662 = vmatpush.msra.mxu0 0.0
    %2663 = vmatpush.msra.mxu0 0.0
    %2664 = vmatpush.msra.mxu0 0.0
    %2665 = vmatpush.msra.mxu0 0.0
    %2666 = vmatpush.msra.mxu0 0.0
    %2667 = vmatpush.msra.mxu0 %v2647
    %2668 = vmatmul.f32.gmra.mxu0 %v2650
    %v2669 = vpop.f32.mrf.mxu0
    %v2670 = vadd.f32 0.0, %v2669
    %2671 = vdwg.mxu0
    %2673 = vrot.lane.b32.xlu0 %v2283, 32
    %v2674 = vpop.permute.xlu0 %2673
    %v2677 = vsel %vm338, %v2644, 0
    %v2680 = vsel %vm338, %v2670, 0
    %2682 = vmatpush.msra.mxu0 0.0
    %2683 = vmatpush.msra.mxu0 0.0
    %2684 = vmatpush.msra.mxu0 0.0
    %2685 = vmatpush.msra.mxu0 0.0
    %2686 = vmatpush.msra.mxu0 0.0
    %2687 = vmatpush.msra.mxu0 0.0
    %2688 = vmatpush.msra.mxu0 0.0
    %2689 = vmatpush.msra.mxu0 0.0
    %2690 = vmatpush.msra.mxu0 0.0
    %2691 = vmatpush.msra.mxu0 0.0
    %2692 = vmatpush.msra.mxu0 0.0
    %2693 = vmatpush.msra.mxu0 0.0
    %2694 = vmatpush.msra.mxu0 0.0
    %2695 = vmatpush.msra.mxu0 0.0
    %2696 = vmatpush.msra.mxu0 0.0
    %2697 = vmatpush.msra.mxu0 %v2674
    %2698 = vmatmul.f32.gmra.mxu0 %v2677
    %v2699 = vpop.f32.mrf.mxu0
    %v2700 = vadd.f32 0.0, %v2699
    %2701 = vmatmul.f32.gmra.mxu0 %v2680
    %v2702 = vpop.f32.mrf.mxu0
    %v2703 = vadd.f32 0.0, %v2702
    %2704 = vdwg.mxu0
    %2706 = vrot.lane.b32.xlu0 %v2282, 32
    %v2707 = vpop.permute.xlu0 %2706
    %v2710 = vsel %vm338, %v2510, 0
    %v2713 = vsel %vm338, %v2536, 0
    %2715 = vmatpush.msra.mxu0 0.0
    %2716 = vmatpush.msra.mxu0 0.0
    %2717 = vmatpush.msra.mxu0 0.0
    %2718 = vmatpush.msra.mxu0 0.0
    %2719 = vmatpush.msra.mxu0 0.0
    %2720 = vmatpush.msra.mxu0 0.0
    %2721 = vmatpush.msra.mxu0 0.0
    %2722 = vmatpush.msra.mxu0 0.0
    %2723 = vmatpush.msra.mxu0 0.0
    %2724 = vmatpush.msra.mxu0 0.0
    %2725 = vmatpush.msra.mxu0 0.0
    %2726 = vmatpush.msra.mxu0 0.0
    %2727 = vmatpush.msra.mxu0 0.0
    %2728 = vmatpush.msra.mxu0 0.0
    %2729 = vmatpush.msra.mxu0 0.0
    %2730 = vmatpush.msra.mxu0 %v2707
    %2731 = vmatmul.f32.gmra.mxu0 %v2710
    %v2732 = vpop.f32.mrf.mxu0
    %v2733 = vadd.f32 %v2700, %v2732
    %2734 = vmatmul.f32.gmra.mxu0 %v2713
    %v2735 = vpop.f32.mrf.mxu0
    %v2736 = vadd.f32 %v2703, %v2735
    %2737 = vdwg.mxu0
    %2738 = vrot.lane.b32.xlu0 %v2401, 112
    %v2739 = vpop.permute.xlu0 %2738
    %2740 = vrot.lane.b32.xlu0 %v2401, 80
    %v2741 = vpop.permute.xlu0 %2740
    %v2742 = vsel %vm338, %v2739, 0
    %v2744 = vsel %vm338, %v2741, 0
    %2746 = vmatpush.xpose.msra.mxu0 0.0
    %2747 = vmatpush.xpose.msra.mxu0 0.0
    %2748 = vmatpush.xpose.msra.mxu0 0.0
    %2749 = vmatpush.xpose.msra.mxu0 0.0
    %2750 = vmatpush.xpose.msra.mxu0 0.0
    %2751 = vmatpush.xpose.msra.mxu0 0.0
    %2752 = vmatpush.xpose.msra.mxu0 0.0
    %2753 = vmatpush.xpose.msra.mxu0 0.0
    %2754 = vmatpush.xpose.msra.mxu0 0.0
    %2755 = vmatpush.xpose.msra.mxu0 0.0
    %2756 = vmatpush.xpose.msra.mxu0 0.0
    %2757 = vmatpush.xpose.msra.mxu0 0.0
    %2758 = vmatpush.xpose.msra.mxu0 0.0
    %2759 = vmatpush.xpose.msra.mxu0 0.0
    %2760 = vmatpush.xpose.msra.mxu0 0.0
    %2761 = vmatpush.xpose.msra.mxu0 %v2744
    %2762 = vmatmul.f32.gmra.mxu0 %v2742
    %v2763 = vpop.f32.mrf.mxu0
    %v2764 = vadd.f32 0.0, %v2763
    %2765 = vdwg.mxu0
    %2766 = vrot.lane.b32.xlu0 %v2404, 112
    %v2767 = vpop.permute.xlu0 %2766
    %2768 = vrot.lane.b32.xlu0 %v2404, 80
    %v2769 = vpop.permute.xlu0 %2768
    %v2770 = vsel %vm338, %v2767, 0
    %v2772 = vsel %vm338, %v2769, 0
    %2774 = vmatpush.xpose.msra.mxu0 0.0
    %2775 = vmatpush.xpose.msra.mxu0 0.0
    %2776 = vmatpush.xpose.msra.mxu0 0.0
    %2777 = vmatpush.xpose.msra.mxu0 0.0
    %2778 = vmatpush.xpose.msra.mxu0 0.0
    %2779 = vmatpush.xpose.msra.mxu0 0.0
    %2780 = vmatpush.xpose.msra.mxu0 0.0
    %2781 = vmatpush.xpose.msra.mxu0 0.0
    %2782 = vmatpush.xpose.msra.mxu0 0.0
    %2783 = vmatpush.xpose.msra.mxu0 0.0
    %2784 = vmatpush.xpose.msra.mxu0 0.0
    %2785 = vmatpush.xpose.msra.mxu0 0.0
    %2786 = vmatpush.xpose.msra.mxu0 0.0
    %2787 = vmatpush.xpose.msra.mxu0 0.0
    %2788 = vmatpush.xpose.msra.mxu0 0.0
    %2789 = vmatpush.xpose.msra.mxu0 %v2772
    %2790 = vmatmul.f32.gmra.mxu0 %v2770
    %v2791 = vpop.f32.mrf.mxu0
    %v2792 = vadd.f32 0.0, %v2791
    %2793 = vdwg.mxu0
    %v2794 = vmul.f32 %v2764, 0.35355338
    %v2795 = vmul.f32 %v2792, 0.35355338
    %v2796 = vadd.f32 %v2794, %v152
    %v2797 = vadd.f32 %v2795, %v153
    %v2798 = vsel %vm338, %v2796, -inf
    %2799 = vmax.xlane.f32.xlu0 %v2798
    %v2800 = vpop.xlane.xlu0 %2799
    %v2801 = vsel %vm338, %v2797, -inf
    %2802 = vmax.xlane.f32.xlu0 %v2801
    %v2803 = vpop.xlane.xlu0 %2802
    %v2804 = vsub.f32 %v2796, %v2800
    %v2805 = vsub.f32 %v2797, %v2803
    %v2806 = vmul.f32 %v2804, 1.442695
    %v2807 = vpow.pop %v2806
    %v2808 = vmul.f32 %v2805, 1.442695
    %v2809 = vpow.pop %v2808
    %v2810 = vsel %vm338, %v2807, 0.0
    %2811 = vadd.xlane.f32.xlu0 %v2810
    %v2812 = vpop.xlane.xlu0 %2811
    %v2813 = vsel %vm338, %v2809, 0.0
    %2814 = vadd.xlane.f32.xlu0 %v2813
    %v2815 = vpop.xlane.xlu0 %2814
    %v2816 = vrcp.pop %v2812
    %v2817 = vrcp.pop %v2815
    %v2818 = vmul.f32 %v2807, %v2816
    %v2819 = vmul.f32 %v2809, %v2817
    %2820 = vrot.lane.b32.xlu0 %v2401, 48
    %v2821 = vpop.permute.xlu0 %2820
    %v2824 = vsel %vm338, %v2818, 0
    %2826 = vmatpush.msra.mxu0 0.0
    %2827 = vmatpush.msra.mxu0 0.0
    %2828 = vmatpush.msra.mxu0 0.0
    %2829 = vmatpush.msra.mxu0 0.0
    %2830 = vmatpush.msra.mxu0 0.0
    %2831 = vmatpush.msra.mxu0 0.0
    %2832 = vmatpush.msra.mxu0 0.0
    %2833 = vmatpush.msra.mxu0 0.0
    %2834 = vmatpush.msra.mxu0 0.0
    %2835 = vmatpush.msra.mxu0 0.0
    %2836 = vmatpush.msra.mxu0 0.0
    %2837 = vmatpush.msra.mxu0 0.0
    %2838 = vmatpush.msra.mxu0 0.0
    %2839 = vmatpush.msra.mxu0 0.0
    %2840 = vmatpush.msra.mxu0 0.0
    %2841 = vmatpush.msra.mxu0 %v2821
    %2842 = vmatmul.f32.gmra.mxu0 %v2824
    %v2843 = vpop.f32.mrf.mxu0
    %v2844 = vadd.f32 0.0, %v2843
    %2845 = vdwg.mxu0
    %2846 = vrot.lane.b32.xlu0 %v2404, 48
    %v2847 = vpop.permute.xlu0 %2846
    %v2850 = vsel %vm338, %v2819, 0
    %2852 = vmatpush.msra.mxu0 0.0
    %2853 = vmatpush.msra.mxu0 0.0
    %2854 = vmatpush.msra.mxu0 0.0
    %2855 = vmatpush.msra.mxu0 0.0
    %2856 = vmatpush.msra.mxu0 0.0
    %2857 = vmatpush.msra.mxu0 0.0
    %2858 = vmatpush.msra.mxu0 0.0
    %2859 = vmatpush.msra.mxu0 0.0
    %2860 = vmatpush.msra.mxu0 0.0
    %2861 = vmatpush.msra.mxu0 0.0
    %2862 = vmatpush.msra.mxu0 0.0
    %2863 = vmatpush.msra.mxu0 0.0
    %2864 = vmatpush.msra.mxu0 0.0
    %2865 = vmatpush.msra.mxu0 0.0
    %2866 = vmatpush.msra.mxu0 0.0
    %2867 = vmatpush.msra.mxu0 %v2847
    %2868 = vmatmul.f32.gmra.mxu0 %v2850
    %v2869 = vpop.f32.mrf.mxu0
    %v2870 = vadd.f32 0.0, %v2869
    %2871 = vdwg.mxu0
    %2873 = vrot.lane.b32.xlu0 %v2284, 32
    %v2874 = vpop.permute.xlu0 %2873
    %v2877 = vsel %vm338, %v2844, 0
    %v2880 = vsel %vm338, %v2870, 0
    %2882 = vmatpush.msra.mxu0 0.0
    %2883 = vmatpush.msra.mxu0 0.0
    %2884 = vmatpush.msra.mxu0 0.0
    %2885 = vmatpush.msra.mxu0 0.0
    %2886 = vmatpush.msra.mxu0 0.0
    %2887 = vmatpush.msra.mxu0 0.0
    %2888 = vmatpush.msra.mxu0 0.0
    %2889 = vmatpush.msra.mxu0 0.0
    %2890 = vmatpush.msra.mxu0 0.0
    %2891 = vmatpush.msra.mxu0 0.0
    %2892 = vmatpush.msra.mxu0 0.0
    %2893 = vmatpush.msra.mxu0 0.0
    %2894 = vmatpush.msra.mxu0 0.0
    %2895 = vmatpush.msra.mxu0 0.0
    %2896 = vmatpush.msra.mxu0 0.0
    %2897 = vmatpush.msra.mxu0 %v2874
    %2898 = vmatmul.f32.gmra.mxu0 %v2877
    %v2899 = vpop.f32.mrf.mxu0
    %v2900 = vadd.f32 0.0, %v2899
    %2901 = vmatmul.f32.gmra.mxu0 %v2880
    %v2902 = vpop.f32.mrf.mxu0
    %v2903 = vadd.f32 0.0, %v2902
    %2904 = vdwg.mxu0
    %v2905 = vadd.f32 %v2733, %v2900
    %v2906 = vadd.f32 %v2736, %v2903
    %2907 = vrot.lane.b32.xlu0 %v2401, 104
    %v2908 = vpop.permute.xlu0 %2907
    %2909 = vrot.lane.b32.xlu0 %v2401, 72
    %v2910 = vpop.permute.xlu0 %2909
    %v2911 = vsel %vm338, %v2908, 0
    %v2913 = vsel %vm338, %v2910, 0
    %2915 = vmatpush.xpose.msra.mxu0 0.0
    %2916 = vmatpush.xpose.msra.mxu0 0.0
    %2917 = vmatpush.xpose.msra.mxu0 0.0
    %2918 = vmatpush.xpose.msra.mxu0 0.0
    %2919 = vmatpush.xpose.msra.mxu0 0.0
    %2920 = vmatpush.xpose.msra.mxu0 0.0
    %2921 = vmatpush.xpose.msra.mxu0 0.0
    %2922 = vmatpush.xpose.msra.mxu0 0.0
    %2923 = vmatpush.xpose.msra.mxu0 0.0
    %2924 = vmatpush.xpose.msra.mxu0 0.0
    %2925 = vmatpush.xpose.msra.mxu0 0.0
    %2926 = vmatpush.xpose.msra.mxu0 0.0
    %2927 = vmatpush.xpose.msra.mxu0 0.0
    %2928 = vmatpush.xpose.msra.mxu0 0.0
    %2929 = vmatpush.xpose.msra.mxu0 0.0
    %2930 = vmatpush.xpose.msra.mxu0 %v2913
    %2931 = vmatmul.f32.gmra.mxu0 %v2911
    %v2932 = vpop.f32.mrf.mxu0
    %v2933 = vadd.f32 0.0, %v2932
    %2934 = vdwg.mxu0
    %2935 = vrot.lane.b32.xlu0 %v2404, 104
    %v2936 = vpop.permute.xlu0 %2935
    %2937 = vrot.lane.b32.xlu0 %v2404, 72
    %v2938 = vpop.permute.xlu0 %2937
    %v2939 = vsel %vm338, %v2936, 0
    %v2941 = vsel %vm338, %v2938, 0
    %2943 = vmatpush.xpose.msra.mxu0 0.0
    %2944 = vmatpush.xpose.msra.mxu0 0.0
    %2945 = vmatpush.xpose.msra.mxu0 0.0
    %2946 = vmatpush.xpose.msra.mxu0 0.0
    %2947 = vmatpush.xpose.msra.mxu0 0.0
    %2948 = vmatpush.xpose.msra.mxu0 0.0
    %2949 = vmatpush.xpose.msra.mxu0 0.0
    %2950 = vmatpush.xpose.msra.mxu0 0.0
    %2951 = vmatpush.xpose.msra.mxu0 0.0
    %2952 = vmatpush.xpose.msra.mxu0 0.0
    %2953 = vmatpush.xpose.msra.mxu0 0.0
    %2954 = vmatpush.xpose.msra.mxu0 0.0
    %2955 = vmatpush.xpose.msra.mxu0 0.0
    %2956 = vmatpush.xpose.msra.mxu0 0.0
    %2957 = vmatpush.xpose.msra.mxu0 0.0
    %2958 = vmatpush.xpose.msra.mxu0 %v2941
    %2959 = vmatmul.f32.gmra.mxu0 %v2939
    %v2960 = vpop.f32.mrf.mxu0
    %v2961 = vadd.f32 0.0, %v2960
    %2962 = vdwg.mxu0
    %v2963 = vmul.f32 %v2933, 0.35355338
    %v2964 = vmul.f32 %v2961, 0.35355338
    %v2965 = vadd.f32 %v2963, %v152
    %v2966 = vadd.f32 %v2964, %v153
    %v2967 = vsel %vm338, %v2965, -inf
    %2968 = vmax.xlane.f32.xlu0 %v2967
    %v2969 = vpop.xlane.xlu0 %2968
    %v2970 = vsel %vm338, %v2966, -inf
    %2971 = vmax.xlane.f32.xlu0 %v2970
    %v2972 = vpop.xlane.xlu0 %2971
    %v2973 = vsub.f32 %v2965, %v2969
    %v2974 = vsub.f32 %v2966, %v2972
    %v2975 = vmul.f32 %v2973, 1.442695
    %v2976 = vpow.pop %v2975
    %v2977 = vmul.f32 %v2974, 1.442695
    %v2978 = vpow.pop %v2977
    %v2979 = vsel %vm338, %v2976, 0.0
    %2980 = vadd.xlane.f32.xlu0 %v2979
    %v2981 = vpop.xlane.xlu0 %2980
    %v2982 = vsel %vm338, %v2978, 0.0
    %2983 = vadd.xlane.f32.xlu0 %v2982
    %v2984 = vpop.xlane.xlu0 %2983
    %v2985 = vrcp.pop %v2981
    %v2986 = vrcp.pop %v2984
    %v2987 = vmul.f32 %v2976, %v2985
    %v2988 = vmul.f32 %v2978, %v2986
    %2989 = vrot.lane.b32.xlu0 %v2401, 40
    %v2990 = vpop.permute.xlu0 %2989
    %v2993 = vsel %vm338, %v2987, 0
    %2995 = vmatpush.msra.mxu0 0.0
    %2996 = vmatpush.msra.mxu0 0.0
    %2997 = vmatpush.msra.mxu0 0.0
    %2998 = vmatpush.msra.mxu0 0.0
    %2999 = vmatpush.msra.mxu0 0.0
    %3000 = vmatpush.msra.mxu0 0.0
    %3001 = vmatpush.msra.mxu0 0.0
    %3002 = vmatpush.msra.mxu0 0.0
    %3003 = vmatpush.msra.mxu0 0.0
    %3004 = vmatpush.msra.mxu0 0.0
    %3005 = vmatpush.msra.mxu0 0.0
    %3006 = vmatpush.msra.mxu0 0.0
    %3007 = vmatpush.msra.mxu0 0.0
    %3008 = vmatpush.msra.mxu0 0.0
    %3009 = vmatpush.msra.mxu0 0.0
    %3010 = vmatpush.msra.mxu0 %v2990
    %3011 = vmatmul.f32.gmra.mxu0 %v2993
    %v3012 = vpop.f32.mrf.mxu0
    %v3013 = vadd.f32 0.0, %v3012
    %3014 = vdwg.mxu0
    %3015 = vrot.lane.b32.xlu0 %v2404, 40
    %v3016 = vpop.permute.xlu0 %3015
    %v3019 = vsel %vm338, %v2988, 0
    %3021 = vmatpush.msra.mxu0 0.0
    %3022 = vmatpush.msra.mxu0 0.0
    %3023 = vmatpush.msra.mxu0 0.0
    %3024 = vmatpush.msra.mxu0 0.0
    %3025 = vmatpush.msra.mxu0 0.0
    %3026 = vmatpush.msra.mxu0 0.0
    %3027 = vmatpush.msra.mxu0 0.0
    %3028 = vmatpush.msra.mxu0 0.0
    %3029 = vmatpush.msra.mxu0 0.0
    %3030 = vmatpush.msra.mxu0 0.0
    %3031 = vmatpush.msra.mxu0 0.0
    %3032 = vmatpush.msra.mxu0 0.0
    %3033 = vmatpush.msra.mxu0 0.0
    %3034 = vmatpush.msra.mxu0 0.0
    %3035 = vmatpush.msra.mxu0 0.0
    %3036 = vmatpush.msra.mxu0 %v3016
    %3037 = vmatmul.f32.gmra.mxu0 %v3019
    %v3038 = vpop.f32.mrf.mxu0
    %v3039 = vadd.f32 0.0, %v3038
    %3040 = vdwg.mxu0
    %3042 = vrot.lane.b32.xlu0 %v2285, 32
    %v3043 = vpop.permute.xlu0 %3042
    %v3046 = vsel %vm338, %v3013, 0
    %v3049 = vsel %vm338, %v3039, 0
    %3051 = vmatpush.msra.mxu0 0.0
    %3052 = vmatpush.msra.mxu0 0.0
    %3053 = vmatpush.msra.mxu0 0.0
    %3054 = vmatpush.msra.mxu0 0.0
    %3055 = vmatpush.msra.mxu0 0.0
    %3056 = vmatpush.msra.mxu0 0.0
    %3057 = vmatpush.msra.mxu0 0.0
    %3058 = vmatpush.msra.mxu0 0.0
    %3059 = vmatpush.msra.mxu0 0.0
    %3060 = vmatpush.msra.mxu0 0.0
    %3061 = vmatpush.msra.mxu0 0.0
    %3062 = vmatpush.msra.mxu0 0.0
    %3063 = vmatpush.msra.mxu0 0.0
    %3064 = vmatpush.msra.mxu0 0.0
    %3065 = vmatpush.msra.mxu0 0.0
    %3066 = vmatpush.msra.mxu0 %v3043
    %3067 = vmatmul.f32.gmra.mxu0 %v3046
    %v3068 = vpop.f32.mrf.mxu0
    %v3069 = vadd.f32 0.0, %v3068
    %3070 = vmatmul.f32.gmra.mxu0 %v3049
    %v3071 = vpop.f32.mrf.mxu0
    %v3072 = vadd.f32 0.0, %v3071
    %3073 = vdwg.mxu0
    %v3074 = vadd.f32 %v2905, %v3069
    %v3075 = vadd.f32 %v2906, %v3072
    %3076 = vrot.lane.b32.xlu0 %v2375, 32
    %v3077 = vpop.permute.xlu0 %3076
    %v3079 = vadd.f32 %v3074, %v3077
    %v3080 = vadd.f32 %v3075, %v3077
    %v3081 = vadd.f32 %v2279, %v3079
    %v3082 = vadd.f32 %v2280, %v3080
    %v3083 = vsel %vm213, %v3081, 0.0
    %3084 = vadd.xlane.f32.xlu0 %v3083
    %v3085 = vpop.xlane.xlu0 %3084
    %v3086 = vsel %vm213, %v3082, 0.0
    %3087 = vadd.xlane.f32.xlu0 %v3086
    %v3088 = vpop.xlane.xlu0 %3087
    %v3089 = vmul.f32 %v3085, %v226
    %v3090 = vmul.f32 %v3088, %v226
    %v3091 = vsub.f32 %v3081, %v3089
    %v3092 = vsub.f32 %v3082, %v3090
    %v3093 = vmul.f32 %v3091, %v3091
    %v3094 = vmul.f32 %v3092, %v3092
    %v3095 = vsel %vm213, %v3093, 0.0
    %3096 = vadd.xlane.f32.xlu0 %v3095
    %v3097 = vpop.xlane.xlu0 %3096
    %v3098 = vsel %vm213, %v3094, 0.0
    %3099 = vadd.xlane.f32.xlu0 %v3098
    %v3100 = vpop.xlane.xlu0 %3099
    %v3101 = vmul.f32 %v3097, 0.032258064
    %v3102 = vmul.f32 %v3100, 0.032258064
    %v3103 = vperm.slane %v2281, 2
    %v3104 = vmul.f32 %v3103, %v3091
    %v3105 = vmul.f32 %v3103, %v3092
    %v3106 = vrsqrt.pop %v3101
    %v3107 = vmul.f32 %v3106, %v3101
    %v3108 = vmul.f32 %v3107, %v3106
    %v3109 = vmul.f32 0.5, %v3108
    %v3110 = vsub.f32 1.5, %v3109
    %v3111 = vmul.f32 %v3106, %v3110
    %v3112 = vmul.f32 %v3101, %v3111
    %vm3113 = vcmp.eq.f32.partialorder %v3101, inf
    %v3114 = vsel %vm3113, %v3101, %v3112
    %vm3115 = vcmp.eq.f32.partialorder %v3101, 0.0
    %v3116 = vand.u32 %v3101, 2147483648
    %v3117 = vsel %vm3115, %v3116, %v3114
    %v3118 = vrsqrt.pop %v3102
    %v3119 = vmul.f32 %v3118, %v3102
    %v3120 = vmul.f32 %v3119, %v3118
    %v3121 = vmul.f32 0.5, %v3120
    %v3122 = vsub.f32 1.5, %v3121
    %v3123 = vmul.f32 %v3118, %v3122
    %v3124 = vmul.f32 %v3102, %v3123
    %vm3125 = vcmp.eq.f32.partialorder %v3102, inf
    %v3126 = vsel %vm3125, %v3102, %v3124
    %vm3127 = vcmp.eq.f32.partialorder %v3102, 0.0
    %v3128 = vand.u32 %v3102, 2147483648
    %v3129 = vsel %vm3127, %v3128, %v3126
    %v3130 = vadd.f32 %v3117, 1e-06
    %v3131 = vadd.f32 %v3129, 1e-06
    %v3132 = vrcp.pop %v3130
    %v3133 = vmul.f32 %v3130, %v3132
    %v3134 = vsub.f32 1.0, %v3133
    %v3135 = vmul.f32 %v3132, %v3134
    %v3136 = vadd.f32 %v3132, %v3135
    %vm3137 = vweird.f32 %v3130
    %vm3138 = vweird.f32 %v3132
    %vm3139 = vmor %vm3137, %vm3138
    %v3140 = vsel %vm3139, %v3132, %v3136
    %v3141 = vand.u32 2147483647, %v3130
    %vm3142 = vcmp.eq.f32.partialorder %v3141, 8.507059e+37
    %v3143 = vand.u32 %v3130, 2147483648
    %v3144 = vor.u32 1.1754944e-38, %v3143
    %v3145 = vsel %vm3142, %v3144, %v3140
    %v3146 = vmul.f32 %v3104, %v3145
    %v3147 = vrcp.pop %v3131
    %v3148 = vmul.f32 %v3131, %v3147
    %v3149 = vsub.f32 1.0, %v3148
    %v3150 = vmul.f32 %v3147, %v3149
    %v3151 = vadd.f32 %v3147, %v3150
    %vm3152 = vweird.f32 %v3131
    %vm3153 = vweird.f32 %v3147
    %vm3154 = vmor %vm3152, %vm3153
    %v3155 = vsel %vm3154, %v3147, %v3151
    %v3156 = vand.u32 2147483647, %v3131
    %vm3157 = vcmp.eq.f32.partialorder %v3156, 8.507059e+37
    %v3158 = vand.u32 %v3131, 2147483648
    %v3159 = vor.u32 1.1754944e-38, %v3158
    %v3160 = vsel %vm3157, %v3159, %v3155
    %v3161 = vmul.f32 %v3105, %v3160
    %v3162 = vperm.slane %v2281, 3
    %v3163 = vadd.f32 %v3146, %v3162
    %v3164 = vadd.f32 %v3161, %v3162
    %v3166 = vperm.slane %v2291, 0
    %v3169 = vsel %vm213, %v3163, 0
    %v3172 = vsel %vm213, %v3164, 0
    %3174 = vmatpush.msra.mxu0 0.0
    %3175 = vmatpush.msra.mxu0 0.0
    %3176 = vmatpush.msra.mxu0 0.0
    %3177 = vmatpush.msra.mxu0 0.0
    %3178 = vmatpush.msra.mxu0 0.0
    %3179 = vmatpush.msra.mxu0 0.0
    %3180 = vmatpush.msra.mxu0 0.0
    %3181 = vmatpush.msra.mxu0 0.0
    %3182 = vmatpush.msra.mxu0 0.0
    %3183 = vmatpush.msra.mxu0 0.0
    %3184 = vmatpush.msra.mxu0 0.0
    %3185 = vmatpush.msra.mxu0 0.0
    %3186 = vmatpush.msra.mxu0 %v2290
    %3187 = vmatpush.msra.mxu0 %v2289
    %3188 = vmatpush.msra.mxu0 %v2288
    %3189 = vmatpush.msra.mxu0 %v2287
    %3190 = vmatmul.f32.gmra.mxu0 %v3169
    %v3191 = vpop.f32.mrf.mxu0
    %v3192 = vadd.f32 %v3166, %v3191
    %3193 = vmatmul.f32.gmra.mxu0 %v3172
    %v3194 = vpop.f32.mrf.mxu0
    %v3195 = vadd.f32 %v3166, %v3194
    %3196 = vdwg.mxu0
    %3201 = vrot.lane.b32.xlu0 %v2287, 96
    %v3202 = vpop.permute.xlu0 %3201
    %3203 = vrot.lane.b32.xlu0 %v2288, 96
    %v3204 = vpop.permute.xlu0 %3203
    %3205 = vrot.lane.b32.xlu0 %v2289, 96
    %v3206 = vpop.permute.xlu0 %3205
    %3207 = vrot.lane.b32.xlu0 %v2290, 96
    %v3208 = vpop.permute.xlu0 %3207
    %3213 = vrot.lane.b32.xlu0 %v3166, 96
    %v3214 = vpop.permute.xlu0 %3213
    %v3217 = vsel %vm213, %v2229, 0
    %v3220 = vsel %vm213, %v2230, 0
    %3222 = vmatpush.msra.mxu0 0.0
    %3223 = vmatpush.msra.mxu0 0.0
    %3224 = vmatpush.msra.mxu0 0.0
    %3225 = vmatpush.msra.mxu0 0.0
    %3226 = vmatpush.msra.mxu0 0.0
    %3227 = vmatpush.msra.mxu0 0.0
    %3228 = vmatpush.msra.mxu0 0.0
    %3229 = vmatpush.msra.mxu0 0.0
    %3230 = vmatpush.msra.mxu0 0.0
    %3231 = vmatpush.msra.mxu0 0.0
    %3232 = vmatpush.msra.mxu0 0.0
    %3233 = vmatpush.msra.mxu0 0.0
    %3234 = vmatpush.msra.mxu0 %v3208
    %3235 = vmatpush.msra.mxu0 %v3206
    %3236 = vmatpush.msra.mxu0 %v3204
    %3237 = vmatpush.msra.mxu0 %v3202
    %3238 = vmatmul.f32.gmra.mxu0 %v3217
    %v3239 = vpop.f32.mrf.mxu0
    %v3240 = vadd.f32 %v3214, %v3239
    %3241 = vmatmul.f32.gmra.mxu0 %v3220
    %v3242 = vpop.f32.mrf.mxu0
    %v3243 = vadd.f32 %v3214, %v3242
    %3244 = vdwg.mxu0
    %v3246 = vsel %vm338, %v3192, 0
    %v3249 = vsel %vm338, %v3240, 0
    %3251 = vmatpush.xpose.msra.mxu0 0.0
    %3252 = vmatpush.xpose.msra.mxu0 0.0
    %3253 = vmatpush.xpose.msra.mxu0 0.0
    %3254 = vmatpush.xpose.msra.mxu0 0.0
    %3255 = vmatpush.xpose.msra.mxu0 0.0
    %3256 = vmatpush.xpose.msra.mxu0 0.0
    %3257 = vmatpush.xpose.msra.mxu0 0.0
    %3258 = vmatpush.xpose.msra.mxu0 0.0
    %3259 = vmatpush.xpose.msra.mxu0 0.0
    %3260 = vmatpush.xpose.msra.mxu0 0.0
    %3261 = vmatpush.xpose.msra.mxu0 0.0
    %3262 = vmatpush.xpose.msra.mxu0 0.0
    %3263 = vmatpush.xpose.msra.mxu0 0.0
    %3264 = vmatpush.xpose.msra.mxu0 0.0
    %3265 = vmatpush.xpose.msra.mxu0 0.0
    %3266 = vmatpush.xpose.msra.mxu0 %v3249
    %3267 = vmatmul.f32.gmra.mxu0 %v3246
    %v3268 = vpop.f32.mrf.mxu0
    %v3269 = vadd.f32 0.0, %v3268
    %3270 = vdwg.mxu0
    %v3272 = vsel %vm338, %v3195, 0
    %v3275 = vsel %vm338, %v3243, 0
    %3277 = vmatpush.xpose.msra.mxu0 0.0
    %3278 = vmatpush.xpose.msra.mxu0 0.0
    %3279 = vmatpush.xpose.msra.mxu0 0.0
    %3280 = vmatpush.xpose.msra.mxu0 0.0
    %3281 = vmatpush.xpose.msra.mxu0 0.0
    %3282 = vmatpush.xpose.msra.mxu0 0.0
    %3283 = vmatpush.xpose.msra.mxu0 0.0
    %3284 = vmatpush.xpose.msra.mxu0 0.0
    %3285 = vmatpush.xpose.msra.mxu0 0.0
    %3286 = vmatpush.xpose.msra.mxu0 0.0
    %3287 = vmatpush.xpose.msra.mxu0 0.0
    %3288 = vmatpush.xpose.msra.mxu0 0.0
    %3289 = vmatpush.xpose.msra.mxu0 0.0
    %3290 = vmatpush.xpose.msra.mxu0 0.0
    %3291 = vmatpush.xpose.msra.mxu0 0.0
    %3292 = vmatpush.xpose.msra.mxu0 %v3275
    %3293 = vmatmul.f32.gmra.mxu0 %v3272
    %v3294 = vpop.f32.mrf.mxu0
    %v3295 = vadd.f32 0.0, %v3294
    %3296 = vdwg.mxu0
    %v3297 = vmul.f32 %v3269, 0.35355338
    %v3298 = vmul.f32 %v3295, 0.35355338
    %v3299 = vadd.f32 %v3297, %v146
    %v3300 = vadd.f32 %v3298, %v147
    %v3301 = vsel %vm338, %v3299, -inf
    %3302 = vmax.xlane.f32.xlu0 %v3301
    %v3303 = vpop.xlane.xlu0 %3302
    %v3304 = vsel %vm338, %v3300, -inf
    %3305 = vmax.xlane.f32.xlu0 %v3304
    %v3306 = vpop.xlane.xlu0 %3305
    %v3307 = vsub.f32 %v3299, %v3303
    %v3308 = vsub.f32 %v3300, %v3306
    %v3309 = vmul.f32 %v3307, 1.442695
    %v3310 = vpow.pop %v3309
    %v3311 = vmul.f32 %v3308, 1.442695
    %v3312 = vpow.pop %v3311
    %v3313 = vsel %vm338, %v3310, 0.0
    %3314 = vadd.xlane.f32.xlu0 %v3313
    %v3315 = vpop.xlane.xlu0 %3314
    %v3316 = vsel %vm338, %v3312, 0.0
    %3317 = vadd.xlane.f32.xlu0 %v3316
    %v3318 = vpop.xlane.xlu0 %3317
    %v3319 = vrcp.pop %v3315
    %v3320 = vrcp.pop %v3318
    %v3321 = vmul.f32 %v3310, %v3319
    %v3322 = vmul.f32 %v3312, %v3320
    %3323 = vrot.lane.b32.xlu0 %v3240, 96
    %v3324 = vpop.permute.xlu0 %3323
    %v3327 = vsel %vm338, %v3321, 0
    %3329 = vmatpush.msra.mxu0 0.0
    %3330 = vmatpush.msra.mxu0 0.0
    %3331 = vmatpush.msra.mxu0 0.0
    %3332 = vmatpush.msra.mxu0 0.0
    %3333 = vmatpush.msra.mxu0 0.0
    %3334 = vmatpush.msra.mxu0 0.0
    %3335 = vmatpush.msra.mxu0 0.0
    %3336 = vmatpush.msra.mxu0 0.0
    %3337 = vmatpush.msra.mxu0 0.0
    %3338 = vmatpush.msra.mxu0 0.0
    %3339 = vmatpush.msra.mxu0 0.0
    %3340 = vmatpush.msra.mxu0 0.0
    %3341 = vmatpush.msra.mxu0 0.0
    %3342 = vmatpush.msra.mxu0 0.0
    %3343 = vmatpush.msra.mxu0 0.0
    %3344 = vmatpush.msra.mxu0 %v3324
    %3345 = vmatmul.f32.gmra.mxu0 %v3327
    %v3346 = vpop.f32.mrf.mxu0
    %v3347 = vadd.f32 0.0, %v3346
    %3348 = vdwg.mxu0
    %3349 = vrot.lane.b32.xlu0 %v3243, 96
    %v3350 = vpop.permute.xlu0 %3349
    %v3353 = vsel %vm338, %v3322, 0
    %3355 = vmatpush.msra.mxu0 0.0
    %3356 = vmatpush.msra.mxu0 0.0
    %3357 = vmatpush.msra.mxu0 0.0
    %3358 = vmatpush.msra.mxu0 0.0
    %3359 = vmatpush.msra.mxu0 0.0
    %3360 = vmatpush.msra.mxu0 0.0
    %3361 = vmatpush.msra.mxu0 0.0
    %3362 = vmatpush.msra.mxu0 0.0
    %3363 = vmatpush.msra.mxu0 0.0
    %3364 = vmatpush.msra.mxu0 0.0
    %3365 = vmatpush.msra.mxu0 0.0
    %3366 = vmatpush.msra.mxu0 0.0
    %3367 = vmatpush.msra.mxu0 0.0
    %3368 = vmatpush.msra.mxu0 0.0
    %3369 = vmatpush.msra.mxu0 0.0
    %3370 = vmatpush.msra.mxu0 %v3350
    %3371 = vmatmul.f32.gmra.mxu0 %v3353
    %v3372 = vpop.f32.mrf.mxu0
    %v3373 = vadd.f32 0.0, %v3372
    %3374 = vdwg.mxu0
    %3375 = vrot.lane.b32.xlu0 %v3192, 120
    %v3376 = vpop.permute.xlu0 %3375
    %3377 = vrot.lane.b32.xlu0 %v3240, 120
    %v3378 = vpop.permute.xlu0 %3377
    %v3379 = vsel %vm338, %v3376, 0
    %v3381 = vsel %vm338, %v3378, 0
    %3383 = vmatpush.xpose.msra.mxu0 0.0
    %3384 = vmatpush.xpose.msra.mxu0 0.0
    %3385 = vmatpush.xpose.msra.mxu0 0.0
    %3386 = vmatpush.xpose.msra.mxu0 0.0
    %3387 = vmatpush.xpose.msra.mxu0 0.0
    %3388 = vmatpush.xpose.msra.mxu0 0.0
    %3389 = vmatpush.xpose.msra.mxu0 0.0
    %3390 = vmatpush.xpose.msra.mxu0 0.0
    %3391 = vmatpush.xpose.msra.mxu0 0.0
    %3392 = vmatpush.xpose.msra.mxu0 0.0
    %3393 = vmatpush.xpose.msra.mxu0 0.0
    %3394 = vmatpush.xpose.msra.mxu0 0.0
    %3395 = vmatpush.xpose.msra.mxu0 0.0
    %3396 = vmatpush.xpose.msra.mxu0 0.0
    %3397 = vmatpush.xpose.msra.mxu0 0.0
    %3398 = vmatpush.xpose.msra.mxu0 %v3381
    %3399 = vmatmul.f32.gmra.mxu0 %v3379
    %v3400 = vpop.f32.mrf.mxu0
    %v3401 = vadd.f32 0.0, %v3400
    %3402 = vdwg.mxu0
    %3403 = vrot.lane.b32.xlu0 %v3195, 120
    %v3404 = vpop.permute.xlu0 %3403
    %3405 = vrot.lane.b32.xlu0 %v3243, 120
    %v3406 = vpop.permute.xlu0 %3405
    %v3407 = vsel %vm338, %v3404, 0
    %v3409 = vsel %vm338, %v3406, 0
    %3411 = vmatpush.xpose.msra.mxu0 0.0
    %3412 = vmatpush.xpose.msra.mxu0 0.0
    %3413 = vmatpush.xpose.msra.mxu0 0.0
    %3414 = vmatpush.xpose.msra.mxu0 0.0
    %3415 = vmatpush.xpose.msra.mxu0 0.0
    %3416 = vmatpush.xpose.msra.mxu0 0.0
    %3417 = vmatpush.xpose.msra.mxu0 0.0
    %3418 = vmatpush.xpose.msra.mxu0 0.0
    %3419 = vmatpush.xpose.msra.mxu0 0.0
    %3420 = vmatpush.xpose.msra.mxu0 0.0
    %3421 = vmatpush.xpose.msra.mxu0 0.0
    %3422 = vmatpush.xpose.msra.mxu0 0.0
    %3423 = vmatpush.xpose.msra.mxu0 0.0
    %3424 = vmatpush.xpose.msra.mxu0 0.0
    %3425 = vmatpush.xpose.msra.mxu0 0.0
    %3426 = vmatpush.xpose.msra.mxu0 %v3409
    %3427 = vmatmul.f32.gmra.mxu0 %v3407
    %v3428 = vpop.f32.mrf.mxu0
    %v3429 = vadd.f32 0.0, %v3428
    %3430 = vdwg.mxu0
    %v3431 = vmul.f32 %v3401, 0.35355338
    %v3432 = vmul.f32 %v3429, 0.35355338
    %v3433 = vadd.f32 %v3431, %v146
    %v3434 = vadd.f32 %v3432, %v147
    %v3435 = vsel %vm338, %v3433, -inf
    %3436 = vmax.xlane.f32.xlu0 %v3435
    %v3437 = vpop.xlane.xlu0 %3436
    %v3438 = vsel %vm338, %v3434, -inf
    %3439 = vmax.xlane.f32.xlu0 %v3438
    %v3440 = vpop.xlane.xlu0 %3439
    %v3441 = vsub.f32 %v3433, %v3437
    %v3442 = vsub.f32 %v3434, %v3440
    %v3443 = vmul.f32 %v3441, 1.442695
    %v3444 = vpow.pop %v3443
    %v3445 = vmul.f32 %v3442, 1.442695
    %v3446 = vpow.pop %v3445
    %v3447 = vsel %vm338, %v3444, 0.0
    %3448 = vadd.xlane.f32.xlu0 %v3447
    %v3449 = vpop.xlane.xlu0 %3448
    %v3450 = vsel %vm338, %v3446, 0.0
    %3451 = vadd.xlane.f32.xlu0 %v3450
    %v3452 = vpop.xlane.xlu0 %3451
    %v3453 = vrcp.pop %v3449
    %v3454 = vrcp.pop %v3452
    %v3455 = vmul.f32 %v3444, %v3453
    %v3456 = vmul.f32 %v3446, %v3454
    %3457 = vrot.lane.b32.xlu0 %v3240, 88
    %v3458 = vpop.permute.xlu0 %3457
    %v3461 = vsel %vm338, %v3455, 0
    %3463 = vmatpush.msra.mxu0 0.0
    %3464 = vmatpush.msra.mxu0 0.0
    %3465 = vmatpush.msra.mxu0 0.0
    %3466 = vmatpush.msra.mxu0 0.0
    %3467 = vmatpush.msra.mxu0 0.0
    %3468 = vmatpush.msra.mxu0 0.0
    %3469 = vmatpush.msra.mxu0 0.0
    %3470 = vmatpush.msra.mxu0 0.0
    %3471 = vmatpush.msra.mxu0 0.0
    %3472 = vmatpush.msra.mxu0 0.0
    %3473 = vmatpush.msra.mxu0 0.0
    %3474 = vmatpush.msra.mxu0 0.0
    %3475 = vmatpush.msra.mxu0 0.0
    %3476 = vmatpush.msra.mxu0 0.0
    %3477 = vmatpush.msra.mxu0 0.0
    %3478 = vmatpush.msra.mxu0 %v3458
    %3479 = vmatmul.f32.gmra.mxu0 %v3461
    %v3480 = vpop.f32.mrf.mxu0
    %v3481 = vadd.f32 0.0, %v3480
    %3482 = vdwg.mxu0
    %3483 = vrot.lane.b32.xlu0 %v3243, 88
    %v3484 = vpop.permute.xlu0 %3483
    %v3487 = vsel %vm338, %v3456, 0
    %3489 = vmatpush.msra.mxu0 0.0
    %3490 = vmatpush.msra.mxu0 0.0
    %3491 = vmatpush.msra.mxu0 0.0
    %3492 = vmatpush.msra.mxu0 0.0
    %3493 = vmatpush.msra.mxu0 0.0
    %3494 = vmatpush.msra.mxu0 0.0
    %3495 = vmatpush.msra.mxu0 0.0
    %3496 = vmatpush.msra.mxu0 0.0
    %3497 = vmatpush.msra.mxu0 0.0
    %3498 = vmatpush.msra.mxu0 0.0
    %3499 = vmatpush.msra.mxu0 0.0
    %3500 = vmatpush.msra.mxu0 0.0
    %3501 = vmatpush.msra.mxu0 0.0
    %3502 = vmatpush.msra.mxu0 0.0
    %3503 = vmatpush.msra.mxu0 0.0
    %3504 = vmatpush.msra.mxu0 %v3484
    %3505 = vmatmul.f32.gmra.mxu0 %v3487
    %v3506 = vpop.f32.mrf.mxu0
    %v3507 = vadd.f32 0.0, %v3506
    %3508 = vdwg.mxu0
    %3509 = vrot.lane.b32.xlu0 %v2288, 32
    %v3510 = vpop.permute.xlu0 %3509
    %v3513 = vsel %vm338, %v3481, 0
    %v3516 = vsel %vm338, %v3507, 0
    %3518 = vmatpush.msra.mxu0 0.0
    %3519 = vmatpush.msra.mxu0 0.0
    %3520 = vmatpush.msra.mxu0 0.0
    %3521 = vmatpush.msra.mxu0 0.0
    %3522 = vmatpush.msra.mxu0 0.0
    %3523 = vmatpush.msra.mxu0 0.0
    %3524 = vmatpush.msra.mxu0 0.0
    %3525 = vmatpush.msra.mxu0 0.0
    %3526 = vmatpush.msra.mxu0 0.0
    %3527 = vmatpush.msra.mxu0 0.0
    %3528 = vmatpush.msra.mxu0 0.0
    %3529 = vmatpush.msra.mxu0 0.0
    %3530 = vmatpush.msra.mxu0 0.0
    %3531 = vmatpush.msra.mxu0 0.0
    %3532 = vmatpush.msra.mxu0 0.0
    %3533 = vmatpush.msra.mxu0 %v3510
    %3534 = vmatmul.f32.gmra.mxu0 %v3513
    %v3535 = vpop.f32.mrf.mxu0
    %v3536 = vadd.f32 0.0, %v3535
    %3537 = vmatmul.f32.gmra.mxu0 %v3516
    %v3538 = vpop.f32.mrf.mxu0
    %v3539 = vadd.f32 0.0, %v3538
    %3540 = vdwg.mxu0
    %3541 = vrot.lane.b32.xlu0 %v2287, 32
    %v3542 = vpop.permute.xlu0 %3541
    %v3545 = vsel %vm338, %v3347, 0
    %v3548 = vsel %vm338, %v3373, 0
    %3550 = vmatpush.msra.mxu0 0.0
    %3551 = vmatpush.msra.mxu0 0.0
    %3552 = vmatpush.msra.mxu0 0.0
    %3553 = vmatpush.msra.mxu0 0.0
    %3554 = vmatpush.msra.mxu0 0.0
    %3555 = vmatpush.msra.mxu0 0.0
    %3556 = vmatpush.msra.mxu0 0.0
    %3557 = vmatpush.msra.mxu0 0.0
    %3558 = vmatpush.msra.mxu0 0.0
    %3559 = vmatpush.msra.mxu0 0.0
    %3560 = vmatpush.msra.mxu0 0.0
    %3561 = vmatpush.msra.mxu0 0.0
    %3562 = vmatpush.msra.mxu0 0.0
    %3563 = vmatpush.msra.mxu0 0.0
    %3564 = vmatpush.msra.mxu0 0.0
    %3565 = vmatpush.msra.mxu0 %v3542
    %3566 = vmatmul.f32.gmra.mxu0 %v3545
    %v3567 = vpop.f32.mrf.mxu0
    %v3568 = vadd.f32 %v3536, %v3567
    %3569 = vmatmul.f32.gmra.mxu0 %v3548
    %v3570 = vpop.f32.mrf.mxu0
    %v3571 = vadd.f32 %v3539, %v3570
    %3572 = vdwg.mxu0
    %3573 = vrot.lane.b32.xlu0 %v3192, 112
    %v3574 = vpop.permute.xlu0 %3573
    %3575 = vrot.lane.b32.xlu0 %v3240, 112
    %v3576 = vpop.permute.xlu0 %3575
    %v3577 = vsel %vm338, %v3574, 0
    %v3579 = vsel %vm338, %v3576, 0
    %3581 = vmatpush.xpose.msra.mxu0 0.0
    %3582 = vmatpush.xpose.msra.mxu0 0.0
    %3583 = vmatpush.xpose.msra.mxu0 0.0
    %3584 = vmatpush.xpose.msra.mxu0 0.0
    %3585 = vmatpush.xpose.msra.mxu0 0.0
    %3586 = vmatpush.xpose.msra.mxu0 0.0
    %3587 = vmatpush.xpose.msra.mxu0 0.0
    %3588 = vmatpush.xpose.msra.mxu0 0.0
    %3589 = vmatpush.xpose.msra.mxu0 0.0
    %3590 = vmatpush.xpose.msra.mxu0 0.0
    %3591 = vmatpush.xpose.msra.mxu0 0.0
    %3592 = vmatpush.xpose.msra.mxu0 0.0
    %3593 = vmatpush.xpose.msra.mxu0 0.0
    %3594 = vmatpush.xpose.msra.mxu0 0.0
    %3595 = vmatpush.xpose.msra.mxu0 0.0
    %3596 = vmatpush.xpose.msra.mxu0 %v3579
    %3597 = vmatmul.f32.gmra.mxu0 %v3577
    %v3598 = vpop.f32.mrf.mxu0
    %v3599 = vadd.f32 0.0, %v3598
    %3600 = vdwg.mxu0
    %3601 = vrot.lane.b32.xlu0 %v3195, 112
    %v3602 = vpop.permute.xlu0 %3601
    %3603 = vrot.lane.b32.xlu0 %v3243, 112
    %v3604 = vpop.permute.xlu0 %3603
    %v3605 = vsel %vm338, %v3602, 0
    %v3607 = vsel %vm338, %v3604, 0
    %3609 = vmatpush.xpose.msra.mxu0 0.0
    %3610 = vmatpush.xpose.msra.mxu0 0.0
    %3611 = vmatpush.xpose.msra.mxu0 0.0
    %3612 = vmatpush.xpose.msra.mxu0 0.0
    %3613 = vmatpush.xpose.msra.mxu0 0.0
    %3614 = vmatpush.xpose.msra.mxu0 0.0
    %3615 = vmatpush.xpose.msra.mxu0 0.0
    %3616 = vmatpush.xpose.msra.mxu0 0.0
    %3617 = vmatpush.xpose.msra.mxu0 0.0
    %3618 = vmatpush.xpose.msra.mxu0 0.0
    %3619 = vmatpush.xpose.msra.mxu0 0.0
    %3620 = vmatpush.xpose.msra.mxu0 0.0
    %3621 = vmatpush.xpose.msra.mxu0 0.0
    %3622 = vmatpush.xpose.msra.mxu0 0.0
    %3623 = vmatpush.xpose.msra.mxu0 0.0
    %3624 = vmatpush.xpose.msra.mxu0 %v3607
    %3625 = vmatmul.f32.gmra.mxu0 %v3605
    %v3626 = vpop.f32.mrf.mxu0
    %v3627 = vadd.f32 0.0, %v3626
    %3628 = vdwg.mxu0
    %v3629 = vmul.f32 %v3599, 0.35355338
    %v3630 = vmul.f32 %v3627, 0.35355338
    %v3631 = vadd.f32 %v3629, %v146
    %v3632 = vadd.f32 %v3630, %v147
    %v3633 = vsel %vm338, %v3631, -inf
    %3634 = vmax.xlane.f32.xlu0 %v3633
    %v3635 = vpop.xlane.xlu0 %3634
    %v3636 = vsel %vm338, %v3632, -inf
    %3637 = vmax.xlane.f32.xlu0 %v3636
    %v3638 = vpop.xlane.xlu0 %3637
    %v3639 = vsub.f32 %v3631, %v3635
    %v3640 = vsub.f32 %v3632, %v3638
    %v3641 = vmul.f32 %v3639, 1.442695
    %v3642 = vpow.pop %v3641
    %v3643 = vmul.f32 %v3640, 1.442695
    %v3644 = vpow.pop %v3643
    %v3645 = vsel %vm338, %v3642, 0.0
    %3646 = vadd.xlane.f32.xlu0 %v3645
    %v3647 = vpop.xlane.xlu0 %3646
    %v3648 = vsel %vm338, %v3644, 0.0
    %3649 = vadd.xlane.f32.xlu0 %v3648
    %v3650 = vpop.xlane.xlu0 %3649
    %v3651 = vrcp.pop %v3647
    %v3652 = vrcp.pop %v3650
    %v3653 = vmul.f32 %v3642, %v3651
    %v3654 = vmul.f32 %v3644, %v3652
    %3655 = vrot.lane.b32.xlu0 %v3240, 80
    %v3656 = vpop.permute.xlu0 %3655
    %v3659 = vsel %vm338, %v3653, 0
    %3661 = vmatpush.msra.mxu0 0.0
    %3662 = vmatpush.msra.mxu0 0.0
    %3663 = vmatpush.msra.mxu0 0.0
    %3664 = vmatpush.msra.mxu0 0.0
    %3665 = vmatpush.msra.mxu0 0.0
    %3666 = vmatpush.msra.mxu0 0.0
    %3667 = vmatpush.msra.mxu0 0.0
    %3668 = vmatpush.msra.mxu0 0.0
    %3669 = vmatpush.msra.mxu0 0.0
    %3670 = vmatpush.msra.mxu0 0.0
    %3671 = vmatpush.msra.mxu0 0.0
    %3672 = vmatpush.msra.mxu0 0.0
    %3673 = vmatpush.msra.mxu0 0.0
    %3674 = vmatpush.msra.mxu0 0.0
    %3675 = vmatpush.msra.mxu0 0.0
    %3676 = vmatpush.msra.mxu0 %v3656
    %3677 = vmatmul.f32.gmra.mxu0 %v3659
    %v3678 = vpop.f32.mrf.mxu0
    %v3679 = vadd.f32 0.0, %v3678
    %3680 = vdwg.mxu0
    %3681 = vrot.lane.b32.xlu0 %v3243, 80
    %v3682 = vpop.permute.xlu0 %3681
    %v3685 = vsel %vm338, %v3654, 0
    %3687 = vmatpush.msra.mxu0 0.0
    %3688 = vmatpush.msra.mxu0 0.0
    %3689 = vmatpush.msra.mxu0 0.0
    %3690 = vmatpush.msra.mxu0 0.0
    %3691 = vmatpush.msra.mxu0 0.0
    %3692 = vmatpush.msra.mxu0 0.0
    %3693 = vmatpush.msra.mxu0 0.0
    %3694 = vmatpush.msra.mxu0 0.0
    %3695 = vmatpush.msra.mxu0 0.0
    %3696 = vmatpush.msra.mxu0 0.0
    %3697 = vmatpush.msra.mxu0 0.0
    %3698 = vmatpush.msra.mxu0 0.0
    %3699 = vmatpush.msra.mxu0 0.0
    %3700 = vmatpush.msra.mxu0 0.0
    %3701 = vmatpush.msra.mxu0 0.0
    %3702 = vmatpush.msra.mxu0 %v3682
    %3703 = vmatmul.f32.gmra.mxu0 %v3685
    %v3704 = vpop.f32.mrf.mxu0
    %v3705 = vadd.f32 0.0, %v3704
    %3706 = vdwg.mxu0
    %3707 = vrot.lane.b32.xlu0 %v2289, 32
    %v3708 = vpop.permute.xlu0 %3707
    %v3711 = vsel %vm338, %v3679, 0
    %v3714 = vsel %vm338, %v3705, 0
    %3716 = vmatpush.msra.mxu0 0.0
    %3717 = vmatpush.msra.mxu0 0.0
    %3718 = vmatpush.msra.mxu0 0.0
    %3719 = vmatpush.msra.mxu0 0.0
    %3720 = vmatpush.msra.mxu0 0.0
    %3721 = vmatpush.msra.mxu0 0.0
    %3722 = vmatpush.msra.mxu0 0.0
    %3723 = vmatpush.msra.mxu0 0.0
    %3724 = vmatpush.msra.mxu0 0.0
    %3725 = vmatpush.msra.mxu0 0.0
    %3726 = vmatpush.msra.mxu0 0.0
    %3727 = vmatpush.msra.mxu0 0.0
    %3728 = vmatpush.msra.mxu0 0.0
    %3729 = vmatpush.msra.mxu0 0.0
    %3730 = vmatpush.msra.mxu0 0.0
    %3731 = vmatpush.msra.mxu0 %v3708
    %3732 = vmatmul.f32.gmra.mxu0 %v3711
    %v3733 = vpop.f32.mrf.mxu0
    %v3734 = vadd.f32 0.0, %v3733
    %3735 = vmatmul.f32.gmra.mxu0 %v3714
    %v3736 = vpop.f32.mrf.mxu0
    %v3737 = vadd.f32 0.0, %v3736
    %3738 = vdwg.mxu0
    %v3739 = vadd.f32 %v3568, %v3734
    %v3740 = vadd.f32 %v3571, %v3737
    %3741 = vrot.lane.b32.xlu0 %v3192, 104
    %v3742 = vpop.permute.xlu0 %3741
    %3743 = vrot.lane.b32.xlu0 %v3240, 104
    %v3744 = vpop.permute.xlu0 %3743
    %v3745 = vsel %vm338, %v3742, 0
    %v3747 = vsel %vm338, %v3744, 0
    %3749 = vmatpush.xpose.msra.mxu0 0.0
    %3750 = vmatpush.xpose.msra.mxu0 0.0
    %3751 = vmatpush.xpose.msra.mxu0 0.0
    %3752 = vmatpush.xpose.msra.mxu0 0.0
    %3753 = vmatpush.xpose.msra.mxu0 0.0
    %3754 = vmatpush.xpose.msra.mxu0 0.0
    %3755 = vmatpush.xpose.msra.mxu0 0.0
    %3756 = vmatpush.xpose.msra.mxu0 0.0
    %3757 = vmatpush.xpose.msra.mxu0 0.0
    %3758 = vmatpush.xpose.msra.mxu0 0.0
    %3759 = vmatpush.xpose.msra.mxu0 0.0
    %3760 = vmatpush.xpose.msra.mxu0 0.0
    %3761 = vmatpush.xpose.msra.mxu0 0.0
    %3762 = vmatpush.xpose.msra.mxu0 0.0
    %3763 = vmatpush.xpose.msra.mxu0 0.0
    %3764 = vmatpush.xpose.msra.mxu0 %v3747
    %3765 = vmatmul.f32.gmra.mxu0 %v3745
    %v3766 = vpop.f32.mrf.mxu0
    %v3767 = vadd.f32 0.0, %v3766
    %3768 = vdwg.mxu0
    %3769 = vrot.lane.b32.xlu0 %v3195, 104
    %v3770 = vpop.permute.xlu0 %3769
    %3771 = vrot.lane.b32.xlu0 %v3243, 104
    %v3772 = vpop.permute.xlu0 %3771
    %v3773 = vsel %vm338, %v3770, 0
    %v3775 = vsel %vm338, %v3772, 0
    %3777 = vmatpush.xpose.msra.mxu0 0.0
    %3778 = vmatpush.xpose.msra.mxu0 0.0
    %3779 = vmatpush.xpose.msra.mxu0 0.0
    %3780 = vmatpush.xpose.msra.mxu0 0.0
    %3781 = vmatpush.xpose.msra.mxu0 0.0
    %3782 = vmatpush.xpose.msra.mxu0 0.0
    %3783 = vmatpush.xpose.msra.mxu0 0.0
    %3784 = vmatpush.xpose.msra.mxu0 0.0
    %3785 = vmatpush.xpose.msra.mxu0 0.0
    %3786 = vmatpush.xpose.msra.mxu0 0.0
    %3787 = vmatpush.xpose.msra.mxu0 0.0
    %3788 = vmatpush.xpose.msra.mxu0 0.0
    %3789 = vmatpush.xpose.msra.mxu0 0.0
    %3790 = vmatpush.xpose.msra.mxu0 0.0
    %3791 = vmatpush.xpose.msra.mxu0 0.0
    %3792 = vmatpush.xpose.msra.mxu0 %v3775
    %3793 = vmatmul.f32.gmra.mxu0 %v3773
    %v3794 = vpop.f32.mrf.mxu0
    %v3795 = vadd.f32 0.0, %v3794
    %3796 = vdwg.mxu0
    %v3797 = vmul.f32 %v3767, 0.35355338
    %v3798 = vmul.f32 %v3795, 0.35355338
    %v3799 = vadd.f32 %v3797, %v146
    %v3800 = vadd.f32 %v3798, %v147
    %v3801 = vsel %vm338, %v3799, -inf
    %3802 = vmax.xlane.f32.xlu0 %v3801
    %v3803 = vpop.xlane.xlu0 %3802
    %v3804 = vsel %vm338, %v3800, -inf
    %3805 = vmax.xlane.f32.xlu0 %v3804
    %v3806 = vpop.xlane.xlu0 %3805
    %v3807 = vsub.f32 %v3799, %v3803
    %v3808 = vsub.f32 %v3800, %v3806
    %v3809 = vmul.f32 %v3807, 1.442695
    %v3810 = vpow.pop %v3809
    %v3811 = vmul.f32 %v3808, 1.442695
    %v3812 = vpow.pop %v3811
    %v3813 = vsel %vm338, %v3810, 0.0
    %3814 = vadd.xlane.f32.xlu0 %v3813
    %v3815 = vpop.xlane.xlu0 %3814
    %v3816 = vsel %vm338, %v3812, 0.0
    %3817 = vadd.xlane.f32.xlu0 %v3816
    %v3818 = vpop.xlane.xlu0 %3817
    %v3819 = vrcp.pop %v3815
    %v3820 = vrcp.pop %v3818
    %v3821 = vmul.f32 %v3810, %v3819
    %v3822 = vmul.f32 %v3812, %v3820
    %3823 = vrot.lane.b32.xlu0 %v3240, 72
    %v3824 = vpop.permute.xlu0 %3823
    %v3827 = vsel %vm338, %v3821, 0
    %3829 = vmatpush.msra.mxu0 0.0
    %3830 = vmatpush.msra.mxu0 0.0
    %3831 = vmatpush.msra.mxu0 0.0
    %3832 = vmatpush.msra.mxu0 0.0
    %3833 = vmatpush.msra.mxu0 0.0
    %3834 = vmatpush.msra.mxu0 0.0
    %3835 = vmatpush.msra.mxu0 0.0
    %3836 = vmatpush.msra.mxu0 0.0
    %3837 = vmatpush.msra.mxu0 0.0
    %3838 = vmatpush.msra.mxu0 0.0
    %3839 = vmatpush.msra.mxu0 0.0
    %3840 = vmatpush.msra.mxu0 0.0
    %3841 = vmatpush.msra.mxu0 0.0
    %3842 = vmatpush.msra.mxu0 0.0
    %3843 = vmatpush.msra.mxu0 0.0
    %3844 = vmatpush.msra.mxu0 %v3824
    %3845 = vmatmul.f32.gmra.mxu0 %v3827
    %v3846 = vpop.f32.mrf.mxu0
    %v3847 = vadd.f32 0.0, %v3846
    %3848 = vdwg.mxu0
    %3849 = vrot.lane.b32.xlu0 %v3243, 72
    %v3850 = vpop.permute.xlu0 %3849
    %v3853 = vsel %vm338, %v3822, 0
    %3855 = vmatpush.msra.mxu0 0.0
    %3856 = vmatpush.msra.mxu0 0.0
    %3857 = vmatpush.msra.mxu0 0.0
    %3858 = vmatpush.msra.mxu0 0.0
    %3859 = vmatpush.msra.mxu0 0.0
    %3860 = vmatpush.msra.mxu0 0.0
    %3861 = vmatpush.msra.mxu0 0.0
    %3862 = vmatpush.msra.mxu0 0.0
    %3863 = vmatpush.msra.mxu0 0.0
    %3864 = vmatpush.msra.mxu0 0.0
    %3865 = vmatpush.msra.mxu0 0.0
    %3866 = vmatpush.msra.mxu0 0.0
    %3867 = vmatpush.msra.mxu0 0.0
    %3868 = vmatpush.msra.mxu0 0.0
    %3869 = vmatpush.msra.mxu0 0.0
    %3870 = vmatpush.msra.mxu0 %v3850
    %3871 = vmatmul.f32.gmra.mxu0 %v3853
    %v3872 = vpop.f32.mrf.mxu0
    %v3873 = vadd.f32 0.0, %v3872
    %3874 = vdwg.mxu0
    %3875 = vrot.lane.b32.xlu0 %v2290, 32
    %v3876 = vpop.permute.xlu0 %3875
    %v3879 = vsel %vm338, %v3847, 0
    %v3882 = vsel %vm338, %v3873, 0
    %3884 = vmatpush.msra.mxu0 0.0
    %3885 = vmatpush.msra.mxu0 0.0
    %3886 = vmatpush.msra.mxu0 0.0
    %3887 = vmatpush.msra.mxu0 0.0
    %3888 = vmatpush.msra.mxu0 0.0
    %3889 = vmatpush.msra.mxu0 0.0
    %3890 = vmatpush.msra.mxu0 0.0
    %3891 = vmatpush.msra.mxu0 0.0
    %3892 = vmatpush.msra.mxu0 0.0
    %3893 = vmatpush.msra.mxu0 0.0
    %3894 = vmatpush.msra.mxu0 0.0
    %3895 = vmatpush.msra.mxu0 0.0
    %3896 = vmatpush.msra.mxu0 0.0
    %3897 = vmatpush.msra.mxu0 0.0
    %3898 = vmatpush.msra.mxu0 0.0
    %3899 = vmatpush.msra.mxu0 %v3876
    %3900 = vmatmul.f32.gmra.mxu0 %v3879
    %v3901 = vpop.f32.mrf.mxu0
    %v3902 = vadd.f32 0.0, %v3901
    %3903 = vmatmul.f32.gmra.mxu0 %v3882
    %v3904 = vpop.f32.mrf.mxu0
    %v3905 = vadd.f32 0.0, %v3904
    %3906 = vdwg.mxu0
    %v3907 = vadd.f32 %v3739, %v3902
    %v3908 = vadd.f32 %v3740, %v3905
    %3909 = vrot.lane.b32.xlu0 %v3166, 32
    %v3910 = vpop.permute.xlu0 %3909
    %v3912 = vadd.f32 %v3907, %v3910
    %v3913 = vadd.f32 %v3908, %v3910
    %v3914 = vadd.f32 %v3081, %v3912
    %v3915 = vadd.f32 %v3082, %v3913
    %v3916 = vsel %vm213, %v3914, 0.0
    %3917 = vadd.xlane.f32.xlu0 %v3916
    %v3918 = vpop.xlane.xlu0 %3917
    %v3919 = vsel %vm213, %v3915, 0.0
    %3920 = vadd.xlane.f32.xlu0 %v3919
    %v3921 = vpop.xlane.xlu0 %3920
    %v3922 = vmul.f32 %v3918, %v226
    %v3923 = vmul.f32 %v3921, %v226
    %v3924 = vsub.f32 %v3914, %v3922
    %v3925 = vsub.f32 %v3915, %v3923
    %v3926 = vmul.f32 %v3924, %v3924
    %v3927 = vmul.f32 %v3925, %v3925
    %v3928 = vsel %vm213, %v3926, 0.0
    %3929 = vadd.xlane.f32.xlu0 %v3928
    %v3930 = vpop.xlane.xlu0 %3929
    %v3931 = vsel %vm213, %v3927, 0.0
    %3932 = vadd.xlane.f32.xlu0 %v3931
    %v3933 = vpop.xlane.xlu0 %3932
    %v3934 = vmul.f32 %v3930, 0.032258064
    %v3935 = vmul.f32 %v3933, 0.032258064
    %v3936 = vperm.slane %v2281, 4
    %v3937 = vmul.f32 %v3936, %v3924
    %v3938 = vmul.f32 %v3936, %v3925
    %v3939 = vrsqrt.pop %v3934
    %v3940 = vmul.f32 %v3939, %v3934
    %v3941 = vmul.f32 %v3940, %v3939
    %v3942 = vmul.f32 0.5, %v3941
    %v3943 = vsub.f32 1.5, %v3942
    %v3944 = vmul.f32 %v3939, %v3943
    %v3945 = vmul.f32 %v3934, %v3944
    %vm3946 = vcmp.eq.f32.partialorder %v3934, inf
    %v3947 = vsel %vm3946, %v3934, %v3945
    %vm3948 = vcmp.eq.f32.partialorder %v3934, 0.0
    %v3949 = vand.u32 %v3934, 2147483648
    %v3950 = vsel %vm3948, %v3949, %v3947
    %v3951 = vrsqrt.pop %v3935
    %v3952 = vmul.f32 %v3951, %v3935
    %v3953 = vmul.f32 %v3952, %v3951
    %v3954 = vmul.f32 0.5, %v3953
    %v3955 = vsub.f32 1.5, %v3954
    %v3956 = vmul.f32 %v3951, %v3955
    %v3957 = vmul.f32 %v3935, %v3956
    %vm3958 = vcmp.eq.f32.partialorder %v3935, inf
    %v3959 = vsel %vm3958, %v3935, %v3957
    %vm3960 = vcmp.eq.f32.partialorder %v3935, 0.0
    %v3961 = vand.u32 %v3935, 2147483648
    %v3962 = vsel %vm3960, %v3961, %v3959
    %v3963 = vadd.f32 %v3950, 1e-06
    %v3964 = vadd.f32 %v3962, 1e-06
    %v3965 = vrcp.pop %v3963
    %v3966 = vmul.f32 %v3963, %v3965
    %v3967 = vsub.f32 1.0, %v3966
    %v3968 = vmul.f32 %v3965, %v3967
    %v3969 = vadd.f32 %v3965, %v3968
    %vm3970 = vweird.f32 %v3963
    %vm3971 = vweird.f32 %v3965
    %vm3972 = vmor %vm3970, %vm3971
    %v3973 = vsel %vm3972, %v3965, %v3969
    %v3974 = vand.u32 2147483647, %v3963
    %vm3975 = vcmp.eq.f32.partialorder %v3974, 8.507059e+37
    %v3976 = vand.u32 %v3963, 2147483648
    %v3977 = vor.u32 1.1754944e-38, %v3976
    %v3978 = vsel %vm3975, %v3977, %v3973
    %v3979 = vmul.f32 %v3937, %v3978
    %v3980 = vrcp.pop %v3964
    %v3981 = vmul.f32 %v3964, %v3980
    %v3982 = vsub.f32 1.0, %v3981
    %v3983 = vmul.f32 %v3980, %v3982
    %v3984 = vadd.f32 %v3980, %v3983
    %vm3985 = vweird.f32 %v3964
    %vm3986 = vweird.f32 %v3980
    %vm3987 = vmor %vm3985, %vm3986
    %v3988 = vsel %vm3987, %v3980, %v3984
    %v3989 = vand.u32 2147483647, %v3964
    %vm3990 = vcmp.eq.f32.partialorder %v3989, 8.507059e+37
    %v3991 = vand.u32 %v3964, 2147483648
    %v3992 = vor.u32 1.1754944e-38, %v3991
    %v3993 = vsel %vm3990, %v3992, %v3988
    %v3994 = vmul.f32 %v3938, %v3993
    %v3995 = vperm.slane %v2281, 5
    %v3996 = vadd.f32 %v3979, %v3995
    %v3997 = vadd.f32 %v3994, %v3995
    %v3998 = vld [vmem:[%s20] sm:$0x1]
    %v3999 = vld [vmem:[%s18] sm:$0xff]
    %v4000 = vld [vmem:[%s18 + $0x8] sm:$0xff]
    %v4001 = vld [vmem:[%s18 + $0x10] sm:$0xff]
    %v4002 = vld [vmem:[%s18 + $0x18] sm:$0xff]
    %v4004 = vperm.slane %v3998, 0
    %v4007 = vsel %vm213, %v3996, 0
    %v4010 = vsel %vm213, %v3997, 0
    %4012 = vmatpush.msra.mxu0 0.0
    %4013 = vmatpush.msra.mxu0 0.0
    %4014 = vmatpush.msra.mxu0 0.0
    %4015 = vmatpush.msra.mxu0 0.0
    %4016 = vmatpush.msra.mxu0 0.0
    %4017 = vmatpush.msra.mxu0 0.0
    %4018 = vmatpush.msra.mxu0 0.0
    %4019 = vmatpush.msra.mxu0 0.0
    %4020 = vmatpush.msra.mxu0 0.0
    %4021 = vmatpush.msra.mxu0 0.0
    %4022 = vmatpush.msra.mxu0 0.0
    %4023 = vmatpush.msra.mxu0 0.0
    %4024 = vmatpush.msra.mxu0 %v4002
    %4025 = vmatpush.msra.mxu0 %v4001
    %4026 = vmatpush.msra.mxu0 %v4000
    %4027 = vmatpush.msra.mxu0 %v3999
    %4028 = vmatmul.f32.gmra.mxu0 %v4007
    %v4029 = vpop.f32.mrf.mxu0
    %v4030 = vadd.f32 %v4004, %v4029
    %4031 = vmatmul.f32.gmra.mxu0 %v4010
    %v4032 = vpop.f32.mrf.mxu0
    %v4033 = vadd.f32 %v4004, %v4032
    %4034 = vdwg.mxu0
    %v4035 = vmax.f32 %v4030, 0.0
    %v4036 = vmax.f32 %v4033, 0.0
    %v4037 = vld [vmem:[%s19] sm:$0xff]
    %v4038 = vld [vmem:[%s19 + $0x8] sm:$0xff]
    %v4039 = vld [vmem:[%s19 + $0x10] sm:$0xff]
    %v4040 = vld [vmem:[%s19 + $0x18] sm:$0xff]
    %v4041 = vld [vmem:[%s19 + $0x20] sm:$0xff]
    %v4042 = vld [vmem:[%s19 + $0x28] sm:$0xff]
    %v4043 = vld [vmem:[%s19 + $0x30] sm:$0xff]
    %v4044 = vld [vmem:[%s19 + $0x38] sm:$0xff]
    %v4046 = vsel %vm1142, %v4035, 0
    %v4049 = vsel %vm1142, %v4036, 0
    %4051 = vmatpush.msra.mxu0 0.0
    %4052 = vmatpush.msra.mxu0 0.0
    %4053 = vmatpush.msra.mxu0 0.0
    %4054 = vmatpush.msra.mxu0 0.0
    %4055 = vmatpush.msra.mxu0 0.0
    %4056 = vmatpush.msra.mxu0 0.0
    %4057 = vmatpush.msra.mxu0 0.0
    %4058 = vmatpush.msra.mxu0 0.0
    %4059 = vmatpush.msra.mxu0 %v4044
    %4060 = vmatpush.msra.mxu0 %v4043
    %4061 = vmatpush.msra.mxu0 %v4042
    %4062 = vmatpush.msra.mxu0 %v4041
    %4063 = vmatpush.msra.mxu0 %v4040
    %4064 = vmatpush.msra.mxu0 %v4039
    %4065 = vmatpush.msra.mxu0 %v4038
    %4066 = vmatpush.msra.mxu0 %v4037
    %4067 = vmatmul.f32.gmra.mxu0 %v4046
    %v4068 = vpop.f32.mrf.mxu0
    %v4069 = vadd.f32 0.0, %v4068
    %4070 = vmatmul.f32.gmra.mxu0 %v4049
    %v4071 = vpop.f32.mrf.mxu0
    %v4072 = vadd.f32 0.0, %v4071
    %4073 = vdwg.mxu0
    %v4074 = vadd.f32 %v3914, %v4069
    %v4075 = vadd.f32 %v3915, %v4072
    %4076 = vrot.lane.b32.xlu0 %v4004, 64
    %v4077 = vpop.permute.xlu0 %4076
    %v4079 = vadd.f32 %v4074, %v4077
    %v4080 = vadd.f32 %v4075, %v4077
    %s4081 = scalar_lea.vmem %s21, 8
    %v4082 = vld [vmem:[%s4081] sm:$0x3f]
    %s4083 = scalar_lea.vmem %s14, 32
    %v4084 = vld [vmem:[%s4083] sm:$0xff]
    %v4085 = vld [vmem:[%s4083 + $0x8] sm:$0xff]
    %v4086 = vld [vmem:[%s4083 + $0x10] sm:$0xff]
    %v4087 = vld [vmem:[%s4083 + $0x18] sm:$0xff]
    %s4088 = scalar_lea.vmem [#allocation7], 1
    %v4089 = vld [vmem:[%s4088] sm:$0x1]
    %s4090 = scalar_lea.vmem %s16, 32
    %v4091 = vld [vmem:[%s4090] sm:$0xff]
    %v4092 = vld [vmem:[%s4090 + $0x8] sm:$0xff]
    %v4093 = vld [vmem:[%s4090 + $0x10] sm:$0xff]
    %v4094 = vld [vmem:[%s4090 + $0x18] sm:$0xff]
    %s4095 = scalar_lea.vmem [#allocation8], 1
    %v4096 = vld [vmem:[%s4095] sm:$0x1]
    %v4097 = vsel %vm213, %v4079, 0.0
    %4098 = vadd.xlane.f32.xlu0 %v4097
    %v4099 = vpop.xlane.xlu0 %4098
    %v4100 = vsel %vm213, %v4080, 0.0
    %4101 = vadd.xlane.f32.xlu0 %v4100
    %v4102 = vpop.xlane.xlu0 %4101
    %v4103 = vmul.f32 %v4099, %v226
    %v4104 = vmul.f32 %v4102, %v226
    %v4105 = vsub.f32 %v4079, %v4103
    %v4106 = vsub.f32 %v4080, %v4104
    %v4107 = vmul.f32 %v4105, %v4105
    %v4108 = vmul.f32 %v4106, %v4106
    %v4109 = vsel %vm213, %v4107, 0.0
    %4110 = vadd.xlane.f32.xlu0 %v4109
    %v4111 = vpop.xlane.xlu0 %4110
    %v4112 = vsel %vm213, %v4108, 0.0
    %4113 = vadd.xlane.f32.xlu0 %v4112
    %v4114 = vpop.xlane.xlu0 %4113
    %v4115 = vmul.f32 %v4111, 0.032258064
    %v4116 = vmul.f32 %v4114, 0.032258064
    %v4117 = vperm.slane %v4082, 0
    %v4118 = vmul.f32 %v4117, %v4105
    %v4119 = vmul.f32 %v4117, %v4106
    %v4120 = vrsqrt.pop %v4115
    %v4121 = vmul.f32 %v4120, %v4115
    %v4122 = vmul.f32 %v4121, %v4120
    %v4123 = vmul.f32 0.5, %v4122
    %v4124 = vsub.f32 1.5, %v4123
    %v4125 = vmul.f32 %v4120, %v4124
    %v4126 = vmul.f32 %v4115, %v4125
    %vm4127 = vcmp.eq.f32.partialorder %v4115, inf
    %v4128 = vsel %vm4127, %v4115, %v4126
    %vm4129 = vcmp.eq.f32.partialorder %v4115, 0.0
    %v4130 = vand.u32 %v4115, 2147483648
    %v4131 = vsel %vm4129, %v4130, %v4128
    %v4132 = vrsqrt.pop %v4116
    %v4133 = vmul.f32 %v4132, %v4116
    %v4134 = vmul.f32 %v4133, %v4132
    %v4135 = vmul.f32 0.5, %v4134
    %v4136 = vsub.f32 1.5, %v4135
    %v4137 = vmul.f32 %v4132, %v4136
    %v4138 = vmul.f32 %v4116, %v4137
    %vm4139 = vcmp.eq.f32.partialorder %v4116, inf
    %v4140 = vsel %vm4139, %v4116, %v4138
    %vm4141 = vcmp.eq.f32.partialorder %v4116, 0.0
    %v4142 = vand.u32 %v4116, 2147483648
    %v4143 = vsel %vm4141, %v4142, %v4140
    %v4144 = vadd.f32 %v4131, 1e-06
    %v4145 = vadd.f32 %v4143, 1e-06
    %v4146 = vrcp.pop %v4144
    %v4147 = vmul.f32 %v4144, %v4146
    %v4148 = vsub.f32 1.0, %v4147
    %v4149 = vmul.f32 %v4146, %v4148
    %v4150 = vadd.f32 %v4146, %v4149
    %vm4151 = vweird.f32 %v4144
    %vm4152 = vweird.f32 %v4146
    %vm4153 = vmor %vm4151, %vm4152
    %v4154 = vsel %vm4153, %v4146, %v4150
    %v4155 = vand.u32 2147483647, %v4144
    %vm4156 = vcmp.eq.f32.partialorder %v4155, 8.507059e+37
    %v4157 = vand.u32 %v4144, 2147483648
    %v4158 = vor.u32 1.1754944e-38, %v4157
    %v4159 = vsel %vm4156, %v4158, %v4154
    %v4160 = vmul.f32 %v4118, %v4159
    %v4161 = vrcp.pop %v4145
    %v4162 = vmul.f32 %v4145, %v4161
    %v4163 = vsub.f32 1.0, %v4162
    %v4164 = vmul.f32 %v4161, %v4163
    %v4165 = vadd.f32 %v4161, %v4164
    %vm4166 = vweird.f32 %v4145
    %vm4167 = vweird.f32 %v4161
    %vm4168 = vmor %vm4166, %vm4167
    %v4169 = vsel %vm4168, %v4161, %v4165
    %v4170 = vand.u32 2147483647, %v4145
    %vm4171 = vcmp.eq.f32.partialorder %v4170, 8.507059e+37
    %v4172 = vand.u32 %v4145, 2147483648
    %v4173 = vor.u32 1.1754944e-38, %v4172
    %v4174 = vsel %vm4171, %v4173, %v4169
    %v4175 = vmul.f32 %v4119, %v4174
    %v4176 = vperm.slane %v4082, 1
    %v4177 = vadd.f32 %v4160, %v4176
    %v4178 = vadd.f32 %v4175, %v4176
    %v4180 = vperm.slane %v4089, 0
    %v4183 = vsel %vm213, %v4177, 0
    %v4186 = vsel %vm213, %v4178, 0
    %4188 = vmatpush.msra.mxu0 0.0
    %4189 = vmatpush.msra.mxu0 0.0
    %4190 = vmatpush.msra.mxu0 0.0
    %4191 = vmatpush.msra.mxu0 0.0
    %4192 = vmatpush.msra.mxu0 0.0
    %4193 = vmatpush.msra.mxu0 0.0
    %4194 = vmatpush.msra.mxu0 0.0
    %4195 = vmatpush.msra.mxu0 0.0
    %4196 = vmatpush.msra.mxu0 0.0
    %4197 = vmatpush.msra.mxu0 0.0
    %4198 = vmatpush.msra.mxu0 0.0
    %4199 = vmatpush.msra.mxu0 0.0
    %4200 = vmatpush.msra.mxu0 %v4087
    %4201 = vmatpush.msra.mxu0 %v4086
    %4202 = vmatpush.msra.mxu0 %v4085
    %4203 = vmatpush.msra.mxu0 %v4084
    %4204 = vmatmul.f32.gmra.mxu0 %v4183
    %v4205 = vpop.f32.mrf.mxu0
    %v4206 = vadd.f32 %v4180, %v4205
    %4207 = vmatmul.f32.gmra.mxu0 %v4186
    %v4208 = vpop.f32.mrf.mxu0
    %v4209 = vadd.f32 %v4180, %v4208
    %4210 = vdwg.mxu0
    %4212 = vrot.lane.b32.xlu0 %v4206, 96
    %v4213 = vpop.permute.xlu0 %4212
    %v4214 = vsel %vm338, %v4206, 0
    %v4216 = vsel %vm338, %v4213, 0
    %4218 = vmatpush.xpose.msra.mxu0 0.0
    %4219 = vmatpush.xpose.msra.mxu0 0.0
    %4220 = vmatpush.xpose.msra.mxu0 0.0
    %4221 = vmatpush.xpose.msra.mxu0 0.0
    %4222 = vmatpush.xpose.msra.mxu0 0.0
    %4223 = vmatpush.xpose.msra.mxu0 0.0
    %4224 = vmatpush.xpose.msra.mxu0 0.0
    %4225 = vmatpush.xpose.msra.mxu0 0.0
    %4226 = vmatpush.xpose.msra.mxu0 0.0
    %4227 = vmatpush.xpose.msra.mxu0 0.0
    %4228 = vmatpush.xpose.msra.mxu0 0.0
    %4229 = vmatpush.xpose.msra.mxu0 0.0
    %4230 = vmatpush.xpose.msra.mxu0 0.0
    %4231 = vmatpush.xpose.msra.mxu0 0.0
    %4232 = vmatpush.xpose.msra.mxu0 0.0
    %4233 = vmatpush.xpose.msra.mxu0 %v4216
    %4234 = vmatmul.f32.gmra.mxu0 %v4214
    %v4235 = vpop.f32.mrf.mxu0
    %v4236 = vadd.f32 0.0, %v4235
    %4237 = vdwg.mxu0
    %4239 = vrot.lane.b32.xlu0 %v4209, 96
    %v4240 = vpop.permute.xlu0 %4239
    %v4241 = vsel %vm338, %v4209, 0
    %v4243 = vsel %vm338, %v4240, 0
    %4245 = vmatpush.xpose.msra.mxu0 0.0
    %4246 = vmatpush.xpose.msra.mxu0 0.0
    %4247 = vmatpush.xpose.msra.mxu0 0.0
    %4248 = vmatpush.xpose.msra.mxu0 0.0
    %4249 = vmatpush.xpose.msra.mxu0 0.0
    %4250 = vmatpush.xpose.msra.mxu0 0.0
    %4251 = vmatpush.xpose.msra.mxu0 0.0
    %4252 = vmatpush.xpose.msra.mxu0 0.0
    %4253 = vmatpush.xpose.msra.mxu0 0.0
    %4254 = vmatpush.xpose.msra.mxu0 0.0
    %4255 = vmatpush.xpose.msra.mxu0 0.0
    %4256 = vmatpush.xpose.msra.mxu0 0.0
    %4257 = vmatpush.xpose.msra.mxu0 0.0
    %4258 = vmatpush.xpose.msra.mxu0 0.0
    %4259 = vmatpush.xpose.msra.mxu0 0.0
    %4260 = vmatpush.xpose.msra.mxu0 %v4243
    %4261 = vmatmul.f32.gmra.mxu0 %v4241
    %v4262 = vpop.f32.mrf.mxu0
    %v4263 = vadd.f32 0.0, %v4262
    %4264 = vdwg.mxu0
    %v4265 = vmul.f32 %v4236, 0.35355338
    %v4266 = vmul.f32 %v4263, 0.35355338
    %v4267 = vadd.f32 %v4265, %v152
    %v4268 = vadd.f32 %v4266, %v153
    %v4269 = vsel %vm338, %v4267, -inf
    %4270 = vmax.xlane.f32.xlu0 %v4269
    %v4271 = vpop.xlane.xlu0 %4270
    %v4272 = vsel %vm338, %v4268, -inf
    %4273 = vmax.xlane.f32.xlu0 %v4272
    %v4274 = vpop.xlane.xlu0 %4273
    %v4275 = vsub.f32 %v4267, %v4271
    %v4276 = vsub.f32 %v4268, %v4274
    %v4277 = vmul.f32 %v4275, 1.442695
    %v4278 = vpow.pop %v4277
    %v4279 = vmul.f32 %v4276, 1.442695
    %v4280 = vpow.pop %v4279
    %v4281 = vsel %vm338, %v4278, 0.0
    %4282 = vadd.xlane.f32.xlu0 %v4281
    %v4283 = vpop.xlane.xlu0 %4282
    %v4284 = vsel %vm338, %v4280, 0.0
    %4285 = vadd.xlane.f32.xlu0 %v4284
    %v4286 = vpop.xlane.xlu0 %4285
    %v4287 = vrcp.pop %v4283
    %v4288 = vrcp.pop %v4286
    %v4289 = vmul.f32 %v4278, %v4287
    %v4290 = vmul.f32 %v4280, %v4288
    %4291 = vrot.lane.b32.xlu0 %v4206, 64
    %v4292 = vpop.permute.xlu0 %4291
    %v4295 = vsel %vm338, %v4289, 0
    %4297 = vmatpush.msra.mxu0 0.0
    %4298 = vmatpush.msra.mxu0 0.0
    %4299 = vmatpush.msra.mxu0 0.0
    %4300 = vmatpush.msra.mxu0 0.0
    %4301 = vmatpush.msra.mxu0 0.0
    %4302 = vmatpush.msra.mxu0 0.0
    %4303 = vmatpush.msra.mxu0 0.0
    %4304 = vmatpush.msra.mxu0 0.0
    %4305 = vmatpush.msra.mxu0 0.0
    %4306 = vmatpush.msra.mxu0 0.0
    %4307 = vmatpush.msra.mxu0 0.0
    %4308 = vmatpush.msra.mxu0 0.0
    %4309 = vmatpush.msra.mxu0 0.0
    %4310 = vmatpush.msra.mxu0 0.0
    %4311 = vmatpush.msra.mxu0 0.0
    %4312 = vmatpush.msra.mxu0 %v4292
    %4313 = vmatmul.f32.gmra.mxu0 %v4295
    %v4314 = vpop.f32.mrf.mxu0
    %v4315 = vadd.f32 0.0, %v4314
    %4316 = vdwg.mxu0
    %4317 = vrot.lane.b32.xlu0 %v4209, 64
    %v4318 = vpop.permute.xlu0 %4317
    %v4321 = vsel %vm338, %v4290, 0
    %4323 = vmatpush.msra.mxu0 0.0
    %4324 = vmatpush.msra.mxu0 0.0
    %4325 = vmatpush.msra.mxu0 0.0
    %4326 = vmatpush.msra.mxu0 0.0
    %4327 = vmatpush.msra.mxu0 0.0
    %4328 = vmatpush.msra.mxu0 0.0
    %4329 = vmatpush.msra.mxu0 0.0
    %4330 = vmatpush.msra.mxu0 0.0
    %4331 = vmatpush.msra.mxu0 0.0
    %4332 = vmatpush.msra.mxu0 0.0
    %4333 = vmatpush.msra.mxu0 0.0
    %4334 = vmatpush.msra.mxu0 0.0
    %4335 = vmatpush.msra.mxu0 0.0
    %4336 = vmatpush.msra.mxu0 0.0
    %4337 = vmatpush.msra.mxu0 0.0
    %4338 = vmatpush.msra.mxu0 %v4318
    %4339 = vmatmul.f32.gmra.mxu0 %v4321
    %v4340 = vpop.f32.mrf.mxu0
    %v4341 = vadd.f32 0.0, %v4340
    %4342 = vdwg.mxu0
    %4343 = vrot.lane.b32.xlu0 %v4206, 120
    %v4344 = vpop.permute.xlu0 %4343
    %4345 = vrot.lane.b32.xlu0 %v4206, 88
    %v4346 = vpop.permute.xlu0 %4345
    %v4347 = vsel %vm338, %v4344, 0
    %v4349 = vsel %vm338, %v4346, 0
    %4351 = vmatpush.xpose.msra.mxu0 0.0
    %4352 = vmatpush.xpose.msra.mxu0 0.0
    %4353 = vmatpush.xpose.msra.mxu0 0.0
    %4354 = vmatpush.xpose.msra.mxu0 0.0
    %4355 = vmatpush.xpose.msra.mxu0 0.0
    %4356 = vmatpush.xpose.msra.mxu0 0.0
    %4357 = vmatpush.xpose.msra.mxu0 0.0
    %4358 = vmatpush.xpose.msra.mxu0 0.0
    %4359 = vmatpush.xpose.msra.mxu0 0.0
    %4360 = vmatpush.xpose.msra.mxu0 0.0
    %4361 = vmatpush.xpose.msra.mxu0 0.0
    %4362 = vmatpush.xpose.msra.mxu0 0.0
    %4363 = vmatpush.xpose.msra.mxu0 0.0
    %4364 = vmatpush.xpose.msra.mxu0 0.0
    %4365 = vmatpush.xpose.msra.mxu0 0.0
    %4366 = vmatpush.xpose.msra.mxu0 %v4349
    %4367 = vmatmul.f32.gmra.mxu0 %v4347
    %v4368 = vpop.f32.mrf.mxu0
    %v4369 = vadd.f32 0.0, %v4368
    %4370 = vdwg.mxu0
    %4371 = vrot.lane.b32.xlu0 %v4209, 120
    %v4372 = vpop.permute.xlu0 %4371
    %4373 = vrot.lane.b32.xlu0 %v4209, 88
    %v4374 = vpop.permute.xlu0 %4373
    %v4375 = vsel %vm338, %v4372, 0
    %v4377 = vsel %vm338, %v4374, 0
    %4379 = vmatpush.xpose.msra.mxu0 0.0
    %4380 = vmatpush.xpose.msra.mxu0 0.0
    %4381 = vmatpush.xpose.msra.mxu0 0.0
    %4382 = vmatpush.xpose.msra.mxu0 0.0
    %4383 = vmatpush.xpose.msra.mxu0 0.0
    %4384 = vmatpush.xpose.msra.mxu0 0.0
    %4385 = vmatpush.xpose.msra.mxu0 0.0
    %4386 = vmatpush.xpose.msra.mxu0 0.0
    %4387 = vmatpush.xpose.msra.mxu0 0.0
    %4388 = vmatpush.xpose.msra.mxu0 0.0
    %4389 = vmatpush.xpose.msra.mxu0 0.0
    %4390 = vmatpush.xpose.msra.mxu0 0.0
    %4391 = vmatpush.xpose.msra.mxu0 0.0
    %4392 = vmatpush.xpose.msra.mxu0 0.0
    %4393 = vmatpush.xpose.msra.mxu0 0.0
    %4394 = vmatpush.xpose.msra.mxu0 %v4377
    %4395 = vmatmul.f32.gmra.mxu0 %v4375
    %v4396 = vpop.f32.mrf.mxu0
    %v4397 = vadd.f32 0.0, %v4396
    %4398 = vdwg.mxu0
    %v4399 = vmul.f32 %v4369, 0.35355338
    %v4400 = vmul.f32 %v4397, 0.35355338
    %v4401 = vadd.f32 %v4399, %v152
    %v4402 = vadd.f32 %v4400, %v153
    %v4403 = vsel %vm338, %v4401, -inf
    %4404 = vmax.xlane.f32.xlu0 %v4403
    %v4405 = vpop.xlane.xlu0 %4404
    %v4406 = vsel %vm338, %v4402, -inf
    %4407 = vmax.xlane.f32.xlu0 %v4406
    %v4408 = vpop.xlane.xlu0 %4407
    %v4409 = vsub.f32 %v4401, %v4405
    %v4410 = vsub.f32 %v4402, %v4408
    %v4411 = vmul.f32 %v4409, 1.442695
    %v4412 = vpow.pop %v4411
    %v4413 = vmul.f32 %v4410, 1.442695
    %v4414 = vpow.pop %v4413
    %v4415 = vsel %vm338, %v4412, 0.0
    %4416 = vadd.xlane.f32.xlu0 %v4415
    %v4417 = vpop.xlane.xlu0 %4416
    %v4418 = vsel %vm338, %v4414, 0.0
    %4419 = vadd.xlane.f32.xlu0 %v4418
    %v4420 = vpop.xlane.xlu0 %4419
    %v4421 = vrcp.pop %v4417
    %v4422 = vrcp.pop %v4420
    %v4423 = vmul.f32 %v4412, %v4421
    %v4424 = vmul.f32 %v4414, %v4422
    %4425 = vrot.lane.b32.xlu0 %v4206, 56
    %v4426 = vpop.permute.xlu0 %4425
    %v4429 = vsel %vm338, %v4423, 0
    %4431 = vmatpush.msra.mxu0 0.0
    %4432 = vmatpush.msra.mxu0 0.0
    %4433 = vmatpush.msra.mxu0 0.0
    %4434 = vmatpush.msra.mxu0 0.0
    %4435 = vmatpush.msra.mxu0 0.0
    %4436 = vmatpush.msra.mxu0 0.0
    %4437 = vmatpush.msra.mxu0 0.0
    %4438 = vmatpush.msra.mxu0 0.0
    %4439 = vmatpush.msra.mxu0 0.0
    %4440 = vmatpush.msra.mxu0 0.0
    %4441 = vmatpush.msra.mxu0 0.0
    %4442 = vmatpush.msra.mxu0 0.0
    %4443 = vmatpush.msra.mxu0 0.0
    %4444 = vmatpush.msra.mxu0 0.0
    %4445 = vmatpush.msra.mxu0 0.0
    %4446 = vmatpush.msra.mxu0 %v4426
    %4447 = vmatmul.f32.gmra.mxu0 %v4429
    %v4448 = vpop.f32.mrf.mxu0
    %v4449 = vadd.f32 0.0, %v4448
    %4450 = vdwg.mxu0
    %4451 = vrot.lane.b32.xlu0 %v4209, 56
    %v4452 = vpop.permute.xlu0 %4451
    %v4455 = vsel %vm338, %v4424, 0
    %4457 = vmatpush.msra.mxu0 0.0
    %4458 = vmatpush.msra.mxu0 0.0
    %4459 = vmatpush.msra.mxu0 0.0
    %4460 = vmatpush.msra.mxu0 0.0
    %4461 = vmatpush.msra.mxu0 0.0
    %4462 = vmatpush.msra.mxu0 0.0
    %4463 = vmatpush.msra.mxu0 0.0
    %4464 = vmatpush.msra.mxu0 0.0
    %4465 = vmatpush.msra.mxu0 0.0
    %4466 = vmatpush.msra.mxu0 0.0
    %4467 = vmatpush.msra.mxu0 0.0
    %4468 = vmatpush.msra.mxu0 0.0
    %4469 = vmatpush.msra.mxu0 0.0
    %4470 = vmatpush.msra.mxu0 0.0
    %4471 = vmatpush.msra.mxu0 0.0
    %4472 = vmatpush.msra.mxu0 %v4452
    %4473 = vmatmul.f32.gmra.mxu0 %v4455
    %v4474 = vpop.f32.mrf.mxu0
    %v4475 = vadd.f32 0.0, %v4474
    %4476 = vdwg.mxu0
    %4478 = vrot.lane.b32.xlu0 %v4085, 32
    %v4479 = vpop.permute.xlu0 %4478
    %v4482 = vsel %vm338, %v4449, 0
    %v4485 = vsel %vm338, %v4475, 0
    %4487 = vmatpush.msra.mxu0 0.0
    %4488 = vmatpush.msra.mxu0 0.0
    %4489 = vmatpush.msra.mxu0 0.0
    %4490 = vmatpush.msra.mxu0 0.0
    %4491 = vmatpush.msra.mxu0 0.0
    %4492 = vmatpush.msra.mxu0 0.0
    %4493 = vmatpush.msra.mxu0 0.0
    %4494 = vmatpush.msra.mxu0 0.0
    %4495 = vmatpush.msra.mxu0 0.0
    %4496 = vmatpush.msra.mxu0 0.0
    %4497 = vmatpush.msra.mxu0 0.0
    %4498 = vmatpush.msra.mxu0 0.0
    %4499 = vmatpush.msra.mxu0 0.0
    %4500 = vmatpush.msra.mxu0 0.0
    %4501 = vmatpush.msra.mxu0 0.0
    %4502 = vmatpush.msra.mxu0 %v4479
    %4503 = vmatmul.f32.gmra.mxu0 %v4482
    %v4504 = vpop.f32.mrf.mxu0
    %v4505 = vadd.f32 0.0, %v4504
    %4506 = vmatmul.f32.gmra.mxu0 %v4485
    %v4507 = vpop.f32.mrf.mxu0
    %v4508 = vadd.f32 0.0, %v4507
    %4509 = vdwg.mxu0
    %4511 = vrot.lane.b32.xlu0 %v4084, 32
    %v4512 = vpop.permute.xlu0 %4511
    %v4515 = vsel %vm338, %v4315, 0
    %v4518 = vsel %vm338, %v4341, 0
    %4520 = vmatpush.msra.mxu0 0.0
    %4521 = vmatpush.msra.mxu0 0.0
    %4522 = vmatpush.msra.mxu0 0.0
    %4523 = vmatpush.msra.mxu0 0.0
    %4524 = vmatpush.msra.mxu0 0.0
    %4525 = vmatpush.msra.mxu0 0.0
    %4526 = vmatpush.msra.mxu0 0.0
    %4527 = vmatpush.msra.mxu0 0.0
    %4528 = vmatpush.msra.mxu0 0.0
    %4529 = vmatpush.msra.mxu0 0.0
    %4530 = vmatpush.msra.mxu0 0.0
    %4531 = vmatpush.msra.mxu0 0.0
    %4532 = vmatpush.msra.mxu0 0.0
    %4533 = vmatpush.msra.mxu0 0.0
    %4534 = vmatpush.msra.mxu0 0.0
    %4535 = vmatpush.msra.mxu0 %v4512
    %4536 = vmatmul.f32.gmra.mxu0 %v4515
    %v4537 = vpop.f32.mrf.mxu0
    %v4538 = vadd.f32 %v4505, %v4537
    %4539 = vmatmul.f32.gmra.mxu0 %v4518
    %v4540 = vpop.f32.mrf.mxu0
    %v4541 = vadd.f32 %v4508, %v4540
    %4542 = vdwg.mxu0
    %4543 = vrot.lane.b32.xlu0 %v4206, 112
    %v4544 = vpop.permute.xlu0 %4543
    %4545 = vrot.lane.b32.xlu0 %v4206, 80
    %v4546 = vpop.permute.xlu0 %4545
    %v4547 = vsel %vm338, %v4544, 0
    %v4549 = vsel %vm338, %v4546, 0
    %4551 = vmatpush.xpose.msra.mxu0 0.0
    %4552 = vmatpush.xpose.msra.mxu0 0.0
    %4553 = vmatpush.xpose.msra.mxu0 0.0
    %4554 = vmatpush.xpose.msra.mxu0 0.0
    %4555 = vmatpush.xpose.msra.mxu0 0.0
    %4556 = vmatpush.xpose.msra.mxu0 0.0
    %4557 = vmatpush.xpose.msra.mxu0 0.0
    %4558 = vmatpush.xpose.msra.mxu0 0.0
    %4559 = vmatpush.xpose.msra.mxu0 0.0
    %4560 = vmatpush.xpose.msra.mxu0 0.0
    %4561 = vmatpush.xpose.msra.mxu0 0.0
    %4562 = vmatpush.xpose.msra.mxu0 0.0
    %4563 = vmatpush.xpose.msra.mxu0 0.0
    %4564 = vmatpush.xpose.msra.mxu0 0.0
    %4565 = vmatpush.xpose.msra.mxu0 0.0
    %4566 = vmatpush.xpose.msra.mxu0 %v4549
    %4567 = vmatmul.f32.gmra.mxu0 %v4547
    %v4568 = vpop.f32.mrf.mxu0
    %v4569 = vadd.f32 0.0, %v4568
    %4570 = vdwg.mxu0
    %4571 = vrot.lane.b32.xlu0 %v4209, 112
    %v4572 = vpop.permute.xlu0 %4571
    %4573 = vrot.lane.b32.xlu0 %v4209, 80
    %v4574 = vpop.permute.xlu0 %4573
    %v4575 = vsel %vm338, %v4572, 0
    %v4577 = vsel %vm338, %v4574, 0
    %4579 = vmatpush.xpose.msra.mxu0 0.0
    %4580 = vmatpush.xpose.msra.mxu0 0.0
    %4581 = vmatpush.xpose.msra.mxu0 0.0
    %4582 = vmatpush.xpose.msra.mxu0 0.0
    %4583 = vmatpush.xpose.msra.mxu0 0.0
    %4584 = vmatpush.xpose.msra.mxu0 0.0
    %4585 = vmatpush.xpose.msra.mxu0 0.0
    %4586 = vmatpush.xpose.msra.mxu0 0.0
    %4587 = vmatpush.xpose.msra.mxu0 0.0
    %4588 = vmatpush.xpose.msra.mxu0 0.0
    %4589 = vmatpush.xpose.msra.mxu0 0.0
    %4590 = vmatpush.xpose.msra.mxu0 0.0
    %4591 = vmatpush.xpose.msra.mxu0 0.0
    %4592 = vmatpush.xpose.msra.mxu0 0.0
    %4593 = vmatpush.xpose.msra.mxu0 0.0
    %4594 = vmatpush.xpose.msra.mxu0 %v4577
    %4595 = vmatmul.f32.gmra.mxu0 %v4575
    %v4596 = vpop.f32.mrf.mxu0
    %v4597 = vadd.f32 0.0, %v4596
    %4598 = vdwg.mxu0
    %v4599 = vmul.f32 %v4569, 0.35355338
    %v4600 = vmul.f32 %v4597, 0.35355338
    %v4601 = vadd.f32 %v4599, %v152
    %v4602 = vadd.f32 %v4600, %v153
    %v4603 = vsel %vm338, %v4601, -inf
    %4604 = vmax.xlane.f32.xlu0 %v4603
    %v4605 = vpop.xlane.xlu0 %4604
    %v4606 = vsel %vm338, %v4602, -inf
    %4607 = vmax.xlane.f32.xlu0 %v4606
    %v4608 = vpop.xlane.xlu0 %4607
    %v4609 = vsub.f32 %v4601, %v4605
    %v4610 = vsub.f32 %v4602, %v4608
    %v4611 = vmul.f32 %v4609, 1.442695
    %v4612 = vpow.pop %v4611
    %v4613 = vmul.f32 %v4610, 1.442695
    %v4614 = vpow.pop %v4613
    %v4615 = vsel %vm338, %v4612, 0.0
    %4616 = vadd.xlane.f32.xlu0 %v4615
    %v4617 = vpop.xlane.xlu0 %4616
    %v4618 = vsel %vm338, %v4614, 0.0
    %4619 = vadd.xlane.f32.xlu0 %v4618
    %v4620 = vpop.xlane.xlu0 %4619
    %v4621 = vrcp.pop %v4617
    %v4622 = vrcp.pop %v4620
    %v4623 = vmul.f32 %v4612, %v4621
    %v4624 = vmul.f32 %v4614, %v4622
    %4625 = vrot.lane.b32.xlu0 %v4206, 48
    %v4626 = vpop.permute.xlu0 %4625
    %v4629 = vsel %vm338, %v4623, 0
    %4631 = vmatpush.msra.mxu0 0.0
    %4632 = vmatpush.msra.mxu0 0.0
    %4633 = vmatpush.msra.mxu0 0.0
    %4634 = vmatpush.msra.mxu0 0.0
    %4635 = vmatpush.msra.mxu0 0.0
    %4636 = vmatpush.msra.mxu0 0.0
    %4637 = vmatpush.msra.mxu0 0.0
    %4638 = vmatpush.msra.mxu0 0.0
    %4639 = vmatpush.msra.mxu0 0.0
    %4640 = vmatpush.msra.mxu0 0.0
    %4641 = vmatpush.msra.mxu0 0.0
    %4642 = vmatpush.msra.mxu0 0.0
    %4643 = vmatpush.msra.mxu0 0.0
    %4644 = vmatpush.msra.mxu0 0.0
    %4645 = vmatpush.msra.mxu0 0.0
    %4646 = vmatpush.msra.mxu0 %v4626
    %4647 = vmatmul.f32.gmra.mxu0 %v4629
    %v4648 = vpop.f32.mrf.mxu0
    %v4649 = vadd.f32 0.0, %v4648
    %4650 = vdwg.mxu0
    %4651 = vrot.lane.b32.xlu0 %v4209, 48
    %v4652 = vpop.permute.xlu0 %4651
    %v4655 = vsel %vm338, %v4624, 0
    %4657 = vmatpush.msra.mxu0 0.0
    %4658 = vmatpush.msra.mxu0 0.0
    %4659 = vmatpush.msra.mxu0 0.0
    %4660 = vmatpush.msra.mxu0 0.0
    %4661 = vmatpush.msra.mxu0 0.0
    %4662 = vmatpush.msra.mxu0 0.0
    %4663 = vmatpush.msra.mxu0 0.0
    %4664 = vmatpush.msra.mxu0 0.0
    %4665 = vmatpush.msra.mxu0 0.0
    %4666 = vmatpush.msra.mxu0 0.0
    %4667 = vmatpush.msra.mxu0 0.0
    %4668 = vmatpush.msra.mxu0 0.0
    %4669 = vmatpush.msra.mxu0 0.0
    %4670 = vmatpush.msra.mxu0 0.0
    %4671 = vmatpush.msra.mxu0 0.0
    %4672 = vmatpush.msra.mxu0 %v4652
    %4673 = vmatmul.f32.gmra.mxu0 %v4655
    %v4674 = vpop.f32.mrf.mxu0
    %v4675 = vadd.f32 0.0, %v4674
    %4676 = vdwg.mxu0
    %4678 = vrot.lane.b32.xlu0 %v4086, 32
    %v4679 = vpop.permute.xlu0 %4678
    %v4682 = vsel %vm338, %v4649, 0
    %v4685 = vsel %vm338, %v4675, 0
    %4687 = vmatpush.msra.mxu0 0.0
    %4688 = vmatpush.msra.mxu0 0.0
    %4689 = vmatpush.msra.mxu0 0.0
    %4690 = vmatpush.msra.mxu0 0.0
    %4691 = vmatpush.msra.mxu0 0.0
    %4692 = vmatpush.msra.mxu0 0.0
    %4693 = vmatpush.msra.mxu0 0.0
    %4694 = vmatpush.msra.mxu0 0.0
    %4695 = vmatpush.msra.mxu0 0.0
    %4696 = vmatpush.msra.mxu0 0.0
    %4697 = vmatpush.msra.mxu0 0.0
    %4698 = vmatpush.msra.mxu0 0.0
    %4699 = vmatpush.msra.mxu0 0.0
    %4700 = vmatpush.msra.mxu0 0.0
    %4701 = vmatpush.msra.mxu0 0.0
    %4702 = vmatpush.msra.mxu0 %v4679
    %4703 = vmatmul.f32.gmra.mxu0 %v4682
    %v4704 = vpop.f32.mrf.mxu0
    %v4705 = vadd.f32 0.0, %v4704
    %4706 = vmatmul.f32.gmra.mxu0 %v4685
    %v4707 = vpop.f32.mrf.mxu0
    %v4708 = vadd.f32 0.0, %v4707
    %4709 = vdwg.mxu0
    %v4710 = vadd.f32 %v4538, %v4705
    %v4711 = vadd.f32 %v4541, %v4708
    %4712 = vrot.lane.b32.xlu0 %v4206, 104
    %v4713 = vpop.permute.xlu0 %4712
    %4714 = vrot.lane.b32.xlu0 %v4206, 72
    %v4715 = vpop.permute.xlu0 %4714
    %v4716 = vsel %vm338, %v4713, 0
    %v4718 = vsel %vm338, %v4715, 0
    %4720 = vmatpush.xpose.msra.mxu0 0.0
    %4721 = vmatpush.xpose.msra.mxu0 0.0
    %4722 = vmatpush.xpose.msra.mxu0 0.0
    %4723 = vmatpush.xpose.msra.mxu0 0.0
    %4724 = vmatpush.xpose.msra.mxu0 0.0
    %4725 = vmatpush.xpose.msra.mxu0 0.0
    %4726 = vmatpush.xpose.msra.mxu0 0.0
    %4727 = vmatpush.xpose.msra.mxu0 0.0
    %4728 = vmatpush.xpose.msra.mxu0 0.0
    %4729 = vmatpush.xpose.msra.mxu0 0.0
    %4730 = vmatpush.xpose.msra.mxu0 0.0
    %4731 = vmatpush.xpose.msra.mxu0 0.0
    %4732 = vmatpush.xpose.msra.mxu0 0.0
    %4733 = vmatpush.xpose.msra.mxu0 0.0
    %4734 = vmatpush.xpose.msra.mxu0 0.0
    %4735 = vmatpush.xpose.msra.mxu0 %v4718
    %4736 = vmatmul.f32.gmra.mxu0 %v4716
    %v4737 = vpop.f32.mrf.mxu0
    %v4738 = vadd.f32 0.0, %v4737
    %4739 = vdwg.mxu0
    %4740 = vrot.lane.b32.xlu0 %v4209, 104
    %v4741 = vpop.permute.xlu0 %4740
    %4742 = vrot.lane.b32.xlu0 %v4209, 72
    %v4743 = vpop.permute.xlu0 %4742
    %v4744 = vsel %vm338, %v4741, 0
    %v4746 = vsel %vm338, %v4743, 0
    %4748 = vmatpush.xpose.msra.mxu0 0.0
    %4749 = vmatpush.xpose.msra.mxu0 0.0
    %4750 = vmatpush.xpose.msra.mxu0 0.0
    %4751 = vmatpush.xpose.msra.mxu0 0.0
    %4752 = vmatpush.xpose.msra.mxu0 0.0
    %4753 = vmatpush.xpose.msra.mxu0 0.0
    %4754 = vmatpush.xpose.msra.mxu0 0.0
    %4755 = vmatpush.xpose.msra.mxu0 0.0
    %4756 = vmatpush.xpose.msra.mxu0 0.0
    %4757 = vmatpush.xpose.msra.mxu0 0.0
    %4758 = vmatpush.xpose.msra.mxu0 0.0
    %4759 = vmatpush.xpose.msra.mxu0 0.0
    %4760 = vmatpush.xpose.msra.mxu0 0.0
    %4761 = vmatpush.xpose.msra.mxu0 0.0
    %4762 = vmatpush.xpose.msra.mxu0 0.0
    %4763 = vmatpush.xpose.msra.mxu0 %v4746
    %4764 = vmatmul.f32.gmra.mxu0 %v4744
    %v4765 = vpop.f32.mrf.mxu0
    %v4766 = vadd.f32 0.0, %v4765
    %4767 = vdwg.mxu0
    %v4768 = vmul.f32 %v4738, 0.35355338
    %v4769 = vmul.f32 %v4766, 0.35355338
    %v4770 = vadd.f32 %v4768, %v152
    %v4771 = vadd.f32 %v4769, %v153
    %v4772 = vsel %vm338, %v4770, -inf
    %4773 = vmax.xlane.f32.xlu0 %v4772
    %v4774 = vpop.xlane.xlu0 %4773
    %v4775 = vsel %vm338, %v4771, -inf
    %4776 = vmax.xlane.f32.xlu0 %v4775
    %v4777 = vpop.xlane.xlu0 %4776
    %v4778 = vsub.f32 %v4770, %v4774
    %v4779 = vsub.f32 %v4771, %v4777
    %v4780 = vmul.f32 %v4778, 1.442695
    %v4781 = vpow.pop %v4780
    %v4782 = vmul.f32 %v4779, 1.442695
    %v4783 = vpow.pop %v4782
    %v4784 = vsel %vm338, %v4781, 0.0
    %4785 = vadd.xlane.f32.xlu0 %v4784
    %v4786 = vpop.xlane.xlu0 %4785
    %v4787 = vsel %vm338, %v4783, 0.0
    %4788 = vadd.xlane.f32.xlu0 %v4787
    %v4789 = vpop.xlane.xlu0 %4788
    %v4790 = vrcp.pop %v4786
    %v4791 = vrcp.pop %v4789
    %v4792 = vmul.f32 %v4781, %v4790
    %v4793 = vmul.f32 %v4783, %v4791
    %4794 = vrot.lane.b32.xlu0 %v4206, 40
    %v4795 = vpop.permute.xlu0 %4794
    %v4798 = vsel %vm338, %v4792, 0
    %4800 = vmatpush.msra.mxu0 0.0
    %4801 = vmatpush.msra.mxu0 0.0
    %4802 = vmatpush.msra.mxu0 0.0
    %4803 = vmatpush.msra.mxu0 0.0
    %4804 = vmatpush.msra.mxu0 0.0
    %4805 = vmatpush.msra.mxu0 0.0
    %4806 = vmatpush.msra.mxu0 0.0
    %4807 = vmatpush.msra.mxu0 0.0
    %4808 = vmatpush.msra.mxu0 0.0
    %4809 = vmatpush.msra.mxu0 0.0
    %4810 = vmatpush.msra.mxu0 0.0
    %4811 = vmatpush.msra.mxu0 0.0
    %4812 = vmatpush.msra.mxu0 0.0
    %4813 = vmatpush.msra.mxu0 0.0
    %4814 = vmatpush.msra.mxu0 0.0
    %4815 = vmatpush.msra.mxu0 %v4795
    %4816 = vmatmul.f32.gmra.mxu0 %v4798
    %v4817 = vpop.f32.mrf.mxu0
    %v4818 = vadd.f32 0.0, %v4817
    %4819 = vdwg.mxu0
    %4820 = vrot.lane.b32.xlu0 %v4209, 40
    %v4821 = vpop.permute.xlu0 %4820
    %v4824 = vsel %vm338, %v4793, 0
    %4826 = vmatpush.msra.mxu0 0.0
    %4827 = vmatpush.msra.mxu0 0.0
    %4828 = vmatpush.msra.mxu0 0.0
    %4829 = vmatpush.msra.mxu0 0.0
    %4830 = vmatpush.msra.mxu0 0.0
    %4831 = vmatpush.msra.mxu0 0.0
    %4832 = vmatpush.msra.mxu0 0.0
    %4833 = vmatpush.msra.mxu0 0.0
    %4834 = vmatpush.msra.mxu0 0.0
    %4835 = vmatpush.msra.mxu0 0.0
    %4836 = vmatpush.msra.mxu0 0.0
    %4837 = vmatpush.msra.mxu0 0.0
    %4838 = vmatpush.msra.mxu0 0.0
    %4839 = vmatpush.msra.mxu0 0.0
    %4840 = vmatpush.msra.mxu0 0.0
    %4841 = vmatpush.msra.mxu0 %v4821
    %4842 = vmatmul.f32.gmra.mxu0 %v4824
    %v4843 = vpop.f32.mrf.mxu0
    %v4844 = vadd.f32 0.0, %v4843
    %4845 = vdwg.mxu0
    %4847 = vrot.lane.b32.xlu0 %v4087, 32
    %v4848 = vpop.permute.xlu0 %4847
    %v4851 = vsel %vm338, %v4818, 0
    %v4854 = vsel %vm338, %v4844, 0
    %4856 = vmatpush.msra.mxu0 0.0
    %4857 = vmatpush.msra.mxu0 0.0
    %4858 = vmatpush.msra.mxu0 0.0
    %4859 = vmatpush.msra.mxu0 0.0
    %4860 = vmatpush.msra.mxu0 0.0
    %4861 = vmatpush.msra.mxu0 0.0
    %4862 = vmatpush.msra.mxu0 0.0
    %4863 = vmatpush.msra.mxu0 0.0
    %4864 = vmatpush.msra.mxu0 0.0
    %4865 = vmatpush.msra.mxu0 0.0
    %4866 = vmatpush.msra.mxu0 0.0
    %4867 = vmatpush.msra.mxu0 0.0
    %4868 = vmatpush.msra.mxu0 0.0
    %4869 = vmatpush.msra.mxu0 0.0
    %4870 = vmatpush.msra.mxu0 0.0
    %4871 = vmatpush.msra.mxu0 %v4848
    %4872 = vmatmul.f32.gmra.mxu0 %v4851
    %v4873 = vpop.f32.mrf.mxu0
    %v4874 = vadd.f32 0.0, %v4873
    %4875 = vmatmul.f32.gmra.mxu0 %v4854
    %v4876 = vpop.f32.mrf.mxu0
    %v4877 = vadd.f32 0.0, %v4876
    %4878 = vdwg.mxu0
    %v4879 = vadd.f32 %v4710, %v4874
    %v4880 = vadd.f32 %v4711, %v4877
    %4881 = vrot.lane.b32.xlu0 %v4180, 32
    %v4882 = vpop.permute.xlu0 %4881
    %v4884 = vadd.f32 %v4879, %v4882
    %v4885 = vadd.f32 %v4880, %v4882
    %v4886 = vadd.f32 %v4079, %v4884
    %v4887 = vadd.f32 %v4080, %v4885
    %v4888 = vsel %vm213, %v4886, 0.0
    %4889 = vadd.xlane.f32.xlu0 %v4888
    %v4890 = vpop.xlane.xlu0 %4889
    %v4891 = vsel %vm213, %v4887, 0.0
    %4892 = vadd.xlane.f32.xlu0 %v4891
    %v4893 = vpop.xlane.xlu0 %4892
    %v4894 = vmul.f32 %v4890, %v226
    %v4895 = vmul.f32 %v4893, %v226
    %v4896 = vsub.f32 %v4886, %v4894
    %v4897 = vsub.f32 %v4887, %v4895
    %v4898 = vmul.f32 %v4896, %v4896
    %v4899 = vmul.f32 %v4897, %v4897
    %v4900 = vsel %vm213, %v4898, 0.0
    %4901 = vadd.xlane.f32.xlu0 %v4900
    %v4902 = vpop.xlane.xlu0 %4901
    %v4903 = vsel %vm213, %v4899, 0.0
    %4904 = vadd.xlane.f32.xlu0 %v4903
    %v4905 = vpop.xlane.xlu0 %4904
    %v4906 = vmul.f32 %v4902, 0.032258064
    %v4907 = vmul.f32 %v4905, 0.032258064
    %v4908 = vperm.slane %v4082, 2
    %v4909 = vmul.f32 %v4908, %v4896
    %v4910 = vmul.f32 %v4908, %v4897
    %v4911 = vrsqrt.pop %v4906
    %v4912 = vmul.f32 %v4911, %v4906
    %v4913 = vmul.f32 %v4912, %v4911
    %v4914 = vmul.f32 0.5, %v4913
    %v4915 = vsub.f32 1.5, %v4914
    %v4916 = vmul.f32 %v4911, %v4915
    %v4917 = vmul.f32 %v4906, %v4916
    %vm4918 = vcmp.eq.f32.partialorder %v4906, inf
    %v4919 = vsel %vm4918, %v4906, %v4917
    %vm4920 = vcmp.eq.f32.partialorder %v4906, 0.0
    %v4921 = vand.u32 %v4906, 2147483648
    %v4922 = vsel %vm4920, %v4921, %v4919
    %v4923 = vrsqrt.pop %v4907
    %v4924 = vmul.f32 %v4923, %v4907
    %v4925 = vmul.f32 %v4924, %v4923
    %v4926 = vmul.f32 0.5, %v4925
    %v4927 = vsub.f32 1.5, %v4926
    %v4928 = vmul.f32 %v4923, %v4927
    %v4929 = vmul.f32 %v4907, %v4928
    %vm4930 = vcmp.eq.f32.partialorder %v4907, inf
    %v4931 = vsel %vm4930, %v4907, %v4929
    %vm4932 = vcmp.eq.f32.partialorder %v4907, 0.0
    %v4933 = vand.u32 %v4907, 2147483648
    %v4934 = vsel %vm4932, %v4933, %v4931
    %v4935 = vadd.f32 %v4922, 1e-06
    %v4936 = vadd.f32 %v4934, 1e-06
    %v4937 = vrcp.pop %v4935
    %v4938 = vmul.f32 %v4935, %v4937
    %v4939 = vsub.f32 1.0, %v4938
    %v4940 = vmul.f32 %v4937, %v4939
    %v4941 = vadd.f32 %v4937, %v4940
    %vm4942 = vweird.f32 %v4935
    %vm4943 = vweird.f32 %v4937
    %vm4944 = vmor %vm4942, %vm4943
    %v4945 = vsel %vm4944, %v4937, %v4941
    %v4946 = vand.u32 2147483647, %v4935
    %vm4947 = vcmp.eq.f32.partialorder %v4946, 8.507059e+37
    %v4948 = vand.u32 %v4935, 2147483648
    %v4949 = vor.u32 1.1754944e-38, %v4948
    %v4950 = vsel %vm4947, %v4949, %v4945
    %v4951 = vmul.f32 %v4909, %v4950
    %v4952 = vrcp.pop %v4936
    %v4953 = vmul.f32 %v4936, %v4952
    %v4954 = vsub.f32 1.0, %v4953
    %v4955 = vmul.f32 %v4952, %v4954
    %v4956 = vadd.f32 %v4952, %v4955
    %vm4957 = vweird.f32 %v4936
    %vm4958 = vweird.f32 %v4952
    %vm4959 = vmor %vm4957, %vm4958
    %v4960 = vsel %vm4959, %v4952, %v4956
    %v4961 = vand.u32 2147483647, %v4936
    %vm4962 = vcmp.eq.f32.partialorder %v4961, 8.507059e+37
    %v4963 = vand.u32 %v4936, 2147483648
    %v4964 = vor.u32 1.1754944e-38, %v4963
    %v4965 = vsel %vm4962, %v4964, %v4960
    %v4966 = vmul.f32 %v4910, %v4965
    %v4967 = vperm.slane %v4082, 3
    %v4968 = vadd.f32 %v4951, %v4967
    %v4969 = vadd.f32 %v4966, %v4967
    %v4971 = vperm.slane %v4096, 0
    %v4974 = vsel %vm213, %v4968, 0
    %v4977 = vsel %vm213, %v4969, 0
    %4979 = vmatpush.msra.mxu0 0.0
    %4980 = vmatpush.msra.mxu0 0.0
    %4981 = vmatpush.msra.mxu0 0.0
    %4982 = vmatpush.msra.mxu0 0.0
    %4983 = vmatpush.msra.mxu0 0.0
    %4984 = vmatpush.msra.mxu0 0.0
    %4985 = vmatpush.msra.mxu0 0.0
    %4986 = vmatpush.msra.mxu0 0.0
    %4987 = vmatpush.msra.mxu0 0.0
    %4988 = vmatpush.msra.mxu0 0.0
    %4989 = vmatpush.msra.mxu0 0.0
    %4990 = vmatpush.msra.mxu0 0.0
    %4991 = vmatpush.msra.mxu0 %v4094
    %4992 = vmatpush.msra.mxu0 %v4093
    %4993 = vmatpush.msra.mxu0 %v4092
    %4994 = vmatpush.msra.mxu0 %v4091
    %4995 = vmatmul.f32.gmra.mxu0 %v4974
    %v4996 = vpop.f32.mrf.mxu0
    %v4997 = vadd.f32 %v4971, %v4996
    %4998 = vmatmul.f32.gmra.mxu0 %v4977
    %v4999 = vpop.f32.mrf.mxu0
    %v5000 = vadd.f32 %v4971, %v4999
    %5001 = vdwg.mxu0
    %5006 = vrot.lane.b32.xlu0 %v4091, 96
    %v5007 = vpop.permute.xlu0 %5006
    %5008 = vrot.lane.b32.xlu0 %v4092, 96
    %v5009 = vpop.permute.xlu0 %5008
    %5010 = vrot.lane.b32.xlu0 %v4093, 96
    %v5011 = vpop.permute.xlu0 %5010
    %5012 = vrot.lane.b32.xlu0 %v4094, 96
    %v5013 = vpop.permute.xlu0 %5012
    %5018 = vrot.lane.b32.xlu0 %v4971, 96
    %v5019 = vpop.permute.xlu0 %5018
    %5021 = vmatpush.msra.mxu0 0.0
    %5022 = vmatpush.msra.mxu0 0.0
    %5023 = vmatpush.msra.mxu0 0.0
    %5024 = vmatpush.msra.mxu0 0.0
    %5025 = vmatpush.msra.mxu0 0.0
    %5026 = vmatpush.msra.mxu0 0.0
    %5027 = vmatpush.msra.mxu0 0.0
    %5028 = vmatpush.msra.mxu0 0.0
    %5029 = vmatpush.msra.mxu0 0.0
    %5030 = vmatpush.msra.mxu0 0.0
    %5031 = vmatpush.msra.mxu0 0.0
    %5032 = vmatpush.msra.mxu0 0.0
    %5033 = vmatpush.msra.mxu0 %v5013
    %5034 = vmatpush.msra.mxu0 %v5011
    %5035 = vmatpush.msra.mxu0 %v5009
    %5036 = vmatpush.msra.mxu0 %v5007
    %5037 = vmatmul.f32.gmra.mxu0 %v3217
    %v5038 = vpop.f32.mrf.mxu0
    %v5039 = vadd.f32 %v5019, %v5038
    %5040 = vmatmul.f32.gmra.mxu0 %v3220
    %v5041 = vpop.f32.mrf.mxu0
    %v5042 = vadd.f32 %v5019, %v5041
    %5043 = vdwg.mxu0
    %v5045 = vsel %vm338, %v4997, 0
    %v5048 = vsel %vm338, %v5039, 0
    %5050 = vmatpush.xpose.msra.mxu0 0.0
    %5051 = vmatpush.xpose.msra.mxu0 0.0
    %5052 = vmatpush.xpose.msra.mxu0 0.0
    %5053 = vmatpush.xpose.msra.mxu0 0.0
    %5054 = vmatpush.xpose.msra.mxu0 0.0
    %5055 = vmatpush.xpose.msra.mxu0 0.0
    %5056 = vmatpush.xpose.msra.mxu0 0.0
    %5057 = vmatpush.xpose.msra.mxu0 0.0
    %5058 = vmatpush.xpose.msra.mxu0 0.0
    %5059 = vmatpush.xpose.msra.mxu0 0.0
    %5060 = vmatpush.xpose.msra.mxu0 0.0
    %5061 = vmatpush.xpose.msra.mxu0 0.0
    %5062 = vmatpush.xpose.msra.mxu0 0.0
    %5063 = vmatpush.xpose.msra.mxu0 0.0
    %5064 = vmatpush.xpose.msra.mxu0 0.0
    %5065 = vmatpush.xpose.msra.mxu0 %v5048
    %5066 = vmatmul.f32.gmra.mxu0 %v5045
    %v5067 = vpop.f32.mrf.mxu0
    %v5068 = vadd.f32 0.0, %v5067
    %5069 = vdwg.mxu0
    %v5071 = vsel %vm338, %v5000, 0
    %v5074 = vsel %vm338, %v5042, 0
    %5076 = vmatpush.xpose.msra.mxu0 0.0
    %5077 = vmatpush.xpose.msra.mxu0 0.0
    %5078 = vmatpush.xpose.msra.mxu0 0.0
    %5079 = vmatpush.xpose.msra.mxu0 0.0
    %5080 = vmatpush.xpose.msra.mxu0 0.0
    %5081 = vmatpush.xpose.msra.mxu0 0.0
    %5082 = vmatpush.xpose.msra.mxu0 0.0
    %5083 = vmatpush.xpose.msra.mxu0 0.0
    %5084 = vmatpush.xpose.msra.mxu0 0.0
    %5085 = vmatpush.xpose.msra.mxu0 0.0
    %5086 = vmatpush.xpose.msra.mxu0 0.0
    %5087 = vmatpush.xpose.msra.mxu0 0.0
    %5088 = vmatpush.xpose.msra.mxu0 0.0
    %5089 = vmatpush.xpose.msra.mxu0 0.0
    %5090 = vmatpush.xpose.msra.mxu0 0.0
    %5091 = vmatpush.xpose.msra.mxu0 %v5074
    %5092 = vmatmul.f32.gmra.mxu0 %v5071
    %v5093 = vpop.f32.mrf.mxu0
    %v5094 = vadd.f32 0.0, %v5093
    %5095 = vdwg.mxu0
    %v5096 = vmul.f32 %v5068, 0.35355338
    %v5097 = vmul.f32 %v5094, 0.35355338
    %v5098 = vadd.f32 %v5096, %v146
    %v5099 = vadd.f32 %v5097, %v147
    %v5100 = vsel %vm338, %v5098, -inf
    %5101 = vmax.xlane.f32.xlu0 %v5100
    %v5102 = vpop.xlane.xlu0 %5101
    %v5103 = vsel %vm338, %v5099, -inf
    %5104 = vmax.xlane.f32.xlu0 %v5103
    %v5105 = vpop.xlane.xlu0 %5104
    %v5106 = vsub.f32 %v5098, %v5102
    %v5107 = vsub.f32 %v5099, %v5105
    %v5108 = vmul.f32 %v5106, 1.442695
    %v5109 = vpow.pop %v5108
    %v5110 = vmul.f32 %v5107, 1.442695
    %v5111 = vpow.pop %v5110
    %v5112 = vsel %vm338, %v5109, 0.0
    %5113 = vadd.xlane.f32.xlu0 %v5112
    %v5114 = vpop.xlane.xlu0 %5113
    %v5115 = vsel %vm338, %v5111, 0.0
    %5116 = vadd.xlane.f32.xlu0 %v5115
    %v5117 = vpop.xlane.xlu0 %5116
    %v5118 = vrcp.pop %v5114
    %v5119 = vrcp.pop %v5117
    %v5120 = vmul.f32 %v5109, %v5118
    %v5121 = vmul.f32 %v5111, %v5119
    %5122 = vrot.lane.b32.xlu0 %v5039, 96
    %v5123 = vpop.permute.xlu0 %5122
    %v5126 = vsel %vm338, %v5120, 0
    %5128 = vmatpush.msra.mxu0 0.0
    %5129 = vmatpush.msra.mxu0 0.0
    %5130 = vmatpush.msra.mxu0 0.0
    %5131 = vmatpush.msra.mxu0 0.0
    %5132 = vmatpush.msra.mxu0 0.0
    %5133 = vmatpush.msra.mxu0 0.0
    %5134 = vmatpush.msra.mxu0 0.0
    %5135 = vmatpush.msra.mxu0 0.0
    %5136 = vmatpush.msra.mxu0 0.0
    %5137 = vmatpush.msra.mxu0 0.0
    %5138 = vmatpush.msra.mxu0 0.0
    %5139 = vmatpush.msra.mxu0 0.0
    %5140 = vmatpush.msra.mxu0 0.0
    %5141 = vmatpush.msra.mxu0 0.0
    %5142 = vmatpush.msra.mxu0 0.0
    %5143 = vmatpush.msra.mxu0 %v5123
    %5144 = vmatmul.f32.gmra.mxu0 %v5126
    %v5145 = vpop.f32.mrf.mxu0
    %v5146 = vadd.f32 0.0, %v5145
    %5147 = vdwg.mxu0
    %5148 = vrot.lane.b32.xlu0 %v5042, 96
    %v5149 = vpop.permute.xlu0 %5148
    %v5152 = vsel %vm338, %v5121, 0
    %5154 = vmatpush.msra.mxu0 0.0
    %5155 = vmatpush.msra.mxu0 0.0
    %5156 = vmatpush.msra.mxu0 0.0
    %5157 = vmatpush.msra.mxu0 0.0
    %5158 = vmatpush.msra.mxu0 0.0
    %5159 = vmatpush.msra.mxu0 0.0
    %5160 = vmatpush.msra.mxu0 0.0
    %5161 = vmatpush.msra.mxu0 0.0
    %5162 = vmatpush.msra.mxu0 0.0
    %5163 = vmatpush.msra.mxu0 0.0
    %5164 = vmatpush.msra.mxu0 0.0
    %5165 = vmatpush.msra.mxu0 0.0
    %5166 = vmatpush.msra.mxu0 0.0
    %5167 = vmatpush.msra.mxu0 0.0
    %5168 = vmatpush.msra.mxu0 0.0
    %5169 = vmatpush.msra.mxu0 %v5149
    %5170 = vmatmul.f32.gmra.mxu0 %v5152
    %v5171 = vpop.f32.mrf.mxu0
    %v5172 = vadd.f32 0.0, %v5171
    %5173 = vdwg.mxu0
    %5174 = vrot.lane.b32.xlu0 %v4997, 120
    %v5175 = vpop.permute.xlu0 %5174
    %5176 = vrot.lane.b32.xlu0 %v5039, 120
    %v5177 = vpop.permute.xlu0 %5176
    %v5178 = vsel %vm338, %v5175, 0
    %v5180 = vsel %vm338, %v5177, 0
    %5182 = vmatpush.xpose.msra.mxu0 0.0
    %5183 = vmatpush.xpose.msra.mxu0 0.0
    %5184 = vmatpush.xpose.msra.mxu0 0.0
    %5185 = vmatpush.xpose.msra.mxu0 0.0
    %5186 = vmatpush.xpose.msra.mxu0 0.0
    %5187 = vmatpush.xpose.msra.mxu0 0.0
    %5188 = vmatpush.xpose.msra.mxu0 0.0
    %5189 = vmatpush.xpose.msra.mxu0 0.0
    %5190 = vmatpush.xpose.msra.mxu0 0.0
    %5191 = vmatpush.xpose.msra.mxu0 0.0
    %5192 = vmatpush.xpose.msra.mxu0 0.0
    %5193 = vmatpush.xpose.msra.mxu0 0.0
    %5194 = vmatpush.xpose.msra.mxu0 0.0
    %5195 = vmatpush.xpose.msra.mxu0 0.0
    %5196 = vmatpush.xpose.msra.mxu0 0.0
    %5197 = vmatpush.xpose.msra.mxu0 %v5180
    %5198 = vmatmul.f32.gmra.mxu0 %v5178
    %v5199 = vpop.f32.mrf.mxu0
    %v5200 = vadd.f32 0.0, %v5199
    %5201 = vdwg.mxu0
    %5202 = vrot.lane.b32.xlu0 %v5000, 120
    %v5203 = vpop.permute.xlu0 %5202
    %5204 = vrot.lane.b32.xlu0 %v5042, 120
    %v5205 = vpop.permute.xlu0 %5204
    %v5206 = vsel %vm338, %v5203, 0
    %v5208 = vsel %vm338, %v5205, 0
    %5210 = vmatpush.xpose.msra.mxu0 0.0
    %5211 = vmatpush.xpose.msra.mxu0 0.0
    %5212 = vmatpush.xpose.msra.mxu0 0.0
    %5213 = vmatpush.xpose.msra.mxu0 0.0
    %5214 = vmatpush.xpose.msra.mxu0 0.0
    %5215 = vmatpush.xpose.msra.mxu0 0.0
    %5216 = vmatpush.xpose.msra.mxu0 0.0
    %5217 = vmatpush.xpose.msra.mxu0 0.0
    %5218 = vmatpush.xpose.msra.mxu0 0.0
    %5219 = vmatpush.xpose.msra.mxu0 0.0
    %5220 = vmatpush.xpose.msra.mxu0 0.0
    %5221 = vmatpush.xpose.msra.mxu0 0.0
    %5222 = vmatpush.xpose.msra.mxu0 0.0
    %5223 = vmatpush.xpose.msra.mxu0 0.0
    %5224 = vmatpush.xpose.msra.mxu0 0.0
    %5225 = vmatpush.xpose.msra.mxu0 %v5208
    %5226 = vmatmul.f32.gmra.mxu0 %v5206
    %v5227 = vpop.f32.mrf.mxu0
    %v5228 = vadd.f32 0.0, %v5227
    %5229 = vdwg.mxu0
    %v5230 = vmul.f32 %v5200, 0.35355338
    %v5231 = vmul.f32 %v5228, 0.35355338
    %v5232 = vadd.f32 %v5230, %v146
    %v5233 = vadd.f32 %v5231, %v147
    %v5234 = vsel %vm338, %v5232, -inf
    %5235 = vmax.xlane.f32.xlu0 %v5234
    %v5236 = vpop.xlane.xlu0 %5235
    %v5237 = vsel %vm338, %v5233, -inf
    %5238 = vmax.xlane.f32.xlu0 %v5237
    %v5239 = vpop.xlane.xlu0 %5238
    %v5240 = vsub.f32 %v5232, %v5236
    %v5241 = vsub.f32 %v5233, %v5239
    %v5242 = vmul.f32 %v5240, 1.442695
    %v5243 = vpow.pop %v5242
    %v5244 = vmul.f32 %v5241, 1.442695
    %v5245 = vpow.pop %v5244
    %v5246 = vsel %vm338, %v5243, 0.0
    %5247 = vadd.xlane.f32.xlu0 %v5246
    %v5248 = vpop.xlane.xlu0 %5247
    %v5249 = vsel %vm338, %v5245, 0.0
    %5250 = vadd.xlane.f32.xlu0 %v5249
    %v5251 = vpop.xlane.xlu0 %5250
    %v5252 = vrcp.pop %v5248
    %v5253 = vrcp.pop %v5251
    %v5254 = vmul.f32 %v5243, %v5252
    %v5255 = vmul.f32 %v5245, %v5253
    %5256 = vrot.lane.b32.xlu0 %v5039, 88
    %v5257 = vpop.permute.xlu0 %5256
    %v5260 = vsel %vm338, %v5254, 0
    %5262 = vmatpush.msra.mxu0 0.0
    %5263 = vmatpush.msra.mxu0 0.0
    %5264 = vmatpush.msra.mxu0 0.0
    %5265 = vmatpush.msra.mxu0 0.0
    %5266 = vmatpush.msra.mxu0 0.0
    %5267 = vmatpush.msra.mxu0 0.0
    %5268 = vmatpush.msra.mxu0 0.0
    %5269 = vmatpush.msra.mxu0 0.0
    %5270 = vmatpush.msra.mxu0 0.0
    %5271 = vmatpush.msra.mxu0 0.0
    %5272 = vmatpush.msra.mxu0 0.0
    %5273 = vmatpush.msra.mxu0 0.0
    %5274 = vmatpush.msra.mxu0 0.0
    %5275 = vmatpush.msra.mxu0 0.0
    %5276 = vmatpush.msra.mxu0 0.0
    %5277 = vmatpush.msra.mxu0 %v5257
    %5278 = vmatmul.f32.gmra.mxu0 %v5260
    %v5279 = vpop.f32.mrf.mxu0
    %v5280 = vadd.f32 0.0, %v5279
    %5281 = vdwg.mxu0
    %5282 = vrot.lane.b32.xlu0 %v5042, 88
    %v5283 = vpop.permute.xlu0 %5282
    %v5286 = vsel %vm338, %v5255, 0
    %5288 = vmatpush.msra.mxu0 0.0
    %5289 = vmatpush.msra.mxu0 0.0
    %5290 = vmatpush.msra.mxu0 0.0
    %5291 = vmatpush.msra.mxu0 0.0
    %5292 = vmatpush.msra.mxu0 0.0
    %5293 = vmatpush.msra.mxu0 0.0
    %5294 = vmatpush.msra.mxu0 0.0
    %5295 = vmatpush.msra.mxu0 0.0
    %5296 = vmatpush.msra.mxu0 0.0
    %5297 = vmatpush.msra.mxu0 0.0
    %5298 = vmatpush.msra.mxu0 0.0
    %5299 = vmatpush.msra.mxu0 0.0
    %5300 = vmatpush.msra.mxu0 0.0
    %5301 = vmatpush.msra.mxu0 0.0
    %5302 = vmatpush.msra.mxu0 0.0
    %5303 = vmatpush.msra.mxu0 %v5283
    %5304 = vmatmul.f32.gmra.mxu0 %v5286
    %v5305 = vpop.f32.mrf.mxu0
    %v5306 = vadd.f32 0.0, %v5305
    %5307 = vdwg.mxu0
    %5308 = vrot.lane.b32.xlu0 %v4092, 32
    %v5309 = vpop.permute.xlu0 %5308
    %v5312 = vsel %vm338, %v5280, 0
    %v5315 = vsel %vm338, %v5306, 0
    %5317 = vmatpush.msra.mxu0 0.0
    %5318 = vmatpush.msra.mxu0 0.0
    %5319 = vmatpush.msra.mxu0 0.0
    %5320 = vmatpush.msra.mxu0 0.0
    %5321 = vmatpush.msra.mxu0 0.0
    %5322 = vmatpush.msra.mxu0 0.0
    %5323 = vmatpush.msra.mxu0 0.0
    %5324 = vmatpush.msra.mxu0 0.0
    %5325 = vmatpush.msra.mxu0 0.0
    %5326 = vmatpush.msra.mxu0 0.0
    %5327 = vmatpush.msra.mxu0 0.0
    %5328 = vmatpush.msra.mxu0 0.0
    %5329 = vmatpush.msra.mxu0 0.0
    %5330 = vmatpush.msra.mxu0 0.0
    %5331 = vmatpush.msra.mxu0 0.0
    %5332 = vmatpush.msra.mxu0 %v5309
    %5333 = vmatmul.f32.gmra.mxu0 %v5312
    %v5334 = vpop.f32.mrf.mxu0
    %v5335 = vadd.f32 0.0, %v5334
    %5336 = vmatmul.f32.gmra.mxu0 %v5315
    %v5337 = vpop.f32.mrf.mxu0
    %v5338 = vadd.f32 0.0, %v5337
    %5339 = vdwg.mxu0
    %5340 = vrot.lane.b32.xlu0 %v4091, 32
    %v5341 = vpop.permute.xlu0 %5340
    %v5344 = vsel %vm338, %v5146, 0
    %v5347 = vsel %vm338, %v5172, 0
    %5349 = vmatpush.msra.mxu0 0.0
    %5350 = vmatpush.msra.mxu0 0.0
    %5351 = vmatpush.msra.mxu0 0.0
    %5352 = vmatpush.msra.mxu0 0.0
    %5353 = vmatpush.msra.mxu0 0.0
    %5354 = vmatpush.msra.mxu0 0.0
    %5355 = vmatpush.msra.mxu0 0.0
    %5356 = vmatpush.msra.mxu0 0.0
    %5357 = vmatpush.msra.mxu0 0.0
    %5358 = vmatpush.msra.mxu0 0.0
    %5359 = vmatpush.msra.mxu0 0.0
    %5360 = vmatpush.msra.mxu0 0.0
    %5361 = vmatpush.msra.mxu0 0.0
    %5362 = vmatpush.msra.mxu0 0.0
    %5363 = vmatpush.msra.mxu0 0.0
    %5364 = vmatpush.msra.mxu0 %v5341
    %5365 = vmatmul.f32.gmra.mxu0 %v5344
    %v5366 = vpop.f32.mrf.mxu0
    %v5367 = vadd.f32 %v5335, %v5366
    %5368 = vmatmul.f32.gmra.mxu0 %v5347
    %v5369 = vpop.f32.mrf.mxu0
    %v5370 = vadd.f32 %v5338, %v5369
    %5371 = vdwg.mxu0
    %5372 = vrot.lane.b32.xlu0 %v4997, 112
    %v5373 = vpop.permute.xlu0 %5372
    %5374 = vrot.lane.b32.xlu0 %v5039, 112
    %v5375 = vpop.permute.xlu0 %5374
    %v5376 = vsel %vm338, %v5373, 0
    %v5378 = vsel %vm338, %v5375, 0
    %5380 = vmatpush.xpose.msra.mxu0 0.0
    %5381 = vmatpush.xpose.msra.mxu0 0.0
    %5382 = vmatpush.xpose.msra.mxu0 0.0
    %5383 = vmatpush.xpose.msra.mxu0 0.0
    %5384 = vmatpush.xpose.msra.mxu0 0.0
    %5385 = vmatpush.xpose.msra.mxu0 0.0
    %5386 = vmatpush.xpose.msra.mxu0 0.0
    %5387 = vmatpush.xpose.msra.mxu0 0.0
    %5388 = vmatpush.xpose.msra.mxu0 0.0
    %5389 = vmatpush.xpose.msra.mxu0 0.0
    %5390 = vmatpush.xpose.msra.mxu0 0.0
    %5391 = vmatpush.xpose.msra.mxu0 0.0
    %5392 = vmatpush.xpose.msra.mxu0 0.0
    %5393 = vmatpush.xpose.msra.mxu0 0.0
    %5394 = vmatpush.xpose.msra.mxu0 0.0
    %5395 = vmatpush.xpose.msra.mxu0 %v5378
    %5396 = vmatmul.f32.gmra.mxu0 %v5376
    %v5397 = vpop.f32.mrf.mxu0
    %v5398 = vadd.f32 0.0, %v5397
    %5399 = vdwg.mxu0
    %5400 = vrot.lane.b32.xlu0 %v5000, 112
    %v5401 = vpop.permute.xlu0 %5400
    %5402 = vrot.lane.b32.xlu0 %v5042, 112
    %v5403 = vpop.permute.xlu0 %5402
    %v5404 = vsel %vm338, %v5401, 0
    %v5406 = vsel %vm338, %v5403, 0
    %5408 = vmatpush.xpose.msra.mxu0 0.0
    %5409 = vmatpush.xpose.msra.mxu0 0.0
    %5410 = vmatpush.xpose.msra.mxu0 0.0
    %5411 = vmatpush.xpose.msra.mxu0 0.0
    %5412 = vmatpush.xpose.msra.mxu0 0.0
    %5413 = vmatpush.xpose.msra.mxu0 0.0
    %5414 = vmatpush.xpose.msra.mxu0 0.0
    %5415 = vmatpush.xpose.msra.mxu0 0.0
    %5416 = vmatpush.xpose.msra.mxu0 0.0
    %5417 = vmatpush.xpose.msra.mxu0 0.0
    %5418 = vmatpush.xpose.msra.mxu0 0.0
    %5419 = vmatpush.xpose.msra.mxu0 0.0
    %5420 = vmatpush.xpose.msra.mxu0 0.0
    %5421 = vmatpush.xpose.msra.mxu0 0.0
    %5422 = vmatpush.xpose.msra.mxu0 0.0
    %5423 = vmatpush.xpose.msra.mxu0 %v5406
    %5424 = vmatmul.f32.gmra.mxu0 %v5404
    %v5425 = vpop.f32.mrf.mxu0
    %v5426 = vadd.f32 0.0, %v5425
    %5427 = vdwg.mxu0
    %v5428 = vmul.f32 %v5398, 0.35355338
    %v5429 = vmul.f32 %v5426, 0.35355338
    %v5430 = vadd.f32 %v5428, %v146
    %v5431 = vadd.f32 %v5429, %v147
    %v5432 = vsel %vm338, %v5430, -inf
    %5433 = vmax.xlane.f32.xlu0 %v5432
    %v5434 = vpop.xlane.xlu0 %5433
    %v5435 = vsel %vm338, %v5431, -inf
    %5436 = vmax.xlane.f32.xlu0 %v5435
    %v5437 = vpop.xlane.xlu0 %5436
    %v5438 = vsub.f32 %v5430, %v5434
    %v5439 = vsub.f32 %v5431, %v5437
    %v5440 = vmul.f32 %v5438, 1.442695
    %v5441 = vpow.pop %v5440
    %v5442 = vmul.f32 %v5439, 1.442695
    %v5443 = vpow.pop %v5442
    %v5444 = vsel %vm338, %v5441, 0.0
    %5445 = vadd.xlane.f32.xlu0 %v5444
    %v5446 = vpop.xlane.xlu0 %5445
    %v5447 = vsel %vm338, %v5443, 0.0
    %5448 = vadd.xlane.f32.xlu0 %v5447
    %v5449 = vpop.xlane.xlu0 %5448
    %v5450 = vrcp.pop %v5446
    %v5451 = vrcp.pop %v5449
    %v5452 = vmul.f32 %v5441, %v5450
    %v5453 = vmul.f32 %v5443, %v5451
    %5454 = vrot.lane.b32.xlu0 %v5039, 80
    %v5455 = vpop.permute.xlu0 %5454
    %v5458 = vsel %vm338, %v5452, 0
    %5460 = vmatpush.msra.mxu0 0.0
    %5461 = vmatpush.msra.mxu0 0.0
    %5462 = vmatpush.msra.mxu0 0.0
    %5463 = vmatpush.msra.mxu0 0.0
    %5464 = vmatpush.msra.mxu0 0.0
    %5465 = vmatpush.msra.mxu0 0.0
    %5466 = vmatpush.msra.mxu0 0.0
    %5467 = vmatpush.msra.mxu0 0.0
    %5468 = vmatpush.msra.mxu0 0.0
    %5469 = vmatpush.msra.mxu0 0.0
    %5470 = vmatpush.msra.mxu0 0.0
    %5471 = vmatpush.msra.mxu0 0.0
    %5472 = vmatpush.msra.mxu0 0.0
    %5473 = vmatpush.msra.mxu0 0.0
    %5474 = vmatpush.msra.mxu0 0.0
    %5475 = vmatpush.msra.mxu0 %v5455
    %5476 = vmatmul.f32.gmra.mxu0 %v5458
    %v5477 = vpop.f32.mrf.mxu0
    %v5478 = vadd.f32 0.0, %v5477
    %5479 = vdwg.mxu0
    %5480 = vrot.lane.b32.xlu0 %v5042, 80
    %v5481 = vpop.permute.xlu0 %5480
    %v5484 = vsel %vm338, %v5453, 0
    %5486 = vmatpush.msra.mxu0 0.0
    %5487 = vmatpush.msra.mxu0 0.0
    %5488 = vmatpush.msra.mxu0 0.0
    %5489 = vmatpush.msra.mxu0 0.0
    %5490 = vmatpush.msra.mxu0 0.0
    %5491 = vmatpush.msra.mxu0 0.0
    %5492 = vmatpush.msra.mxu0 0.0
    %5493 = vmatpush.msra.mxu0 0.0
    %5494 = vmatpush.msra.mxu0 0.0
    %5495 = vmatpush.msra.mxu0 0.0
    %5496 = vmatpush.msra.mxu0 0.0
    %5497 = vmatpush.msra.mxu0 0.0
    %5498 = vmatpush.msra.mxu0 0.0
    %5499 = vmatpush.msra.mxu0 0.0
    %5500 = vmatpush.msra.mxu0 0.0
    %5501 = vmatpush.msra.mxu0 %v5481
    %5502 = vmatmul.f32.gmra.mxu0 %v5484
    %v5503 = vpop.f32.mrf.mxu0
    %v5504 = vadd.f32 0.0, %v5503
    %5505 = vdwg.mxu0
    %5506 = vrot.lane.b32.xlu0 %v4093, 32
    %v5507 = vpop.permute.xlu0 %5506
    %v5510 = vsel %vm338, %v5478, 0
    %v5513 = vsel %vm338, %v5504, 0
    %5515 = vmatpush.msra.mxu0 0.0
    %5516 = vmatpush.msra.mxu0 0.0
    %5517 = vmatpush.msra.mxu0 0.0
    %5518 = vmatpush.msra.mxu0 0.0
    %5519 = vmatpush.msra.mxu0 0.0
    %5520 = vmatpush.msra.mxu0 0.0
    %5521 = vmatpush.msra.mxu0 0.0
    %5522 = vmatpush.msra.mxu0 0.0
    %5523 = vmatpush.msra.mxu0 0.0
    %5524 = vmatpush.msra.mxu0 0.0
    %5525 = vmatpush.msra.mxu0 0.0
    %5526 = vmatpush.msra.mxu0 0.0
    %5527 = vmatpush.msra.mxu0 0.0
    %5528 = vmatpush.msra.mxu0 0.0
    %5529 = vmatpush.msra.mxu0 0.0
    %5530 = vmatpush.msra.mxu0 %v5507
    %5531 = vmatmul.f32.gmra.mxu0 %v5510
    %v5532 = vpop.f32.mrf.mxu0
    %v5533 = vadd.f32 0.0, %v5532
    %5534 = vmatmul.f32.gmra.mxu0 %v5513
    %v5535 = vpop.f32.mrf.mxu0
    %v5536 = vadd.f32 0.0, %v5535
    %5537 = vdwg.mxu0
    %v5538 = vadd.f32 %v5367, %v5533
    %v5539 = vadd.f32 %v5370, %v5536
    %5540 = vrot.lane.b32.xlu0 %v4997, 104
    %v5541 = vpop.permute.xlu0 %5540
    %5542 = vrot.lane.b32.xlu0 %v5039, 104
    %v5543 = vpop.permute.xlu0 %5542
    %v5544 = vsel %vm338, %v5541, 0
    %v5546 = vsel %vm338, %v5543, 0
    %5548 = vmatpush.xpose.msra.mxu0 0.0
    %5549 = vmatpush.xpose.msra.mxu0 0.0
    %5550 = vmatpush.xpose.msra.mxu0 0.0
    %5551 = vmatpush.xpose.msra.mxu0 0.0
    %5552 = vmatpush.xpose.msra.mxu0 0.0
    %5553 = vmatpush.xpose.msra.mxu0 0.0
    %5554 = vmatpush.xpose.msra.mxu0 0.0
    %5555 = vmatpush.xpose.msra.mxu0 0.0
    %5556 = vmatpush.xpose.msra.mxu0 0.0
    %5557 = vmatpush.xpose.msra.mxu0 0.0
    %5558 = vmatpush.xpose.msra.mxu0 0.0
    %5559 = vmatpush.xpose.msra.mxu0 0.0
    %5560 = vmatpush.xpose.msra.mxu0 0.0
    %5561 = vmatpush.xpose.msra.mxu0 0.0
    %5562 = vmatpush.xpose.msra.mxu0 0.0
    %5563 = vmatpush.xpose.msra.mxu0 %v5546
    %5564 = vmatmul.f32.gmra.mxu0 %v5544
    %v5565 = vpop.f32.mrf.mxu0
    %v5566 = vadd.f32 0.0, %v5565
    %5567 = vdwg.mxu0
    %5568 = vrot.lane.b32.xlu0 %v5000, 104
    %v5569 = vpop.permute.xlu0 %5568
    %5570 = vrot.lane.b32.xlu0 %v5042, 104
    %v5571 = vpop.permute.xlu0 %5570
    %v5572 = vsel %vm338, %v5569, 0
    %v5574 = vsel %vm338, %v5571, 0
    %5576 = vmatpush.xpose.msra.mxu0 0.0
    %5577 = vmatpush.xpose.msra.mxu0 0.0
    %5578 = vmatpush.xpose.msra.mxu0 0.0
    %5579 = vmatpush.xpose.msra.mxu0 0.0
    %5580 = vmatpush.xpose.msra.mxu0 0.0
    %5581 = vmatpush.xpose.msra.mxu0 0.0
    %5582 = vmatpush.xpose.msra.mxu0 0.0
    %5583 = vmatpush.xpose.msra.mxu0 0.0
    %5584 = vmatpush.xpose.msra.mxu0 0.0
    %5585 = vmatpush.xpose.msra.mxu0 0.0
    %5586 = vmatpush.xpose.msra.mxu0 0.0
    %5587 = vmatpush.xpose.msra.mxu0 0.0
    %5588 = vmatpush.xpose.msra.mxu0 0.0
    %5589 = vmatpush.xpose.msra.mxu0 0.0
    %5590 = vmatpush.xpose.msra.mxu0 0.0
    %5591 = vmatpush.xpose.msra.mxu0 %v5574
    %5592 = vmatmul.f32.gmra.mxu0 %v5572
    %v5593 = vpop.f32.mrf.mxu0
    %v5594 = vadd.f32 0.0, %v5593
    %5595 = vdwg.mxu0
    %v5596 = vmul.f32 %v5566, 0.35355338
    %v5597 = vmul.f32 %v5594, 0.35355338
    %v5598 = vadd.f32 %v5596, %v146
    %v5599 = vadd.f32 %v5597, %v147
    %v5600 = vsel %vm338, %v5598, -inf
    %5601 = vmax.xlane.f32.xlu0 %v5600
    %v5602 = vpop.xlane.xlu0 %5601
    %v5603 = vsel %vm338, %v5599, -inf
    %5604 = vmax.xlane.f32.xlu0 %v5603
    %v5605 = vpop.xlane.xlu0 %5604
    %v5606 = vsub.f32 %v5598, %v5602
    %v5607 = vsub.f32 %v5599, %v5605
    %v5608 = vmul.f32 %v5606, 1.442695
    %v5609 = vpow.pop %v5608
    %v5610 = vmul.f32 %v5607, 1.442695
    %v5611 = vpow.pop %v5610
    %v5612 = vsel %vm338, %v5609, 0.0
    %5613 = vadd.xlane.f32.xlu0 %v5612
    %v5614 = vpop.xlane.xlu0 %5613
    %v5615 = vsel %vm338, %v5611, 0.0
    %5616 = vadd.xlane.f32.xlu0 %v5615
    %v5617 = vpop.xlane.xlu0 %5616
    %v5618 = vrcp.pop %v5614
    %v5619 = vrcp.pop %v5617
    %v5620 = vmul.f32 %v5609, %v5618
    %v5621 = vmul.f32 %v5611, %v5619
    %5622 = vrot.lane.b32.xlu0 %v5039, 72
    %v5623 = vpop.permute.xlu0 %5622
    %v5626 = vsel %vm338, %v5620, 0
    %5628 = vmatpush.msra.mxu0 0.0
    %5629 = vmatpush.msra.mxu0 0.0
    %5630 = vmatpush.msra.mxu0 0.0
    %5631 = vmatpush.msra.mxu0 0.0
    %5632 = vmatpush.msra.mxu0 0.0
    %5633 = vmatpush.msra.mxu0 0.0
    %5634 = vmatpush.msra.mxu0 0.0
    %5635 = vmatpush.msra.mxu0 0.0
    %5636 = vmatpush.msra.mxu0 0.0
    %5637 = vmatpush.msra.mxu0 0.0
    %5638 = vmatpush.msra.mxu0 0.0
    %5639 = vmatpush.msra.mxu0 0.0
    %5640 = vmatpush.msra.mxu0 0.0
    %5641 = vmatpush.msra.mxu0 0.0
    %5642 = vmatpush.msra.mxu0 0.0
    %5643 = vmatpush.msra.mxu0 %v5623
    %5644 = vmatmul.f32.gmra.mxu0 %v5626
    %v5645 = vpop.f32.mrf.mxu0
    %v5646 = vadd.f32 0.0, %v5645
    %5647 = vdwg.mxu0
    %5648 = vrot.lane.b32.xlu0 %v5042, 72
    %v5649 = vpop.permute.xlu0 %5648
    %v5652 = vsel %vm338, %v5621, 0
    %5654 = vmatpush.msra.mxu0 0.0
    %5655 = vmatpush.msra.mxu0 0.0
    %5656 = vmatpush.msra.mxu0 0.0
    %5657 = vmatpush.msra.mxu0 0.0
    %5658 = vmatpush.msra.mxu0 0.0
    %5659 = vmatpush.msra.mxu0 0.0
    %5660 = vmatpush.msra.mxu0 0.0
    %5661 = vmatpush.msra.mxu0 0.0
    %5662 = vmatpush.msra.mxu0 0.0
    %5663 = vmatpush.msra.mxu0 0.0
    %5664 = vmatpush.msra.mxu0 0.0
    %5665 = vmatpush.msra.mxu0 0.0
    %5666 = vmatpush.msra.mxu0 0.0
    %5667 = vmatpush.msra.mxu0 0.0
    %5668 = vmatpush.msra.mxu0 0.0
    %5669 = vmatpush.msra.mxu0 %v5649
    %5670 = vmatmul.f32.gmra.mxu0 %v5652
    %v5671 = vpop.f32.mrf.mxu0
    %v5672 = vadd.f32 0.0, %v5671
    %5673 = vdwg.mxu0
    %5674 = vrot.lane.b32.xlu0 %v4094, 32
    %v5675 = vpop.permute.xlu0 %5674
    %v5678 = vsel %vm338, %v5646, 0
    %v5681 = vsel %vm338, %v5672, 0
    %5683 = vmatpush.msra.mxu0 0.0
    %5684 = vmatpush.msra.mxu0 0.0
    %5685 = vmatpush.msra.mxu0 0.0
    %5686 = vmatpush.msra.mxu0 0.0
    %5687 = vmatpush.msra.mxu0 0.0
    %5688 = vmatpush.msra.mxu0 0.0
    %5689 = vmatpush.msra.mxu0 0.0
    %5690 = vmatpush.msra.mxu0 0.0
    %5691 = vmatpush.msra.mxu0 0.0
    %5692 = vmatpush.msra.mxu0 0.0
    %5693 = vmatpush.msra.mxu0 0.0
    %5694 = vmatpush.msra.mxu0 0.0
    %5695 = vmatpush.msra.mxu0 0.0
    %5696 = vmatpush.msra.mxu0 0.0
    %5697 = vmatpush.msra.mxu0 0.0
    %5698 = vmatpush.msra.mxu0 %v5675
    %5699 = vmatmul.f32.gmra.mxu0 %v5678
    %v5700 = vpop.f32.mrf.mxu0
    %v5701 = vadd.f32 0.0, %v5700
    %5702 = vmatmul.f32.gmra.mxu0 %v5681
    %v5703 = vpop.f32.mrf.mxu0
    %v5704 = vadd.f32 0.0, %v5703
    %5705 = vdwg.mxu0
    %v5706 = vadd.f32 %v5538, %v5701
    %v5707 = vadd.f32 %v5539, %v5704
    %5708 = vrot.lane.b32.xlu0 %v4971, 32
    %v5709 = vpop.permute.xlu0 %5708
    %v5711 = vadd.f32 %v5706, %v5709
    %v5712 = vadd.f32 %v5707, %v5709
    %v5713 = vadd.f32 %v4886, %v5711
    %v5714 = vadd.f32 %v4887, %v5712
    %v5715 = vsel %vm213, %v5713, 0.0
    %5716 = vadd.xlane.f32.xlu0 %v5715
    %v5717 = vpop.xlane.xlu0 %5716
    %v5718 = vsel %vm213, %v5714, 0.0
    %5719 = vadd.xlane.f32.xlu0 %v5718
    %v5720 = vpop.xlane.xlu0 %5719
    %v5721 = vmul.f32 %v5717, %v226
    %v5722 = vmul.f32 %v5720, %v226
    %v5723 = vsub.f32 %v5713, %v5721
    %v5724 = vsub.f32 %v5714, %v5722
    %v5725 = vmul.f32 %v5723, %v5723
    %v5726 = vmul.f32 %v5724, %v5724
    %v5727 = vsel %vm213, %v5725, 0.0
    %5728 = vadd.xlane.f32.xlu0 %v5727
    %v5729 = vpop.xlane.xlu0 %5728
    %v5730 = vsel %vm213, %v5726, 0.0
    %5731 = vadd.xlane.f32.xlu0 %v5730
    %v5732 = vpop.xlane.xlu0 %5731
    %v5733 = vmul.f32 %v5729, 0.032258064
    %v5734 = vmul.f32 %v5732, 0.032258064
    %v5735 = vperm.slane %v4082, 4
    %v5736 = vmul.f32 %v5735, %v5723
    %v5737 = vmul.f32 %v5735, %v5724
    %v5738 = vrsqrt.pop %v5733
    %v5739 = vmul.f32 %v5738, %v5733
    %v5740 = vmul.f32 %v5739, %v5738
    %v5741 = vmul.f32 0.5, %v5740
    %v5742 = vsub.f32 1.5, %v5741
    %v5743 = vmul.f32 %v5738, %v5742
    %v5744 = vmul.f32 %v5733, %v5743
    %vm5745 = vcmp.eq.f32.partialorder %v5733, inf
    %v5746 = vsel %vm5745, %v5733, %v5744
    %vm5747 = vcmp.eq.f32.partialorder %v5733, 0.0
    %v5748 = vand.u32 %v5733, 2147483648
    %v5749 = vsel %vm5747, %v5748, %v5746
    %v5750 = vrsqrt.pop %v5734
    %v5751 = vmul.f32 %v5750, %v5734
    %v5752 = vmul.f32 %v5751, %v5750
    %v5753 = vmul.f32 0.5, %v5752
    %v5754 = vsub.f32 1.5, %v5753
    %v5755 = vmul.f32 %v5750, %v5754
    %v5756 = vmul.f32 %v5734, %v5755
    %vm5757 = vcmp.eq.f32.partialorder %v5734, inf
    %v5758 = vsel %vm5757, %v5734, %v5756
    %vm5759 = vcmp.eq.f32.partialorder %v5734, 0.0
    %v5760 = vand.u32 %v5734, 2147483648
    %v5761 = vsel %vm5759, %v5760, %v5758
    %v5762 = vadd.f32 %v5749, 1e-06
    %v5763 = vadd.f32 %v5761, 1e-06
    %v5764 = vrcp.pop %v5762
    %v5765 = vmul.f32 %v5762, %v5764
    %v5766 = vsub.f32 1.0, %v5765
    %v5767 = vmul.f32 %v5764, %v5766
    %v5768 = vadd.f32 %v5764, %v5767
    %vm5769 = vweird.f32 %v5762
    %vm5770 = vweird.f32 %v5764
    %vm5771 = vmor %vm5769, %vm5770
    %v5772 = vsel %vm5771, %v5764, %v5768
    %v5773 = vand.u32 2147483647, %v5762
    %vm5774 = vcmp.eq.f32.partialorder %v5773, 8.507059e+37
    %v5775 = vand.u32 %v5762, 2147483648
    %v5776 = vor.u32 1.1754944e-38, %v5775
    %v5777 = vsel %vm5774, %v5776, %v5772
    %v5778 = vmul.f32 %v5736, %v5777
    %v5779 = vrcp.pop %v5763
    %v5780 = vmul.f32 %v5763, %v5779
    %v5781 = vsub.f32 1.0, %v5780
    %v5782 = vmul.f32 %v5779, %v5781
    %v5783 = vadd.f32 %v5779, %v5782
    %vm5784 = vweird.f32 %v5763
    %vm5785 = vweird.f32 %v5779
    %vm5786 = vmor %vm5784, %vm5785
    %v5787 = vsel %vm5786, %v5779, %v5783
    %v5788 = vand.u32 2147483647, %v5763
    %vm5789 = vcmp.eq.f32.partialorder %v5788, 8.507059e+37
    %v5790 = vand.u32 %v5763, 2147483648
    %v5791 = vor.u32 1.1754944e-38, %v5790
    %v5792 = vsel %vm5789, %v5791, %v5787
    %v5793 = vmul.f32 %v5737, %v5792
    %v5794 = vperm.slane %v4082, 5
    %v5795 = vadd.f32 %v5778, %v5794
    %v5796 = vadd.f32 %v5793, %v5794
    %s5797 = scalar_lea.vmem %s20, 1
    %v5798 = vld [vmem:[%s5797] sm:$0x1]
    %s5799 = scalar_lea.vmem %s18, 32
    %v5800 = vld [vmem:[%s5799] sm:$0xff]
    %v5801 = vld [vmem:[%s5799 + $0x8] sm:$0xff]
    %v5802 = vld [vmem:[%s5799 + $0x10] sm:$0xff]
    %v5803 = vld [vmem:[%s5799 + $0x18] sm:$0xff]
    %v5805 = vperm.slane %v5798, 0
    %v5808 = vsel %vm213, %v5795, 0
    %v5811 = vsel %vm213, %v5796, 0
    %5813 = vmatpush.msra.mxu0 0.0
    %5814 = vmatpush.msra.mxu0 0.0
    %5815 = vmatpush.msra.mxu0 0.0
    %5816 = vmatpush.msra.mxu0 0.0
    %5817 = vmatpush.msra.mxu0 0.0
    %5818 = vmatpush.msra.mxu0 0.0
    %5819 = vmatpush.msra.mxu0 0.0
    %5820 = vmatpush.msra.mxu0 0.0
    %5821 = vmatpush.msra.mxu0 0.0
    %5822 = vmatpush.msra.mxu0 0.0
    %5823 = vmatpush.msra.mxu0 0.0
    %5824 = vmatpush.msra.mxu0 0.0
    %5825 = vmatpush.msra.mxu0 %v5803
    %5826 = vmatpush.msra.mxu0 %v5802
    %5827 = vmatpush.msra.mxu0 %v5801
    %5828 = vmatpush.msra.mxu0 %v5800
    %5829 = vmatmul.f32.gmra.mxu0 %v5808
    %v5830 = vpop.f32.mrf.mxu0
    %v5831 = vadd.f32 %v5805, %v5830
    %5832 = vmatmul.f32.gmra.mxu0 %v5811
    %v5833 = vpop.f32.mrf.mxu0
    %v5834 = vadd.f32 %v5805, %v5833
    %5835 = vdwg.mxu0
    %v5836 = vmax.f32 %v5831, 0.0
    %v5837 = vmax.f32 %v5834, 0.0
    %s5838 = scalar_lea.vmem %s19, 64
    %v5839 = vld [vmem:[%s5838] sm:$0xff]
    %v5840 = vld [vmem:[%s5838 + $0x8] sm:$0xff]
    %v5841 = vld [vmem:[%s5838 + $0x10] sm:$0xff]
    %v5842 = vld [vmem:[%s5838 + $0x18] sm:$0xff]
    %v5843 = vld [vmem:[%s5838 + $0x20] sm:$0xff]
    %v5844 = vld [vmem:[%s5838 + $0x28] sm:$0xff]
    %v5845 = vld [vmem:[%s5838 + $0x30] sm:$0xff]
    %v5846 = vld [vmem:[%s5838 + $0x38] sm:$0xff]
    %v5848 = vsel %vm1142, %v5836, 0
    %v5851 = vsel %vm1142, %v5837, 0
    %5853 = vmatpush.msra.mxu0 0.0
    %5854 = vmatpush.msra.mxu0 0.0
    %5855 = vmatpush.msra.mxu0 0.0
    %5856 = vmatpush.msra.mxu0 0.0
    %5857 = vmatpush.msra.mxu0 0.0
    %5858 = vmatpush.msra.mxu0 0.0
    %5859 = vmatpush.msra.mxu0 0.0
    %5860 = vmatpush.msra.mxu0 0.0
    %5861 = vmatpush.msra.mxu0 %v5846
    %5862 = vmatpush.msra.mxu0 %v5845
    %5863 = vmatpush.msra.mxu0 %v5844
    %5864 = vmatpush.msra.mxu0 %v5843
    %5865 = vmatpush.msra.mxu0 %v5842
    %5866 = vmatpush.msra.mxu0 %v5841
    %5867 = vmatpush.msra.mxu0 %v5840
    %5868 = vmatpush.msra.mxu0 %v5839
    %5869 = vmatmul.f32.gmra.mxu0 %v5848
    %v5870 = vpop.f32.mrf.mxu0
    %v5871 = vadd.f32 0.0, %v5870
    %5872 = vmatmul.f32.gmra.mxu0 %v5851
    %v5873 = vpop.f32.mrf.mxu0
    %v5874 = vadd.f32 0.0, %v5873
    %5875 = vdwg.mxu0
    %v5876 = vadd.f32 %v5713, %v5871
    %v5877 = vadd.f32 %v5714, %v5874
    %5878 = vrot.lane.b32.xlu0 %v5805, 64
    %v5879 = vpop.permute.xlu0 %5878
    %v5881 = vadd.f32 %v5876, %v5879
    %v5882 = vadd.f32 %v5877, %v5879
    %v5883 = vld [vmem:[%s22] sm:$0x1]
    %v5884 = vld [vmem:[%s22 + $0x1] sm:$0x1]
    %v5885 = vsel %vm213, %v5881, 0.0
    %5886 = vadd.xlane.f32.xlu0 %v5885
    %v5887 = vpop.xlane.xlu0 %5886
    %v5888 = vsel %vm213, %v5882, 0.0
    %5889 = vadd.xlane.f32.xlu0 %v5888
    %v5890 = vpop.xlane.xlu0 %5889
    %v5891 = vmul.f32 %v5887, %v226
    %v5892 = vmul.f32 %v5890, %v226
    %v5893 = vsub.f32 %v5881, %v5891
    %v5894 = vsub.f32 %v5882, %v5892
    %v5895 = vmul.f32 %v5893, %v5893
    %v5896 = vmul.f32 %v5894, %v5894
    %v5897 = vsel %vm213, %v5895, 0.0
    %5898 = vadd.xlane.f32.xlu0 %v5897
    %v5899 = vpop.xlane.xlu0 %5898
    %v5900 = vsel %vm213, %v5896, 0.0
    %5901 = vadd.xlane.f32.xlu0 %v5900
    %v5902 = vpop.xlane.xlu0 %5901
    %v5903 = vmul.f32 %v5899, 0.032258064
    %v5904 = vmul.f32 %v5902, 0.032258064
    %v5905 = vperm.slane %v5883, 0
    %v5906 = vmul.f32 %v5905, %v5893
    %v5907 = vmul.f32 %v5905, %v5894
    %v5908 = vrsqrt.pop %v5903
    %v5909 = vmul.f32 %v5908, %v5903
    %v5910 = vmul.f32 %v5909, %v5908
    %v5911 = vmul.f32 0.5, %v5910
    %v5912 = vsub.f32 1.5, %v5911
    %v5913 = vmul.f32 %v5908, %v5912
    %v5914 = vmul.f32 %v5903, %v5913
    %vm5915 = vcmp.eq.f32.partialorder %v5903, inf
    %v5916 = vsel %vm5915, %v5903, %v5914
    %vm5917 = vcmp.eq.f32.partialorder %v5903, 0.0
    %v5918 = vand.u32 %v5903, 2147483648
    %v5919 = vsel %vm5917, %v5918, %v5916
    %v5920 = vrsqrt.pop %v5904
    %v5921 = vmul.f32 %v5920, %v5904
    %v5922 = vmul.f32 %v5921, %v5920
    %v5923 = vmul.f32 0.5, %v5922
    %v5924 = vsub.f32 1.5, %v5923
    %v5925 = vmul.f32 %v5920, %v5924
    %v5926 = vmul.f32 %v5904, %v5925
    %vm5927 = vcmp.eq.f32.partialorder %v5904, inf
    %v5928 = vsel %vm5927, %v5904, %v5926
    %vm5929 = vcmp.eq.f32.partialorder %v5904, 0.0
    %v5930 = vand.u32 %v5904, 2147483648
    %v5931 = vsel %vm5929, %v5930, %v5928
    %v5932 = vadd.f32 %v5919, 1e-06
    %v5933 = vadd.f32 %v5931, 1e-06
    %v5934 = vrcp.pop %v5932
    %v5935 = vmul.f32 %v5932, %v5934
    %v5936 = vsub.f32 1.0, %v5935
    %v5937 = vmul.f32 %v5934, %v5936
    %v5938 = vadd.f32 %v5934, %v5937
    %vm5939 = vweird.f32 %v5932
    %vm5940 = vweird.f32 %v5934
    %vm5941 = vmor %vm5939, %vm5940
    %v5942 = vsel %vm5941, %v5934, %v5938
    %v5943 = vand.u32 2147483647, %v5932
    %vm5944 = vcmp.eq.f32.partialorder %v5943, 8.507059e+37
    %v5945 = vand.u32 %v5932, 2147483648
    %v5946 = vor.u32 1.1754944e-38, %v5945
    %v5947 = vsel %vm5944, %v5946, %v5942
    %v5948 = vmul.f32 %v5906, %v5947
    %v5949 = vrcp.pop %v5933
    %v5950 = vmul.f32 %v5933, %v5949
    %v5951 = vsub.f32 1.0, %v5950
    %v5952 = vmul.f32 %v5949, %v5951
    %v5953 = vadd.f32 %v5949, %v5952
    %vm5954 = vweird.f32 %v5933
    %vm5955 = vweird.f32 %v5949
    %vm5956 = vmor %vm5954, %vm5955
    %v5957 = vsel %vm5956, %v5949, %v5953
    %v5958 = vand.u32 2147483647, %v5933
    %vm5959 = vcmp.eq.f32.partialorder %v5958, 8.507059e+37
    %v5960 = vand.u32 %v5933, 2147483648
    %v5961 = vor.u32 1.1754944e-38, %v5960
    %v5962 = vsel %vm5959, %v5961, %v5957
    %v5963 = vmul.f32 %v5907, %v5962
    %v5964 = vperm.slane %v5884, 0
    %v5965 = vadd.f32 %v5948, %v5964
    %v5966 = vadd.f32 %v5963, %v5964
    %5967 = vst.msk [vmem:[#allocation10] sm:$0xff] %vm213, %v5965
    %5968 = vst.msk [vmem:[#allocation10 + $0x8] sm:$0xff] %vm213, %v5966
    // Predicated region
    $region110: #{tpu_custom_call.1} parent=1 // pred_check
      _
    $region111: #{tpu_custom_call.1} parent=1 // pred_check_branch
      %5970 = sbr.rel (0) target = $region113
    $region112: #{tpu_custom_call.1} parent=1 // pred_region
      %5972 = vsyncadd [#allocation4], 0
      %s5973 = sshll.u32 [#allocation10], 4
      %s5974 = int_to_ptr.vmem [resolvable:$true] %s5973
      %s5975 = sshll.u32 %s23, 4
      %s5976 = int_to_ptr.hbm [resolvable:$true] %s5975
      %5981 = dma.vmem_to_hbm [thread:$0]  %s5974, 256, %s5976, [#allocation4], 128, 128, 8
    $region113: #{tpu_custom_call.1} parent=1 // pred_fallthru
      _
    // Predicated region
    $region114: #{tpu_custom_call.1} parent=1 // pred_check
      _
    $region115: #{tpu_custom_call.1} parent=1 // pred_check_branch
      %5983 = sbr.rel (0) target = $region117
    $region116: #{tpu_custom_call.1} parent=1 // pred_region
      %5985 = dma.done [#allocation4], 256
    $region117: #{tpu_custom_call.1} parent=1 // pred_fallthru
      _
    %5986 = vsyncpa [#allocation3], 1
    %5987 = vsyncpa [#allocation6], 1
    %5988 = vsyncpa [#allocation9], 1
    %5989 = vsyncpa [#allocation4], 1

</llo_original>
